<compile_context>
chip_gen: v5e
topology: v5e:2x2
jax: 0.10.0
libtpu: 0.0.40
codegen_flags: <defaults>
</compile_context>

<pallas_src>
import functools

import jax
import jax.numpy as jnp
from jax.experimental import pallas as pl
from jax.experimental.pallas import tpu as pltpu

VMEM_SPEC = pl.BlockSpec(memory_space=pltpu.MemorySpace.VMEM)
SMEM_SPEC = pl.BlockSpec(memory_space=pltpu.MemorySpace.SMEM)


# ------------------------------- kernel --------------------------------------
def fused_gatv2_kernel(feat_ref, w_in_ref, adjb_ref, eidx_ref, wslab_ref,
                       pslab_ref, o_ref, xbuf_ref, *, n, hidden, heads,
                       n_edges):
    H = hidden
    HH = heads * H
    f32, bf16 = jnp.float32, jnp.bfloat16

    # packed small-parameter slab row offsets (must match the wrapper)
    r_att1 = 2
    r_att2 = 2 + heads
    r_bias1 = 2 + 2 * heads
    r_bias2 = r_bias1 + 1
    r_pb1 = r_bias2 + 1
    r_pw2 = r_pb1 + 1

    wslab = wslab_ref[...]                                # [3H, 2*heads*H] bf16
    pslab = pslab_ref[...]                                # [r_pw2+1, 2*heads*H] f32
    adj_bias = adjb_ref[...].astype(f32)                  # [n, n], 0 / -1e9

    # ---- fused user/product input Linears (biases folded via indicator cols)
    x = jnp.dot(feat_ref[...], w_in_ref[...],
                preferred_element_type=f32)                # [n, H] f32

    def gat_layer(x, w, b_row, att2d, bias_row):
        # single lane-dense projection: [n, H] @ [H, 2*heads*H]
        g = jnp.dot(x.astype(bf16), w, preferred_element_type=f32) + b_row
        gl, gr = g[:, :HH], g[:, HH:]          # lin_l (source), lin_r (target)
        # restack heads onto a leading batch axis ONCE on the small [n, HH]
        # projections (not per head on the N^2 score tensor).
        glT = jnp.stack([gl[:, h * H:(h + 1) * H] for h in range(heads)], 0)
        grT = jnp.stack([gr[:, h * H:(h + 1) * H] for h in range(heads)], 0)
        att = att2d[:, None, None, :]                      # [heads, 1, 1, H]

        # GATv2 score with factorized leaky_relu(.2): lrelu(z) = .6 z + .4|z|.
        # The target-side .6*att.gr_i linear term is constant along the softmax
        # axis and cancels exactly; the source-side term rides in the same
        # sweep.  Sweep kept f32 (v5e has no bf16 VALU; bf16 is a v6e/v7x opt).
        z = grT[:, :, None, :] + glT[:, None, :, :]         # [heads, n, n, H]
        scored = jnp.abs(z) * (0.4 * att) + (0.6 * att) * glT[:, None, :, :]
        e = jnp.sum(scored, axis=-1) + adj_bias[None]       # [heads, n, n]

        # masked edge softmax over sources: ONE slab pass covers both heads.
        e = e - jnp.max(e, axis=-1, keepdims=True)
        p = jnp.exp(e)                 # masked entries underflow to exactly 0
        alpha = p * pl.reciprocal(jnp.sum(p, axis=-1, keepdims=True),
                                  approx=True)

        # both heads aggregated in one batched MXU contraction, then head-mean
        outh = jnp.einsum('hij,hjd->hid', alpha.astype(bf16), glT.astype(bf16),
                          preferred_element_type=f32)       # [heads, n, H]
        return jnp.sum(outh, axis=0) * (1.0 / heads) + bias_row

    x = gat_layer(x, wslab[0:H, :], pslab[0:1, :],
                  pslab[r_att1:r_att1 + heads, :H],
                  pslab[r_bias1:r_bias1 + 1, :H])
    x = jnp.maximum(x, 0.0)
    # TODO(synk): F.dropout(p=0.2) is identity in eval mode; training-mode
    # stochastic dropout is not implemented.
    x = gat_layer(x, wslab[H:2 * H, :], pslab[1:2, :],
                  pslab[r_att2:r_att2 + heads, :H],
                  pslab[r_bias2:r_bias2 + 1, :H])

    # ---- per-edge endpoint gather: x stays VMEM-resident, rows are picked by
    # the SMEM edge indices (replaces the old [E, N] one-hot selector matmuls).
    xbuf_ref[...] = x
    u = jnp.concatenate(
        [xbuf_ref[pl.ds(eidx_ref[0, t], 1), :] for t in range(n_edges)], axis=0)
    v = jnp.concatenate(
        [xbuf_ref[pl.ds(eidx_ref[1, t], 1), :] for t in range(n_edges)], axis=0)

    # ---- F.normalize(p=2, dim=-1), eps = 1e-12 ------------------------------
    un = u * jax.lax.rsqrt(
        jnp.maximum(jnp.sum(u * u, axis=-1, keepdims=True), 1e-24))
    vn = v * jax.lax.rsqrt(
        jnp.maximum(jnp.sum(v * v, axis=-1, keepdims=True), 1e-24))
    d = (un * vn).astype(bf16)

    # ---- predictor MLP.  W1/b1/w2 are zero-padded to the slab width; padded
    # column H carries the final bias (relu(0 @ W1 + 1.0) * b2 == b2).  The
    # [H, 1] output Linear is a VPU multiply + lane reduce, and the result is
    # written lane-dense as a (1, E) row.
    hmid = jnp.maximum(
        jnp.dot(d, wslab[2 * H:3 * H, :], preferred_element_type=f32)
        + pslab[r_pb1:r_pb1 + 1, :], 0.0)                   # [E, 2*heads*H]
    o_ref[...] = jnp.sum(hmid * pslab[r_pw2:r_pw2 + 1, :],
                         axis=-1).reshape(1, n_edges)


# --------------------------- parameter init ----------------------------------
def _lin_init(key, fan_in, fan_out):
    k1, k2 = jax.random.split(key)
    lim = 1.0 / jnp.sqrt(jnp.float32(fan_in))
    w = jax.random.uniform(k1, (fan_in, fan_out), jnp.float32, -lim, lim)
    b = jax.random.uniform(k2, (fan_out,), jnp.float32, -lim, lim)
    return w, b


def init_params(key, user_fdim, prod_fdim, hidden, heads):
    ks = jax.random.split(key, 6)

    def conv(k):
        ka, kb, kc = jax.random.split(k, 3)
        wl, bl = _lin_init(ka, hidden, heads * hidden)   # lin_l (source)
        wr, br = _lin_init(kb, hidden, heads * hidden)   # lin_r (target)
        att = jax.random.normal(kc, (heads, hidden), jnp.float32) * 0.1
        bias = jnp.zeros((hidden,), jnp.float32)         # conv output bias
        return dict(w=jnp.concatenate([wl, wr], axis=1),  # [hidden, 2*heads*hidden]
                    b=jnp.concatenate([bl, br]),          # [2*heads*hidden]
                    att=att, bias=bias)

    w_user, b_user = _lin_init(ks[0], user_fdim, hidden)
    w_prod, b_prod = _lin_init(ks[1], prod_fdim, hidden)
    w1, b1 = _lin_init(ks[4], hidden, hidden)
    w2, b2 = _lin_init(ks[5], hidden, 1)
    return dict(w_user=w_user, b_user=b_user, w_prod=w_prod, b_prod=b_prod,
                conv1=conv(ks[2]), conv2=conv(ks[3]),
                w1=w1, b1=b1, w2=w2, b2=b2)


# ------------------------------- forward --------------------------------------
def gatv2_model_forward(edge_index, user_features, product_features, params,
                        *, hidden, heads):
    f32, bf16 = jnp.float32, jnp.bfloat16
    H = hidden
    num_users, du = user_features.shape
    num_products, dp = product_features.shape
    n = num_users + num_products
    e = edge_index.shape[1]
    L = 2 * heads * H                   # lane width of the packed slabs
    assert L >= H + 1

    # Fused input Linear: block-diagonal features plus two per-type indicator
    # columns (fold b_user / b_prod into the weight) -> one bf16 MXU matmul.
    din = du + dp + 2
    feat = jnp.zeros((n, din), f32)
    feat = feat.at[:num_users, :du].set(user_features)
    feat = feat.at[num_users:, du:du + dp].set(product_features)
    feat = feat.at[:num_users, du + dp].set(1.0)
    feat = feat.at[num_users:, du + dp + 1].set(1.0)
    w_in = jnp.zeros((din, H), f32)
    w_in = w_in.at[:du].set(params["w_user"])
    w_in = w_in.at[du:du + dp].set(params["w_prod"])
    w_in = w_in.at[du + dp].set(params["b_user"])
    w_in = w_in.at[du + dp + 1].set(params["b_prod"])

    # Bidirectional edges + self-loops as an additive softmax mask
    # (adj_bias[target, source] = 0 for edges, -1e9 otherwise), shipped bf16.
    # Self-loops keep every softmax row non-degenerate.
    ar = jnp.arange(n, dtype=edge_index.dtype)
    src = jnp.concatenate([edge_index[0], edge_index[1], ar])
    dst = jnp.concatenate([edge_index[1], edge_index[0], ar])
    adj_bias = jnp.full((n, n), -1e9, f32).at[dst, src].set(0.0).astype(bf16)

    # Packed parameter slabs: one bf16 MXU-weight slab + one f32 row slab.
    c1, c2 = params["conv1"], params["conv2"]
    w1_pad = jnp.zeros((H, L), f32).at[:, :H].set(params["w1"])
    wslab = jnp.concatenate([c1["w"], c2["w"], w1_pad], axis=0).astype(bf16)

    def pad_rows(m):
        m = m.reshape((-1, m.shape[-1]))
        return jnp.zeros((m.shape[0], L), f32).at[:, :m.shape[1]].set(m)

    b1_ext = (jnp.zeros((1, L), f32).at[0, :H].set(params["b1"])
              .at[0, H].set(1.0))                       # col H: bias carrier
    w2_ext = (jnp.zeros((1, L), f32).at[0, :H].set(params["w2"].reshape(-1))
              .at[0, H].set(params["b2"][0]))
    pslab = jnp.concatenate(
        [pad_rows(c1["b"]), pad_rows(c2["b"]),
         pad_rows(c1["att"]), pad_rows(c2["att"]),
         pad_rows(c1["bias"]), pad_rows(c2["bias"]),
         b1_ext, w2_ext], axis=0)                       # [8 + 2*heads, L]

    kernel = functools.partial(fused_gatv2_kernel, n=n, hidden=H, heads=heads,
                               n_edges=e)
    out = pl.pallas_call(
        kernel,
        out_shape=jax.ShapeDtypeStruct((1, e), jnp.float32),   # lane-dense row
        in_specs=[VMEM_SPEC, VMEM_SPEC, VMEM_SPEC, SMEM_SPEC, VMEM_SPEC,
                  VMEM_SPEC],
        out_specs=VMEM_SPEC,
        scratch_shapes=[pltpu.VMEM((n, H), jnp.float32)],
    )(feat.astype(bf16), w_in.astype(bf16), adj_bias,
      edge_index.astype(jnp.int32), wslab, pslab)
    return out[0]                       # squeeze to (E,)


# --------------------------------- main ---------------------------------------
if __name__ == "__main__":
    num_users, num_products = 8, 16
    user_fdim, prod_fdim = 16, 24
    hidden, heads = 32, 2
    n_edges = 12

    key = jax.random.PRNGKey(0)
    k_feat_u, k_feat_p, k_edge, k_param = jax.random.split(key, 4)

    user_features = jax.random.normal(k_feat_u, (num_users, user_fdim),
                                      jnp.float32)
    product_features = jax.random.normal(k_feat_p, (num_products, prod_fdim),
                                         jnp.float32)

    # Unique user->product edges; products are globally indexed as
    # num_users .. num_users + num_products - 1 (bipartite graph).
    prod_perm = jax.random.permutation(k_edge, num_products)[:n_edges]
    users = jnp.arange(n_edges, dtype=jnp.int32) % num_users
    products = prod_perm.astype(jnp.int32) + num_users
    edge_index = jnp.stack([users, products], axis=0)      # [2, E]

    params = init_params(k_param, user_fdim, prod_fdim, hidden, heads)

    preds = gatv2_model_forward(edge_index, user_features, product_features,
                                params, hidden=hidden, heads=heads)
    preds = jax.block_until_ready(preds)
    assert preds.shape == (n_edges,)
    assert bool(jnp.all(jnp.isfinite(preds)))
    print("KERNEL_OK")
</pallas_src>

<mosaic_0001>
module attributes {stable_mosaic.version = 11 : i64} {
  func.func @fused_gatv2_kernel(%arg0: memref<24x42xbf16, #tpu.memory_space<vmem>>, %arg1: memref<42x32xbf16, #tpu.memory_space<vmem>>, %arg2: memref<24x24xbf16, #tpu.memory_space<vmem>>, %arg3: memref<2x12xi32, #tpu.memory_space<smem>>, %arg4: memref<96x128xbf16, #tpu.memory_space<vmem>>, %arg5: memref<10x128xf32, #tpu.memory_space<vmem>>, %arg6: memref<1x12xf32, #tpu.memory_space<vmem>>, %arg7: memref<24x32xf32, #tpu.memory_space<vmem>>) attributes {dimension_semantics = [], scalar_prefetch = 0 : i64, scratch_operands = 1 : i64, tpu.core_type = #tpu.core_type<tc>} {
    %c0 = arith.constant 0 : index
    %c0_0 = arith.constant 0 : index
    %0 = vector.load %arg4[%c0, %c0_0] : memref<96x128xbf16, #tpu.memory_space<vmem>>, vector<96x128xbf16>
    %c0_1 = arith.constant 0 : index
    %c0_2 = arith.constant 0 : index
    %1 = vector.load %arg5[%c0_1, %c0_2] : memref<10x128xf32, #tpu.memory_space<vmem>>, vector<10x128xf32>
    %c0_3 = arith.constant 0 : index
    %c0_4 = arith.constant 0 : index
    %2 = vector.load %arg2[%c0_3, %c0_4] : memref<24x24xbf16, #tpu.memory_space<vmem>>, vector<24x24xbf16>
    %3 = arith.extf %2 : vector<24x24xbf16> to vector<24x24xf32>
    %c0_5 = arith.constant 0 : index
    %c0_6 = arith.constant 0 : index
    %4 = vector.load %arg0[%c0_5, %c0_6] : memref<24x42xbf16, #tpu.memory_space<vmem>>, vector<24x42xbf16>
    %c0_7 = arith.constant 0 : index
    %c0_8 = arith.constant 0 : index
    %5 = vector.load %arg1[%c0_7, %c0_8] : memref<42x32xbf16, #tpu.memory_space<vmem>>, vector<42x32xbf16>
    %cst = arith.constant dense<0.000000e+00> : vector<24x32xf32>
    %6 = tpu.matmul %4, %5, %cst {dimension_numbers = #tpu.dot_dimension_numbers<[1], [0], [0], [1], [0, 0, 1, 1], [], []>} : vector<24x42xbf16>, vector<42x32xbf16>, vector<24x32xf32> -> vector<24x32xf32>
    %7 = vector.extract_strided_slice %0 {offsets = [0, 0], sizes = [32, 128], strides = [1, 1]} : vector<96x128xbf16> to vector<32x128xbf16>
    %8 = vector.extract_strided_slice %1 {offsets = [0, 0], sizes = [1, 128], strides = [1, 1]} : vector<10x128xf32> to vector<1x128xf32>
    %9 = vector.extract_strided_slice %1 {offsets = [2, 0], sizes = [2, 32], strides = [1, 1]} : vector<10x128xf32> to vector<2x32xf32>
    %10 = vector.extract_strided_slice %1 {offsets = [6, 0], sizes = [1, 32], strides = [1, 1]} : vector<10x128xf32> to vector<1x32xf32>
    %11 = arith.truncf %6 : vector<24x32xf32> to vector<24x32xbf16>
    %cst_9 = arith.constant dense<0.000000e+00> : vector<24x128xf32>
    %12 = tpu.matmul %11, %7, %cst_9 {dimension_numbers = #tpu.dot_dimension_numbers<[1], [0], [0], [1], [0, 0, 1, 1], [], []>} : vector<24x32xbf16>, vector<32x128xbf16>, vector<24x128xf32> -> vector<24x128xf32>
    %13 = vector.broadcast %8 : vector<1x128xf32> to vector<24x128xf32>
    %14 = arith.addf %12, %13 : vector<24x128xf32>
    %15 = vector.extract_strided_slice %14 {offsets = [0, 0], sizes = [24, 64], strides = [1, 1]} : vector<24x128xf32> to vector<24x64xf32>
    %16 = vector.extract_strided_slice %14 {offsets = [0, 64], sizes = [24, 64], strides = [1, 1]} : vector<24x128xf32> to vector<24x64xf32>
    %17 = vector.extract_strided_slice %15 {offsets = [0, 0], sizes = [24, 32], strides = [1, 1]} : vector<24x64xf32> to vector<24x32xf32>
    %18 = vector.extract_strided_slice %15 {offsets = [0, 32], sizes = [24, 32], strides = [1, 1]} : vector<24x64xf32> to vector<24x32xf32>
    %19 = vector.shape_cast %17 : vector<24x32xf32> to vector<1x24x32xf32>
    %20 = vector.shape_cast %18 : vector<24x32xf32> to vector<1x24x32xf32>
    %21 = tpu.concatenate %19, %20 in 0 : vector<1x24x32xf32>, vector<1x24x32xf32> -> vector<2x24x32xf32>
    %22 = vector.extract_strided_slice %16 {offsets = [0, 0], sizes = [24, 32], strides = [1, 1]} : vector<24x64xf32> to vector<24x32xf32>
    %23 = vector.extract_strided_slice %16 {offsets = [0, 32], sizes = [24, 32], strides = [1, 1]} : vector<24x64xf32> to vector<24x32xf32>
    %24 = vector.shape_cast %22 : vector<24x32xf32> to vector<1x24x32xf32>
    %25 = vector.shape_cast %23 : vector<24x32xf32> to vector<1x24x32xf32>
    %26 = tpu.concatenate %24, %25 in 0 : vector<1x24x32xf32>, vector<1x24x32xf32> -> vector<2x24x32xf32>
    %27 = vector.shape_cast %9 : vector<2x32xf32> to vector<2x1x1x32xf32>
    %28 = vector.shape_cast %26 : vector<2x24x32xf32> to vector<2x24x1x32xf32>
    %29 = vector.shape_cast %21 : vector<2x24x32xf32> to vector<2x1x24x32xf32>
    %30 = vector.broadcast %28 : vector<2x24x1x32xf32> to vector<2x24x24x32xf32>
    %31 = vector.broadcast %29 : vector<2x1x24x32xf32> to vector<2x24x24x32xf32>
    %32 = arith.addf %30, %31 : vector<2x24x24x32xf32>
    %33 = math.absf %32 : vector<2x24x24x32xf32>
    %cst_10 = arith.constant 4.000000e-01 : f32
    %34 = vector.broadcast %cst_10 : f32 to vector<2x1x1x32xf32>
    %35 = arith.mulf %34, %27 : vector<2x1x1x32xf32>
    %36 = vector.broadcast %35 : vector<2x1x1x32xf32> to vector<2x24x24x32xf32>
    %37 = arith.mulf %33, %36 : vector<2x24x24x32xf32>
    %cst_11 = arith.constant 6.000000e-01 : f32
    %38 = vector.broadcast %cst_11 : f32 to vector<2x1x1x32xf32>
    %39 = arith.mulf %38, %27 : vector<2x1x1x32xf32>
    %40 = vector.shape_cast %21 : vector<2x24x32xf32> to vector<2x1x24x32xf32>
    %41 = vector.broadcast %39 : vector<2x1x1x32xf32> to vector<2x1x24x32xf32>
    %42 = arith.mulf %41, %40 : vector<2x1x24x32xf32>
    %43 = vector.broadcast %42 : vector<2x1x24x32xf32> to vector<2x24x24x32xf32>
    %44 = arith.addf %37, %43 : vector<2x24x24x32xf32>
    %cst_12 = arith.constant dense<0.000000e+00> : vector<2x24x24xf32>
    %45 = vector.multi_reduction <add>, %44, %cst_12 [3] : vector<2x24x24x32xf32> to vector<2x24x24xf32>
    %46 = vector.shape_cast %3 : vector<24x24xf32> to vector<1x24x24xf32>
    %47 = vector.broadcast %46 : vector<1x24x24xf32> to vector<2x24x24xf32>
    %48 = arith.addf %45, %47 : vector<2x24x24xf32>
    %cst_13 = arith.constant dense<0xFF800000> : vector<2x24xf32>
    %49 = vector.multi_reduction <maximumf>, %48, %cst_13 [2] : vector<2x24x24xf32> to vector<2x24xf32>
    %50 = vector.shape_cast %49 : vector<2x24xf32> to vector<2x24x1xf32>
    %51 = vector.broadcast %50 : vector<2x24x1xf32> to vector<2x24x24xf32>
    %52 = arith.subf %48, %51 : vector<2x24x24xf32>
    %53 = math.exp %52 : vector<2x24x24xf32>
    %cst_14 = arith.constant dense<0.000000e+00> : vector<2x24xf32>
    %54 = vector.multi_reduction <add>, %53, %cst_14 [2] : vector<2x24x24xf32> to vector<2x24xf32>
    %55 = vector.shape_cast %54 : vector<2x24xf32> to vector<2x24x1xf32>
    %56 = tpu.reciprocal %55 {approx = true} : vector<2x24x1xf32> -> vector<2x24x1xf32>
    %57 = vector.broadcast %56 : vector<2x24x1xf32> to vector<2x24x24xf32>
    %58 = arith.mulf %53, %57 : vector<2x24x24xf32>
    %59 = arith.truncf %58 : vector<2x24x24xf32> to vector<2x24x24xbf16>
    %60 = arith.truncf %21 : vector<2x24x32xf32> to vector<2x24x32xbf16>
    "tpu.trace_start"() <{level = 10 : i32, message = "hij,hjd->hid"}> : () -> ()
    %cst_15 = arith.constant dense<0.000000e+00> : vector<2x24x32xf32>
    %61 = tpu.matmul %59, %60, %cst_15 {dimension_numbers = #tpu.dot_dimension_numbers<[2], [1], [1], [2], [0, 0, 0, 1, 1, 2], [0], [0]>} : vector<2x24x24xbf16>, vector<2x24x32xbf16>, vector<2x24x32xf32> -> vector<2x24x32xf32>
    "tpu.trace_stop"() : () -> ()
    %cst_16 = arith.constant dense<0.000000e+00> : vector<24x32xf32>
    %62 = vector.multi_reduction <add>, %61, %cst_16 [0] : vector<2x24x32xf32> to vector<24x32xf32>
    %cst_17 = arith.constant 5.000000e-01 : f32
    %63 = vector.broadcast %cst_17 : f32 to vector<24x32xf32>
    %64 = arith.mulf %62, %63 : vector<24x32xf32>
    %65 = vector.broadcast %10 : vector<1x32xf32> to vector<24x32xf32>
    %66 = arith.addf %64, %65 : vector<24x32xf32>
    %cst_18 = arith.constant 0.000000e+00 : f32
    %67 = vector.broadcast %cst_18 : f32 to vector<24x32xf32>
    %68 = arith.maximumf %66, %67 : vector<24x32xf32>
    %69 = vector.extract_strided_slice %0 {offsets = [32, 0], sizes = [32, 128], strides = [1, 1]} : vector<96x128xbf16> to vector<32x128xbf16>
    %70 = vector.extract_strided_slice %1 {offsets = [1, 0], sizes = [1, 128], strides = [1, 1]} : vector<10x128xf32> to vector<1x128xf32>
    %71 = vector.extract_strided_slice %1 {offsets = [4, 0], sizes = [2, 32], strides = [1, 1]} : vector<10x128xf32> to vector<2x32xf32>
    %72 = vector.extract_strided_slice %1 {offsets = [7, 0], sizes = [1, 32], strides = [1, 1]} : vector<10x128xf32> to vector<1x32xf32>
    %73 = arith.truncf %68 : vector<24x32xf32> to vector<24x32xbf16>
    %cst_19 = arith.constant dense<0.000000e+00> : vector<24x128xf32>
    %74 = tpu.matmul %73, %69, %cst_19 {dimension_numbers = #tpu.dot_dimension_numbers<[1], [0], [0], [1], [0, 0, 1, 1], [], []>} : vector<24x32xbf16>, vector<32x128xbf16>, vector<24x128xf32> -> vector<24x128xf32>
    %75 = vector.broadcast %70 : vector<1x128xf32> to vector<24x128xf32>
    %76 = arith.addf %74, %75 : vector<24x128xf32>
    %77 = vector.extract_strided_slice %76 {offsets = [0, 0], sizes = [24, 64], strides = [1, 1]} : vector<24x128xf32> to vector<24x64xf32>
    %78 = vector.extract_strided_slice %76 {offsets = [0, 64], sizes = [24, 64], strides = [1, 1]} : vector<24x128xf32> to vector<24x64xf32>
    %79 = vector.extract_strided_slice %77 {offsets = [0, 0], sizes = [24, 32], strides = [1, 1]} : vector<24x64xf32> to vector<24x32xf32>
    %80 = vector.extract_strided_slice %77 {offsets = [0, 32], sizes = [24, 32], strides = [1, 1]} : vector<24x64xf32> to vector<24x32xf32>
    %81 = vector.shape_cast %79 : vector<24x32xf32> to vector<1x24x32xf32>
    %82 = vector.shape_cast %80 : vector<24x32xf32> to vector<1x24x32xf32>
    %83 = tpu.concatenate %81, %82 in 0 : vector<1x24x32xf32>, vector<1x24x32xf32> -> vector<2x24x32xf32>
    %84 = vector.extract_strided_slice %78 {offsets = [0, 0], sizes = [24, 32], strides = [1, 1]} : vector<24x64xf32> to vector<24x32xf32>
    %85 = vector.extract_strided_slice %78 {offsets = [0, 32], sizes = [24, 32], strides = [1, 1]} : vector<24x64xf32> to vector<24x32xf32>
    %86 = vector.shape_cast %84 : vector<24x32xf32> to vector<1x24x32xf32>
    %87 = vector.shape_cast %85 : vector<24x32xf32> to vector<1x24x32xf32>
    %88 = tpu.concatenate %86, %87 in 0 : vector<1x24x32xf32>, vector<1x24x32xf32> -> vector<2x24x32xf32>
    %89 = vector.shape_cast %71 : vector<2x32xf32> to vector<2x1x1x32xf32>
    %90 = vector.shape_cast %88 : vector<2x24x32xf32> to vector<2x24x1x32xf32>
    %91 = vector.shape_cast %83 : vector<2x24x32xf32> to vector<2x1x24x32xf32>
    %92 = vector.broadcast %90 : vector<2x24x1x32xf32> to vector<2x24x24x32xf32>
    %93 = vector.broadcast %91 : vector<2x1x24x32xf32> to vector<2x24x24x32xf32>
    %94 = arith.addf %92, %93 : vector<2x24x24x32xf32>
    %95 = math.absf %94 : vector<2x24x24x32xf32>
    %cst_20 = arith.constant 4.000000e-01 : f32
    %96 = vector.broadcast %cst_20 : f32 to vector<2x1x1x32xf32>
    %97 = arith.mulf %96, %89 : vector<2x1x1x32xf32>
    %98 = vector.broadcast %97 : vector<2x1x1x32xf32> to vector<2x24x24x32xf32>
    %99 = arith.mulf %95, %98 : vector<2x24x24x32xf32>
    %cst_21 = arith.constant 6.000000e-01 : f32
    %100 = vector.broadcast %cst_21 : f32 to vector<2x1x1x32xf32>
    %101 = arith.mulf %100, %89 : vector<2x1x1x32xf32>
    %102 = vector.shape_cast %83 : vector<2x24x32xf32> to vector<2x1x24x32xf32>
    %103 = vector.broadcast %101 : vector<2x1x1x32xf32> to vector<2x1x24x32xf32>
    %104 = arith.mulf %103, %102 : vector<2x1x24x32xf32>
    %105 = vector.broadcast %104 : vector<2x1x24x32xf32> to vector<2x24x24x32xf32>
    %106 = arith.addf %99, %105 : vector<2x24x24x32xf32>
    %cst_22 = arith.constant dense<0.000000e+00> : vector<2x24x24xf32>
    %107 = vector.multi_reduction <add>, %106, %cst_22 [3] : vector<2x24x24x32xf32> to vector<2x24x24xf32>
    %108 = vector.shape_cast %3 : vector<24x24xf32> to vector<1x24x24xf32>
    %109 = vector.broadcast %108 : vector<1x24x24xf32> to vector<2x24x24xf32>
    %110 = arith.addf %107, %109 : vector<2x24x24xf32>
    %cst_23 = arith.constant dense<0xFF800000> : vector<2x24xf32>
    %111 = vector.multi_reduction <maximumf>, %110, %cst_23 [2] : vector<2x24x24xf32> to vector<2x24xf32>
    %112 = vector.shape_cast %111 : vector<2x24xf32> to vector<2x24x1xf32>
    %113 = vector.broadcast %112 : vector<2x24x1xf32> to vector<2x24x24xf32>
    %114 = arith.subf %110, %113 : vector<2x24x24xf32>
    %115 = math.exp %114 : vector<2x24x24xf32>
    %cst_24 = arith.constant dense<0.000000e+00> : vector<2x24xf32>
    %116 = vector.multi_reduction <add>, %115, %cst_24 [2] : vector<2x24x24xf32> to vector<2x24xf32>
    %117 = vector.shape_cast %116 : vector<2x24xf32> to vector<2x24x1xf32>
    %118 = tpu.reciprocal %117 {approx = true} : vector<2x24x1xf32> -> vector<2x24x1xf32>
    %119 = vector.broadcast %118 : vector<2x24x1xf32> to vector<2x24x24xf32>
    %120 = arith.mulf %115, %119 : vector<2x24x24xf32>
    %121 = arith.truncf %120 : vector<2x24x24xf32> to vector<2x24x24xbf16>
    %122 = arith.truncf %83 : vector<2x24x32xf32> to vector<2x24x32xbf16>
    "tpu.trace_start"() <{level = 10 : i32, message = "hij,hjd->hid"}> : () -> ()
    %cst_25 = arith.constant dense<0.000000e+00> : vector<2x24x32xf32>
    %123 = tpu.matmul %121, %122, %cst_25 {dimension_numbers = #tpu.dot_dimension_numbers<[2], [1], [1], [2], [0, 0, 0, 1, 1, 2], [0], [0]>} : vector<2x24x24xbf16>, vector<2x24x32xbf16>, vector<2x24x32xf32> -> vector<2x24x32xf32>
    "tpu.trace_stop"() : () -> ()
    %cst_26 = arith.constant dense<0.000000e+00> : vector<24x32xf32>
    %124 = vector.multi_reduction <add>, %123, %cst_26 [0] : vector<2x24x32xf32> to vector<24x32xf32>
    %cst_27 = arith.constant 5.000000e-01 : f32
    %125 = vector.broadcast %cst_27 : f32 to vector<24x32xf32>
    %126 = arith.mulf %124, %125 : vector<24x32xf32>
    %127 = vector.broadcast %72 : vector<1x32xf32> to vector<24x32xf32>
    %128 = arith.addf %126, %127 : vector<24x32xf32>
    %c0_28 = arith.constant 0 : index
    %c0_29 = arith.constant 0 : index
    %129 = vector.load %arg7[%c0_28, %c0_29] : memref<24x32xf32, #tpu.memory_space<vmem>>, vector<24x32xf32>
    tpu.vector_store %arg7[%c0_28, %c0_29], %128 {strides = array<i32>} : memref<24x32xf32, #tpu.memory_space<vmem>>, vector<24x32xf32>,
    %c0_30 = arith.constant 0 : index
    %c0_31 = arith.constant 0 : index
    %130 = memref.load %arg3[%c0_30, %c0_31] : memref<2x12xi32, #tpu.memory_space<smem>>
    %131 = arith.index_cast %130 : i32 to index
    %c0_32 = arith.constant 0 : index
    %132 = vector.load %arg7[%131, %c0_32] : memref<24x32xf32, #tpu.memory_space<vmem>>, vector<1x32xf32>
    %c0_33 = arith.constant 0 : index
    %c1 = arith.constant 1 : index
    %133 = memref.load %arg3[%c0_33, %c1] : memref<2x12xi32, #tpu.memory_space<smem>>
    %134 = arith.index_cast %133 : i32 to index
    %c0_34 = arith.constant 0 : index
    %135 = vector.load %arg7[%134, %c0_34] : memref<24x32xf32, #tpu.memory_space<vmem>>, vector<1x32xf32>
    %c0_35 = arith.constant 0 : index
    %c2 = arith.constant 2 : index
    %136 = memref.load %arg3[%c0_35, %c2] : memref<2x12xi32, #tpu.memory_space<smem>>
    %137 = arith.index_cast %136 : i32 to index
    %c0_36 = arith.constant 0 : index
    %138 = vector.load %arg7[%137, %c0_36] : memref<24x32xf32, #tpu.memory_space<vmem>>, vector<1x32xf32>
    %c0_37 = arith.constant 0 : index
    %c3 = arith.constant 3 : index
    %139 = memref.load %arg3[%c0_37, %c3] : memref<2x12xi32, #tpu.memory_space<smem>>
    %140 = arith.index_cast %139 : i32 to index
    %c0_38 = arith.constant 0 : index
    %141 = vector.load %arg7[%140, %c0_38] : memref<24x32xf32, #tpu.memory_space<vmem>>, vector<1x32xf32>
    %c0_39 = arith.constant 0 : index
    %c4 = arith.constant 4 : index
    %142 = memref.load %arg3[%c0_39, %c4] : memref<2x12xi32, #tpu.memory_space<smem>>
    %143 = arith.index_cast %142 : i32 to index
    %c0_40 = arith.constant 0 : index
    %144 = vector.load %arg7[%143, %c0_40] : memref<24x32xf32, #tpu.memory_space<vmem>>, vector<1x32xf32>
    %c0_41 = arith.constant 0 : index
    %c5 = arith.constant 5 : index
    %145 = memref.load %arg3[%c0_41, %c5] : memref<2x12xi32, #tpu.memory_space<smem>>
    %146 = arith.index_cast %145 : i32 to index
    %c0_42 = arith.constant 0 : index
    %147 = vector.load %arg7[%146, %c0_42] : memref<24x32xf32, #tpu.memory_space<vmem>>, vector<1x32xf32>
    %c0_43 = arith.constant 0 : index
    %c6 = arith.constant 6 : index
    %148 = memref.load %arg3[%c0_43, %c6] : memref<2x12xi32, #tpu.memory_space<smem>>
    %149 = arith.index_cast %148 : i32 to index
    %c0_44 = arith.constant 0 : index
    %150 = vector.load %arg7[%149, %c0_44] : memref<24x32xf32, #tpu.memory_space<vmem>>, vector<1x32xf32>
    %c0_45 = arith.constant 0 : index
    %c7 = arith.constant 7 : index
    %151 = memref.load %arg3[%c0_45, %c7] : memref<2x12xi32, #tpu.memory_space<smem>>
    %152 = arith.index_cast %151 : i32 to index
    %c0_46 = arith.constant 0 : index
    %153 = vector.load %arg7[%152, %c0_46] : memref<24x32xf32, #tpu.memory_space<vmem>>, vector<1x32xf32>
    %c0_47 = arith.constant 0 : index
    %c8 = arith.constant 8 : index
    %154 = memref.load %arg3[%c0_47, %c8] : memref<2x12xi32, #tpu.memory_space<smem>>
    %155 = arith.index_cast %154 : i32 to index
    %c0_48 = arith.constant 0 : index
    %156 = vector.load %arg7[%155, %c0_48] : memref<24x32xf32, #tpu.memory_space<vmem>>, vector<1x32xf32>
    %c0_49 = arith.constant 0 : index
    %c9 = arith.constant 9 : index
    %157 = memref.load %arg3[%c0_49, %c9] : memref<2x12xi32, #tpu.memory_space<smem>>
    %158 = arith.index_cast %157 : i32 to index
    %c0_50 = arith.constant 0 : index
    %159 = vector.load %arg7[%158, %c0_50] : memref<24x32xf32, #tpu.memory_space<vmem>>, vector<1x32xf32>
    %c0_51 = arith.constant 0 : index
    %c10 = arith.constant 10 : index
    %160 = memref.load %arg3[%c0_51, %c10] : memref<2x12xi32, #tpu.memory_space<smem>>
    %161 = arith.index_cast %160 : i32 to index
    %c0_52 = arith.constant 0 : index
    %162 = vector.load %arg7[%161, %c0_52] : memref<24x32xf32, #tpu.memory_space<vmem>>, vector<1x32xf32>
    %c0_53 = arith.constant 0 : index
    %c11 = arith.constant 11 : index
    %163 = memref.load %arg3[%c0_53, %c11] : memref<2x12xi32, #tpu.memory_space<smem>>
    %164 = arith.index_cast %163 : i32 to index
    %c0_54 = arith.constant 0 : index
    %165 = vector.load %arg7[%164, %c0_54] : memref<24x32xf32, #tpu.memory_space<vmem>>, vector<1x32xf32>
    %166 = tpu.concatenate %132, %135, %138, %141, %144, %147, %150, %153, %156, %159, %162, %165 in 0 : vector<1x32xf32>, vector<1x32xf32>, vector<1x32xf32>, vector<1x32xf32>, vector<1x32xf32>, vector<1x32xf32>, vector<1x32xf32>, vector<1x32xf32>, vector<1x32xf32>, vector<1x32xf32>, vector<1x32xf32>, vector<1x32xf32> -> vector<12x32xf32>
    %c1_55 = arith.constant 1 : index
    %c0_56 = arith.constant 0 : index
    %167 = memref.load %arg3[%c1_55, %c0_56] : memref<2x12xi32, #tpu.memory_space<smem>>
    %168 = arith.index_cast %167 : i32 to index
    %c0_57 = arith.constant 0 : index
    %169 = vector.load %arg7[%168, %c0_57] : memref<24x32xf32, #tpu.memory_space<vmem>>, vector<1x32xf32>
    %c1_58 = arith.constant 1 : index
    %c1_59 = arith.constant 1 : index
    %170 = memref.load %arg3[%c1_58, %c1_59] : memref<2x12xi32, #tpu.memory_space<smem>>
    %171 = arith.index_cast %170 : i32 to index
    %c0_60 = arith.constant 0 : index
    %172 = vector.load %arg7[%171, %c0_60] : memref<24x32xf32, #tpu.memory_space<vmem>>, vector<1x32xf32>
    %c1_61 = arith.constant 1 : index
    %c2_62 = arith.constant 2 : index
    %173 = memref.load %arg3[%c1_61, %c2_62] : memref<2x12xi32, #tpu.memory_space<smem>>
    %174 = arith.index_cast %173 : i32 to index
    %c0_63 = arith.constant 0 : index
    %175 = vector.load %arg7[%174, %c0_63] : memref<24x32xf32, #tpu.memory_space<vmem>>, vector<1x32xf32>
    %c1_64 = arith.constant 1 : index
    %c3_65 = arith.constant 3 : index
    %176 = memref.load %arg3[%c1_64, %c3_65] : memref<2x12xi32, #tpu.memory_space<smem>>
    %177 = arith.index_cast %176 : i32 to index
    %c0_66 = arith.constant 0 : index
    %178 = vector.load %arg7[%177, %c0_66] : memref<24x32xf32, #tpu.memory_space<vmem>>, vector<1x32xf32>
    %c1_67 = arith.constant 1 : index
    %c4_68 = arith.constant 4 : index
    %179 = memref.load %arg3[%c1_67, %c4_68] : memref<2x12xi32, #tpu.memory_space<smem>>
    %180 = arith.index_cast %179 : i32 to index
    %c0_69 = arith.constant 0 : index
    %181 = vector.load %arg7[%180, %c0_69] : memref<24x32xf32, #tpu.memory_space<vmem>>, vector<1x32xf32>
    %c1_70 = arith.constant 1 : index
    %c5_71 = arith.constant 5 : index
    %182 = memref.load %arg3[%c1_70, %c5_71] : memref<2x12xi32, #tpu.memory_space<smem>>
    %183 = arith.index_cast %182 : i32 to index
    %c0_72 = arith.constant 0 : index
    %184 = vector.load %arg7[%183, %c0_72] : memref<24x32xf32, #tpu.memory_space<vmem>>, vector<1x32xf32>
    %c1_73 = arith.constant 1 : index
    %c6_74 = arith.constant 6 : index
    %185 = memref.load %arg3[%c1_73, %c6_74] : memref<2x12xi32, #tpu.memory_space<smem>>
    %186 = arith.index_cast %185 : i32 to index
    %c0_75 = arith.constant 0 : index
    %187 = vector.load %arg7[%186, %c0_75] : memref<24x32xf32, #tpu.memory_space<vmem>>, vector<1x32xf32>
    %c1_76 = arith.constant 1 : index
    %c7_77 = arith.constant 7 : index
    %188 = memref.load %arg3[%c1_76, %c7_77] : memref<2x12xi32, #tpu.memory_space<smem>>
    %189 = arith.index_cast %188 : i32 to index
    %c0_78 = arith.constant 0 : index
    %190 = vector.load %arg7[%189, %c0_78] : memref<24x32xf32, #tpu.memory_space<vmem>>, vector<1x32xf32>
    %c1_79 = arith.constant 1 : index
    %c8_80 = arith.constant 8 : index
    %191 = memref.load %arg3[%c1_79, %c8_80] : memref<2x12xi32, #tpu.memory_space<smem>>
    %192 = arith.index_cast %191 : i32 to index
    %c0_81 = arith.constant 0 : index
    %193 = vector.load %arg7[%192, %c0_81] : memref<24x32xf32, #tpu.memory_space<vmem>>, vector<1x32xf32>
    %c1_82 = arith.constant 1 : index
    %c9_83 = arith.constant 9 : index
    %194 = memref.load %arg3[%c1_82, %c9_83] : memref<2x12xi32, #tpu.memory_space<smem>>
    %195 = arith.index_cast %194 : i32 to index
    %c0_84 = arith.constant 0 : index
    %196 = vector.load %arg7[%195, %c0_84] : memref<24x32xf32, #tpu.memory_space<vmem>>, vector<1x32xf32>
    %c1_85 = arith.constant 1 : index
    %c10_86 = arith.constant 10 : index
    %197 = memref.load %arg3[%c1_85, %c10_86] : memref<2x12xi32, #tpu.memory_space<smem>>
    %198 = arith.index_cast %197 : i32 to index
    %c0_87 = arith.constant 0 : index
    %199 = vector.load %arg7[%198, %c0_87] : memref<24x32xf32, #tpu.memory_space<vmem>>, vector<1x32xf32>
    %c1_88 = arith.constant 1 : index
    %c11_89 = arith.constant 11 : index
    %200 = memref.load %arg3[%c1_88, %c11_89] : memref<2x12xi32, #tpu.memory_space<smem>>
    %201 = arith.index_cast %200 : i32 to index
    %c0_90 = arith.constant 0 : index
    %202 = vector.load %arg7[%201, %c0_90] : memref<24x32xf32, #tpu.memory_space<vmem>>, vector<1x32xf32>
    %203 = tpu.concatenate %169, %172, %175, %178, %181, %184, %187, %190, %193, %196, %199, %202 in 0 : vector<1x32xf32>, vector<1x32xf32>, vector<1x32xf32>, vector<1x32xf32>, vector<1x32xf32>, vector<1x32xf32>, vector<1x32xf32>, vector<1x32xf32>, vector<1x32xf32>, vector<1x32xf32>, vector<1x32xf32>, vector<1x32xf32> -> vector<12x32xf32>
    %204 = arith.mulf %166, %166 : vector<12x32xf32>
    %cst_91 = arith.constant dense<0.000000e+00> : vector<12xf32>
    %205 = vector.multi_reduction <add>, %204, %cst_91 [1] : vector<12x32xf32> to vector<12xf32>
    %206 = vector.shape_cast %205 : vector<12xf32> to vector<12x1xf32>
    %cst_92 = arith.constant 1.000000e-24 : f32
    %207 = vector.broadcast %cst_92 : f32 to vector<12x1xf32>
    %208 = arith.maximumf %206, %207 : vector<12x1xf32>
    %209 = math.rsqrt %208 : vector<12x1xf32>
    %210 = vector.broadcast %209 : vector<12x1xf32> to vector<12x32xf32>
    %211 = arith.mulf %166, %210 : vector<12x32xf32>
    %212 = arith.mulf %203, %203 : vector<12x32xf32>
    %cst_93 = arith.constant dense<0.000000e+00> : vector<12xf32>
    %213 = vector.multi_reduction <add>, %212, %cst_93 [1] : vector<12x32xf32> to vector<12xf32>
    %214 = vector.shape_cast %213 : vector<12xf32> to vector<12x1xf32>
    %cst_94 = arith.constant 1.000000e-24 : f32
    %215 = vector.broadcast %cst_94 : f32 to vector<12x1xf32>
    %216 = arith.maximumf %214, %215 : vector<12x1xf32>
    %217 = math.rsqrt %216 : vector<12x1xf32>
    %218 = vector.broadcast %217 : vector<12x1xf32> to vector<12x32xf32>
    %219 = arith.mulf %203, %218 : vector<12x32xf32>
    %220 = arith.mulf %211, %219 : vector<12x32xf32>
    %221 = arith.truncf %220 : vector<12x32xf32> to vector<12x32xbf16>
    %222 = vector.extract_strided_slice %0 {offsets = [64, 0], sizes = [32, 128], strides = [1, 1]} : vector<96x128xbf16> to vector<32x128xbf16>
    %cst_95 = arith.constant dense<0.000000e+00> : vector<12x128xf32>
    %223 = tpu.matmul %221, %222, %cst_95 {dimension_numbers = #tpu.dot_dimension_numbers<[1], [0], [0], [1], [0, 0, 1, 1], [], []>} : vector<12x32xbf16>, vector<32x128xbf16>, vector<12x128xf32> -> vector<12x128xf32>
    %224 = vector.extract_strided_slice %1 {offsets = [8, 0], sizes = [1, 128], strides = [1, 1]} : vector<10x128xf32> to vector<1x128xf32>
    %225 = vector.broadcast %224 : vector<1x128xf32> to vector<12x128xf32>
    %226 = arith.addf %223, %225 : vector<12x128xf32>
    %cst_96 = arith.constant 0.000000e+00 : f32
    %227 = vector.broadcast %cst_96 : f32 to vector<12x128xf32>
    %228 = arith.maximumf %226, %227 : vector<12x128xf32>
    %229 = vector.extract_strided_slice %1 {offsets = [9, 0], sizes = [1, 128], strides = [1, 1]} : vector<10x128xf32> to vector<1x128xf32>
    %230 = vector.broadcast %229 : vector<1x128xf32> to vector<12x128xf32>
    %231 = arith.mulf %228, %230 : vector<12x128xf32>
    %cst_97 = arith.constant dense<0.000000e+00> : vector<12xf32>
    %232 = vector.multi_reduction <add>, %231, %cst_97 [1] : vector<12x128xf32> to vector<12xf32>
    %233 = vector.shape_cast %232 : vector<12xf32> to vector<1x12xf32>
    %c0_98 = arith.constant 0 : index
    %c0_99 = arith.constant 0 : index
    %234 = vector.load %arg6[%c0_98, %c0_99] : memref<1x12xf32, #tpu.memory_space<vmem>>, vector<1x12xf32>
    tpu.vector_store %arg6[%c0_98, %c0_99], %233 {strides = array<i32>} : memref<1x12xf32, #tpu.memory_space<vmem>>, vector<1x12xf32>,
    return
  }
}

</mosaic_0001>

<llo_original>
// kernel: tpu_custom_call.1
$region0: #{tpu_custom_call.1}
  #allocation0 [shape = 'u32[]', space=smem, size = 0x4, offset = 0x4, fixed_abs, tag = 'smem constant byte address 0x4 - core index']
  #allocation1 [shape = 'u32[72,128]{1,0:T(1,128)}', space=vmem, size = 0x9000, scoped, tag = 'internal scratch']
  #allocation2 [shape = 'f32[24,32]{1,0:T(8,128)}', space=vmem, size = 0x3000, scoped, tag = 'scratch operand']
  %s0 = inlined_call_operand.vmem [shape: bf16[24,42], index: 0, kind: input, shape index: {}]
  %s1 = inlined_call_operand.vmem [shape: bf16[42,32], index: 1, kind: input, shape index: {}]
  %s2 = inlined_call_operand.vmem [shape: bf16[24,24], index: 2, kind: input, shape index: {}]
  %s3 = inlined_call_operand.vmem [shape: s32[2,12], index: 3, kind: input, shape index: {}]
  %s4 = inlined_call_operand.hbm [shape: bf16[96,128], index: 4, kind: input, shape index: {}]
  %s5 = inlined_call_operand.vmem [shape: f32[10,128], index: 5, kind: input, shape index: {}]
  %s6 = inlined_call_operand.hbm [shape: f32[1,12], index: 6, kind: output, shape index: {}]
  %s7 = sld [smem:[#allocation0]]
  $region42: #{tpu_custom_call.1} parent=0
    _
  %s9 = ssub.s32 1, %s7
  %s10 = scalar_select 0, %s9, %s7
  $region1: #{tpu_custom_call.1} parent=0
    #allocation3 [shape = 'u8[1024]{0}', space=smem, size = 0x400, scoped, tag = 'input window, operand 3, single buffered']
    #allocation4 [shape = 's32[1]{0}', space=sflag, size = 0x4, scoped, tag = 'scoped memory for tpu_custom_call.1']
    #allocation5 [shape = 's32[1]{0}', space=sflag, size = 0x4, scoped, tag = 'scoped memory for tpu_custom_call.1']
    #allocation6 [shape = 's32[1]{0}', space=sflag, size = 0x4, scoped, tag = 'scoped memory for tpu_custom_call.1']
    #allocation7 [shape = 'u8[24576]{0}', space=vmem, size = 0x6000, scoped, tag = 'input window, operand 4, single buffered']
    #allocation8 [shape = 'u8[512]{0}', space=vmem, size = 0x400, scoped, tag = 'output window, operand 0, single buffered']
    %11 = vsyncpa [#allocation6], 0
    %12 = vsyncpa [#allocation4], 0
    %13 = vsyncpa [#allocation5], 0
    // Predicated region
    $region2: #{tpu_custom_call.1} parent=1 // pred_check
      _
    $region3: #{tpu_custom_call.1} parent=1 // pred_check_branch
      %15 = sbr.rel (0) target = $region5
    $region4: #{tpu_custom_call.1} parent=1 // pred_region
      _
    $region5: #{tpu_custom_call.1} parent=1 // pred_fallthru
      _
    // Predicated region
    $region6: #{tpu_custom_call.1} parent=1 // pred_check
      _
    $region7: #{tpu_custom_call.1} parent=1 // pred_check_branch
      %17 = sbr.rel (0) target = $region9
    $region8: #{tpu_custom_call.1} parent=1 // pred_region
      _
    $region9: #{tpu_custom_call.1} parent=1 // pred_fallthru
      _
    // Predicated region
    $region10: #{tpu_custom_call.1} parent=1 // pred_check
      _
    $region11: #{tpu_custom_call.1} parent=1 // pred_check_branch
      %19 = sbr.rel (0) target = $region13
    $region12: #{tpu_custom_call.1} parent=1 // pred_region
      _
    $region13: #{tpu_custom_call.1} parent=1 // pred_fallthru
      _
    // Predicated region
    $region14: #{tpu_custom_call.1} parent=1 // pred_check
      _
    $region15: #{tpu_custom_call.1} parent=1 // pred_check_branch
      %21 = sbr.rel (0) target = $region17
    $region16: #{tpu_custom_call.1} parent=1 // pred_region
      %23 = vsyncadd [#allocation6], 0
      %s25 = sshll.u32 %s3, 4
      %s26 = int_to_ptr.vmem [resolvable:$true] %s25
      %28 = dma.vmem_to_smem %s26, 32, [#allocation3], [#allocation6]
    $region17: #{tpu_custom_call.1} parent=1 // pred_fallthru
      _
    // Predicated region
    $region18: #{tpu_custom_call.1} parent=1 // pred_check
      _
    $region19: #{tpu_custom_call.1} parent=1 // pred_check_branch
      %30 = sbr.rel (0) target = $region21
    $region20: #{tpu_custom_call.1} parent=1 // pred_region
      %32 = vsyncadd [#allocation4], 0
      %s33 = sshll.u32 %s4, 4
      %s34 = int_to_ptr.hbm [resolvable:$true] %s33
      %s35 = sshll.u32 [#allocation7], 4
      %s36 = int_to_ptr.vmem [resolvable:$true] %s35
      %41 = dma.hbm_to_vmem [thread:$0]  %s34, 768, %s36, [#allocation4], 64, 64, 4
    $region21: #{tpu_custom_call.1} parent=1 // pred_fallthru
      _
    // Predicated region
    $region22: #{tpu_custom_call.1} parent=1 // pred_check
      _
    $region23: #{tpu_custom_call.1} parent=1 // pred_check_branch
      %43 = sbr.rel (0) target = $region25
    $region24: #{tpu_custom_call.1} parent=1 // pred_region
      _
    $region25: #{tpu_custom_call.1} parent=1 // pred_fallthru
      _
    // Predicated region
    $region26: #{tpu_custom_call.1} parent=1 // pred_check
      _
    $region27: #{tpu_custom_call.1} parent=1 // pred_check_branch
      %45 = sbr.rel (0) target = $region29
    $region28: #{tpu_custom_call.1} parent=1 // pred_region
      %47 = dma.done [#allocation6], 32
    $region29: #{tpu_custom_call.1} parent=1 // pred_fallthru
      _
    // Predicated region
    $region30: #{tpu_custom_call.1} parent=1 // pred_check
      _
    $region31: #{tpu_custom_call.1} parent=1 // pred_check_branch
      %49 = sbr.rel (0) target = $region33
    $region32: #{tpu_custom_call.1} parent=1 // pred_region
      %51 = dma.done [#allocation4], 768
    $region33: #{tpu_custom_call.1} parent=1 // pred_fallthru
      _
    %52 = sfence
    %v54 = vld [vmem:[#allocation7] sm:$0xf]
    %v55 = vld [vmem:[#allocation7 + $0x4] sm:$0xf]
    %v56 = vld [vmem:[#allocation7 + $0x8] sm:$0xf]
    %v57 = vld [vmem:[#allocation7 + $0xc] sm:$0xf]
    %v58 = vld [vmem:[#allocation7 + $0x10] sm:$0xf]
    %v59 = vld [vmem:[#allocation7 + $0x14] sm:$0xf]
    %v60 = vld [vmem:[#allocation7 + $0x18] sm:$0xf]
    %v61 = vld [vmem:[#allocation7 + $0x1c] sm:$0xf]
    %v62 = vld [vmem:[#allocation7 + $0x20] sm:$0xf]
    %v63 = vld [vmem:[#allocation7 + $0x24] sm:$0xf]
    %v64 = vld [vmem:[#allocation7 + $0x28] sm:$0xf]
    %v65 = vld [vmem:[#allocation7 + $0x2c] sm:$0xf]
    %v66 = vld [vmem:[%s5] sm:$0xff]
    %v67 = vld [vmem:[%s5 + $0x8] sm:$0x3]
    %v68 = vld [vmem:[%s2] sm:$0xf]
    %v69 = vld [vmem:[%s2 + $0x4] sm:$0xf]
    %v70 = vld [vmem:[%s2 + $0x8] sm:$0xf]
    %v71 = vunpack.c.l.bf16 %v68
    %v72 = vunpack.c.l.bf16 %v69
    %v73 = vunpack.c.l.bf16 %v70
    %v74 = vld [vmem:[%s0] sm:$0xf]
    %v75 = vld [vmem:[%s0 + $0x4] sm:$0xf]
    %v76 = vld [vmem:[%s0 + $0x8] sm:$0xf]
    %v77 = vld [vmem:[%s1] sm:$0xf]
    %v78 = vld [vmem:[%s1 + $0x4] sm:$0xf]
    %v79 = vld [vmem:[%s1 + $0x8] sm:$0xf]
    %v80 = vld [vmem:[%s1 + $0xc] sm:$0xf]
    %v81 = vld [vmem:[%s1 + $0x10] sm:$0xf]
    %v82 = vld [vmem:[%s1 + $0x14] sm:$0x1]
    %v86 = vunpack.c.l.b16 %v74
    %v87 = vunpack.c.l.b16 %v75
    %v88 = vunpack.c.l.b16 %v76
    %v89 = vpack.c.b16 %v87, %v86
    %v90 = vpack.c.b16 %v88, %v88
    %v97 = vunpack.c.l.b16 %v77
    %v98 = vunpack.c.l.b16 %v78
    %v99 = vunpack.c.l.b16 %v79
    %v100 = vunpack.c.l.b16 %v80
    %v101 = vunpack.c.l.b16 %v81
    %v102 = vunpack.c.l.b16 %v82
    %v103 = vpack.c.b16 %v98, %v97
    %v104 = vpack.c.b16 %v100, %v99
    %v105 = vpack.c.b16 %v102, %v101
    %vm108 = vcmask 343040
    %v110 = vsel %vm108, %v89, 0
    %v113 = vsel %vm108, %v90, 0
    %vm115 = vcmask 1044480
    %v117 = vsel %vm115, %v105, 0
    %119 = vmatpush.bf16.msra.mxu0 0
    %120 = vmatpush.bf16.msra.mxu0 0
    %121 = vmatpush.bf16.msra.mxu0 0
    %122 = vmatpush.bf16.msra.mxu0 0
    %123 = vmatpush.bf16.msra.mxu0 0
    %124 = vmatpush.bf16.msra.mxu0 %v117
    %125 = vmatpush.bf16.msra.mxu0 %v104
    %126 = vmatpush.bf16.msra.mxu0 %v103
    %127 = vmatmul.bf16.gmra.mxu0 %v110
    %v128 = vpop.f32.mrf.mxu0
    %v129 = vadd.f32 0.0, %v128
    %v130 = vpop.f32.mrf.mxu0
    %v131 = vadd.f32 0.0, %v130
    %132 = vmatmul.bf16.gmra.mxu0 %v113
    %v133 = vpop.f32.mrf.mxu0
    %v134 = vadd.f32 0.0, %v133
    %v135 = vpop.f32.mrf.mxu0
    %136 = vdwg.mxu0
    %v137 = vpack.c.bf16 %v131, %v129
    %v138 = vpack.c.bf16 %v134, %v134
    %v139 = vperm.slane %v66, 0
    %v144 = vunpack.c.l.b16 %v54
    %v145 = vunpack.c.l.b16 %v55
    %v146 = vunpack.c.l.b16 %v56
    %v147 = vunpack.c.l.b16 %v57
    %v148 = vpack.c.b16 %v145, %v144
    %v149 = vpack.c.b16 %v147, %v146
    %vm152 = vcmask 261120
    %v154 = vsel %vm152, %v137, 0
    %v157 = vsel %vm152, %v138, 0
    %159 = vmatpush.bf16.msra.mxu0 0
    %160 = vmatpush.bf16.msra.mxu0 0
    %161 = vmatpush.bf16.msra.mxu0 0
    %162 = vmatpush.bf16.msra.mxu0 0
    %163 = vmatpush.bf16.msra.mxu0 0
    %164 = vmatpush.bf16.msra.mxu0 0
    %165 = vmatpush.bf16.msra.mxu0 %v149
    %166 = vmatpush.bf16.msra.mxu0 %v148
    %167 = vmatmul.bf16.gmra.mxu0 %v154
    %v168 = vpop.f32.mrf.mxu0
    %v169 = vadd.f32 %v139, %v168
    %v170 = vpop.f32.mrf.mxu0
    %v171 = vadd.f32 %v139, %v170
    %172 = vmatmul.bf16.gmra.mxu0 %v157
    %v173 = vpop.f32.mrf.mxu0
    %v174 = vadd.f32 %v139, %v173
    %v175 = vpop.f32.mrf.mxu0
    %176 = vdwg.mxu0
    %180 = vrot.lane.b32.xlu0 %v169, 96
    %v181 = vpop.permute.xlu0 %180
    %182 = vrot.lane.b32.xlu0 %v171, 96
    %v183 = vpop.permute.xlu0 %182
    %184 = vrot.lane.b32.xlu0 %v174, 96
    %v185 = vpop.permute.xlu0 %184
    %190 = vst [vmem:[#allocation1] sm:$0xff] %v66
    %s191 = scalar_lea.vmem [#allocation1], 2
    %v192 = vld [vmem:[%s191] ss:$9 sm:$0xff]
    %s193 = scalar_lea.vmem [#allocation1], 3
    %v194 = vld [vmem:[%s193] ss:$9 sm:$0xff]
    %v197 = vrot.slane %v169, 1
    %v198 = vrot.slane %v169, 2
    %v199 = vrot.slane %v169, 3
    %v200 = vrot.slane %v169, 4
    %v201 = vrot.slane %v169, 5
    %v202 = vrot.slane %v169, 6
    %v203 = vrot.slane %v169, 7
    %v204 = vrot.slane %v171, 1
    %v205 = vrot.slane %v171, 2
    %v206 = vrot.slane %v171, 3
    %v207 = vrot.slane %v171, 4
    %v208 = vrot.slane %v171, 5
    %v209 = vrot.slane %v171, 6
    %v210 = vrot.slane %v171, 7
    %v211 = vrot.slane %v174, 1
    %v212 = vrot.slane %v174, 2
    %v213 = vrot.slane %v174, 3
    %v214 = vrot.slane %v174, 4
    %v215 = vrot.slane %v174, 5
    %v216 = vrot.slane %v174, 6
    %v217 = vrot.slane %v174, 7
    %v218 = vrot.slane %v181, 1
    %v219 = vrot.slane %v181, 2
    %v220 = vrot.slane %v181, 3
    %v221 = vrot.slane %v181, 4
    %v222 = vrot.slane %v181, 5
    %v223 = vrot.slane %v181, 6
    %v224 = vrot.slane %v181, 7
    %v225 = vrot.slane %v183, 1
    %v226 = vrot.slane %v183, 2
    %v227 = vrot.slane %v183, 3
    %v228 = vrot.slane %v183, 4
    %v229 = vrot.slane %v183, 5
    %v230 = vrot.slane %v183, 6
    %v231 = vrot.slane %v183, 7
    %v232 = vrot.slane %v185, 1
    %v233 = vrot.slane %v185, 2
    %v234 = vrot.slane %v185, 3
    %v235 = vrot.slane %v185, 4
    %v236 = vrot.slane %v185, 5
    %v237 = vrot.slane %v185, 6
    %v238 = vrot.slane %v185, 7
    %v239 = vperm.slane %v169, 0
    %v240 = vperm.slane %v197, 0
    %v241 = vperm.slane %v198, 0
    %v242 = vperm.slane %v199, 0
    %v243 = vperm.slane %v200, 0
    %v244 = vperm.slane %v201, 0
    %v245 = vperm.slane %v202, 0
    %v246 = vperm.slane %v203, 0
    %v247 = vperm.slane %v171, 0
    %v248 = vperm.slane %v204, 0
    %v249 = vperm.slane %v205, 0
    %v250 = vperm.slane %v206, 0
    %v251 = vperm.slane %v207, 0
    %v252 = vperm.slane %v208, 0
    %v253 = vperm.slane %v209, 0
    %v254 = vperm.slane %v210, 0
    %v255 = vperm.slane %v174, 0
    %v256 = vperm.slane %v211, 0
    %v257 = vperm.slane %v212, 0
    %v258 = vperm.slane %v213, 0
    %v259 = vperm.slane %v214, 0
    %v260 = vperm.slane %v215, 0
    %v261 = vperm.slane %v216, 0
    %v262 = vperm.slane %v217, 0
    %v263 = vperm.slane %v181, 0
    %v264 = vperm.slane %v218, 0
    %v265 = vperm.slane %v219, 0
    %v266 = vperm.slane %v220, 0
    %v267 = vperm.slane %v221, 0
    %v268 = vperm.slane %v222, 0
    %v269 = vperm.slane %v223, 0
    %v270 = vperm.slane %v224, 0
    %v271 = vperm.slane %v183, 0
    %v272 = vperm.slane %v225, 0
    %v273 = vperm.slane %v226, 0
    %v274 = vperm.slane %v227, 0
    %v275 = vperm.slane %v228, 0
    %v276 = vperm.slane %v229, 0
    %v277 = vperm.slane %v230, 0
    %v278 = vperm.slane %v231, 0
    %v279 = vperm.slane %v185, 0
    %v280 = vperm.slane %v232, 0
    %v281 = vperm.slane %v233, 0
    %v282 = vperm.slane %v234, 0
    %v283 = vperm.slane %v235, 0
    %v284 = vperm.slane %v236, 0
    %v285 = vperm.slane %v237, 0
    %v286 = vperm.slane %v238, 0
    %335 = vrot.lane.b32.xlu0 %v169, 64
    %v336 = vpop.permute.xlu0 %335
    %337 = vrot.lane.b32.xlu0 %v171, 64
    %v338 = vpop.permute.xlu0 %337
    %339 = vrot.lane.b32.xlu0 %v174, 64
    %v340 = vpop.permute.xlu0 %339
    %341 = vrot.lane.b32.xlu0 %v181, 64
    %v342 = vpop.permute.xlu0 %341
    %343 = vrot.lane.b32.xlu0 %v183, 64
    %v344 = vpop.permute.xlu0 %343
    %345 = vrot.lane.b32.xlu0 %v185, 64
    %v346 = vpop.permute.xlu0 %345
    %v353 = vadd.f32 %v239, %v336
    %v354 = vadd.f32 %v239, %v338
    %v355 = vadd.f32 %v239, %v340
    %v356 = vadd.f32 %v240, %v336
    %v357 = vadd.f32 %v240, %v338
    %v358 = vadd.f32 %v240, %v340
    %v359 = vadd.f32 %v241, %v336
    %v360 = vadd.f32 %v241, %v338
    %v361 = vadd.f32 %v241, %v340
    %v362 = vadd.f32 %v242, %v336
    %v363 = vadd.f32 %v242, %v338
    %v364 = vadd.f32 %v242, %v340
    %v365 = vadd.f32 %v243, %v336
    %v366 = vadd.f32 %v243, %v338
    %v367 = vadd.f32 %v243, %v340
    %v368 = vadd.f32 %v244, %v336
    %v369 = vadd.f32 %v244, %v338
    %v370 = vadd.f32 %v244, %v340
    %v371 = vadd.f32 %v245, %v336
    %v372 = vadd.f32 %v245, %v338
    %v373 = vadd.f32 %v245, %v340
    %v374 = vadd.f32 %v246, %v336
    %v375 = vadd.f32 %v246, %v338
    %v376 = vadd.f32 %v246, %v340
    %v377 = vadd.f32 %v247, %v336
    %v378 = vadd.f32 %v247, %v338
    %v379 = vadd.f32 %v247, %v340
    %v380 = vadd.f32 %v248, %v336
    %v381 = vadd.f32 %v248, %v338
    %v382 = vadd.f32 %v248, %v340
    %v383 = vadd.f32 %v249, %v336
    %v384 = vadd.f32 %v249, %v338
    %v385 = vadd.f32 %v249, %v340
    %v386 = vadd.f32 %v250, %v336
    %v387 = vadd.f32 %v250, %v338
    %v388 = vadd.f32 %v250, %v340
    %v389 = vadd.f32 %v251, %v336
    %v390 = vadd.f32 %v251, %v338
    %v391 = vadd.f32 %v251, %v340
    %v392 = vadd.f32 %v252, %v336
    %v393 = vadd.f32 %v252, %v338
    %v394 = vadd.f32 %v252, %v340
    %v395 = vadd.f32 %v253, %v336
    %v396 = vadd.f32 %v253, %v338
    %v397 = vadd.f32 %v253, %v340
    %v398 = vadd.f32 %v254, %v336
    %v399 = vadd.f32 %v254, %v338
    %v400 = vadd.f32 %v254, %v340
    %v401 = vadd.f32 %v255, %v336
    %v402 = vadd.f32 %v255, %v338
    %v403 = vadd.f32 %v255, %v340
    %v404 = vadd.f32 %v256, %v336
    %v405 = vadd.f32 %v256, %v338
    %v406 = vadd.f32 %v256, %v340
    %v407 = vadd.f32 %v257, %v336
    %v408 = vadd.f32 %v257, %v338
    %v409 = vadd.f32 %v257, %v340
    %v410 = vadd.f32 %v258, %v336
    %v411 = vadd.f32 %v258, %v338
    %v412 = vadd.f32 %v258, %v340
    %v413 = vadd.f32 %v259, %v336
    %v414 = vadd.f32 %v259, %v338
    %v415 = vadd.f32 %v259, %v340
    %v416 = vadd.f32 %v260, %v336
    %v417 = vadd.f32 %v260, %v338
    %v418 = vadd.f32 %v260, %v340
    %v419 = vadd.f32 %v261, %v336
    %v420 = vadd.f32 %v261, %v338
    %v421 = vadd.f32 %v261, %v340
    %v422 = vadd.f32 %v262, %v336
    %v423 = vadd.f32 %v262, %v338
    %v424 = vadd.f32 %v262, %v340
    %v425 = vadd.f32 %v263, %v342
    %v426 = vadd.f32 %v263, %v344
    %v427 = vadd.f32 %v263, %v346
    %v428 = vadd.f32 %v264, %v342
    %v429 = vadd.f32 %v264, %v344
    %v430 = vadd.f32 %v264, %v346
    %v431 = vadd.f32 %v265, %v342
    %v432 = vadd.f32 %v265, %v344
    %v433 = vadd.f32 %v265, %v346
    %v434 = vadd.f32 %v266, %v342
    %v435 = vadd.f32 %v266, %v344
    %v436 = vadd.f32 %v266, %v346
    %v437 = vadd.f32 %v267, %v342
    %v438 = vadd.f32 %v267, %v344
    %v439 = vadd.f32 %v267, %v346
    %v440 = vadd.f32 %v268, %v342
    %v441 = vadd.f32 %v268, %v344
    %v442 = vadd.f32 %v268, %v346
    %v443 = vadd.f32 %v269, %v342
    %v444 = vadd.f32 %v269, %v344
    %v445 = vadd.f32 %v269, %v346
    %v446 = vadd.f32 %v270, %v342
    %v447 = vadd.f32 %v270, %v344
    %v448 = vadd.f32 %v270, %v346
    %v449 = vadd.f32 %v271, %v342
    %v450 = vadd.f32 %v271, %v344
    %v451 = vadd.f32 %v271, %v346
    %v452 = vadd.f32 %v272, %v342
    %v453 = vadd.f32 %v272, %v344
    %v454 = vadd.f32 %v272, %v346
    %v455 = vadd.f32 %v273, %v342
    %v456 = vadd.f32 %v273, %v344
    %v457 = vadd.f32 %v273, %v346
    %v458 = vadd.f32 %v274, %v342
    %v459 = vadd.f32 %v274, %v344
    %v460 = vadd.f32 %v274, %v346
    %v461 = vadd.f32 %v275, %v342
    %v462 = vadd.f32 %v275, %v344
    %v463 = vadd.f32 %v275, %v346
    %v464 = vadd.f32 %v276, %v342
    %v465 = vadd.f32 %v276, %v344
    %v466 = vadd.f32 %v276, %v346
    %v467 = vadd.f32 %v277, %v342
    %v468 = vadd.f32 %v277, %v344
    %v469 = vadd.f32 %v277, %v346
    %v470 = vadd.f32 %v278, %v342
    %v471 = vadd.f32 %v278, %v344
    %v472 = vadd.f32 %v278, %v346
    %v473 = vadd.f32 %v279, %v342
    %v474 = vadd.f32 %v279, %v344
    %v475 = vadd.f32 %v279, %v346
    %v476 = vadd.f32 %v280, %v342
    %v477 = vadd.f32 %v280, %v344
    %v478 = vadd.f32 %v280, %v346
    %v479 = vadd.f32 %v281, %v342
    %v480 = vadd.f32 %v281, %v344
    %v481 = vadd.f32 %v281, %v346
    %v482 = vadd.f32 %v282, %v342
    %v483 = vadd.f32 %v282, %v344
    %v484 = vadd.f32 %v282, %v346
    %v485 = vadd.f32 %v283, %v342
    %v486 = vadd.f32 %v283, %v344
    %v487 = vadd.f32 %v283, %v346
    %v488 = vadd.f32 %v284, %v342
    %v489 = vadd.f32 %v284, %v344
    %v490 = vadd.f32 %v284, %v346
    %v491 = vadd.f32 %v285, %v342
    %v492 = vadd.f32 %v285, %v344
    %v493 = vadd.f32 %v285, %v346
    %v494 = vadd.f32 %v286, %v342
    %v495 = vadd.f32 %v286, %v344
    %v496 = vadd.f32 %v286, %v346
    %v497 = vand.u32 2147483647, %v353
    %v498 = vand.u32 2147483647, %v354
    %v499 = vand.u32 2147483647, %v355
    %v500 = vand.u32 2147483647, %v356
    %v501 = vand.u32 2147483647, %v357
    %v502 = vand.u32 2147483647, %v358
    %v503 = vand.u32 2147483647, %v359
    %v504 = vand.u32 2147483647, %v360
    %v505 = vand.u32 2147483647, %v361
    %v506 = vand.u32 2147483647, %v362
    %v507 = vand.u32 2147483647, %v363
    %v508 = vand.u32 2147483647, %v364
    %v509 = vand.u32 2147483647, %v365
    %v510 = vand.u32 2147483647, %v366
    %v511 = vand.u32 2147483647, %v367
    %v512 = vand.u32 2147483647, %v368
    %v513 = vand.u32 2147483647, %v369
    %v514 = vand.u32 2147483647, %v370
    %v515 = vand.u32 2147483647, %v371
    %v516 = vand.u32 2147483647, %v372
    %v517 = vand.u32 2147483647, %v373
    %v518 = vand.u32 2147483647, %v374
    %v519 = vand.u32 2147483647, %v375
    %v520 = vand.u32 2147483647, %v376
    %v521 = vand.u32 2147483647, %v377
    %v522 = vand.u32 2147483647, %v378
    %v523 = vand.u32 2147483647, %v379
    %v524 = vand.u32 2147483647, %v380
    %v525 = vand.u32 2147483647, %v381
    %v526 = vand.u32 2147483647, %v382
    %v527 = vand.u32 2147483647, %v383
    %v528 = vand.u32 2147483647, %v384
    %v529 = vand.u32 2147483647, %v385
    %v530 = vand.u32 2147483647, %v386
    %v531 = vand.u32 2147483647, %v387
    %v532 = vand.u32 2147483647, %v388
    %v533 = vand.u32 2147483647, %v389
    %v534 = vand.u32 2147483647, %v390
    %v535 = vand.u32 2147483647, %v391
    %v536 = vand.u32 2147483647, %v392
    %v537 = vand.u32 2147483647, %v393
    %v538 = vand.u32 2147483647, %v394
    %v539 = vand.u32 2147483647, %v395
    %v540 = vand.u32 2147483647, %v396
    %v541 = vand.u32 2147483647, %v397
    %v542 = vand.u32 2147483647, %v398
    %v543 = vand.u32 2147483647, %v399
    %v544 = vand.u32 2147483647, %v400
    %v545 = vand.u32 2147483647, %v401
    %v546 = vand.u32 2147483647, %v402
    %v547 = vand.u32 2147483647, %v403
    %v548 = vand.u32 2147483647, %v404
    %v549 = vand.u32 2147483647, %v405
    %v550 = vand.u32 2147483647, %v406
    %v551 = vand.u32 2147483647, %v407
    %v552 = vand.u32 2147483647, %v408
    %v553 = vand.u32 2147483647, %v409
    %v554 = vand.u32 2147483647, %v410
    %v555 = vand.u32 2147483647, %v411
    %v556 = vand.u32 2147483647, %v412
    %v557 = vand.u32 2147483647, %v413
    %v558 = vand.u32 2147483647, %v414
    %v559 = vand.u32 2147483647, %v415
    %v560 = vand.u32 2147483647, %v416
    %v561 = vand.u32 2147483647, %v417
    %v562 = vand.u32 2147483647, %v418
    %v563 = vand.u32 2147483647, %v419
    %v564 = vand.u32 2147483647, %v420
    %v565 = vand.u32 2147483647, %v421
    %v566 = vand.u32 2147483647, %v422
    %v567 = vand.u32 2147483647, %v423
    %v568 = vand.u32 2147483647, %v424
    %v569 = vand.u32 2147483647, %v425
    %v570 = vand.u32 2147483647, %v426
    %v571 = vand.u32 2147483647, %v427
    %v572 = vand.u32 2147483647, %v428
    %v573 = vand.u32 2147483647, %v429
    %v574 = vand.u32 2147483647, %v430
    %v575 = vand.u32 2147483647, %v431
    %v576 = vand.u32 2147483647, %v432
    %v577 = vand.u32 2147483647, %v433
    %v578 = vand.u32 2147483647, %v434
    %v579 = vand.u32 2147483647, %v435
    %v580 = vand.u32 2147483647, %v436
    %v581 = vand.u32 2147483647, %v437
    %v582 = vand.u32 2147483647, %v438
    %v583 = vand.u32 2147483647, %v439
    %v584 = vand.u32 2147483647, %v440
    %v585 = vand.u32 2147483647, %v441
    %v586 = vand.u32 2147483647, %v442
    %v587 = vand.u32 2147483647, %v443
    %v588 = vand.u32 2147483647, %v444
    %v589 = vand.u32 2147483647, %v445
    %v590 = vand.u32 2147483647, %v446
    %v591 = vand.u32 2147483647, %v447
    %v592 = vand.u32 2147483647, %v448
    %v593 = vand.u32 2147483647, %v449
    %v594 = vand.u32 2147483647, %v450
    %v595 = vand.u32 2147483647, %v451
    %v596 = vand.u32 2147483647, %v452
    %v597 = vand.u32 2147483647, %v453
    %v598 = vand.u32 2147483647, %v454
    %v599 = vand.u32 2147483647, %v455
    %v600 = vand.u32 2147483647, %v456
    %v601 = vand.u32 2147483647, %v457
    %v602 = vand.u32 2147483647, %v458
    %v603 = vand.u32 2147483647, %v459
    %v604 = vand.u32 2147483647, %v460
    %v605 = vand.u32 2147483647, %v461
    %v606 = vand.u32 2147483647, %v462
    %v607 = vand.u32 2147483647, %v463
    %v608 = vand.u32 2147483647, %v464
    %v609 = vand.u32 2147483647, %v465
    %v610 = vand.u32 2147483647, %v466
    %v611 = vand.u32 2147483647, %v467
    %v612 = vand.u32 2147483647, %v468
    %v613 = vand.u32 2147483647, %v469
    %v614 = vand.u32 2147483647, %v470
    %v615 = vand.u32 2147483647, %v471
    %v616 = vand.u32 2147483647, %v472
    %v617 = vand.u32 2147483647, %v473
    %v618 = vand.u32 2147483647, %v474
    %v619 = vand.u32 2147483647, %v475
    %v620 = vand.u32 2147483647, %v476
    %v621 = vand.u32 2147483647, %v477
    %v622 = vand.u32 2147483647, %v478
    %v623 = vand.u32 2147483647, %v479
    %v624 = vand.u32 2147483647, %v480
    %v625 = vand.u32 2147483647, %v481
    %v626 = vand.u32 2147483647, %v482
    %v627 = vand.u32 2147483647, %v483
    %v628 = vand.u32 2147483647, %v484
    %v629 = vand.u32 2147483647, %v485
    %v630 = vand.u32 2147483647, %v486
    %v631 = vand.u32 2147483647, %v487
    %v632 = vand.u32 2147483647, %v488
    %v633 = vand.u32 2147483647, %v489
    %v634 = vand.u32 2147483647, %v490
    %v635 = vand.u32 2147483647, %v491
    %v636 = vand.u32 2147483647, %v492
    %v637 = vand.u32 2147483647, %v493
    %v638 = vand.u32 2147483647, %v494
    %v639 = vand.u32 2147483647, %v495
    %v640 = vand.u32 2147483647, %v496
    %v641 = vmul.f32 %v192, 0.4
    %v642 = vmul.f32 %v194, 0.4
    %v645 = vperm.slane %v641, 0
    %v646 = vperm.slane %v642, 0
    %647 = vrot.lane.b32.xlu0 %v645, 64
    %v648 = vpop.permute.xlu0 %647
    %649 = vrot.lane.b32.xlu0 %v646, 64
    %v650 = vpop.permute.xlu0 %649
    %v653 = vmul.f32 %v497, %v648
    %v654 = vmul.f32 %v498, %v648
    %v655 = vmul.f32 %v499, %v648
    %v656 = vmul.f32 %v500, %v648
    %v657 = vmul.f32 %v501, %v648
    %v658 = vmul.f32 %v502, %v648
    %v659 = vmul.f32 %v503, %v648
    %v660 = vmul.f32 %v504, %v648
    %v661 = vmul.f32 %v505, %v648
    %v662 = vmul.f32 %v506, %v648
    %v663 = vmul.f32 %v507, %v648
    %v664 = vmul.f32 %v508, %v648
    %v665 = vmul.f32 %v509, %v648
    %v666 = vmul.f32 %v510, %v648
    %v667 = vmul.f32 %v511, %v648
    %v668 = vmul.f32 %v512, %v648
    %v669 = vmul.f32 %v513, %v648
    %v670 = vmul.f32 %v514, %v648
    %v671 = vmul.f32 %v515, %v648
    %v672 = vmul.f32 %v516, %v648
    %v673 = vmul.f32 %v517, %v648
    %v674 = vmul.f32 %v518, %v648
    %v675 = vmul.f32 %v519, %v648
    %v676 = vmul.f32 %v520, %v648
    %v677 = vmul.f32 %v521, %v648
    %v678 = vmul.f32 %v522, %v648
    %v679 = vmul.f32 %v523, %v648
    %v680 = vmul.f32 %v524, %v648
    %v681 = vmul.f32 %v525, %v648
    %v682 = vmul.f32 %v526, %v648
    %v683 = vmul.f32 %v527, %v648
    %v684 = vmul.f32 %v528, %v648
    %v685 = vmul.f32 %v529, %v648
    %v686 = vmul.f32 %v530, %v648
    %v687 = vmul.f32 %v531, %v648
    %v688 = vmul.f32 %v532, %v648
    %v689 = vmul.f32 %v533, %v648
    %v690 = vmul.f32 %v534, %v648
    %v691 = vmul.f32 %v535, %v648
    %v692 = vmul.f32 %v536, %v648
    %v693 = vmul.f32 %v537, %v648
    %v694 = vmul.f32 %v538, %v648
    %v695 = vmul.f32 %v539, %v648
    %v696 = vmul.f32 %v540, %v648
    %v697 = vmul.f32 %v541, %v648
    %v698 = vmul.f32 %v542, %v648
    %v699 = vmul.f32 %v543, %v648
    %v700 = vmul.f32 %v544, %v648
    %v701 = vmul.f32 %v545, %v648
    %v702 = vmul.f32 %v546, %v648
    %v703 = vmul.f32 %v547, %v648
    %v704 = vmul.f32 %v548, %v648
    %v705 = vmul.f32 %v549, %v648
    %v706 = vmul.f32 %v550, %v648
    %v707 = vmul.f32 %v551, %v648
    %v708 = vmul.f32 %v552, %v648
    %v709 = vmul.f32 %v553, %v648
    %v710 = vmul.f32 %v554, %v648
    %v711 = vmul.f32 %v555, %v648
    %v712 = vmul.f32 %v556, %v648
    %v713 = vmul.f32 %v557, %v648
    %v714 = vmul.f32 %v558, %v648
    %v715 = vmul.f32 %v559, %v648
    %v716 = vmul.f32 %v560, %v648
    %v717 = vmul.f32 %v561, %v648
    %v718 = vmul.f32 %v562, %v648
    %v719 = vmul.f32 %v563, %v648
    %v720 = vmul.f32 %v564, %v648
    %v721 = vmul.f32 %v565, %v648
    %v722 = vmul.f32 %v566, %v648
    %v723 = vmul.f32 %v567, %v648
    %v724 = vmul.f32 %v568, %v648
    %v725 = vmul.f32 %v569, %v650
    %v726 = vmul.f32 %v570, %v650
    %v727 = vmul.f32 %v571, %v650
    %v728 = vmul.f32 %v572, %v650
    %v729 = vmul.f32 %v573, %v650
    %v730 = vmul.f32 %v574, %v650
    %v731 = vmul.f32 %v575, %v650
    %v732 = vmul.f32 %v576, %v650
    %v733 = vmul.f32 %v577, %v650
    %v734 = vmul.f32 %v578, %v650
    %v735 = vmul.f32 %v579, %v650
    %v736 = vmul.f32 %v580, %v650
    %v737 = vmul.f32 %v581, %v650
    %v738 = vmul.f32 %v582, %v650
    %v739 = vmul.f32 %v583, %v650
    %v740 = vmul.f32 %v584, %v650
    %v741 = vmul.f32 %v585, %v650
    %v742 = vmul.f32 %v586, %v650
    %v743 = vmul.f32 %v587, %v650
    %v744 = vmul.f32 %v588, %v650
    %v745 = vmul.f32 %v589, %v650
    %v746 = vmul.f32 %v590, %v650
    %v747 = vmul.f32 %v591, %v650
    %v748 = vmul.f32 %v592, %v650
    %v749 = vmul.f32 %v593, %v650
    %v750 = vmul.f32 %v594, %v650
    %v751 = vmul.f32 %v595, %v650
    %v752 = vmul.f32 %v596, %v650
    %v753 = vmul.f32 %v597, %v650
    %v754 = vmul.f32 %v598, %v650
    %v755 = vmul.f32 %v599, %v650
    %v756 = vmul.f32 %v600, %v650
    %v757 = vmul.f32 %v601, %v650
    %v758 = vmul.f32 %v602, %v650
    %v759 = vmul.f32 %v603, %v650
    %v760 = vmul.f32 %v604, %v650
    %v761 = vmul.f32 %v605, %v650
    %v762 = vmul.f32 %v606, %v650
    %v763 = vmul.f32 %v607, %v650
    %v764 = vmul.f32 %v608, %v650
    %v765 = vmul.f32 %v609, %v650
    %v766 = vmul.f32 %v610, %v650
    %v767 = vmul.f32 %v611, %v650
    %v768 = vmul.f32 %v612, %v650
    %v769 = vmul.f32 %v613, %v650
    %v770 = vmul.f32 %v614, %v650
    %v771 = vmul.f32 %v615, %v650
    %v772 = vmul.f32 %v616, %v650
    %v773 = vmul.f32 %v617, %v650
    %v774 = vmul.f32 %v618, %v650
    %v775 = vmul.f32 %v619, %v650
    %v776 = vmul.f32 %v620, %v650
    %v777 = vmul.f32 %v621, %v650
    %v778 = vmul.f32 %v622, %v650
    %v779 = vmul.f32 %v623, %v650
    %v780 = vmul.f32 %v624, %v650
    %v781 = vmul.f32 %v625, %v650
    %v782 = vmul.f32 %v626, %v650
    %v783 = vmul.f32 %v627, %v650
    %v784 = vmul.f32 %v628, %v650
    %v785 = vmul.f32 %v629, %v650
    %v786 = vmul.f32 %v630, %v650
    %v787 = vmul.f32 %v631, %v650
    %v788 = vmul.f32 %v632, %v650
    %v789 = vmul.f32 %v633, %v650
    %v790 = vmul.f32 %v634, %v650
    %v791 = vmul.f32 %v635, %v650
    %v792 = vmul.f32 %v636, %v650
    %v793 = vmul.f32 %v637, %v650
    %v794 = vmul.f32 %v638, %v650
    %v795 = vmul.f32 %v639, %v650
    %v796 = vmul.f32 %v640, %v650
    %v797 = vmul.f32 %v192, 0.6
    %v798 = vmul.f32 %v194, 0.6
    %v801 = vperm.slane %v797, 0
    %v802 = vperm.slane %v798, 0
    %v805 = vmul.f32 %v801, %v169
    %v806 = vmul.f32 %v801, %v171
    %v807 = vmul.f32 %v801, %v174
    %v808 = vmul.f32 %v802, %v181
    %v809 = vmul.f32 %v802, %v183
    %v810 = vmul.f32 %v802, %v185
    %817 = vrot.lane.b32.xlu0 %v805, 64
    %v818 = vpop.permute.xlu0 %817
    %819 = vrot.lane.b32.xlu0 %v806, 64
    %v820 = vpop.permute.xlu0 %819
    %821 = vrot.lane.b32.xlu0 %v807, 64
    %v822 = vpop.permute.xlu0 %821
    %823 = vrot.lane.b32.xlu0 %v808, 64
    %v824 = vpop.permute.xlu0 %823
    %825 = vrot.lane.b32.xlu0 %v809, 64
    %v826 = vpop.permute.xlu0 %825
    %827 = vrot.lane.b32.xlu0 %v810, 64
    %v828 = vpop.permute.xlu0 %827
    %v835 = vadd.f32 %v653, %v818
    %v836 = vadd.f32 %v654, %v820
    %v837 = vadd.f32 %v655, %v822
    %v838 = vadd.f32 %v656, %v818
    %v839 = vadd.f32 %v657, %v820
    %v840 = vadd.f32 %v658, %v822
    %v841 = vadd.f32 %v659, %v818
    %v842 = vadd.f32 %v660, %v820
    %v843 = vadd.f32 %v661, %v822
    %v844 = vadd.f32 %v662, %v818
    %v845 = vadd.f32 %v663, %v820
    %v846 = vadd.f32 %v664, %v822
    %v847 = vadd.f32 %v665, %v818
    %v848 = vadd.f32 %v666, %v820
    %v849 = vadd.f32 %v667, %v822
    %v850 = vadd.f32 %v668, %v818
    %v851 = vadd.f32 %v669, %v820
    %v852 = vadd.f32 %v670, %v822
    %v853 = vadd.f32 %v671, %v818
    %v854 = vadd.f32 %v672, %v820
    %v855 = vadd.f32 %v673, %v822
    %v856 = vadd.f32 %v674, %v818
    %v857 = vadd.f32 %v675, %v820
    %v858 = vadd.f32 %v676, %v822
    %v859 = vadd.f32 %v677, %v818
    %v860 = vadd.f32 %v678, %v820
    %v861 = vadd.f32 %v679, %v822
    %v862 = vadd.f32 %v680, %v818
    %v863 = vadd.f32 %v681, %v820
    %v864 = vadd.f32 %v682, %v822
    %v865 = vadd.f32 %v683, %v818
    %v866 = vadd.f32 %v684, %v820
    %v867 = vadd.f32 %v685, %v822
    %v868 = vadd.f32 %v686, %v818
    %v869 = vadd.f32 %v687, %v820
    %v870 = vadd.f32 %v688, %v822
    %v871 = vadd.f32 %v689, %v818
    %v872 = vadd.f32 %v690, %v820
    %v873 = vadd.f32 %v691, %v822
    %v874 = vadd.f32 %v692, %v818
    %v875 = vadd.f32 %v693, %v820
    %v876 = vadd.f32 %v694, %v822
    %v877 = vadd.f32 %v695, %v818
    %v878 = vadd.f32 %v696, %v820
    %v879 = vadd.f32 %v697, %v822
    %v880 = vadd.f32 %v698, %v818
    %v881 = vadd.f32 %v699, %v820
    %v882 = vadd.f32 %v700, %v822
    %v883 = vadd.f32 %v701, %v818
    %v884 = vadd.f32 %v702, %v820
    %v885 = vadd.f32 %v703, %v822
    %v886 = vadd.f32 %v704, %v818
    %v887 = vadd.f32 %v705, %v820
    %v888 = vadd.f32 %v706, %v822
    %v889 = vadd.f32 %v707, %v818
    %v890 = vadd.f32 %v708, %v820
    %v891 = vadd.f32 %v709, %v822
    %v892 = vadd.f32 %v710, %v818
    %v893 = vadd.f32 %v711, %v820
    %v894 = vadd.f32 %v712, %v822
    %v895 = vadd.f32 %v713, %v818
    %v896 = vadd.f32 %v714, %v820
    %v897 = vadd.f32 %v715, %v822
    %v898 = vadd.f32 %v716, %v818
    %v899 = vadd.f32 %v717, %v820
    %v900 = vadd.f32 %v718, %v822
    %v901 = vadd.f32 %v719, %v818
    %v902 = vadd.f32 %v720, %v820
    %v903 = vadd.f32 %v721, %v822
    %v904 = vadd.f32 %v722, %v818
    %v905 = vadd.f32 %v723, %v820
    %v906 = vadd.f32 %v724, %v822
    %v907 = vadd.f32 %v725, %v824
    %v908 = vadd.f32 %v726, %v826
    %v909 = vadd.f32 %v727, %v828
    %v910 = vadd.f32 %v728, %v824
    %v911 = vadd.f32 %v729, %v826
    %v912 = vadd.f32 %v730, %v828
    %v913 = vadd.f32 %v731, %v824
    %v914 = vadd.f32 %v732, %v826
    %v915 = vadd.f32 %v733, %v828
    %v916 = vadd.f32 %v734, %v824
    %v917 = vadd.f32 %v735, %v826
    %v918 = vadd.f32 %v736, %v828
    %v919 = vadd.f32 %v737, %v824
    %v920 = vadd.f32 %v738, %v826
    %v921 = vadd.f32 %v739, %v828
    %v922 = vadd.f32 %v740, %v824
    %v923 = vadd.f32 %v741, %v826
    %v924 = vadd.f32 %v742, %v828
    %v925 = vadd.f32 %v743, %v824
    %v926 = vadd.f32 %v744, %v826
    %v927 = vadd.f32 %v745, %v828
    %v928 = vadd.f32 %v746, %v824
    %v929 = vadd.f32 %v747, %v826
    %v930 = vadd.f32 %v748, %v828
    %v931 = vadd.f32 %v749, %v824
    %v932 = vadd.f32 %v750, %v826
    %v933 = vadd.f32 %v751, %v828
    %v934 = vadd.f32 %v752, %v824
    %v935 = vadd.f32 %v753, %v826
    %v936 = vadd.f32 %v754, %v828
    %v937 = vadd.f32 %v755, %v824
    %v938 = vadd.f32 %v756, %v826
    %v939 = vadd.f32 %v757, %v828
    %v940 = vadd.f32 %v758, %v824
    %v941 = vadd.f32 %v759, %v826
    %v942 = vadd.f32 %v760, %v828
    %v943 = vadd.f32 %v761, %v824
    %v944 = vadd.f32 %v762, %v826
    %v945 = vadd.f32 %v763, %v828
    %v946 = vadd.f32 %v764, %v824
    %v947 = vadd.f32 %v765, %v826
    %v948 = vadd.f32 %v766, %v828
    %v949 = vadd.f32 %v767, %v824
    %v950 = vadd.f32 %v768, %v826
    %v951 = vadd.f32 %v769, %v828
    %v952 = vadd.f32 %v770, %v824
    %v953 = vadd.f32 %v771, %v826
    %v954 = vadd.f32 %v772, %v828
    %v955 = vadd.f32 %v773, %v824
    %v956 = vadd.f32 %v774, %v826
    %v957 = vadd.f32 %v775, %v828
    %v958 = vadd.f32 %v776, %v824
    %v959 = vadd.f32 %v777, %v826
    %v960 = vadd.f32 %v778, %v828
    %v961 = vadd.f32 %v779, %v824
    %v962 = vadd.f32 %v780, %v826
    %v963 = vadd.f32 %v781, %v828
    %v964 = vadd.f32 %v782, %v824
    %v965 = vadd.f32 %v783, %v826
    %v966 = vadd.f32 %v784, %v828
    %v967 = vadd.f32 %v785, %v824
    %v968 = vadd.f32 %v786, %v826
    %v969 = vadd.f32 %v787, %v828
    %v970 = vadd.f32 %v788, %v824
    %v971 = vadd.f32 %v789, %v826
    %v972 = vadd.f32 %v790, %v828
    %v973 = vadd.f32 %v791, %v824
    %v974 = vadd.f32 %v792, %v826
    %v975 = vadd.f32 %v793, %v828
    %v976 = vadd.f32 %v794, %v824
    %v977 = vadd.f32 %v795, %v826
    %v978 = vadd.f32 %v796, %v828
    %1123 = vrot.lane.b32.xlu0 %v835, 64
    %v1124 = vpop.permute.xlu0 %1123
    %1125 = vrot.lane.b32.xlu0 %v836, 64
    %v1126 = vpop.permute.xlu0 %1125
    %1127 = vrot.lane.b32.xlu0 %v837, 64
    %v1128 = vpop.permute.xlu0 %1127
    %1129 = vrot.lane.b32.xlu0 %v838, 64
    %v1130 = vpop.permute.xlu0 %1129
    %1131 = vrot.lane.b32.xlu0 %v839, 64
    %v1132 = vpop.permute.xlu0 %1131
    %1133 = vrot.lane.b32.xlu0 %v840, 64
    %v1134 = vpop.permute.xlu0 %1133
    %1135 = vrot.lane.b32.xlu0 %v841, 64
    %v1136 = vpop.permute.xlu0 %1135
    %1137 = vrot.lane.b32.xlu0 %v842, 64
    %v1138 = vpop.permute.xlu0 %1137
    %1139 = vrot.lane.b32.xlu0 %v843, 64
    %v1140 = vpop.permute.xlu0 %1139
    %1141 = vrot.lane.b32.xlu0 %v844, 64
    %v1142 = vpop.permute.xlu0 %1141
    %1143 = vrot.lane.b32.xlu0 %v845, 64
    %v1144 = vpop.permute.xlu0 %1143
    %1145 = vrot.lane.b32.xlu0 %v846, 64
    %v1146 = vpop.permute.xlu0 %1145
    %1147 = vrot.lane.b32.xlu0 %v847, 64
    %v1148 = vpop.permute.xlu0 %1147
    %1149 = vrot.lane.b32.xlu0 %v848, 64
    %v1150 = vpop.permute.xlu0 %1149
    %1151 = vrot.lane.b32.xlu0 %v849, 64
    %v1152 = vpop.permute.xlu0 %1151
    %1153 = vrot.lane.b32.xlu0 %v850, 64
    %v1154 = vpop.permute.xlu0 %1153
    %1155 = vrot.lane.b32.xlu0 %v851, 64
    %v1156 = vpop.permute.xlu0 %1155
    %1157 = vrot.lane.b32.xlu0 %v852, 64
    %v1158 = vpop.permute.xlu0 %1157
    %1159 = vrot.lane.b32.xlu0 %v853, 64
    %v1160 = vpop.permute.xlu0 %1159
    %1161 = vrot.lane.b32.xlu0 %v854, 64
    %v1162 = vpop.permute.xlu0 %1161
    %1163 = vrot.lane.b32.xlu0 %v855, 64
    %v1164 = vpop.permute.xlu0 %1163
    %1165 = vrot.lane.b32.xlu0 %v856, 64
    %v1166 = vpop.permute.xlu0 %1165
    %1167 = vrot.lane.b32.xlu0 %v857, 64
    %v1168 = vpop.permute.xlu0 %1167
    %1169 = vrot.lane.b32.xlu0 %v858, 64
    %v1170 = vpop.permute.xlu0 %1169
    %1171 = vrot.lane.b32.xlu0 %v859, 64
    %v1172 = vpop.permute.xlu0 %1171
    %1173 = vrot.lane.b32.xlu0 %v860, 64
    %v1174 = vpop.permute.xlu0 %1173
    %1175 = vrot.lane.b32.xlu0 %v861, 64
    %v1176 = vpop.permute.xlu0 %1175
    %1177 = vrot.lane.b32.xlu0 %v862, 64
    %v1178 = vpop.permute.xlu0 %1177
    %1179 = vrot.lane.b32.xlu0 %v863, 64
    %v1180 = vpop.permute.xlu0 %1179
    %1181 = vrot.lane.b32.xlu0 %v864, 64
    %v1182 = vpop.permute.xlu0 %1181
    %1183 = vrot.lane.b32.xlu0 %v865, 64
    %v1184 = vpop.permute.xlu0 %1183
    %1185 = vrot.lane.b32.xlu0 %v866, 64
    %v1186 = vpop.permute.xlu0 %1185
    %1187 = vrot.lane.b32.xlu0 %v867, 64
    %v1188 = vpop.permute.xlu0 %1187
    %1189 = vrot.lane.b32.xlu0 %v868, 64
    %v1190 = vpop.permute.xlu0 %1189
    %1191 = vrot.lane.b32.xlu0 %v869, 64
    %v1192 = vpop.permute.xlu0 %1191
    %1193 = vrot.lane.b32.xlu0 %v870, 64
    %v1194 = vpop.permute.xlu0 %1193
    %1195 = vrot.lane.b32.xlu0 %v871, 64
    %v1196 = vpop.permute.xlu0 %1195
    %1197 = vrot.lane.b32.xlu0 %v872, 64
    %v1198 = vpop.permute.xlu0 %1197
    %1199 = vrot.lane.b32.xlu0 %v873, 64
    %v1200 = vpop.permute.xlu0 %1199
    %1201 = vrot.lane.b32.xlu0 %v874, 64
    %v1202 = vpop.permute.xlu0 %1201
    %1203 = vrot.lane.b32.xlu0 %v875, 64
    %v1204 = vpop.permute.xlu0 %1203
    %1205 = vrot.lane.b32.xlu0 %v876, 64
    %v1206 = vpop.permute.xlu0 %1205
    %1207 = vrot.lane.b32.xlu0 %v877, 64
    %v1208 = vpop.permute.xlu0 %1207
    %1209 = vrot.lane.b32.xlu0 %v878, 64
    %v1210 = vpop.permute.xlu0 %1209
    %1211 = vrot.lane.b32.xlu0 %v879, 64
    %v1212 = vpop.permute.xlu0 %1211
    %1213 = vrot.lane.b32.xlu0 %v880, 64
    %v1214 = vpop.permute.xlu0 %1213
    %1215 = vrot.lane.b32.xlu0 %v881, 64
    %v1216 = vpop.permute.xlu0 %1215
    %1217 = vrot.lane.b32.xlu0 %v882, 64
    %v1218 = vpop.permute.xlu0 %1217
    %1219 = vrot.lane.b32.xlu0 %v883, 64
    %v1220 = vpop.permute.xlu0 %1219
    %1221 = vrot.lane.b32.xlu0 %v884, 64
    %v1222 = vpop.permute.xlu0 %1221
    %1223 = vrot.lane.b32.xlu0 %v885, 64
    %v1224 = vpop.permute.xlu0 %1223
    %1225 = vrot.lane.b32.xlu0 %v886, 64
    %v1226 = vpop.permute.xlu0 %1225
    %1227 = vrot.lane.b32.xlu0 %v887, 64
    %v1228 = vpop.permute.xlu0 %1227
    %1229 = vrot.lane.b32.xlu0 %v888, 64
    %v1230 = vpop.permute.xlu0 %1229
    %1231 = vrot.lane.b32.xlu0 %v889, 64
    %v1232 = vpop.permute.xlu0 %1231
    %1233 = vrot.lane.b32.xlu0 %v890, 64
    %v1234 = vpop.permute.xlu0 %1233
    %1235 = vrot.lane.b32.xlu0 %v891, 64
    %v1236 = vpop.permute.xlu0 %1235
    %1237 = vrot.lane.b32.xlu0 %v892, 64
    %v1238 = vpop.permute.xlu0 %1237
    %1239 = vrot.lane.b32.xlu0 %v893, 64
    %v1240 = vpop.permute.xlu0 %1239
    %1241 = vrot.lane.b32.xlu0 %v894, 64
    %v1242 = vpop.permute.xlu0 %1241
    %1243 = vrot.lane.b32.xlu0 %v895, 64
    %v1244 = vpop.permute.xlu0 %1243
    %1245 = vrot.lane.b32.xlu0 %v896, 64
    %v1246 = vpop.permute.xlu0 %1245
    %1247 = vrot.lane.b32.xlu0 %v897, 64
    %v1248 = vpop.permute.xlu0 %1247
    %1249 = vrot.lane.b32.xlu0 %v898, 64
    %v1250 = vpop.permute.xlu0 %1249
    %1251 = vrot.lane.b32.xlu0 %v899, 64
    %v1252 = vpop.permute.xlu0 %1251
    %1253 = vrot.lane.b32.xlu0 %v900, 64
    %v1254 = vpop.permute.xlu0 %1253
    %1255 = vrot.lane.b32.xlu0 %v901, 64
    %v1256 = vpop.permute.xlu0 %1255
    %1257 = vrot.lane.b32.xlu0 %v902, 64
    %v1258 = vpop.permute.xlu0 %1257
    %1259 = vrot.lane.b32.xlu0 %v903, 64
    %v1260 = vpop.permute.xlu0 %1259
    %1261 = vrot.lane.b32.xlu0 %v904, 64
    %v1262 = vpop.permute.xlu0 %1261
    %1263 = vrot.lane.b32.xlu0 %v905, 64
    %v1264 = vpop.permute.xlu0 %1263
    %1265 = vrot.lane.b32.xlu0 %v906, 64
    %v1266 = vpop.permute.xlu0 %1265
    %1267 = vrot.lane.b32.xlu0 %v907, 64
    %v1268 = vpop.permute.xlu0 %1267
    %1269 = vrot.lane.b32.xlu0 %v908, 64
    %v1270 = vpop.permute.xlu0 %1269
    %1271 = vrot.lane.b32.xlu0 %v909, 64
    %v1272 = vpop.permute.xlu0 %1271
    %1273 = vrot.lane.b32.xlu0 %v910, 64
    %v1274 = vpop.permute.xlu0 %1273
    %1275 = vrot.lane.b32.xlu0 %v911, 64
    %v1276 = vpop.permute.xlu0 %1275
    %1277 = vrot.lane.b32.xlu0 %v912, 64
    %v1278 = vpop.permute.xlu0 %1277
    %1279 = vrot.lane.b32.xlu0 %v913, 64
    %v1280 = vpop.permute.xlu0 %1279
    %1281 = vrot.lane.b32.xlu0 %v914, 64
    %v1282 = vpop.permute.xlu0 %1281
    %1283 = vrot.lane.b32.xlu0 %v915, 64
    %v1284 = vpop.permute.xlu0 %1283
    %1285 = vrot.lane.b32.xlu0 %v916, 64
    %v1286 = vpop.permute.xlu0 %1285
    %1287 = vrot.lane.b32.xlu0 %v917, 64
    %v1288 = vpop.permute.xlu0 %1287
    %1289 = vrot.lane.b32.xlu0 %v918, 64
    %v1290 = vpop.permute.xlu0 %1289
    %1291 = vrot.lane.b32.xlu0 %v919, 64
    %v1292 = vpop.permute.xlu0 %1291
    %1293 = vrot.lane.b32.xlu0 %v920, 64
    %v1294 = vpop.permute.xlu0 %1293
    %1295 = vrot.lane.b32.xlu0 %v921, 64
    %v1296 = vpop.permute.xlu0 %1295
    %1297 = vrot.lane.b32.xlu0 %v922, 64
    %v1298 = vpop.permute.xlu0 %1297
    %1299 = vrot.lane.b32.xlu0 %v923, 64
    %v1300 = vpop.permute.xlu0 %1299
    %1301 = vrot.lane.b32.xlu0 %v924, 64
    %v1302 = vpop.permute.xlu0 %1301
    %1303 = vrot.lane.b32.xlu0 %v925, 64
    %v1304 = vpop.permute.xlu0 %1303
    %1305 = vrot.lane.b32.xlu0 %v926, 64
    %v1306 = vpop.permute.xlu0 %1305
    %1307 = vrot.lane.b32.xlu0 %v927, 64
    %v1308 = vpop.permute.xlu0 %1307
    %1309 = vrot.lane.b32.xlu0 %v928, 64
    %v1310 = vpop.permute.xlu0 %1309
    %1311 = vrot.lane.b32.xlu0 %v929, 64
    %v1312 = vpop.permute.xlu0 %1311
    %1313 = vrot.lane.b32.xlu0 %v930, 64
    %v1314 = vpop.permute.xlu0 %1313
    %1315 = vrot.lane.b32.xlu0 %v931, 64
    %v1316 = vpop.permute.xlu0 %1315
    %1317 = vrot.lane.b32.xlu0 %v932, 64
    %v1318 = vpop.permute.xlu0 %1317
    %1319 = vrot.lane.b32.xlu0 %v933, 64
    %v1320 = vpop.permute.xlu0 %1319
    %1321 = vrot.lane.b32.xlu0 %v934, 64
    %v1322 = vpop.permute.xlu0 %1321
    %1323 = vrot.lane.b32.xlu0 %v935, 64
    %v1324 = vpop.permute.xlu0 %1323
    %1325 = vrot.lane.b32.xlu0 %v936, 64
    %v1326 = vpop.permute.xlu0 %1325
    %1327 = vrot.lane.b32.xlu0 %v937, 64
    %v1328 = vpop.permute.xlu0 %1327
    %1329 = vrot.lane.b32.xlu0 %v938, 64
    %v1330 = vpop.permute.xlu0 %1329
    %1331 = vrot.lane.b32.xlu0 %v939, 64
    %v1332 = vpop.permute.xlu0 %1331
    %1333 = vrot.lane.b32.xlu0 %v940, 64
    %v1334 = vpop.permute.xlu0 %1333
    %1335 = vrot.lane.b32.xlu0 %v941, 64
    %v1336 = vpop.permute.xlu0 %1335
    %1337 = vrot.lane.b32.xlu0 %v942, 64
    %v1338 = vpop.permute.xlu0 %1337
    %1339 = vrot.lane.b32.xlu0 %v943, 64
    %v1340 = vpop.permute.xlu0 %1339
    %1341 = vrot.lane.b32.xlu0 %v944, 64
    %v1342 = vpop.permute.xlu0 %1341
    %1343 = vrot.lane.b32.xlu0 %v945, 64
    %v1344 = vpop.permute.xlu0 %1343
    %1345 = vrot.lane.b32.xlu0 %v946, 64
    %v1346 = vpop.permute.xlu0 %1345
    %1347 = vrot.lane.b32.xlu0 %v947, 64
    %v1348 = vpop.permute.xlu0 %1347
    %1349 = vrot.lane.b32.xlu0 %v948, 64
    %v1350 = vpop.permute.xlu0 %1349
    %1351 = vrot.lane.b32.xlu0 %v949, 64
    %v1352 = vpop.permute.xlu0 %1351
    %1353 = vrot.lane.b32.xlu0 %v950, 64
    %v1354 = vpop.permute.xlu0 %1353
    %1355 = vrot.lane.b32.xlu0 %v951, 64
    %v1356 = vpop.permute.xlu0 %1355
    %1357 = vrot.lane.b32.xlu0 %v952, 64
    %v1358 = vpop.permute.xlu0 %1357
    %1359 = vrot.lane.b32.xlu0 %v953, 64
    %v1360 = vpop.permute.xlu0 %1359
    %1361 = vrot.lane.b32.xlu0 %v954, 64
    %v1362 = vpop.permute.xlu0 %1361
    %1363 = vrot.lane.b32.xlu0 %v955, 64
    %v1364 = vpop.permute.xlu0 %1363
    %1365 = vrot.lane.b32.xlu0 %v956, 64
    %v1366 = vpop.permute.xlu0 %1365
    %1367 = vrot.lane.b32.xlu0 %v957, 64
    %v1368 = vpop.permute.xlu0 %1367
    %1369 = vrot.lane.b32.xlu0 %v958, 64
    %v1370 = vpop.permute.xlu0 %1369
    %1371 = vrot.lane.b32.xlu0 %v959, 64
    %v1372 = vpop.permute.xlu0 %1371
    %1373 = vrot.lane.b32.xlu0 %v960, 64
    %v1374 = vpop.permute.xlu0 %1373
    %1375 = vrot.lane.b32.xlu0 %v961, 64
    %v1376 = vpop.permute.xlu0 %1375
    %1377 = vrot.lane.b32.xlu0 %v962, 64
    %v1378 = vpop.permute.xlu0 %1377
    %1379 = vrot.lane.b32.xlu0 %v963, 64
    %v1380 = vpop.permute.xlu0 %1379
    %1381 = vrot.lane.b32.xlu0 %v964, 64
    %v1382 = vpop.permute.xlu0 %1381
    %1383 = vrot.lane.b32.xlu0 %v965, 64
    %v1384 = vpop.permute.xlu0 %1383
    %1385 = vrot.lane.b32.xlu0 %v966, 64
    %v1386 = vpop.permute.xlu0 %1385
    %1387 = vrot.lane.b32.xlu0 %v967, 64
    %v1388 = vpop.permute.xlu0 %1387
    %1389 = vrot.lane.b32.xlu0 %v968, 64
    %v1390 = vpop.permute.xlu0 %1389
    %1391 = vrot.lane.b32.xlu0 %v969, 64
    %v1392 = vpop.permute.xlu0 %1391
    %1393 = vrot.lane.b32.xlu0 %v970, 64
    %v1394 = vpop.permute.xlu0 %1393
    %1395 = vrot.lane.b32.xlu0 %v971, 64
    %v1396 = vpop.permute.xlu0 %1395
    %1397 = vrot.lane.b32.xlu0 %v972, 64
    %v1398 = vpop.permute.xlu0 %1397
    %1399 = vrot.lane.b32.xlu0 %v973, 64
    %v1400 = vpop.permute.xlu0 %1399
    %1401 = vrot.lane.b32.xlu0 %v974, 64
    %v1402 = vpop.permute.xlu0 %1401
    %1403 = vrot.lane.b32.xlu0 %v975, 64
    %v1404 = vpop.permute.xlu0 %1403
    %1405 = vrot.lane.b32.xlu0 %v976, 64
    %v1406 = vpop.permute.xlu0 %1405
    %1407 = vrot.lane.b32.xlu0 %v977, 64
    %v1408 = vpop.permute.xlu0 %1407
    %1409 = vrot.lane.b32.xlu0 %v978, 64
    %v1410 = vpop.permute.xlu0 %1409
    %v1555 = vsel %vm152, %v1124, 0.0
    %1556 = vadd.xlane.f32.xlu0 %v1555
    %v1557 = vpop.xlane.xlu0 %1556
    %v1558 = vsel %vm152, %v1126, 0.0
    %1559 = vadd.xlane.f32.xlu0 %v1558
    %v1560 = vpop.xlane.xlu0 %1559
    %v1561 = vsel %vm152, %v1128, 0.0
    %1562 = vadd.xlane.f32.xlu0 %v1561
    %v1563 = vpop.xlane.xlu0 %1562
    %v1564 = vsel %vm152, %v1130, 0.0
    %1565 = vadd.xlane.f32.xlu0 %v1564
    %v1566 = vpop.xlane.xlu0 %1565
    %v1567 = vsel %vm152, %v1132, 0.0
    %1568 = vadd.xlane.f32.xlu0 %v1567
    %v1569 = vpop.xlane.xlu0 %1568
    %v1570 = vsel %vm152, %v1134, 0.0
    %1571 = vadd.xlane.f32.xlu0 %v1570
    %v1572 = vpop.xlane.xlu0 %1571
    %v1573 = vsel %vm152, %v1136, 0.0
    %1574 = vadd.xlane.f32.xlu0 %v1573
    %v1575 = vpop.xlane.xlu0 %1574
    %v1576 = vsel %vm152, %v1138, 0.0
    %1577 = vadd.xlane.f32.xlu0 %v1576
    %v1578 = vpop.xlane.xlu0 %1577
    %v1579 = vsel %vm152, %v1140, 0.0
    %1580 = vadd.xlane.f32.xlu0 %v1579
    %v1581 = vpop.xlane.xlu0 %1580
    %v1582 = vsel %vm152, %v1142, 0.0
    %1583 = vadd.xlane.f32.xlu0 %v1582
    %v1584 = vpop.xlane.xlu0 %1583
    %v1585 = vsel %vm152, %v1144, 0.0
    %1586 = vadd.xlane.f32.xlu0 %v1585
    %v1587 = vpop.xlane.xlu0 %1586
    %v1588 = vsel %vm152, %v1146, 0.0
    %1589 = vadd.xlane.f32.xlu0 %v1588
    %v1590 = vpop.xlane.xlu0 %1589
    %v1591 = vsel %vm152, %v1148, 0.0
    %1592 = vadd.xlane.f32.xlu0 %v1591
    %v1593 = vpop.xlane.xlu0 %1592
    %v1594 = vsel %vm152, %v1150, 0.0
    %1595 = vadd.xlane.f32.xlu0 %v1594
    %v1596 = vpop.xlane.xlu0 %1595
    %v1597 = vsel %vm152, %v1152, 0.0
    %1598 = vadd.xlane.f32.xlu0 %v1597
    %v1599 = vpop.xlane.xlu0 %1598
    %v1600 = vsel %vm152, %v1154, 0.0
    %1601 = vadd.xlane.f32.xlu0 %v1600
    %v1602 = vpop.xlane.xlu0 %1601
    %v1603 = vsel %vm152, %v1156, 0.0
    %1604 = vadd.xlane.f32.xlu0 %v1603
    %v1605 = vpop.xlane.xlu0 %1604
    %v1606 = vsel %vm152, %v1158, 0.0
    %1607 = vadd.xlane.f32.xlu0 %v1606
    %v1608 = vpop.xlane.xlu0 %1607
    %v1609 = vsel %vm152, %v1160, 0.0
    %1610 = vadd.xlane.f32.xlu0 %v1609
    %v1611 = vpop.xlane.xlu0 %1610
    %v1612 = vsel %vm152, %v1162, 0.0
    %1613 = vadd.xlane.f32.xlu0 %v1612
    %v1614 = vpop.xlane.xlu0 %1613
    %v1615 = vsel %vm152, %v1164, 0.0
    %1616 = vadd.xlane.f32.xlu0 %v1615
    %v1617 = vpop.xlane.xlu0 %1616
    %v1618 = vsel %vm152, %v1166, 0.0
    %1619 = vadd.xlane.f32.xlu0 %v1618
    %v1620 = vpop.xlane.xlu0 %1619
    %v1621 = vsel %vm152, %v1168, 0.0
    %1622 = vadd.xlane.f32.xlu0 %v1621
    %v1623 = vpop.xlane.xlu0 %1622
    %v1624 = vsel %vm152, %v1170, 0.0
    %1625 = vadd.xlane.f32.xlu0 %v1624
    %v1626 = vpop.xlane.xlu0 %1625
    %v1627 = vsel %vm152, %v1172, 0.0
    %1628 = vadd.xlane.f32.xlu0 %v1627
    %v1629 = vpop.xlane.xlu0 %1628
    %v1630 = vsel %vm152, %v1174, 0.0
    %1631 = vadd.xlane.f32.xlu0 %v1630
    %v1632 = vpop.xlane.xlu0 %1631
    %v1633 = vsel %vm152, %v1176, 0.0
    %1634 = vadd.xlane.f32.xlu0 %v1633
    %v1635 = vpop.xlane.xlu0 %1634
    %v1636 = vsel %vm152, %v1178, 0.0
    %1637 = vadd.xlane.f32.xlu0 %v1636
    %v1638 = vpop.xlane.xlu0 %1637
    %v1639 = vsel %vm152, %v1180, 0.0
    %1640 = vadd.xlane.f32.xlu0 %v1639
    %v1641 = vpop.xlane.xlu0 %1640
    %v1642 = vsel %vm152, %v1182, 0.0
    %1643 = vadd.xlane.f32.xlu0 %v1642
    %v1644 = vpop.xlane.xlu0 %1643
    %v1645 = vsel %vm152, %v1184, 0.0
    %1646 = vadd.xlane.f32.xlu0 %v1645
    %v1647 = vpop.xlane.xlu0 %1646
    %v1648 = vsel %vm152, %v1186, 0.0
    %1649 = vadd.xlane.f32.xlu0 %v1648
    %v1650 = vpop.xlane.xlu0 %1649
    %v1651 = vsel %vm152, %v1188, 0.0
    %1652 = vadd.xlane.f32.xlu0 %v1651
    %v1653 = vpop.xlane.xlu0 %1652
    %v1654 = vsel %vm152, %v1190, 0.0
    %1655 = vadd.xlane.f32.xlu0 %v1654
    %v1656 = vpop.xlane.xlu0 %1655
    %v1657 = vsel %vm152, %v1192, 0.0
    %1658 = vadd.xlane.f32.xlu0 %v1657
    %v1659 = vpop.xlane.xlu0 %1658
    %v1660 = vsel %vm152, %v1194, 0.0
    %1661 = vadd.xlane.f32.xlu0 %v1660
    %v1662 = vpop.xlane.xlu0 %1661
    %v1663 = vsel %vm152, %v1196, 0.0
    %1664 = vadd.xlane.f32.xlu0 %v1663
    %v1665 = vpop.xlane.xlu0 %1664
    %v1666 = vsel %vm152, %v1198, 0.0
    %1667 = vadd.xlane.f32.xlu0 %v1666
    %v1668 = vpop.xlane.xlu0 %1667
    %v1669 = vsel %vm152, %v1200, 0.0
    %1670 = vadd.xlane.f32.xlu0 %v1669
    %v1671 = vpop.xlane.xlu0 %1670
    %v1672 = vsel %vm152, %v1202, 0.0
    %1673 = vadd.xlane.f32.xlu0 %v1672
    %v1674 = vpop.xlane.xlu0 %1673
    %v1675 = vsel %vm152, %v1204, 0.0
    %1676 = vadd.xlane.f32.xlu0 %v1675
    %v1677 = vpop.xlane.xlu0 %1676
    %v1678 = vsel %vm152, %v1206, 0.0
    %1679 = vadd.xlane.f32.xlu0 %v1678
    %v1680 = vpop.xlane.xlu0 %1679
    %v1681 = vsel %vm152, %v1208, 0.0
    %1682 = vadd.xlane.f32.xlu0 %v1681
    %v1683 = vpop.xlane.xlu0 %1682
    %v1684 = vsel %vm152, %v1210, 0.0
    %1685 = vadd.xlane.f32.xlu0 %v1684
    %v1686 = vpop.xlane.xlu0 %1685
    %v1687 = vsel %vm152, %v1212, 0.0
    %1688 = vadd.xlane.f32.xlu0 %v1687
    %v1689 = vpop.xlane.xlu0 %1688
    %v1690 = vsel %vm152, %v1214, 0.0
    %1691 = vadd.xlane.f32.xlu0 %v1690
    %v1692 = vpop.xlane.xlu0 %1691
    %v1693 = vsel %vm152, %v1216, 0.0
    %1694 = vadd.xlane.f32.xlu0 %v1693
    %v1695 = vpop.xlane.xlu0 %1694
    %v1696 = vsel %vm152, %v1218, 0.0
    %1697 = vadd.xlane.f32.xlu0 %v1696
    %v1698 = vpop.xlane.xlu0 %1697
    %v1699 = vsel %vm152, %v1220, 0.0
    %1700 = vadd.xlane.f32.xlu0 %v1699
    %v1701 = vpop.xlane.xlu0 %1700
    %v1702 = vsel %vm152, %v1222, 0.0
    %1703 = vadd.xlane.f32.xlu0 %v1702
    %v1704 = vpop.xlane.xlu0 %1703
    %v1705 = vsel %vm152, %v1224, 0.0
    %1706 = vadd.xlane.f32.xlu0 %v1705
    %v1707 = vpop.xlane.xlu0 %1706
    %v1708 = vsel %vm152, %v1226, 0.0
    %1709 = vadd.xlane.f32.xlu0 %v1708
    %v1710 = vpop.xlane.xlu0 %1709
    %v1711 = vsel %vm152, %v1228, 0.0
    %1712 = vadd.xlane.f32.xlu0 %v1711
    %v1713 = vpop.xlane.xlu0 %1712
    %v1714 = vsel %vm152, %v1230, 0.0
    %1715 = vadd.xlane.f32.xlu0 %v1714
    %v1716 = vpop.xlane.xlu0 %1715
    %v1717 = vsel %vm152, %v1232, 0.0
    %1718 = vadd.xlane.f32.xlu0 %v1717
    %v1719 = vpop.xlane.xlu0 %1718
    %v1720 = vsel %vm152, %v1234, 0.0
    %1721 = vadd.xlane.f32.xlu0 %v1720
    %v1722 = vpop.xlane.xlu0 %1721
    %v1723 = vsel %vm152, %v1236, 0.0
    %1724 = vadd.xlane.f32.xlu0 %v1723
    %v1725 = vpop.xlane.xlu0 %1724
    %v1726 = vsel %vm152, %v1238, 0.0
    %1727 = vadd.xlane.f32.xlu0 %v1726
    %v1728 = vpop.xlane.xlu0 %1727
    %v1729 = vsel %vm152, %v1240, 0.0
    %1730 = vadd.xlane.f32.xlu0 %v1729
    %v1731 = vpop.xlane.xlu0 %1730
    %v1732 = vsel %vm152, %v1242, 0.0
    %1733 = vadd.xlane.f32.xlu0 %v1732
    %v1734 = vpop.xlane.xlu0 %1733
    %v1735 = vsel %vm152, %v1244, 0.0
    %1736 = vadd.xlane.f32.xlu0 %v1735
    %v1737 = vpop.xlane.xlu0 %1736
    %v1738 = vsel %vm152, %v1246, 0.0
    %1739 = vadd.xlane.f32.xlu0 %v1738
    %v1740 = vpop.xlane.xlu0 %1739
    %v1741 = vsel %vm152, %v1248, 0.0
    %1742 = vadd.xlane.f32.xlu0 %v1741
    %v1743 = vpop.xlane.xlu0 %1742
    %v1744 = vsel %vm152, %v1250, 0.0
    %1745 = vadd.xlane.f32.xlu0 %v1744
    %v1746 = vpop.xlane.xlu0 %1745
    %v1747 = vsel %vm152, %v1252, 0.0
    %1748 = vadd.xlane.f32.xlu0 %v1747
    %v1749 = vpop.xlane.xlu0 %1748
    %v1750 = vsel %vm152, %v1254, 0.0
    %1751 = vadd.xlane.f32.xlu0 %v1750
    %v1752 = vpop.xlane.xlu0 %1751
    %v1753 = vsel %vm152, %v1256, 0.0
    %1754 = vadd.xlane.f32.xlu0 %v1753
    %v1755 = vpop.xlane.xlu0 %1754
    %v1756 = vsel %vm152, %v1258, 0.0
    %1757 = vadd.xlane.f32.xlu0 %v1756
    %v1758 = vpop.xlane.xlu0 %1757
    %v1759 = vsel %vm152, %v1260, 0.0
    %1760 = vadd.xlane.f32.xlu0 %v1759
    %v1761 = vpop.xlane.xlu0 %1760
    %v1762 = vsel %vm152, %v1262, 0.0
    %1763 = vadd.xlane.f32.xlu0 %v1762
    %v1764 = vpop.xlane.xlu0 %1763
    %v1765 = vsel %vm152, %v1264, 0.0
    %1766 = vadd.xlane.f32.xlu0 %v1765
    %v1767 = vpop.xlane.xlu0 %1766
    %v1768 = vsel %vm152, %v1266, 0.0
    %1769 = vadd.xlane.f32.xlu0 %v1768
    %v1770 = vpop.xlane.xlu0 %1769
    %v1771 = vsel %vm152, %v1268, 0.0
    %1772 = vadd.xlane.f32.xlu0 %v1771
    %v1773 = vpop.xlane.xlu0 %1772
    %v1774 = vsel %vm152, %v1270, 0.0
    %1775 = vadd.xlane.f32.xlu0 %v1774
    %v1776 = vpop.xlane.xlu0 %1775
    %v1777 = vsel %vm152, %v1272, 0.0
    %1778 = vadd.xlane.f32.xlu0 %v1777
    %v1779 = vpop.xlane.xlu0 %1778
    %v1780 = vsel %vm152, %v1274, 0.0
    %1781 = vadd.xlane.f32.xlu0 %v1780
    %v1782 = vpop.xlane.xlu0 %1781
    %v1783 = vsel %vm152, %v1276, 0.0
    %1784 = vadd.xlane.f32.xlu0 %v1783
    %v1785 = vpop.xlane.xlu0 %1784
    %v1786 = vsel %vm152, %v1278, 0.0
    %1787 = vadd.xlane.f32.xlu0 %v1786
    %v1788 = vpop.xlane.xlu0 %1787
    %v1789 = vsel %vm152, %v1280, 0.0
    %1790 = vadd.xlane.f32.xlu0 %v1789
    %v1791 = vpop.xlane.xlu0 %1790
    %v1792 = vsel %vm152, %v1282, 0.0
    %1793 = vadd.xlane.f32.xlu0 %v1792
    %v1794 = vpop.xlane.xlu0 %1793
    %v1795 = vsel %vm152, %v1284, 0.0
    %1796 = vadd.xlane.f32.xlu0 %v1795
    %v1797 = vpop.xlane.xlu0 %1796
    %v1798 = vsel %vm152, %v1286, 0.0
    %1799 = vadd.xlane.f32.xlu0 %v1798
    %v1800 = vpop.xlane.xlu0 %1799
    %v1801 = vsel %vm152, %v1288, 0.0
    %1802 = vadd.xlane.f32.xlu0 %v1801
    %v1803 = vpop.xlane.xlu0 %1802
    %v1804 = vsel %vm152, %v1290, 0.0
    %1805 = vadd.xlane.f32.xlu0 %v1804
    %v1806 = vpop.xlane.xlu0 %1805
    %v1807 = vsel %vm152, %v1292, 0.0
    %1808 = vadd.xlane.f32.xlu0 %v1807
    %v1809 = vpop.xlane.xlu0 %1808
    %v1810 = vsel %vm152, %v1294, 0.0
    %1811 = vadd.xlane.f32.xlu0 %v1810
    %v1812 = vpop.xlane.xlu0 %1811
    %v1813 = vsel %vm152, %v1296, 0.0
    %1814 = vadd.xlane.f32.xlu0 %v1813
    %v1815 = vpop.xlane.xlu0 %1814
    %v1816 = vsel %vm152, %v1298, 0.0
    %1817 = vadd.xlane.f32.xlu0 %v1816
    %v1818 = vpop.xlane.xlu0 %1817
    %v1819 = vsel %vm152, %v1300, 0.0
    %1820 = vadd.xlane.f32.xlu0 %v1819
    %v1821 = vpop.xlane.xlu0 %1820
    %v1822 = vsel %vm152, %v1302, 0.0
    %1823 = vadd.xlane.f32.xlu0 %v1822
    %v1824 = vpop.xlane.xlu0 %1823
    %v1825 = vsel %vm152, %v1304, 0.0
    %1826 = vadd.xlane.f32.xlu0 %v1825
    %v1827 = vpop.xlane.xlu0 %1826
    %v1828 = vsel %vm152, %v1306, 0.0
    %1829 = vadd.xlane.f32.xlu0 %v1828
    %v1830 = vpop.xlane.xlu0 %1829
    %v1831 = vsel %vm152, %v1308, 0.0
    %1832 = vadd.xlane.f32.xlu0 %v1831
    %v1833 = vpop.xlane.xlu0 %1832
    %v1834 = vsel %vm152, %v1310, 0.0
    %1835 = vadd.xlane.f32.xlu0 %v1834
    %v1836 = vpop.xlane.xlu0 %1835
    %v1837 = vsel %vm152, %v1312, 0.0
    %1838 = vadd.xlane.f32.xlu0 %v1837
    %v1839 = vpop.xlane.xlu0 %1838
    %v1840 = vsel %vm152, %v1314, 0.0
    %1841 = vadd.xlane.f32.xlu0 %v1840
    %v1842 = vpop.xlane.xlu0 %1841
    %v1843 = vsel %vm152, %v1316, 0.0
    %1844 = vadd.xlane.f32.xlu0 %v1843
    %v1845 = vpop.xlane.xlu0 %1844
    %v1846 = vsel %vm152, %v1318, 0.0
    %1847 = vadd.xlane.f32.xlu0 %v1846
    %v1848 = vpop.xlane.xlu0 %1847
    %v1849 = vsel %vm152, %v1320, 0.0
    %1850 = vadd.xlane.f32.xlu0 %v1849
    %v1851 = vpop.xlane.xlu0 %1850
    %v1852 = vsel %vm152, %v1322, 0.0
    %1853 = vadd.xlane.f32.xlu0 %v1852
    %v1854 = vpop.xlane.xlu0 %1853
    %v1855 = vsel %vm152, %v1324, 0.0
    %1856 = vadd.xlane.f32.xlu0 %v1855
    %v1857 = vpop.xlane.xlu0 %1856
    %v1858 = vsel %vm152, %v1326, 0.0
    %1859 = vadd.xlane.f32.xlu0 %v1858
    %v1860 = vpop.xlane.xlu0 %1859
    %v1861 = vsel %vm152, %v1328, 0.0
    %1862 = vadd.xlane.f32.xlu0 %v1861
    %v1863 = vpop.xlane.xlu0 %1862
    %v1864 = vsel %vm152, %v1330, 0.0
    %1865 = vadd.xlane.f32.xlu0 %v1864
    %v1866 = vpop.xlane.xlu0 %1865
    %v1867 = vsel %vm152, %v1332, 0.0
    %1868 = vadd.xlane.f32.xlu0 %v1867
    %v1869 = vpop.xlane.xlu0 %1868
    %v1870 = vsel %vm152, %v1334, 0.0
    %1871 = vadd.xlane.f32.xlu0 %v1870
    %v1872 = vpop.xlane.xlu0 %1871
    %v1873 = vsel %vm152, %v1336, 0.0
    %1874 = vadd.xlane.f32.xlu0 %v1873
    %v1875 = vpop.xlane.xlu0 %1874
    %v1876 = vsel %vm152, %v1338, 0.0
    %1877 = vadd.xlane.f32.xlu0 %v1876
    %v1878 = vpop.xlane.xlu0 %1877
    %v1879 = vsel %vm152, %v1340, 0.0
    %1880 = vadd.xlane.f32.xlu0 %v1879
    %v1881 = vpop.xlane.xlu0 %1880
    %v1882 = vsel %vm152, %v1342, 0.0
    %1883 = vadd.xlane.f32.xlu0 %v1882
    %v1884 = vpop.xlane.xlu0 %1883
    %v1885 = vsel %vm152, %v1344, 0.0
    %1886 = vadd.xlane.f32.xlu0 %v1885
    %v1887 = vpop.xlane.xlu0 %1886
    %v1888 = vsel %vm152, %v1346, 0.0
    %1889 = vadd.xlane.f32.xlu0 %v1888
    %v1890 = vpop.xlane.xlu0 %1889
    %v1891 = vsel %vm152, %v1348, 0.0
    %1892 = vadd.xlane.f32.xlu0 %v1891
    %v1893 = vpop.xlane.xlu0 %1892
    %v1894 = vsel %vm152, %v1350, 0.0
    %1895 = vadd.xlane.f32.xlu0 %v1894
    %v1896 = vpop.xlane.xlu0 %1895
    %v1897 = vsel %vm152, %v1352, 0.0
    %1898 = vadd.xlane.f32.xlu0 %v1897
    %v1899 = vpop.xlane.xlu0 %1898
    %v1900 = vsel %vm152, %v1354, 0.0
    %1901 = vadd.xlane.f32.xlu0 %v1900
    %v1902 = vpop.xlane.xlu0 %1901
    %v1903 = vsel %vm152, %v1356, 0.0
    %1904 = vadd.xlane.f32.xlu0 %v1903
    %v1905 = vpop.xlane.xlu0 %1904
    %v1906 = vsel %vm152, %v1358, 0.0
    %1907 = vadd.xlane.f32.xlu0 %v1906
    %v1908 = vpop.xlane.xlu0 %1907
    %v1909 = vsel %vm152, %v1360, 0.0
    %1910 = vadd.xlane.f32.xlu0 %v1909
    %v1911 = vpop.xlane.xlu0 %1910
    %v1912 = vsel %vm152, %v1362, 0.0
    %1913 = vadd.xlane.f32.xlu0 %v1912
    %v1914 = vpop.xlane.xlu0 %1913
    %v1915 = vsel %vm152, %v1364, 0.0
    %1916 = vadd.xlane.f32.xlu0 %v1915
    %v1917 = vpop.xlane.xlu0 %1916
    %v1918 = vsel %vm152, %v1366, 0.0
    %1919 = vadd.xlane.f32.xlu0 %v1918
    %v1920 = vpop.xlane.xlu0 %1919
    %v1921 = vsel %vm152, %v1368, 0.0
    %1922 = vadd.xlane.f32.xlu0 %v1921
    %v1923 = vpop.xlane.xlu0 %1922
    %v1924 = vsel %vm152, %v1370, 0.0
    %1925 = vadd.xlane.f32.xlu0 %v1924
    %v1926 = vpop.xlane.xlu0 %1925
    %v1927 = vsel %vm152, %v1372, 0.0
    %1928 = vadd.xlane.f32.xlu0 %v1927
    %v1929 = vpop.xlane.xlu0 %1928
    %v1930 = vsel %vm152, %v1374, 0.0
    %1931 = vadd.xlane.f32.xlu0 %v1930
    %v1932 = vpop.xlane.xlu0 %1931
    %v1933 = vsel %vm152, %v1376, 0.0
    %1934 = vadd.xlane.f32.xlu0 %v1933
    %v1935 = vpop.xlane.xlu0 %1934
    %v1936 = vsel %vm152, %v1378, 0.0
    %1937 = vadd.xlane.f32.xlu0 %v1936
    %v1938 = vpop.xlane.xlu0 %1937
    %v1939 = vsel %vm152, %v1380, 0.0
    %1940 = vadd.xlane.f32.xlu0 %v1939
    %v1941 = vpop.xlane.xlu0 %1940
    %v1942 = vsel %vm152, %v1382, 0.0
    %1943 = vadd.xlane.f32.xlu0 %v1942
    %v1944 = vpop.xlane.xlu0 %1943
    %v1945 = vsel %vm152, %v1384, 0.0
    %1946 = vadd.xlane.f32.xlu0 %v1945
    %v1947 = vpop.xlane.xlu0 %1946
    %v1948 = vsel %vm152, %v1386, 0.0
    %1949 = vadd.xlane.f32.xlu0 %v1948
    %v1950 = vpop.xlane.xlu0 %1949
    %v1951 = vsel %vm152, %v1388, 0.0
    %1952 = vadd.xlane.f32.xlu0 %v1951
    %v1953 = vpop.xlane.xlu0 %1952
    %v1954 = vsel %vm152, %v1390, 0.0
    %1955 = vadd.xlane.f32.xlu0 %v1954
    %v1956 = vpop.xlane.xlu0 %1955
    %v1957 = vsel %vm152, %v1392, 0.0
    %1958 = vadd.xlane.f32.xlu0 %v1957
    %v1959 = vpop.xlane.xlu0 %1958
    %v1960 = vsel %vm152, %v1394, 0.0
    %1961 = vadd.xlane.f32.xlu0 %v1960
    %v1962 = vpop.xlane.xlu0 %1961
    %v1963 = vsel %vm152, %v1396, 0.0
    %1964 = vadd.xlane.f32.xlu0 %v1963
    %v1965 = vpop.xlane.xlu0 %1964
    %v1966 = vsel %vm152, %v1398, 0.0
    %1967 = vadd.xlane.f32.xlu0 %v1966
    %v1968 = vpop.xlane.xlu0 %1967
    %v1969 = vsel %vm152, %v1400, 0.0
    %1970 = vadd.xlane.f32.xlu0 %v1969
    %v1971 = vpop.xlane.xlu0 %1970
    %v1972 = vsel %vm152, %v1402, 0.0
    %1973 = vadd.xlane.f32.xlu0 %v1972
    %v1974 = vpop.xlane.xlu0 %1973
    %v1975 = vsel %vm152, %v1404, 0.0
    %1976 = vadd.xlane.f32.xlu0 %v1975
    %v1977 = vpop.xlane.xlu0 %1976
    %v1978 = vsel %vm152, %v1406, 0.0
    %1979 = vadd.xlane.f32.xlu0 %v1978
    %v1980 = vpop.xlane.xlu0 %1979
    %v1981 = vsel %vm152, %v1408, 0.0
    %1982 = vadd.xlane.f32.xlu0 %v1981
    %v1983 = vpop.xlane.xlu0 %1982
    %v1984 = vsel %vm152, %v1410, 0.0
    %1985 = vadd.xlane.f32.xlu0 %v1984
    %v1986 = vpop.xlane.xlu0 %1985
    %v1990 = vperm.slane %v71, 0
    %v1991 = vlaneseq
    %v1992 = vshrl.u32 %v1991, 7
    %1994 = vset.pattern.permute.xlu0 %v1992
    %1995 = vperm.xlu0 %1994, %v1990
    %v1996 = vpop.permute.xlu0 %1995
    %v1997 = vlaneseq
    %v1998 = vshrl.u32 %v1997, 7
    %v1999 = vadd.s32 %v1998, 8
    %2000 = vset.pattern.permute.xlu0 %v1999
    %2001 = vperm.xlu0 %2000, %v1990
    %v2002 = vpop.permute.xlu0 %2001
    %v2003 = vlaneseq
    %v2004 = vshrl.u32 %v2003, 7
    %v2005 = vadd.s32 %v2004, 16
    %2006 = vset.pattern.permute.xlu0 %v2005
    %2007 = vperm.xlu0 %2006, %v1990
    %v2008 = vpop.permute.xlu0 %2007
    %v2009 = vperm.slane %v71, 1
    %v2010 = vlaneseq
    %v2011 = vshrl.u32 %v2010, 7
    %2013 = vset.pattern.permute.xlu0 %v2011
    %2014 = vperm.xlu0 %2013, %v2009
    %v2015 = vpop.permute.xlu0 %2014
    %v2016 = vlaneseq
    %v2017 = vshrl.u32 %v2016, 7
    %v2018 = vadd.s32 %v2017, 8
    %2019 = vset.pattern.permute.xlu0 %v2018
    %2020 = vperm.xlu0 %2019, %v2009
    %v2021 = vpop.permute.xlu0 %2020
    %v2022 = vlaneseq
    %v2023 = vshrl.u32 %v2022, 7
    %v2024 = vadd.s32 %v2023, 16
    %2025 = vset.pattern.permute.xlu0 %v2024
    %2026 = vperm.xlu0 %2025, %v2009
    %v2027 = vpop.permute.xlu0 %2026
    %v2028 = vperm.slane %v71, 2
    %v2029 = vlaneseq
    %v2030 = vshrl.u32 %v2029, 7
    %2032 = vset.pattern.permute.xlu0 %v2030
    %2033 = vperm.xlu0 %2032, %v2028
    %v2034 = vpop.permute.xlu0 %2033
    %v2035 = vlaneseq
    %v2036 = vshrl.u32 %v2035, 7
    %v2037 = vadd.s32 %v2036, 8
    %2038 = vset.pattern.permute.xlu0 %v2037
    %2039 = vperm.xlu0 %2038, %v2028
    %v2040 = vpop.permute.xlu0 %2039
    %v2041 = vlaneseq
    %v2042 = vshrl.u32 %v2041, 7
    %v2043 = vadd.s32 %v2042, 16
    %2044 = vset.pattern.permute.xlu0 %v2043
    %2045 = vperm.xlu0 %2044, %v2028
    %v2046 = vpop.permute.xlu0 %2045
    %v2047 = vperm.slane %v71, 3
    %v2048 = vlaneseq
    %v2049 = vshrl.u32 %v2048, 7
    %2051 = vset.pattern.permute.xlu0 %v2049
    %2052 = vperm.xlu0 %2051, %v2047
    %v2053 = vpop.permute.xlu0 %2052
    %v2054 = vlaneseq
    %v2055 = vshrl.u32 %v2054, 7
    %v2056 = vadd.s32 %v2055, 8
    %2057 = vset.pattern.permute.xlu0 %v2056
    %2058 = vperm.xlu0 %2057, %v2047
    %v2059 = vpop.permute.xlu0 %2058
    %v2060 = vlaneseq
    %v2061 = vshrl.u32 %v2060, 7
    %v2062 = vadd.s32 %v2061, 16
    %2063 = vset.pattern.permute.xlu0 %v2062
    %2064 = vperm.xlu0 %2063, %v2047
    %v2065 = vpop.permute.xlu0 %2064
    %v2066 = vperm.slane %v71, 4
    %v2067 = vlaneseq
    %v2068 = vshrl.u32 %v2067, 7
    %2070 = vset.pattern.permute.xlu0 %v2068
    %2071 = vperm.xlu0 %2070, %v2066
    %v2072 = vpop.permute.xlu0 %2071
    %v2073 = vlaneseq
    %v2074 = vshrl.u32 %v2073, 7
    %v2075 = vadd.s32 %v2074, 8
    %2076 = vset.pattern.permute.xlu0 %v2075
    %2077 = vperm.xlu0 %2076, %v2066
    %v2078 = vpop.permute.xlu0 %2077
    %v2079 = vlaneseq
    %v2080 = vshrl.u32 %v2079, 7
    %v2081 = vadd.s32 %v2080, 16
    %2082 = vset.pattern.permute.xlu0 %v2081
    %2083 = vperm.xlu0 %2082, %v2066
    %v2084 = vpop.permute.xlu0 %2083
    %v2085 = vperm.slane %v71, 5
    %v2086 = vlaneseq
    %v2087 = vshrl.u32 %v2086, 7
    %2089 = vset.pattern.permute.xlu0 %v2087
    %2090 = vperm.xlu0 %2089, %v2085
    %v2091 = vpop.permute.xlu0 %2090
    %v2092 = vlaneseq
    %v2093 = vshrl.u32 %v2092, 7
    %v2094 = vadd.s32 %v2093, 8
    %2095 = vset.pattern.permute.xlu0 %v2094
    %2096 = vperm.xlu0 %2095, %v2085
    %v2097 = vpop.permute.xlu0 %2096
    %v2098 = vlaneseq
    %v2099 = vshrl.u32 %v2098, 7
    %v2100 = vadd.s32 %v2099, 16
    %2101 = vset.pattern.permute.xlu0 %v2100
    %2102 = vperm.xlu0 %2101, %v2085
    %v2103 = vpop.permute.xlu0 %2102
    %v2104 = vperm.slane %v71, 6
    %v2105 = vlaneseq
    %v2106 = vshrl.u32 %v2105, 7
    %2108 = vset.pattern.permute.xlu0 %v2106
    %2109 = vperm.xlu0 %2108, %v2104
    %v2110 = vpop.permute.xlu0 %2109
    %v2111 = vlaneseq
    %v2112 = vshrl.u32 %v2111, 7
    %v2113 = vadd.s32 %v2112, 8
    %2114 = vset.pattern.permute.xlu0 %v2113
    %2115 = vperm.xlu0 %2114, %v2104
    %v2116 = vpop.permute.xlu0 %2115
    %v2117 = vlaneseq
    %v2118 = vshrl.u32 %v2117, 7
    %v2119 = vadd.s32 %v2118, 16
    %2120 = vset.pattern.permute.xlu0 %v2119
    %2121 = vperm.xlu0 %2120, %v2104
    %v2122 = vpop.permute.xlu0 %2121
    %v2123 = vperm.slane %v71, 7
    %v2124 = vlaneseq
    %v2125 = vshrl.u32 %v2124, 7
    %2127 = vset.pattern.permute.xlu0 %v2125
    %2128 = vperm.xlu0 %2127, %v2123
    %v2129 = vpop.permute.xlu0 %2128
    %v2130 = vlaneseq
    %v2131 = vshrl.u32 %v2130, 7
    %v2132 = vadd.s32 %v2131, 8
    %2133 = vset.pattern.permute.xlu0 %v2132
    %2134 = vperm.xlu0 %2133, %v2123
    %v2135 = vpop.permute.xlu0 %2134
    %v2136 = vlaneseq
    %v2137 = vshrl.u32 %v2136, 7
    %v2138 = vadd.s32 %v2137, 16
    %2139 = vset.pattern.permute.xlu0 %v2138
    %2140 = vperm.xlu0 %2139, %v2123
    %v2141 = vpop.permute.xlu0 %2140
    %v2142 = vperm.slane %v72, 0
    %v2143 = vlaneseq
    %v2144 = vshrl.u32 %v2143, 7
    %2146 = vset.pattern.permute.xlu0 %v2144
    %2147 = vperm.xlu0 %2146, %v2142
    %v2148 = vpop.permute.xlu0 %2147
    %v2149 = vlaneseq
    %v2150 = vshrl.u32 %v2149, 7
    %v2151 = vadd.s32 %v2150, 8
    %2152 = vset.pattern.permute.xlu0 %v2151
    %2153 = vperm.xlu0 %2152, %v2142
    %v2154 = vpop.permute.xlu0 %2153
    %v2155 = vlaneseq
    %v2156 = vshrl.u32 %v2155, 7
    %v2157 = vadd.s32 %v2156, 16
    %2158 = vset.pattern.permute.xlu0 %v2157
    %2159 = vperm.xlu0 %2158, %v2142
    %v2160 = vpop.permute.xlu0 %2159
    %v2161 = vperm.slane %v72, 1
    %v2162 = vlaneseq
    %v2163 = vshrl.u32 %v2162, 7
    %2165 = vset.pattern.permute.xlu0 %v2163
    %2166 = vperm.xlu0 %2165, %v2161
    %v2167 = vpop.permute.xlu0 %2166
    %v2168 = vlaneseq
    %v2169 = vshrl.u32 %v2168, 7
    %v2170 = vadd.s32 %v2169, 8
    %2171 = vset.pattern.permute.xlu0 %v2170
    %2172 = vperm.xlu0 %2171, %v2161
    %v2173 = vpop.permute.xlu0 %2172
    %v2174 = vlaneseq
    %v2175 = vshrl.u32 %v2174, 7
    %v2176 = vadd.s32 %v2175, 16
    %2177 = vset.pattern.permute.xlu0 %v2176
    %2178 = vperm.xlu0 %2177, %v2161
    %v2179 = vpop.permute.xlu0 %2178
    %v2180 = vperm.slane %v72, 2
    %v2181 = vlaneseq
    %v2182 = vshrl.u32 %v2181, 7
    %2184 = vset.pattern.permute.xlu0 %v2182
    %2185 = vperm.xlu0 %2184, %v2180
    %v2186 = vpop.permute.xlu0 %2185
    %v2187 = vlaneseq
    %v2188 = vshrl.u32 %v2187, 7
    %v2189 = vadd.s32 %v2188, 8
    %2190 = vset.pattern.permute.xlu0 %v2189
    %2191 = vperm.xlu0 %2190, %v2180
    %v2192 = vpop.permute.xlu0 %2191
    %v2193 = vlaneseq
    %v2194 = vshrl.u32 %v2193, 7
    %v2195 = vadd.s32 %v2194, 16
    %2196 = vset.pattern.permute.xlu0 %v2195
    %2197 = vperm.xlu0 %2196, %v2180
    %v2198 = vpop.permute.xlu0 %2197
    %v2199 = vperm.slane %v72, 3
    %v2200 = vlaneseq
    %v2201 = vshrl.u32 %v2200, 7
    %2203 = vset.pattern.permute.xlu0 %v2201
    %2204 = vperm.xlu0 %2203, %v2199
    %v2205 = vpop.permute.xlu0 %2204
    %v2206 = vlaneseq
    %v2207 = vshrl.u32 %v2206, 7
    %v2208 = vadd.s32 %v2207, 8
    %2209 = vset.pattern.permute.xlu0 %v2208
    %2210 = vperm.xlu0 %2209, %v2199
    %v2211 = vpop.permute.xlu0 %2210
    %v2212 = vlaneseq
    %v2213 = vshrl.u32 %v2212, 7
    %v2214 = vadd.s32 %v2213, 16
    %2215 = vset.pattern.permute.xlu0 %v2214
    %2216 = vperm.xlu0 %2215, %v2199
    %v2217 = vpop.permute.xlu0 %2216
    %v2218 = vperm.slane %v72, 4
    %v2219 = vlaneseq
    %v2220 = vshrl.u32 %v2219, 7
    %2222 = vset.pattern.permute.xlu0 %v2220
    %2223 = vperm.xlu0 %2222, %v2218
    %v2224 = vpop.permute.xlu0 %2223
    %v2225 = vlaneseq
    %v2226 = vshrl.u32 %v2225, 7
    %v2227 = vadd.s32 %v2226, 8
    %2228 = vset.pattern.permute.xlu0 %v2227
    %2229 = vperm.xlu0 %2228, %v2218
    %v2230 = vpop.permute.xlu0 %2229
    %v2231 = vlaneseq
    %v2232 = vshrl.u32 %v2231, 7
    %v2233 = vadd.s32 %v2232, 16
    %2234 = vset.pattern.permute.xlu0 %v2233
    %2235 = vperm.xlu0 %2234, %v2218
    %v2236 = vpop.permute.xlu0 %2235
    %v2237 = vperm.slane %v72, 5
    %v2238 = vlaneseq
    %v2239 = vshrl.u32 %v2238, 7
    %2241 = vset.pattern.permute.xlu0 %v2239
    %2242 = vperm.xlu0 %2241, %v2237
    %v2243 = vpop.permute.xlu0 %2242
    %v2244 = vlaneseq
    %v2245 = vshrl.u32 %v2244, 7
    %v2246 = vadd.s32 %v2245, 8
    %2247 = vset.pattern.permute.xlu0 %v2246
    %2248 = vperm.xlu0 %2247, %v2237
    %v2249 = vpop.permute.xlu0 %2248
    %v2250 = vlaneseq
    %v2251 = vshrl.u32 %v2250, 7
    %v2252 = vadd.s32 %v2251, 16
    %2253 = vset.pattern.permute.xlu0 %v2252
    %2254 = vperm.xlu0 %2253, %v2237
    %v2255 = vpop.permute.xlu0 %2254
    %v2256 = vperm.slane %v72, 6
    %v2257 = vlaneseq
    %v2258 = vshrl.u32 %v2257, 7
    %2260 = vset.pattern.permute.xlu0 %v2258
    %2261 = vperm.xlu0 %2260, %v2256
    %v2262 = vpop.permute.xlu0 %2261
    %v2263 = vlaneseq
    %v2264 = vshrl.u32 %v2263, 7
    %v2265 = vadd.s32 %v2264, 8
    %2266 = vset.pattern.permute.xlu0 %v2265
    %2267 = vperm.xlu0 %2266, %v2256
    %v2268 = vpop.permute.xlu0 %2267
    %v2269 = vlaneseq
    %v2270 = vshrl.u32 %v2269, 7
    %v2271 = vadd.s32 %v2270, 16
    %2272 = vset.pattern.permute.xlu0 %v2271
    %2273 = vperm.xlu0 %2272, %v2256
    %v2274 = vpop.permute.xlu0 %2273
    %v2275 = vperm.slane %v72, 7
    %v2276 = vlaneseq
    %v2277 = vshrl.u32 %v2276, 7
    %2279 = vset.pattern.permute.xlu0 %v2277
    %2280 = vperm.xlu0 %2279, %v2275
    %v2281 = vpop.permute.xlu0 %2280
    %v2282 = vlaneseq
    %v2283 = vshrl.u32 %v2282, 7
    %v2284 = vadd.s32 %v2283, 8
    %2285 = vset.pattern.permute.xlu0 %v2284
    %2286 = vperm.xlu0 %2285, %v2275
    %v2287 = vpop.permute.xlu0 %2286
    %v2288 = vlaneseq
    %v2289 = vshrl.u32 %v2288, 7
    %v2290 = vadd.s32 %v2289, 16
    %2291 = vset.pattern.permute.xlu0 %v2290
    %2292 = vperm.xlu0 %2291, %v2275
    %v2293 = vpop.permute.xlu0 %2292
    %v2294 = vperm.slane %v73, 0
    %v2295 = vlaneseq
    %v2296 = vshrl.u32 %v2295, 7
    %2298 = vset.pattern.permute.xlu0 %v2296
    %2299 = vperm.xlu0 %2298, %v2294
    %v2300 = vpop.permute.xlu0 %2299
    %v2301 = vlaneseq
    %v2302 = vshrl.u32 %v2301, 7
    %v2303 = vadd.s32 %v2302, 8
    %2304 = vset.pattern.permute.xlu0 %v2303
    %2305 = vperm.xlu0 %2304, %v2294
    %v2306 = vpop.permute.xlu0 %2305
    %v2307 = vlaneseq
    %v2308 = vshrl.u32 %v2307, 7
    %v2309 = vadd.s32 %v2308, 16
    %2310 = vset.pattern.permute.xlu0 %v2309
    %2311 = vperm.xlu0 %2310, %v2294
    %v2312 = vpop.permute.xlu0 %2311
    %v2313 = vperm.slane %v73, 1
    %v2314 = vlaneseq
    %v2315 = vshrl.u32 %v2314, 7
    %2317 = vset.pattern.permute.xlu0 %v2315
    %2318 = vperm.xlu0 %2317, %v2313
    %v2319 = vpop.permute.xlu0 %2318
    %v2320 = vlaneseq
    %v2321 = vshrl.u32 %v2320, 7
    %v2322 = vadd.s32 %v2321, 8
    %2323 = vset.pattern.permute.xlu0 %v2322
    %2324 = vperm.xlu0 %2323, %v2313
    %v2325 = vpop.permute.xlu0 %2324
    %v2326 = vlaneseq
    %v2327 = vshrl.u32 %v2326, 7
    %v2328 = vadd.s32 %v2327, 16
    %2329 = vset.pattern.permute.xlu0 %v2328
    %2330 = vperm.xlu0 %2329, %v2313
    %v2331 = vpop.permute.xlu0 %2330
    %v2332 = vperm.slane %v73, 2
    %v2333 = vlaneseq
    %v2334 = vshrl.u32 %v2333, 7
    %2336 = vset.pattern.permute.xlu0 %v2334
    %2337 = vperm.xlu0 %2336, %v2332
    %v2338 = vpop.permute.xlu0 %2337
    %v2339 = vlaneseq
    %v2340 = vshrl.u32 %v2339, 7
    %v2341 = vadd.s32 %v2340, 8
    %2342 = vset.pattern.permute.xlu0 %v2341
    %2343 = vperm.xlu0 %2342, %v2332
    %v2344 = vpop.permute.xlu0 %2343
    %v2345 = vlaneseq
    %v2346 = vshrl.u32 %v2345, 7
    %v2347 = vadd.s32 %v2346, 16
    %2348 = vset.pattern.permute.xlu0 %v2347
    %2349 = vperm.xlu0 %2348, %v2332
    %v2350 = vpop.permute.xlu0 %2349
    %v2351 = vperm.slane %v73, 3
    %v2352 = vlaneseq
    %v2353 = vshrl.u32 %v2352, 7
    %2355 = vset.pattern.permute.xlu0 %v2353
    %2356 = vperm.xlu0 %2355, %v2351
    %v2357 = vpop.permute.xlu0 %2356
    %v2358 = vlaneseq
    %v2359 = vshrl.u32 %v2358, 7
    %v2360 = vadd.s32 %v2359, 8
    %2361 = vset.pattern.permute.xlu0 %v2360
    %2362 = vperm.xlu0 %2361, %v2351
    %v2363 = vpop.permute.xlu0 %2362
    %v2364 = vlaneseq
    %v2365 = vshrl.u32 %v2364, 7
    %v2366 = vadd.s32 %v2365, 16
    %2367 = vset.pattern.permute.xlu0 %v2366
    %2368 = vperm.xlu0 %2367, %v2351
    %v2369 = vpop.permute.xlu0 %2368
    %v2370 = vperm.slane %v73, 4
    %v2371 = vlaneseq
    %v2372 = vshrl.u32 %v2371, 7
    %2374 = vset.pattern.permute.xlu0 %v2372
    %2375 = vperm.xlu0 %2374, %v2370
    %v2376 = vpop.permute.xlu0 %2375
    %v2377 = vlaneseq
    %v2378 = vshrl.u32 %v2377, 7
    %v2379 = vadd.s32 %v2378, 8
    %2380 = vset.pattern.permute.xlu0 %v2379
    %2381 = vperm.xlu0 %2380, %v2370
    %v2382 = vpop.permute.xlu0 %2381
    %v2383 = vlaneseq
    %v2384 = vshrl.u32 %v2383, 7
    %v2385 = vadd.s32 %v2384, 16
    %2386 = vset.pattern.permute.xlu0 %v2385
    %2387 = vperm.xlu0 %2386, %v2370
    %v2388 = vpop.permute.xlu0 %2387
    %v2389 = vperm.slane %v73, 5
    %v2390 = vlaneseq
    %v2391 = vshrl.u32 %v2390, 7
    %2393 = vset.pattern.permute.xlu0 %v2391
    %2394 = vperm.xlu0 %2393, %v2389
    %v2395 = vpop.permute.xlu0 %2394
    %v2396 = vlaneseq
    %v2397 = vshrl.u32 %v2396, 7
    %v2398 = vadd.s32 %v2397, 8
    %2399 = vset.pattern.permute.xlu0 %v2398
    %2400 = vperm.xlu0 %2399, %v2389
    %v2401 = vpop.permute.xlu0 %2400
    %v2402 = vlaneseq
    %v2403 = vshrl.u32 %v2402, 7
    %v2404 = vadd.s32 %v2403, 16
    %2405 = vset.pattern.permute.xlu0 %v2404
    %2406 = vperm.xlu0 %2405, %v2389
    %v2407 = vpop.permute.xlu0 %2406
    %v2408 = vperm.slane %v73, 6
    %v2409 = vlaneseq
    %v2410 = vshrl.u32 %v2409, 7
    %2412 = vset.pattern.permute.xlu0 %v2410
    %2413 = vperm.xlu0 %2412, %v2408
    %v2414 = vpop.permute.xlu0 %2413
    %v2415 = vlaneseq
    %v2416 = vshrl.u32 %v2415, 7
    %v2417 = vadd.s32 %v2416, 8
    %2418 = vset.pattern.permute.xlu0 %v2417
    %2419 = vperm.xlu0 %2418, %v2408
    %v2420 = vpop.permute.xlu0 %2419
    %v2421 = vlaneseq
    %v2422 = vshrl.u32 %v2421, 7
    %v2423 = vadd.s32 %v2422, 16
    %2424 = vset.pattern.permute.xlu0 %v2423
    %2425 = vperm.xlu0 %2424, %v2408
    %v2426 = vpop.permute.xlu0 %2425
    %v2427 = vperm.slane %v73, 7
    %v2428 = vlaneseq
    %v2429 = vshrl.u32 %v2428, 7
    %2431 = vset.pattern.permute.xlu0 %v2429
    %2432 = vperm.xlu0 %2431, %v2427
    %v2433 = vpop.permute.xlu0 %2432
    %v2434 = vlaneseq
    %v2435 = vshrl.u32 %v2434, 7
    %v2436 = vadd.s32 %v2435, 8
    %2437 = vset.pattern.permute.xlu0 %v2436
    %2438 = vperm.xlu0 %2437, %v2427
    %v2439 = vpop.permute.xlu0 %2438
    %v2440 = vlaneseq
    %v2441 = vshrl.u32 %v2440, 7
    %v2442 = vadd.s32 %v2441, 16
    %2443 = vset.pattern.permute.xlu0 %v2442
    %2444 = vperm.xlu0 %2443, %v2427
    %v2445 = vpop.permute.xlu0 %2444
    %v2518 = vadd.f32 %v1557, %v1996
    %v2519 = vadd.f32 %v1560, %v2002
    %v2520 = vadd.f32 %v1563, %v2008
    %v2521 = vadd.f32 %v1566, %v2015
    %v2522 = vadd.f32 %v1569, %v2021
    %v2523 = vadd.f32 %v1572, %v2027
    %v2524 = vadd.f32 %v1575, %v2034
    %v2525 = vadd.f32 %v1578, %v2040
    %v2526 = vadd.f32 %v1581, %v2046
    %v2527 = vadd.f32 %v1584, %v2053
    %v2528 = vadd.f32 %v1587, %v2059
    %v2529 = vadd.f32 %v1590, %v2065
    %v2530 = vadd.f32 %v1593, %v2072
    %v2531 = vadd.f32 %v1596, %v2078
    %v2532 = vadd.f32 %v1599, %v2084
    %v2533 = vadd.f32 %v1602, %v2091
    %v2534 = vadd.f32 %v1605, %v2097
    %v2535 = vadd.f32 %v1608, %v2103
    %v2536 = vadd.f32 %v1611, %v2110
    %v2537 = vadd.f32 %v1614, %v2116
    %v2538 = vadd.f32 %v1617, %v2122
    %v2539 = vadd.f32 %v1620, %v2129
    %v2540 = vadd.f32 %v1623, %v2135
    %v2541 = vadd.f32 %v1626, %v2141
    %v2542 = vadd.f32 %v1629, %v2148
    %v2543 = vadd.f32 %v1632, %v2154
    %v2544 = vadd.f32 %v1635, %v2160
    %v2545 = vadd.f32 %v1638, %v2167
    %v2546 = vadd.f32 %v1641, %v2173
    %v2547 = vadd.f32 %v1644, %v2179
    %v2548 = vadd.f32 %v1647, %v2186
    %v2549 = vadd.f32 %v1650, %v2192
    %v2550 = vadd.f32 %v1653, %v2198
    %v2551 = vadd.f32 %v1656, %v2205
    %v2552 = vadd.f32 %v1659, %v2211
    %v2553 = vadd.f32 %v1662, %v2217
    %v2554 = vadd.f32 %v1665, %v2224
    %v2555 = vadd.f32 %v1668, %v2230
    %v2556 = vadd.f32 %v1671, %v2236
    %v2557 = vadd.f32 %v1674, %v2243
    %v2558 = vadd.f32 %v1677, %v2249
    %v2559 = vadd.f32 %v1680, %v2255
    %v2560 = vadd.f32 %v1683, %v2262
    %v2561 = vadd.f32 %v1686, %v2268
    %v2562 = vadd.f32 %v1689, %v2274
    %v2563 = vadd.f32 %v1692, %v2281
    %v2564 = vadd.f32 %v1695, %v2287
    %v2565 = vadd.f32 %v1698, %v2293
    %v2566 = vadd.f32 %v1701, %v2300
    %v2567 = vadd.f32 %v1704, %v2306
    %v2568 = vadd.f32 %v1707, %v2312
    %v2569 = vadd.f32 %v1710, %v2319
    %v2570 = vadd.f32 %v1713, %v2325
    %v2571 = vadd.f32 %v1716, %v2331
    %v2572 = vadd.f32 %v1719, %v2338
    %v2573 = vadd.f32 %v1722, %v2344
    %v2574 = vadd.f32 %v1725, %v2350
    %v2575 = vadd.f32 %v1728, %v2357
    %v2576 = vadd.f32 %v1731, %v2363
    %v2577 = vadd.f32 %v1734, %v2369
    %v2578 = vadd.f32 %v1737, %v2376
    %v2579 = vadd.f32 %v1740, %v2382
    %v2580 = vadd.f32 %v1743, %v2388
    %v2581 = vadd.f32 %v1746, %v2395
    %v2582 = vadd.f32 %v1749, %v2401
    %v2583 = vadd.f32 %v1752, %v2407
    %v2584 = vadd.f32 %v1755, %v2414
    %v2585 = vadd.f32 %v1758, %v2420
    %v2586 = vadd.f32 %v1761, %v2426
    %v2587 = vadd.f32 %v1764, %v2433
    %v2588 = vadd.f32 %v1767, %v2439
    %v2589 = vadd.f32 %v1770, %v2445
    %v2590 = vadd.f32 %v1773, %v1996
    %v2591 = vadd.f32 %v1776, %v2002
    %v2592 = vadd.f32 %v1779, %v2008
    %v2593 = vadd.f32 %v1782, %v2015
    %v2594 = vadd.f32 %v1785, %v2021
    %v2595 = vadd.f32 %v1788, %v2027
    %v2596 = vadd.f32 %v1791, %v2034
    %v2597 = vadd.f32 %v1794, %v2040
    %v2598 = vadd.f32 %v1797, %v2046
    %v2599 = vadd.f32 %v1800, %v2053
    %v2600 = vadd.f32 %v1803, %v2059
    %v2601 = vadd.f32 %v1806, %v2065
    %v2602 = vadd.f32 %v1809, %v2072
    %v2603 = vadd.f32 %v1812, %v2078
    %v2604 = vadd.f32 %v1815, %v2084
    %v2605 = vadd.f32 %v1818, %v2091
    %v2606 = vadd.f32 %v1821, %v2097
    %v2607 = vadd.f32 %v1824, %v2103
    %v2608 = vadd.f32 %v1827, %v2110
    %v2609 = vadd.f32 %v1830, %v2116
    %v2610 = vadd.f32 %v1833, %v2122
    %v2611 = vadd.f32 %v1836, %v2129
    %v2612 = vadd.f32 %v1839, %v2135
    %v2613 = vadd.f32 %v1842, %v2141
    %v2614 = vadd.f32 %v1845, %v2148
    %v2615 = vadd.f32 %v1848, %v2154
    %v2616 = vadd.f32 %v1851, %v2160
    %v2617 = vadd.f32 %v1854, %v2167
    %v2618 = vadd.f32 %v1857, %v2173
    %v2619 = vadd.f32 %v1860, %v2179
    %v2620 = vadd.f32 %v1863, %v2186
    %v2621 = vadd.f32 %v1866, %v2192
    %v2622 = vadd.f32 %v1869, %v2198
    %v2623 = vadd.f32 %v1872, %v2205
    %v2624 = vadd.f32 %v1875, %v2211
    %v2625 = vadd.f32 %v1878, %v2217
    %v2626 = vadd.f32 %v1881, %v2224
    %v2627 = vadd.f32 %v1884, %v2230
    %v2628 = vadd.f32 %v1887, %v2236
    %v2629 = vadd.f32 %v1890, %v2243
    %v2630 = vadd.f32 %v1893, %v2249
    %v2631 = vadd.f32 %v1896, %v2255
    %v2632 = vadd.f32 %v1899, %v2262
    %v2633 = vadd.f32 %v1902, %v2268
    %v2634 = vadd.f32 %v1905, %v2274
    %v2635 = vadd.f32 %v1908, %v2281
    %v2636 = vadd.f32 %v1911, %v2287
    %v2637 = vadd.f32 %v1914, %v2293
    %v2638 = vadd.f32 %v1917, %v2300
    %v2639 = vadd.f32 %v1920, %v2306
    %v2640 = vadd.f32 %v1923, %v2312
    %v2641 = vadd.f32 %v1926, %v2319
    %v2642 = vadd.f32 %v1929, %v2325
    %v2643 = vadd.f32 %v1932, %v2331
    %v2644 = vadd.f32 %v1935, %v2338
    %v2645 = vadd.f32 %v1938, %v2344
    %v2646 = vadd.f32 %v1941, %v2350
    %v2647 = vadd.f32 %v1944, %v2357
    %v2648 = vadd.f32 %v1947, %v2363
    %v2649 = vadd.f32 %v1950, %v2369
    %v2650 = vadd.f32 %v1953, %v2376
    %v2651 = vadd.f32 %v1956, %v2382
    %v2652 = vadd.f32 %v1959, %v2388
    %v2653 = vadd.f32 %v1962, %v2395
    %v2654 = vadd.f32 %v1965, %v2401
    %v2655 = vadd.f32 %v1968, %v2407
    %v2656 = vadd.f32 %v1971, %v2414
    %v2657 = vadd.f32 %v1974, %v2420
    %v2658 = vadd.f32 %v1977, %v2426
    %v2659 = vadd.f32 %v1980, %v2433
    %v2660 = vadd.f32 %v1983, %v2439
    %v2661 = vadd.f32 %v1986, %v2445
    %2806 = vset.pattern.permute.xlu0 0
    %2807 = vperm.xlu0 %2806, %v2518
    %v2808 = vpop.permute.xlu0 %2807
    %2809 = vset.pattern.permute.xlu0 0
    %2810 = vperm.xlu0 %2809, %v2519
    %v2811 = vpop.permute.xlu0 %2810
    %2812 = vset.pattern.permute.xlu0 0
    %2813 = vperm.xlu0 %2812, %v2520
    %v2814 = vpop.permute.xlu0 %2813
    %2815 = vset.pattern.permute.xlu0 0
    %2816 = vperm.xlu0 %2815, %v2521
    %v2817 = vpop.permute.xlu0 %2816
    %2818 = vset.pattern.permute.xlu0 0
    %2819 = vperm.xlu0 %2818, %v2522
    %v2820 = vpop.permute.xlu0 %2819
    %2821 = vset.pattern.permute.xlu0 0
    %2822 = vperm.xlu0 %2821, %v2523
    %v2823 = vpop.permute.xlu0 %2822
    %2824 = vset.pattern.permute.xlu0 0
    %2825 = vperm.xlu0 %2824, %v2524
    %v2826 = vpop.permute.xlu0 %2825
    %2827 = vset.pattern.permute.xlu0 0
    %2828 = vperm.xlu0 %2827, %v2525
    %v2829 = vpop.permute.xlu0 %2828
    %2830 = vset.pattern.permute.xlu0 0
    %2831 = vperm.xlu0 %2830, %v2526
    %v2832 = vpop.permute.xlu0 %2831
    %2833 = vset.pattern.permute.xlu0 0
    %2834 = vperm.xlu0 %2833, %v2527
    %v2835 = vpop.permute.xlu0 %2834
    %2836 = vset.pattern.permute.xlu0 0
    %2837 = vperm.xlu0 %2836, %v2528
    %v2838 = vpop.permute.xlu0 %2837
    %2839 = vset.pattern.permute.xlu0 0
    %2840 = vperm.xlu0 %2839, %v2529
    %v2841 = vpop.permute.xlu0 %2840
    %2842 = vset.pattern.permute.xlu0 0
    %2843 = vperm.xlu0 %2842, %v2530
    %v2844 = vpop.permute.xlu0 %2843
    %2845 = vset.pattern.permute.xlu0 0
    %2846 = vperm.xlu0 %2845, %v2531
    %v2847 = vpop.permute.xlu0 %2846
    %2848 = vset.pattern.permute.xlu0 0
    %2849 = vperm.xlu0 %2848, %v2532
    %v2850 = vpop.permute.xlu0 %2849
    %2851 = vset.pattern.permute.xlu0 0
    %2852 = vperm.xlu0 %2851, %v2533
    %v2853 = vpop.permute.xlu0 %2852
    %2854 = vset.pattern.permute.xlu0 0
    %2855 = vperm.xlu0 %2854, %v2534
    %v2856 = vpop.permute.xlu0 %2855
    %2857 = vset.pattern.permute.xlu0 0
    %2858 = vperm.xlu0 %2857, %v2535
    %v2859 = vpop.permute.xlu0 %2858
    %2860 = vset.pattern.permute.xlu0 0
    %2861 = vperm.xlu0 %2860, %v2536
    %v2862 = vpop.permute.xlu0 %2861
    %2863 = vset.pattern.permute.xlu0 0
    %2864 = vperm.xlu0 %2863, %v2537
    %v2865 = vpop.permute.xlu0 %2864
    %2866 = vset.pattern.permute.xlu0 0
    %2867 = vperm.xlu0 %2866, %v2538
    %v2868 = vpop.permute.xlu0 %2867
    %2869 = vset.pattern.permute.xlu0 0
    %2870 = vperm.xlu0 %2869, %v2539
    %v2871 = vpop.permute.xlu0 %2870
    %2872 = vset.pattern.permute.xlu0 0
    %2873 = vperm.xlu0 %2872, %v2540
    %v2874 = vpop.permute.xlu0 %2873
    %2875 = vset.pattern.permute.xlu0 0
    %2876 = vperm.xlu0 %2875, %v2541
    %v2877 = vpop.permute.xlu0 %2876
    %2878 = vset.pattern.permute.xlu0 0
    %2879 = vperm.xlu0 %2878, %v2542
    %v2880 = vpop.permute.xlu0 %2879
    %2881 = vset.pattern.permute.xlu0 0
    %2882 = vperm.xlu0 %2881, %v2543
    %v2883 = vpop.permute.xlu0 %2882
    %2884 = vset.pattern.permute.xlu0 0
    %2885 = vperm.xlu0 %2884, %v2544
    %v2886 = vpop.permute.xlu0 %2885
    %2887 = vset.pattern.permute.xlu0 0
    %2888 = vperm.xlu0 %2887, %v2545
    %v2889 = vpop.permute.xlu0 %2888
    %2890 = vset.pattern.permute.xlu0 0
    %2891 = vperm.xlu0 %2890, %v2546
    %v2892 = vpop.permute.xlu0 %2891
    %2893 = vset.pattern.permute.xlu0 0
    %2894 = vperm.xlu0 %2893, %v2547
    %v2895 = vpop.permute.xlu0 %2894
    %2896 = vset.pattern.permute.xlu0 0
    %2897 = vperm.xlu0 %2896, %v2548
    %v2898 = vpop.permute.xlu0 %2897
    %2899 = vset.pattern.permute.xlu0 0
    %2900 = vperm.xlu0 %2899, %v2549
    %v2901 = vpop.permute.xlu0 %2900
    %2902 = vset.pattern.permute.xlu0 0
    %2903 = vperm.xlu0 %2902, %v2550
    %v2904 = vpop.permute.xlu0 %2903
    %2905 = vset.pattern.permute.xlu0 0
    %2906 = vperm.xlu0 %2905, %v2551
    %v2907 = vpop.permute.xlu0 %2906
    %2908 = vset.pattern.permute.xlu0 0
    %2909 = vperm.xlu0 %2908, %v2552
    %v2910 = vpop.permute.xlu0 %2909
    %2911 = vset.pattern.permute.xlu0 0
    %2912 = vperm.xlu0 %2911, %v2553
    %v2913 = vpop.permute.xlu0 %2912
    %2914 = vset.pattern.permute.xlu0 0
    %2915 = vperm.xlu0 %2914, %v2554
    %v2916 = vpop.permute.xlu0 %2915
    %2917 = vset.pattern.permute.xlu0 0
    %2918 = vperm.xlu0 %2917, %v2555
    %v2919 = vpop.permute.xlu0 %2918
    %2920 = vset.pattern.permute.xlu0 0
    %2921 = vperm.xlu0 %2920, %v2556
    %v2922 = vpop.permute.xlu0 %2921
    %2923 = vset.pattern.permute.xlu0 0
    %2924 = vperm.xlu0 %2923, %v2557
    %v2925 = vpop.permute.xlu0 %2924
    %2926 = vset.pattern.permute.xlu0 0
    %2927 = vperm.xlu0 %2926, %v2558
    %v2928 = vpop.permute.xlu0 %2927
    %2929 = vset.pattern.permute.xlu0 0
    %2930 = vperm.xlu0 %2929, %v2559
    %v2931 = vpop.permute.xlu0 %2930
    %2932 = vset.pattern.permute.xlu0 0
    %2933 = vperm.xlu0 %2932, %v2560
    %v2934 = vpop.permute.xlu0 %2933
    %2935 = vset.pattern.permute.xlu0 0
    %2936 = vperm.xlu0 %2935, %v2561
    %v2937 = vpop.permute.xlu0 %2936
    %2938 = vset.pattern.permute.xlu0 0
    %2939 = vperm.xlu0 %2938, %v2562
    %v2940 = vpop.permute.xlu0 %2939
    %2941 = vset.pattern.permute.xlu0 0
    %2942 = vperm.xlu0 %2941, %v2563
    %v2943 = vpop.permute.xlu0 %2942
    %2944 = vset.pattern.permute.xlu0 0
    %2945 = vperm.xlu0 %2944, %v2564
    %v2946 = vpop.permute.xlu0 %2945
    %2947 = vset.pattern.permute.xlu0 0
    %2948 = vperm.xlu0 %2947, %v2565
    %v2949 = vpop.permute.xlu0 %2948
    %2950 = vset.pattern.permute.xlu0 0
    %2951 = vperm.xlu0 %2950, %v2566
    %v2952 = vpop.permute.xlu0 %2951
    %2953 = vset.pattern.permute.xlu0 0
    %2954 = vperm.xlu0 %2953, %v2567
    %v2955 = vpop.permute.xlu0 %2954
    %2956 = vset.pattern.permute.xlu0 0
    %2957 = vperm.xlu0 %2956, %v2568
    %v2958 = vpop.permute.xlu0 %2957
    %2959 = vset.pattern.permute.xlu0 0
    %2960 = vperm.xlu0 %2959, %v2569
    %v2961 = vpop.permute.xlu0 %2960
    %2962 = vset.pattern.permute.xlu0 0
    %2963 = vperm.xlu0 %2962, %v2570
    %v2964 = vpop.permute.xlu0 %2963
    %2965 = vset.pattern.permute.xlu0 0
    %2966 = vperm.xlu0 %2965, %v2571
    %v2967 = vpop.permute.xlu0 %2966
    %2968 = vset.pattern.permute.xlu0 0
    %2969 = vperm.xlu0 %2968, %v2572
    %v2970 = vpop.permute.xlu0 %2969
    %2971 = vset.pattern.permute.xlu0 0
    %2972 = vperm.xlu0 %2971, %v2573
    %v2973 = vpop.permute.xlu0 %2972
    %2974 = vset.pattern.permute.xlu0 0
    %2975 = vperm.xlu0 %2974, %v2574
    %v2976 = vpop.permute.xlu0 %2975
    %2977 = vset.pattern.permute.xlu0 0
    %2978 = vperm.xlu0 %2977, %v2575
    %v2979 = vpop.permute.xlu0 %2978
    %2980 = vset.pattern.permute.xlu0 0
    %2981 = vperm.xlu0 %2980, %v2576
    %v2982 = vpop.permute.xlu0 %2981
    %2983 = vset.pattern.permute.xlu0 0
    %2984 = vperm.xlu0 %2983, %v2577
    %v2985 = vpop.permute.xlu0 %2984
    %2986 = vset.pattern.permute.xlu0 0
    %2987 = vperm.xlu0 %2986, %v2578
    %v2988 = vpop.permute.xlu0 %2987
    %2989 = vset.pattern.permute.xlu0 0
    %2990 = vperm.xlu0 %2989, %v2579
    %v2991 = vpop.permute.xlu0 %2990
    %2992 = vset.pattern.permute.xlu0 0
    %2993 = vperm.xlu0 %2992, %v2580
    %v2994 = vpop.permute.xlu0 %2993
    %2995 = vset.pattern.permute.xlu0 0
    %2996 = vperm.xlu0 %2995, %v2581
    %v2997 = vpop.permute.xlu0 %2996
    %2998 = vset.pattern.permute.xlu0 0
    %2999 = vperm.xlu0 %2998, %v2582
    %v3000 = vpop.permute.xlu0 %2999
    %3001 = vset.pattern.permute.xlu0 0
    %3002 = vperm.xlu0 %3001, %v2583
    %v3003 = vpop.permute.xlu0 %3002
    %3004 = vset.pattern.permute.xlu0 0
    %3005 = vperm.xlu0 %3004, %v2584
    %v3006 = vpop.permute.xlu0 %3005
    %3007 = vset.pattern.permute.xlu0 0
    %3008 = vperm.xlu0 %3007, %v2585
    %v3009 = vpop.permute.xlu0 %3008
    %3010 = vset.pattern.permute.xlu0 0
    %3011 = vperm.xlu0 %3010, %v2586
    %v3012 = vpop.permute.xlu0 %3011
    %3013 = vset.pattern.permute.xlu0 0
    %3014 = vperm.xlu0 %3013, %v2587
    %v3015 = vpop.permute.xlu0 %3014
    %3016 = vset.pattern.permute.xlu0 0
    %3017 = vperm.xlu0 %3016, %v2588
    %v3018 = vpop.permute.xlu0 %3017
    %3019 = vset.pattern.permute.xlu0 0
    %3020 = vperm.xlu0 %3019, %v2589
    %v3021 = vpop.permute.xlu0 %3020
    %3022 = vset.pattern.permute.xlu0 0
    %3023 = vperm.xlu0 %3022, %v2590
    %v3024 = vpop.permute.xlu0 %3023
    %3025 = vset.pattern.permute.xlu0 0
    %3026 = vperm.xlu0 %3025, %v2591
    %v3027 = vpop.permute.xlu0 %3026
    %3028 = vset.pattern.permute.xlu0 0
    %3029 = vperm.xlu0 %3028, %v2592
    %v3030 = vpop.permute.xlu0 %3029
    %3031 = vset.pattern.permute.xlu0 0
    %3032 = vperm.xlu0 %3031, %v2593
    %v3033 = vpop.permute.xlu0 %3032
    %3034 = vset.pattern.permute.xlu0 0
    %3035 = vperm.xlu0 %3034, %v2594
    %v3036 = vpop.permute.xlu0 %3035
    %3037 = vset.pattern.permute.xlu0 0
    %3038 = vperm.xlu0 %3037, %v2595
    %v3039 = vpop.permute.xlu0 %3038
    %3040 = vset.pattern.permute.xlu0 0
    %3041 = vperm.xlu0 %3040, %v2596
    %v3042 = vpop.permute.xlu0 %3041
    %3043 = vset.pattern.permute.xlu0 0
    %3044 = vperm.xlu0 %3043, %v2597
    %v3045 = vpop.permute.xlu0 %3044
    %3046 = vset.pattern.permute.xlu0 0
    %3047 = vperm.xlu0 %3046, %v2598
    %v3048 = vpop.permute.xlu0 %3047
    %3049 = vset.pattern.permute.xlu0 0
    %3050 = vperm.xlu0 %3049, %v2599
    %v3051 = vpop.permute.xlu0 %3050
    %3052 = vset.pattern.permute.xlu0 0
    %3053 = vperm.xlu0 %3052, %v2600
    %v3054 = vpop.permute.xlu0 %3053
    %3055 = vset.pattern.permute.xlu0 0
    %3056 = vperm.xlu0 %3055, %v2601
    %v3057 = vpop.permute.xlu0 %3056
    %3058 = vset.pattern.permute.xlu0 0
    %3059 = vperm.xlu0 %3058, %v2602
    %v3060 = vpop.permute.xlu0 %3059
    %3061 = vset.pattern.permute.xlu0 0
    %3062 = vperm.xlu0 %3061, %v2603
    %v3063 = vpop.permute.xlu0 %3062
    %3064 = vset.pattern.permute.xlu0 0
    %3065 = vperm.xlu0 %3064, %v2604
    %v3066 = vpop.permute.xlu0 %3065
    %3067 = vset.pattern.permute.xlu0 0
    %3068 = vperm.xlu0 %3067, %v2605
    %v3069 = vpop.permute.xlu0 %3068
    %3070 = vset.pattern.permute.xlu0 0
    %3071 = vperm.xlu0 %3070, %v2606
    %v3072 = vpop.permute.xlu0 %3071
    %3073 = vset.pattern.permute.xlu0 0
    %3074 = vperm.xlu0 %3073, %v2607
    %v3075 = vpop.permute.xlu0 %3074
    %3076 = vset.pattern.permute.xlu0 0
    %3077 = vperm.xlu0 %3076, %v2608
    %v3078 = vpop.permute.xlu0 %3077
    %3079 = vset.pattern.permute.xlu0 0
    %3080 = vperm.xlu0 %3079, %v2609
    %v3081 = vpop.permute.xlu0 %3080
    %3082 = vset.pattern.permute.xlu0 0
    %3083 = vperm.xlu0 %3082, %v2610
    %v3084 = vpop.permute.xlu0 %3083
    %3085 = vset.pattern.permute.xlu0 0
    %3086 = vperm.xlu0 %3085, %v2611
    %v3087 = vpop.permute.xlu0 %3086
    %3088 = vset.pattern.permute.xlu0 0
    %3089 = vperm.xlu0 %3088, %v2612
    %v3090 = vpop.permute.xlu0 %3089
    %3091 = vset.pattern.permute.xlu0 0
    %3092 = vperm.xlu0 %3091, %v2613
    %v3093 = vpop.permute.xlu0 %3092
    %3094 = vset.pattern.permute.xlu0 0
    %3095 = vperm.xlu0 %3094, %v2614
    %v3096 = vpop.permute.xlu0 %3095
    %3097 = vset.pattern.permute.xlu0 0
    %3098 = vperm.xlu0 %3097, %v2615
    %v3099 = vpop.permute.xlu0 %3098
    %3100 = vset.pattern.permute.xlu0 0
    %3101 = vperm.xlu0 %3100, %v2616
    %v3102 = vpop.permute.xlu0 %3101
    %3103 = vset.pattern.permute.xlu0 0
    %3104 = vperm.xlu0 %3103, %v2617
    %v3105 = vpop.permute.xlu0 %3104
    %3106 = vset.pattern.permute.xlu0 0
    %3107 = vperm.xlu0 %3106, %v2618
    %v3108 = vpop.permute.xlu0 %3107
    %3109 = vset.pattern.permute.xlu0 0
    %3110 = vperm.xlu0 %3109, %v2619
    %v3111 = vpop.permute.xlu0 %3110
    %3112 = vset.pattern.permute.xlu0 0
    %3113 = vperm.xlu0 %3112, %v2620
    %v3114 = vpop.permute.xlu0 %3113
    %3115 = vset.pattern.permute.xlu0 0
    %3116 = vperm.xlu0 %3115, %v2621
    %v3117 = vpop.permute.xlu0 %3116
    %3118 = vset.pattern.permute.xlu0 0
    %3119 = vperm.xlu0 %3118, %v2622
    %v3120 = vpop.permute.xlu0 %3119
    %3121 = vset.pattern.permute.xlu0 0
    %3122 = vperm.xlu0 %3121, %v2623
    %v3123 = vpop.permute.xlu0 %3122
    %3124 = vset.pattern.permute.xlu0 0
    %3125 = vperm.xlu0 %3124, %v2624
    %v3126 = vpop.permute.xlu0 %3125
    %3127 = vset.pattern.permute.xlu0 0
    %3128 = vperm.xlu0 %3127, %v2625
    %v3129 = vpop.permute.xlu0 %3128
    %3130 = vset.pattern.permute.xlu0 0
    %3131 = vperm.xlu0 %3130, %v2626
    %v3132 = vpop.permute.xlu0 %3131
    %3133 = vset.pattern.permute.xlu0 0
    %3134 = vperm.xlu0 %3133, %v2627
    %v3135 = vpop.permute.xlu0 %3134
    %3136 = vset.pattern.permute.xlu0 0
    %3137 = vperm.xlu0 %3136, %v2628
    %v3138 = vpop.permute.xlu0 %3137
    %3139 = vset.pattern.permute.xlu0 0
    %3140 = vperm.xlu0 %3139, %v2629
    %v3141 = vpop.permute.xlu0 %3140
    %3142 = vset.pattern.permute.xlu0 0
    %3143 = vperm.xlu0 %3142, %v2630
    %v3144 = vpop.permute.xlu0 %3143
    %3145 = vset.pattern.permute.xlu0 0
    %3146 = vperm.xlu0 %3145, %v2631
    %v3147 = vpop.permute.xlu0 %3146
    %3148 = vset.pattern.permute.xlu0 0
    %3149 = vperm.xlu0 %3148, %v2632
    %v3150 = vpop.permute.xlu0 %3149
    %3151 = vset.pattern.permute.xlu0 0
    %3152 = vperm.xlu0 %3151, %v2633
    %v3153 = vpop.permute.xlu0 %3152
    %3154 = vset.pattern.permute.xlu0 0
    %3155 = vperm.xlu0 %3154, %v2634
    %v3156 = vpop.permute.xlu0 %3155
    %3157 = vset.pattern.permute.xlu0 0
    %3158 = vperm.xlu0 %3157, %v2635
    %v3159 = vpop.permute.xlu0 %3158
    %3160 = vset.pattern.permute.xlu0 0
    %3161 = vperm.xlu0 %3160, %v2636
    %v3162 = vpop.permute.xlu0 %3161
    %3163 = vset.pattern.permute.xlu0 0
    %3164 = vperm.xlu0 %3163, %v2637
    %v3165 = vpop.permute.xlu0 %3164
    %3166 = vset.pattern.permute.xlu0 0
    %3167 = vperm.xlu0 %3166, %v2638
    %v3168 = vpop.permute.xlu0 %3167
    %3169 = vset.pattern.permute.xlu0 0
    %3170 = vperm.xlu0 %3169, %v2639
    %v3171 = vpop.permute.xlu0 %3170
    %3172 = vset.pattern.permute.xlu0 0
    %3173 = vperm.xlu0 %3172, %v2640
    %v3174 = vpop.permute.xlu0 %3173
    %3175 = vset.pattern.permute.xlu0 0
    %3176 = vperm.xlu0 %3175, %v2641
    %v3177 = vpop.permute.xlu0 %3176
    %3178 = vset.pattern.permute.xlu0 0
    %3179 = vperm.xlu0 %3178, %v2642
    %v3180 = vpop.permute.xlu0 %3179
    %3181 = vset.pattern.permute.xlu0 0
    %3182 = vperm.xlu0 %3181, %v2643
    %v3183 = vpop.permute.xlu0 %3182
    %3184 = vset.pattern.permute.xlu0 0
    %3185 = vperm.xlu0 %3184, %v2644
    %v3186 = vpop.permute.xlu0 %3185
    %3187 = vset.pattern.permute.xlu0 0
    %3188 = vperm.xlu0 %3187, %v2645
    %v3189 = vpop.permute.xlu0 %3188
    %3190 = vset.pattern.permute.xlu0 0
    %3191 = vperm.xlu0 %3190, %v2646
    %v3192 = vpop.permute.xlu0 %3191
    %3193 = vset.pattern.permute.xlu0 0
    %3194 = vperm.xlu0 %3193, %v2647
    %v3195 = vpop.permute.xlu0 %3194
    %3196 = vset.pattern.permute.xlu0 0
    %3197 = vperm.xlu0 %3196, %v2648
    %v3198 = vpop.permute.xlu0 %3197
    %3199 = vset.pattern.permute.xlu0 0
    %3200 = vperm.xlu0 %3199, %v2649
    %v3201 = vpop.permute.xlu0 %3200
    %3202 = vset.pattern.permute.xlu0 0
    %3203 = vperm.xlu0 %3202, %v2650
    %v3204 = vpop.permute.xlu0 %3203
    %3205 = vset.pattern.permute.xlu0 0
    %3206 = vperm.xlu0 %3205, %v2651
    %v3207 = vpop.permute.xlu0 %3206
    %3208 = vset.pattern.permute.xlu0 0
    %3209 = vperm.xlu0 %3208, %v2652
    %v3210 = vpop.permute.xlu0 %3209
    %3211 = vset.pattern.permute.xlu0 0
    %3212 = vperm.xlu0 %3211, %v2653
    %v3213 = vpop.permute.xlu0 %3212
    %3214 = vset.pattern.permute.xlu0 0
    %3215 = vperm.xlu0 %3214, %v2654
    %v3216 = vpop.permute.xlu0 %3215
    %3217 = vset.pattern.permute.xlu0 0
    %3218 = vperm.xlu0 %3217, %v2655
    %v3219 = vpop.permute.xlu0 %3218
    %3220 = vset.pattern.permute.xlu0 0
    %3221 = vperm.xlu0 %3220, %v2656
    %v3222 = vpop.permute.xlu0 %3221
    %3223 = vset.pattern.permute.xlu0 0
    %3224 = vperm.xlu0 %3223, %v2657
    %v3225 = vpop.permute.xlu0 %3224
    %3226 = vset.pattern.permute.xlu0 0
    %3227 = vperm.xlu0 %3226, %v2658
    %v3228 = vpop.permute.xlu0 %3227
    %3229 = vset.pattern.permute.xlu0 0
    %3230 = vperm.xlu0 %3229, %v2659
    %v3231 = vpop.permute.xlu0 %3230
    %3232 = vset.pattern.permute.xlu0 0
    %3233 = vperm.xlu0 %3232, %v2660
    %v3234 = vpop.permute.xlu0 %3233
    %3235 = vset.pattern.permute.xlu0 0
    %3236 = vperm.xlu0 %3235, %v2661
    %v3237 = vpop.permute.xlu0 %3236
    %v3238 = vlaneseq
    %v3239 = vand.u32 %v3238, 127
    %v3240 = vperm.slane %v2808, %v3239
    %v3241 = vadd.s32 %v3239, 4294967288
    %v3242 = vperm.slane %v2811, %v3241
    %vm3243 = vcmask 130112
    %v3244 = vsel %vm3243, %v3242, %v3240
    %v3245 = vadd.s32 %v3239, 4294967280
    %v3246 = vperm.slane %v2814, %v3245
    %vm3247 = vcmask 195712
    %v3248 = vsel %vm3247, %v3246, %v3244
    %v3249 = vperm.slane %v2817, %v3239
    %v3250 = vperm.slane %v2820, %v3241
    %v3251 = vsel %vm3243, %v3250, %v3249
    %v3252 = vperm.slane %v2823, %v3245
    %v3253 = vsel %vm3247, %v3252, %v3251
    %v3254 = vperm.slane %v2826, %v3239
    %v3255 = vperm.slane %v2829, %v3241
    %v3256 = vsel %vm3243, %v3255, %v3254
    %v3257 = vperm.slane %v2832, %v3245
    %v3258 = vsel %vm3247, %v3257, %v3256
    %v3259 = vperm.slane %v2835, %v3239
    %v3260 = vperm.slane %v2838, %v3241
    %v3261 = vsel %vm3243, %v3260, %v3259
    %v3262 = vperm.slane %v2841, %v3245
    %v3263 = vsel %vm3247, %v3262, %v3261
    %v3264 = vperm.slane %v2844, %v3239
    %v3265 = vperm.slane %v2847, %v3241
    %v3266 = vsel %vm3243, %v3265, %v3264
    %v3267 = vperm.slane %v2850, %v3245
    %v3268 = vsel %vm3247, %v3267, %v3266
    %v3269 = vperm.slane %v2853, %v3239
    %v3270 = vperm.slane %v2856, %v3241
    %v3271 = vsel %vm3243, %v3270, %v3269
    %v3272 = vperm.slane %v2859, %v3245
    %v3273 = vsel %vm3247, %v3272, %v3271
    %v3274 = vperm.slane %v2862, %v3239
    %v3275 = vperm.slane %v2865, %v3241
    %v3276 = vsel %vm3243, %v3275, %v3274
    %v3277 = vperm.slane %v2868, %v3245
    %v3278 = vsel %vm3247, %v3277, %v3276
    %v3279 = vperm.slane %v2871, %v3239
    %v3280 = vperm.slane %v2874, %v3241
    %v3281 = vsel %vm3243, %v3280, %v3279
    %v3282 = vperm.slane %v2877, %v3245
    %v3283 = vsel %vm3247, %v3282, %v3281
    %v3284 = vperm.slane %v2880, %v3239
    %v3285 = vperm.slane %v2883, %v3241
    %v3286 = vsel %vm3243, %v3285, %v3284
    %v3287 = vperm.slane %v2886, %v3245
    %v3288 = vsel %vm3247, %v3287, %v3286
    %v3289 = vperm.slane %v2889, %v3239
    %v3290 = vperm.slane %v2892, %v3241
    %v3291 = vsel %vm3243, %v3290, %v3289
    %v3292 = vperm.slane %v2895, %v3245
    %v3293 = vsel %vm3247, %v3292, %v3291
    %v3294 = vperm.slane %v2898, %v3239
    %v3295 = vperm.slane %v2901, %v3241
    %v3296 = vsel %vm3243, %v3295, %v3294
    %v3297 = vperm.slane %v2904, %v3245
    %v3298 = vsel %vm3247, %v3297, %v3296
    %v3299 = vperm.slane %v2907, %v3239
    %v3300 = vperm.slane %v2910, %v3241
    %v3301 = vsel %vm3243, %v3300, %v3299
    %v3302 = vperm.slane %v2913, %v3245
    %v3303 = vsel %vm3247, %v3302, %v3301
    %v3304 = vperm.slane %v2916, %v3239
    %v3305 = vperm.slane %v2919, %v3241
    %v3306 = vsel %vm3243, %v3305, %v3304
    %v3307 = vperm.slane %v2922, %v3245
    %v3308 = vsel %vm3247, %v3307, %v3306
    %v3309 = vperm.slane %v2925, %v3239
    %v3310 = vperm.slane %v2928, %v3241
    %v3311 = vsel %vm3243, %v3310, %v3309
    %v3312 = vperm.slane %v2931, %v3245
    %v3313 = vsel %vm3247, %v3312, %v3311
    %v3314 = vperm.slane %v2934, %v3239
    %v3315 = vperm.slane %v2937, %v3241
    %v3316 = vsel %vm3243, %v3315, %v3314
    %v3317 = vperm.slane %v2940, %v3245
    %v3318 = vsel %vm3247, %v3317, %v3316
    %v3319 = vperm.slane %v2943, %v3239
    %v3320 = vperm.slane %v2946, %v3241
    %v3321 = vsel %vm3243, %v3320, %v3319
    %v3322 = vperm.slane %v2949, %v3245
    %v3323 = vsel %vm3247, %v3322, %v3321
    %v3324 = vperm.slane %v2952, %v3239
    %v3325 = vperm.slane %v2955, %v3241
    %v3326 = vsel %vm3243, %v3325, %v3324
    %v3327 = vperm.slane %v2958, %v3245
    %v3328 = vsel %vm3247, %v3327, %v3326
    %v3329 = vperm.slane %v2961, %v3239
    %v3330 = vperm.slane %v2964, %v3241
    %v3331 = vsel %vm3243, %v3330, %v3329
    %v3332 = vperm.slane %v2967, %v3245
    %v3333 = vsel %vm3247, %v3332, %v3331
    %v3334 = vperm.slane %v2970, %v3239
    %v3335 = vperm.slane %v2973, %v3241
    %v3336 = vsel %vm3243, %v3335, %v3334
    %v3337 = vperm.slane %v2976, %v3245
    %v3338 = vsel %vm3247, %v3337, %v3336
    %v3339 = vperm.slane %v2979, %v3239
    %v3340 = vperm.slane %v2982, %v3241
    %v3341 = vsel %vm3243, %v3340, %v3339
    %v3342 = vperm.slane %v2985, %v3245
    %v3343 = vsel %vm3247, %v3342, %v3341
    %v3344 = vperm.slane %v2988, %v3239
    %v3345 = vperm.slane %v2991, %v3241
    %v3346 = vsel %vm3243, %v3345, %v3344
    %v3347 = vperm.slane %v2994, %v3245
    %v3348 = vsel %vm3247, %v3347, %v3346
    %v3349 = vperm.slane %v2997, %v3239
    %v3350 = vperm.slane %v3000, %v3241
    %v3351 = vsel %vm3243, %v3350, %v3349
    %v3352 = vperm.slane %v3003, %v3245
    %v3353 = vsel %vm3247, %v3352, %v3351
    %v3354 = vperm.slane %v3006, %v3239
    %v3355 = vperm.slane %v3009, %v3241
    %v3356 = vsel %vm3243, %v3355, %v3354
    %v3357 = vperm.slane %v3012, %v3245
    %v3358 = vsel %vm3247, %v3357, %v3356
    %v3359 = vperm.slane %v3015, %v3239
    %v3360 = vperm.slane %v3018, %v3241
    %v3361 = vsel %vm3243, %v3360, %v3359
    %v3362 = vperm.slane %v3021, %v3245
    %v3363 = vsel %vm3247, %v3362, %v3361
    %v3364 = vperm.slane %v3024, %v3239
    %v3365 = vperm.slane %v3027, %v3241
    %v3366 = vsel %vm3243, %v3365, %v3364
    %v3367 = vperm.slane %v3030, %v3245
    %v3368 = vsel %vm3247, %v3367, %v3366
    %v3369 = vperm.slane %v3033, %v3239
    %v3370 = vperm.slane %v3036, %v3241
    %v3371 = vsel %vm3243, %v3370, %v3369
    %v3372 = vperm.slane %v3039, %v3245
    %v3373 = vsel %vm3247, %v3372, %v3371
    %v3374 = vperm.slane %v3042, %v3239
    %v3375 = vperm.slane %v3045, %v3241
    %v3376 = vsel %vm3243, %v3375, %v3374
    %v3377 = vperm.slane %v3048, %v3245
    %v3378 = vsel %vm3247, %v3377, %v3376
    %v3379 = vperm.slane %v3051, %v3239
    %v3380 = vperm.slane %v3054, %v3241
    %v3381 = vsel %vm3243, %v3380, %v3379
    %v3382 = vperm.slane %v3057, %v3245
    %v3383 = vsel %vm3247, %v3382, %v3381
    %v3384 = vperm.slane %v3060, %v3239
    %v3385 = vperm.slane %v3063, %v3241
    %v3386 = vsel %vm3243, %v3385, %v3384
    %v3387 = vperm.slane %v3066, %v3245
    %v3388 = vsel %vm3247, %v3387, %v3386
    %v3389 = vperm.slane %v3069, %v3239
    %v3390 = vperm.slane %v3072, %v3241
    %v3391 = vsel %vm3243, %v3390, %v3389
    %v3392 = vperm.slane %v3075, %v3245
    %v3393 = vsel %vm3247, %v3392, %v3391
    %v3394 = vperm.slane %v3078, %v3239
    %v3395 = vperm.slane %v3081, %v3241
    %v3396 = vsel %vm3243, %v3395, %v3394
    %v3397 = vperm.slane %v3084, %v3245
    %v3398 = vsel %vm3247, %v3397, %v3396
    %v3399 = vperm.slane %v3087, %v3239
    %v3400 = vperm.slane %v3090, %v3241
    %v3401 = vsel %vm3243, %v3400, %v3399
    %v3402 = vperm.slane %v3093, %v3245
    %v3403 = vsel %vm3247, %v3402, %v3401
    %v3404 = vperm.slane %v3096, %v3239
    %v3405 = vperm.slane %v3099, %v3241
    %v3406 = vsel %vm3243, %v3405, %v3404
    %v3407 = vperm.slane %v3102, %v3245
    %v3408 = vsel %vm3247, %v3407, %v3406
    %v3409 = vperm.slane %v3105, %v3239
    %v3410 = vperm.slane %v3108, %v3241
    %v3411 = vsel %vm3243, %v3410, %v3409
    %v3412 = vperm.slane %v3111, %v3245
    %v3413 = vsel %vm3247, %v3412, %v3411
    %v3414 = vperm.slane %v3114, %v3239
    %v3415 = vperm.slane %v3117, %v3241
    %v3416 = vsel %vm3243, %v3415, %v3414
    %v3417 = vperm.slane %v3120, %v3245
    %v3418 = vsel %vm3247, %v3417, %v3416
    %v3419 = vperm.slane %v3123, %v3239
    %v3420 = vperm.slane %v3126, %v3241
    %v3421 = vsel %vm3243, %v3420, %v3419
    %v3422 = vperm.slane %v3129, %v3245
    %v3423 = vsel %vm3247, %v3422, %v3421
    %v3424 = vperm.slane %v3132, %v3239
    %v3425 = vperm.slane %v3135, %v3241
    %v3426 = vsel %vm3243, %v3425, %v3424
    %v3427 = vperm.slane %v3138, %v3245
    %v3428 = vsel %vm3247, %v3427, %v3426
    %v3429 = vperm.slane %v3141, %v3239
    %v3430 = vperm.slane %v3144, %v3241
    %v3431 = vsel %vm3243, %v3430, %v3429
    %v3432 = vperm.slane %v3147, %v3245
    %v3433 = vsel %vm3247, %v3432, %v3431
    %v3434 = vperm.slane %v3150, %v3239
    %v3435 = vperm.slane %v3153, %v3241
    %v3436 = vsel %vm3243, %v3435, %v3434
    %v3437 = vperm.slane %v3156, %v3245
    %v3438 = vsel %vm3247, %v3437, %v3436
    %v3439 = vperm.slane %v3159, %v3239
    %v3440 = vperm.slane %v3162, %v3241
    %v3441 = vsel %vm3243, %v3440, %v3439
    %v3442 = vperm.slane %v3165, %v3245
    %v3443 = vsel %vm3247, %v3442, %v3441
    %v3444 = vperm.slane %v3168, %v3239
    %v3445 = vperm.slane %v3171, %v3241
    %v3446 = vsel %vm3243, %v3445, %v3444
    %v3447 = vperm.slane %v3174, %v3245
    %v3448 = vsel %vm3247, %v3447, %v3446
    %v3449 = vperm.slane %v3177, %v3239
    %v3450 = vperm.slane %v3180, %v3241
    %v3451 = vsel %vm3243, %v3450, %v3449
    %v3452 = vperm.slane %v3183, %v3245
    %v3453 = vsel %vm3247, %v3452, %v3451
    %v3454 = vperm.slane %v3186, %v3239
    %v3455 = vperm.slane %v3189, %v3241
    %v3456 = vsel %vm3243, %v3455, %v3454
    %v3457 = vperm.slane %v3192, %v3245
    %v3458 = vsel %vm3247, %v3457, %v3456
    %v3459 = vperm.slane %v3195, %v3239
    %v3460 = vperm.slane %v3198, %v3241
    %v3461 = vsel %vm3243, %v3460, %v3459
    %v3462 = vperm.slane %v3201, %v3245
    %v3463 = vsel %vm3247, %v3462, %v3461
    %v3464 = vperm.slane %v3204, %v3239
    %v3465 = vperm.slane %v3207, %v3241
    %v3466 = vsel %vm3243, %v3465, %v3464
    %v3467 = vperm.slane %v3210, %v3245
    %v3468 = vsel %vm3247, %v3467, %v3466
    %v3469 = vperm.slane %v3213, %v3239
    %v3470 = vperm.slane %v3216, %v3241
    %v3471 = vsel %vm3243, %v3470, %v3469
    %v3472 = vperm.slane %v3219, %v3245
    %v3473 = vsel %vm3247, %v3472, %v3471
    %v3474 = vperm.slane %v3222, %v3239
    %v3475 = vperm.slane %v3225, %v3241
    %v3476 = vsel %vm3243, %v3475, %v3474
    %v3477 = vperm.slane %v3228, %v3245
    %v3478 = vsel %vm3247, %v3477, %v3476
    %v3479 = vperm.slane %v3231, %v3239
    %v3480 = vperm.slane %v3234, %v3241
    %v3481 = vsel %vm3243, %v3480, %v3479
    %v3482 = vperm.slane %v3237, %v3245
    %v3483 = vsel %vm3247, %v3482, %v3481
    %vm3484 = vcmask 1041409
    %v3485 = vsel %vm3484, %v3253, %v3248
    %vm3486 = vcmask 1042434
    %v3487 = vsel %vm3486, %v3258, %v3485
    %vm3488 = vcmask 1043459
    %v3489 = vsel %vm3488, %v3263, %v3487
    %vm3490 = vcmask 1044484
    %v3491 = vsel %vm3490, %v3268, %v3489
    %vm3492 = vcmask 1045509
    %v3493 = vsel %vm3492, %v3273, %v3491
    %vm3494 = vcmask 1046534
    %v3495 = vsel %vm3494, %v3278, %v3493
    %vm3496 = vcmask 1047559
    %v3497 = vsel %vm3496, %v3283, %v3495
    %v3498 = vsel %vm3484, %v3293, %v3288
    %v3499 = vsel %vm3486, %v3298, %v3498
    %v3500 = vsel %vm3488, %v3303, %v3499
    %v3501 = vsel %vm3490, %v3308, %v3500
    %v3502 = vsel %vm3492, %v3313, %v3501
    %v3503 = vsel %vm3494, %v3318, %v3502
    %v3504 = vsel %vm3496, %v3323, %v3503
    %v3505 = vsel %vm3484, %v3333, %v3328
    %v3506 = vsel %vm3486, %v3338, %v3505
    %v3507 = vsel %vm3488, %v3343, %v3506
    %v3508 = vsel %vm3490, %v3348, %v3507
    %v3509 = vsel %vm3492, %v3353, %v3508
    %v3510 = vsel %vm3494, %v3358, %v3509
    %v3511 = vsel %vm3496, %v3363, %v3510
    %v3512 = vsel %vm3484, %v3373, %v3368
    %v3513 = vsel %vm3486, %v3378, %v3512
    %v3514 = vsel %vm3488, %v3383, %v3513
    %v3515 = vsel %vm3490, %v3388, %v3514
    %v3516 = vsel %vm3492, %v3393, %v3515
    %v3517 = vsel %vm3494, %v3398, %v3516
    %v3518 = vsel %vm3496, %v3403, %v3517
    %v3519 = vsel %vm3484, %v3413, %v3408
    %v3520 = vsel %vm3486, %v3418, %v3519
    %v3521 = vsel %vm3488, %v3423, %v3520
    %v3522 = vsel %vm3490, %v3428, %v3521
    %v3523 = vsel %vm3492, %v3433, %v3522
    %v3524 = vsel %vm3494, %v3438, %v3523
    %v3525 = vsel %vm3496, %v3443, %v3524
    %v3526 = vsel %vm3484, %v3453, %v3448
    %v3527 = vsel %vm3486, %v3458, %v3526
    %v3528 = vsel %vm3488, %v3463, %v3527
    %v3529 = vsel %vm3490, %v3468, %v3528
    %v3530 = vsel %vm3492, %v3473, %v3529
    %v3531 = vsel %vm3494, %v3478, %v3530
    %v3532 = vsel %vm3496, %v3483, %v3531
    %vm3539 = vcmask 195584
    %v3540 = vsel %vm3539, %v3497, -inf
    %3541 = vmax.xlane.f32.xlu0 %v3540
    %v3542 = vpop.xlane.xlu0 %3541
    %v3543 = vsel %vm3539, %v3504, -inf
    %3544 = vmax.xlane.f32.xlu0 %v3543
    %v3545 = vpop.xlane.xlu0 %3544
    %v3546 = vsel %vm3539, %v3511, -inf
    %3547 = vmax.xlane.f32.xlu0 %v3546
    %v3548 = vpop.xlane.xlu0 %3547
    %v3549 = vsel %vm3539, %v3518, -inf
    %3550 = vmax.xlane.f32.xlu0 %v3549
    %v3551 = vpop.xlane.xlu0 %3550
    %v3552 = vsel %vm3539, %v3525, -inf
    %3553 = vmax.xlane.f32.xlu0 %v3552
    %v3554 = vpop.xlane.xlu0 %3553
    %v3555 = vsel %vm3539, %v3532, -inf
    %3556 = vmax.xlane.f32.xlu0 %v3555
    %v3557 = vpop.xlane.xlu0 %3556
    %v3564 = vperm.slane %v3542, 0
    %v3565 = vperm.slane %v3542, 1
    %v3566 = vperm.slane %v3542, 2
    %v3567 = vperm.slane %v3542, 3
    %v3568 = vperm.slane %v3542, 4
    %v3569 = vperm.slane %v3542, 5
    %v3570 = vperm.slane %v3542, 6
    %v3571 = vperm.slane %v3542, 7
    %v3572 = vperm.slane %v3545, 0
    %v3573 = vperm.slane %v3545, 1
    %v3574 = vperm.slane %v3545, 2
    %v3575 = vperm.slane %v3545, 3
    %v3576 = vperm.slane %v3545, 4
    %v3577 = vperm.slane %v3545, 5
    %v3578 = vperm.slane %v3545, 6
    %v3579 = vperm.slane %v3545, 7
    %v3580 = vperm.slane %v3548, 0
    %v3581 = vperm.slane %v3548, 1
    %v3582 = vperm.slane %v3548, 2
    %v3583 = vperm.slane %v3548, 3
    %v3584 = vperm.slane %v3548, 4
    %v3585 = vperm.slane %v3548, 5
    %v3586 = vperm.slane %v3548, 6
    %v3587 = vperm.slane %v3548, 7
    %v3588 = vperm.slane %v3551, 0
    %v3589 = vperm.slane %v3551, 1
    %v3590 = vperm.slane %v3551, 2
    %v3591 = vperm.slane %v3551, 3
    %v3592 = vperm.slane %v3551, 4
    %v3593 = vperm.slane %v3551, 5
    %v3594 = vperm.slane %v3551, 6
    %v3595 = vperm.slane %v3551, 7
    %v3596 = vperm.slane %v3554, 0
    %v3597 = vperm.slane %v3554, 1
    %v3598 = vperm.slane %v3554, 2
    %v3599 = vperm.slane %v3554, 3
    %v3600 = vperm.slane %v3554, 4
    %v3601 = vperm.slane %v3554, 5
    %v3602 = vperm.slane %v3554, 6
    %v3603 = vperm.slane %v3554, 7
    %v3604 = vperm.slane %v3557, 0
    %v3605 = vperm.slane %v3557, 1
    %v3606 = vperm.slane %v3557, 2
    %v3607 = vperm.slane %v3557, 3
    %v3608 = vperm.slane %v3557, 4
    %v3609 = vperm.slane %v3557, 5
    %v3610 = vperm.slane %v3557, 6
    %v3611 = vperm.slane %v3557, 7
    %v3660 = vsub.f32 %v2518, %v3564
    %v3661 = vsub.f32 %v2519, %v3564
    %v3662 = vsub.f32 %v2520, %v3564
    %v3663 = vsub.f32 %v2521, %v3565
    %v3664 = vsub.f32 %v2522, %v3565
    %v3665 = vsub.f32 %v2523, %v3565
    %v3666 = vsub.f32 %v2524, %v3566
    %v3667 = vsub.f32 %v2525, %v3566
    %v3668 = vsub.f32 %v2526, %v3566
    %v3669 = vsub.f32 %v2527, %v3567
    %v3670 = vsub.f32 %v2528, %v3567
    %v3671 = vsub.f32 %v2529, %v3567
    %v3672 = vsub.f32 %v2530, %v3568
    %v3673 = vsub.f32 %v2531, %v3568
    %v3674 = vsub.f32 %v2532, %v3568
    %v3675 = vsub.f32 %v2533, %v3569
    %v3676 = vsub.f32 %v2534, %v3569
    %v3677 = vsub.f32 %v2535, %v3569
    %v3678 = vsub.f32 %v2536, %v3570
    %v3679 = vsub.f32 %v2537, %v3570
    %v3680 = vsub.f32 %v2538, %v3570
    %v3681 = vsub.f32 %v2539, %v3571
    %v3682 = vsub.f32 %v2540, %v3571
    %v3683 = vsub.f32 %v2541, %v3571
    %v3684 = vsub.f32 %v2542, %v3572
    %v3685 = vsub.f32 %v2543, %v3572
    %v3686 = vsub.f32 %v2544, %v3572
    %v3687 = vsub.f32 %v2545, %v3573
    %v3688 = vsub.f32 %v2546, %v3573
    %v3689 = vsub.f32 %v2547, %v3573
    %v3690 = vsub.f32 %v2548, %v3574
    %v3691 = vsub.f32 %v2549, %v3574
    %v3692 = vsub.f32 %v2550, %v3574
    %v3693 = vsub.f32 %v2551, %v3575
    %v3694 = vsub.f32 %v2552, %v3575
    %v3695 = vsub.f32 %v2553, %v3575
    %v3696 = vsub.f32 %v2554, %v3576
    %v3697 = vsub.f32 %v2555, %v3576
    %v3698 = vsub.f32 %v2556, %v3576
    %v3699 = vsub.f32 %v2557, %v3577
    %v3700 = vsub.f32 %v2558, %v3577
    %v3701 = vsub.f32 %v2559, %v3577
    %v3702 = vsub.f32 %v2560, %v3578
    %v3703 = vsub.f32 %v2561, %v3578
    %v3704 = vsub.f32 %v2562, %v3578
    %v3705 = vsub.f32 %v2563, %v3579
    %v3706 = vsub.f32 %v2564, %v3579
    %v3707 = vsub.f32 %v2565, %v3579
    %v3708 = vsub.f32 %v2566, %v3580
    %v3709 = vsub.f32 %v2567, %v3580
    %v3710 = vsub.f32 %v2568, %v3580
    %v3711 = vsub.f32 %v2569, %v3581
    %v3712 = vsub.f32 %v2570, %v3581
    %v3713 = vsub.f32 %v2571, %v3581
    %v3714 = vsub.f32 %v2572, %v3582
    %v3715 = vsub.f32 %v2573, %v3582
    %v3716 = vsub.f32 %v2574, %v3582
    %v3717 = vsub.f32 %v2575, %v3583
    %v3718 = vsub.f32 %v2576, %v3583
    %v3719 = vsub.f32 %v2577, %v3583
    %v3720 = vsub.f32 %v2578, %v3584
    %v3721 = vsub.f32 %v2579, %v3584
    %v3722 = vsub.f32 %v2580, %v3584
    %v3723 = vsub.f32 %v2581, %v3585
    %v3724 = vsub.f32 %v2582, %v3585
    %v3725 = vsub.f32 %v2583, %v3585
    %v3726 = vsub.f32 %v2584, %v3586
    %v3727 = vsub.f32 %v2585, %v3586
    %v3728 = vsub.f32 %v2586, %v3586
    %v3729 = vsub.f32 %v2587, %v3587
    %v3730 = vsub.f32 %v2588, %v3587
    %v3731 = vsub.f32 %v2589, %v3587
    %v3732 = vsub.f32 %v2590, %v3588
    %v3733 = vsub.f32 %v2591, %v3588
    %v3734 = vsub.f32 %v2592, %v3588
    %v3735 = vsub.f32 %v2593, %v3589
    %v3736 = vsub.f32 %v2594, %v3589
    %v3737 = vsub.f32 %v2595, %v3589
    %v3738 = vsub.f32 %v2596, %v3590
    %v3739 = vsub.f32 %v2597, %v3590
    %v3740 = vsub.f32 %v2598, %v3590
    %v3741 = vsub.f32 %v2599, %v3591
    %v3742 = vsub.f32 %v2600, %v3591
    %v3743 = vsub.f32 %v2601, %v3591
    %v3744 = vsub.f32 %v2602, %v3592
    %v3745 = vsub.f32 %v2603, %v3592
    %v3746 = vsub.f32 %v2604, %v3592
    %v3747 = vsub.f32 %v2605, %v3593
    %v3748 = vsub.f32 %v2606, %v3593
    %v3749 = vsub.f32 %v2607, %v3593
    %v3750 = vsub.f32 %v2608, %v3594
    %v3751 = vsub.f32 %v2609, %v3594
    %v3752 = vsub.f32 %v2610, %v3594
    %v3753 = vsub.f32 %v2611, %v3595
    %v3754 = vsub.f32 %v2612, %v3595
    %v3755 = vsub.f32 %v2613, %v3595
    %v3756 = vsub.f32 %v2614, %v3596
    %v3757 = vsub.f32 %v2615, %v3596
    %v3758 = vsub.f32 %v2616, %v3596
    %v3759 = vsub.f32 %v2617, %v3597
    %v3760 = vsub.f32 %v2618, %v3597
    %v3761 = vsub.f32 %v2619, %v3597
    %v3762 = vsub.f32 %v2620, %v3598
    %v3763 = vsub.f32 %v2621, %v3598
    %v3764 = vsub.f32 %v2622, %v3598
    %v3765 = vsub.f32 %v2623, %v3599
    %v3766 = vsub.f32 %v2624, %v3599
    %v3767 = vsub.f32 %v2625, %v3599
    %v3768 = vsub.f32 %v2626, %v3600
    %v3769 = vsub.f32 %v2627, %v3600
    %v3770 = vsub.f32 %v2628, %v3600
    %v3771 = vsub.f32 %v2629, %v3601
    %v3772 = vsub.f32 %v2630, %v3601
    %v3773 = vsub.f32 %v2631, %v3601
    %v3774 = vsub.f32 %v2632, %v3602
    %v3775 = vsub.f32 %v2633, %v3602
    %v3776 = vsub.f32 %v2634, %v3602
    %v3777 = vsub.f32 %v2635, %v3603
    %v3778 = vsub.f32 %v2636, %v3603
    %v3779 = vsub.f32 %v2637, %v3603
    %v3780 = vsub.f32 %v2638, %v3604
    %v3781 = vsub.f32 %v2639, %v3604
    %v3782 = vsub.f32 %v2640, %v3604
    %v3783 = vsub.f32 %v2641, %v3605
    %v3784 = vsub.f32 %v2642, %v3605
    %v3785 = vsub.f32 %v2643, %v3605
    %v3786 = vsub.f32 %v2644, %v3606
    %v3787 = vsub.f32 %v2645, %v3606
    %v3788 = vsub.f32 %v2646, %v3606
    %v3789 = vsub.f32 %v2647, %v3607
    %v3790 = vsub.f32 %v2648, %v3607
    %v3791 = vsub.f32 %v2649, %v3607
    %v3792 = vsub.f32 %v2650, %v3608
    %v3793 = vsub.f32 %v2651, %v3608
    %v3794 = vsub.f32 %v2652, %v3608
    %v3795 = vsub.f32 %v2653, %v3609
    %v3796 = vsub.f32 %v2654, %v3609
    %v3797 = vsub.f32 %v2655, %v3609
    %v3798 = vsub.f32 %v2656, %v3610
    %v3799 = vsub.f32 %v2657, %v3610
    %v3800 = vsub.f32 %v2658, %v3610
    %v3801 = vsub.f32 %v2659, %v3611
    %v3802 = vsub.f32 %v2660, %v3611
    %v3803 = vsub.f32 %v2661, %v3611
    %v3804 = vmul.f32 %v3660, 1.442695
    %v3805 = vpow.pop %v3804
    %v3806 = vmul.f32 %v3661, 1.442695
    %v3807 = vpow.pop %v3806
    %v3808 = vmul.f32 %v3662, 1.442695
    %v3809 = vpow.pop %v3808
    %v3810 = vmul.f32 %v3663, 1.442695
    %v3811 = vpow.pop %v3810
    %v3812 = vmul.f32 %v3664, 1.442695
    %v3813 = vpow.pop %v3812
    %v3814 = vmul.f32 %v3665, 1.442695
    %v3815 = vpow.pop %v3814
    %v3816 = vmul.f32 %v3666, 1.442695
    %v3817 = vpow.pop %v3816
    %v3818 = vmul.f32 %v3667, 1.442695
    %v3819 = vpow.pop %v3818
    %v3820 = vmul.f32 %v3668, 1.442695
    %v3821 = vpow.pop %v3820
    %v3822 = vmul.f32 %v3669, 1.442695
    %v3823 = vpow.pop %v3822
    %v3824 = vmul.f32 %v3670, 1.442695
    %v3825 = vpow.pop %v3824
    %v3826 = vmul.f32 %v3671, 1.442695
    %v3827 = vpow.pop %v3826
    %v3828 = vmul.f32 %v3672, 1.442695
    %v3829 = vpow.pop %v3828
    %v3830 = vmul.f32 %v3673, 1.442695
    %v3831 = vpow.pop %v3830
    %v3832 = vmul.f32 %v3674, 1.442695
    %v3833 = vpow.pop %v3832
    %v3834 = vmul.f32 %v3675, 1.442695
    %v3835 = vpow.pop %v3834
    %v3836 = vmul.f32 %v3676, 1.442695
    %v3837 = vpow.pop %v3836
    %v3838 = vmul.f32 %v3677, 1.442695
    %v3839 = vpow.pop %v3838
    %v3840 = vmul.f32 %v3678, 1.442695
    %v3841 = vpow.pop %v3840
    %v3842 = vmul.f32 %v3679, 1.442695
    %v3843 = vpow.pop %v3842
    %v3844 = vmul.f32 %v3680, 1.442695
    %v3845 = vpow.pop %v3844
    %v3846 = vmul.f32 %v3681, 1.442695
    %v3847 = vpow.pop %v3846
    %v3848 = vmul.f32 %v3682, 1.442695
    %v3849 = vpow.pop %v3848
    %v3850 = vmul.f32 %v3683, 1.442695
    %v3851 = vpow.pop %v3850
    %v3852 = vmul.f32 %v3684, 1.442695
    %v3853 = vpow.pop %v3852
    %v3854 = vmul.f32 %v3685, 1.442695
    %v3855 = vpow.pop %v3854
    %v3856 = vmul.f32 %v3686, 1.442695
    %v3857 = vpow.pop %v3856
    %v3858 = vmul.f32 %v3687, 1.442695
    %v3859 = vpow.pop %v3858
    %v3860 = vmul.f32 %v3688, 1.442695
    %v3861 = vpow.pop %v3860
    %v3862 = vmul.f32 %v3689, 1.442695
    %v3863 = vpow.pop %v3862
    %v3864 = vmul.f32 %v3690, 1.442695
    %v3865 = vpow.pop %v3864
    %v3866 = vmul.f32 %v3691, 1.442695
    %v3867 = vpow.pop %v3866
    %v3868 = vmul.f32 %v3692, 1.442695
    %v3869 = vpow.pop %v3868
    %v3870 = vmul.f32 %v3693, 1.442695
    %v3871 = vpow.pop %v3870
    %v3872 = vmul.f32 %v3694, 1.442695
    %v3873 = vpow.pop %v3872
    %v3874 = vmul.f32 %v3695, 1.442695
    %v3875 = vpow.pop %v3874
    %v3876 = vmul.f32 %v3696, 1.442695
    %v3877 = vpow.pop %v3876
    %v3878 = vmul.f32 %v3697, 1.442695
    %v3879 = vpow.pop %v3878
    %v3880 = vmul.f32 %v3698, 1.442695
    %v3881 = vpow.pop %v3880
    %v3882 = vmul.f32 %v3699, 1.442695
    %v3883 = vpow.pop %v3882
    %v3884 = vmul.f32 %v3700, 1.442695
    %v3885 = vpow.pop %v3884
    %v3886 = vmul.f32 %v3701, 1.442695
    %v3887 = vpow.pop %v3886
    %v3888 = vmul.f32 %v3702, 1.442695
    %v3889 = vpow.pop %v3888
    %v3890 = vmul.f32 %v3703, 1.442695
    %v3891 = vpow.pop %v3890
    %v3892 = vmul.f32 %v3704, 1.442695
    %v3893 = vpow.pop %v3892
    %v3894 = vmul.f32 %v3705, 1.442695
    %v3895 = vpow.pop %v3894
    %v3896 = vmul.f32 %v3706, 1.442695
    %v3897 = vpow.pop %v3896
    %v3898 = vmul.f32 %v3707, 1.442695
    %v3899 = vpow.pop %v3898
    %v3900 = vmul.f32 %v3708, 1.442695
    %v3901 = vpow.pop %v3900
    %v3902 = vmul.f32 %v3709, 1.442695
    %v3903 = vpow.pop %v3902
    %v3904 = vmul.f32 %v3710, 1.442695
    %v3905 = vpow.pop %v3904
    %v3906 = vmul.f32 %v3711, 1.442695
    %v3907 = vpow.pop %v3906
    %v3908 = vmul.f32 %v3712, 1.442695
    %v3909 = vpow.pop %v3908
    %v3910 = vmul.f32 %v3713, 1.442695
    %v3911 = vpow.pop %v3910
    %v3912 = vmul.f32 %v3714, 1.442695
    %v3913 = vpow.pop %v3912
    %v3914 = vmul.f32 %v3715, 1.442695
    %v3915 = vpow.pop %v3914
    %v3916 = vmul.f32 %v3716, 1.442695
    %v3917 = vpow.pop %v3916
    %v3918 = vmul.f32 %v3717, 1.442695
    %v3919 = vpow.pop %v3918
    %v3920 = vmul.f32 %v3718, 1.442695
    %v3921 = vpow.pop %v3920
    %v3922 = vmul.f32 %v3719, 1.442695
    %v3923 = vpow.pop %v3922
    %v3924 = vmul.f32 %v3720, 1.442695
    %v3925 = vpow.pop %v3924
    %v3926 = vmul.f32 %v3721, 1.442695
    %v3927 = vpow.pop %v3926
    %v3928 = vmul.f32 %v3722, 1.442695
    %v3929 = vpow.pop %v3928
    %v3930 = vmul.f32 %v3723, 1.442695
    %v3931 = vpow.pop %v3930
    %v3932 = vmul.f32 %v3724, 1.442695
    %v3933 = vpow.pop %v3932
    %v3934 = vmul.f32 %v3725, 1.442695
    %v3935 = vpow.pop %v3934
    %v3936 = vmul.f32 %v3726, 1.442695
    %v3937 = vpow.pop %v3936
    %v3938 = vmul.f32 %v3727, 1.442695
    %v3939 = vpow.pop %v3938
    %v3940 = vmul.f32 %v3728, 1.442695
    %v3941 = vpow.pop %v3940
    %v3942 = vmul.f32 %v3729, 1.442695
    %v3943 = vpow.pop %v3942
    %v3944 = vmul.f32 %v3730, 1.442695
    %v3945 = vpow.pop %v3944
    %v3946 = vmul.f32 %v3731, 1.442695
    %v3947 = vpow.pop %v3946
    %v3948 = vmul.f32 %v3732, 1.442695
    %v3949 = vpow.pop %v3948
    %v3950 = vmul.f32 %v3733, 1.442695
    %v3951 = vpow.pop %v3950
    %v3952 = vmul.f32 %v3734, 1.442695
    %v3953 = vpow.pop %v3952
    %v3954 = vmul.f32 %v3735, 1.442695
    %v3955 = vpow.pop %v3954
    %v3956 = vmul.f32 %v3736, 1.442695
    %v3957 = vpow.pop %v3956
    %v3958 = vmul.f32 %v3737, 1.442695
    %v3959 = vpow.pop %v3958
    %v3960 = vmul.f32 %v3738, 1.442695
    %v3961 = vpow.pop %v3960
    %v3962 = vmul.f32 %v3739, 1.442695
    %v3963 = vpow.pop %v3962
    %v3964 = vmul.f32 %v3740, 1.442695
    %v3965 = vpow.pop %v3964
    %v3966 = vmul.f32 %v3741, 1.442695
    %v3967 = vpow.pop %v3966
    %v3968 = vmul.f32 %v3742, 1.442695
    %v3969 = vpow.pop %v3968
    %v3970 = vmul.f32 %v3743, 1.442695
    %v3971 = vpow.pop %v3970
    %v3972 = vmul.f32 %v3744, 1.442695
    %v3973 = vpow.pop %v3972
    %v3974 = vmul.f32 %v3745, 1.442695
    %v3975 = vpow.pop %v3974
    %v3976 = vmul.f32 %v3746, 1.442695
    %v3977 = vpow.pop %v3976
    %v3978 = vmul.f32 %v3747, 1.442695
    %v3979 = vpow.pop %v3978
    %v3980 = vmul.f32 %v3748, 1.442695
    %v3981 = vpow.pop %v3980
    %v3982 = vmul.f32 %v3749, 1.442695
    %v3983 = vpow.pop %v3982
    %v3984 = vmul.f32 %v3750, 1.442695
    %v3985 = vpow.pop %v3984
    %v3986 = vmul.f32 %v3751, 1.442695
    %v3987 = vpow.pop %v3986
    %v3988 = vmul.f32 %v3752, 1.442695
    %v3989 = vpow.pop %v3988
    %v3990 = vmul.f32 %v3753, 1.442695
    %v3991 = vpow.pop %v3990
    %v3992 = vmul.f32 %v3754, 1.442695
    %v3993 = vpow.pop %v3992
    %v3994 = vmul.f32 %v3755, 1.442695
    %v3995 = vpow.pop %v3994
    %v3996 = vmul.f32 %v3756, 1.442695
    %v3997 = vpow.pop %v3996
    %v3998 = vmul.f32 %v3757, 1.442695
    %v3999 = vpow.pop %v3998
    %v4000 = vmul.f32 %v3758, 1.442695
    %v4001 = vpow.pop %v4000
    %v4002 = vmul.f32 %v3759, 1.442695
    %v4003 = vpow.pop %v4002
    %v4004 = vmul.f32 %v3760, 1.442695
    %v4005 = vpow.pop %v4004
    %v4006 = vmul.f32 %v3761, 1.442695
    %v4007 = vpow.pop %v4006
    %v4008 = vmul.f32 %v3762, 1.442695
    %v4009 = vpow.pop %v4008
    %v4010 = vmul.f32 %v3763, 1.442695
    %v4011 = vpow.pop %v4010
    %v4012 = vmul.f32 %v3764, 1.442695
    %v4013 = vpow.pop %v4012
    %v4014 = vmul.f32 %v3765, 1.442695
    %v4015 = vpow.pop %v4014
    %v4016 = vmul.f32 %v3766, 1.442695
    %v4017 = vpow.pop %v4016
    %v4018 = vmul.f32 %v3767, 1.442695
    %v4019 = vpow.pop %v4018
    %v4020 = vmul.f32 %v3768, 1.442695
    %v4021 = vpow.pop %v4020
    %v4022 = vmul.f32 %v3769, 1.442695
    %v4023 = vpow.pop %v4022
    %v4024 = vmul.f32 %v3770, 1.442695
    %v4025 = vpow.pop %v4024
    %v4026 = vmul.f32 %v3771, 1.442695
    %v4027 = vpow.pop %v4026
    %v4028 = vmul.f32 %v3772, 1.442695
    %v4029 = vpow.pop %v4028
    %v4030 = vmul.f32 %v3773, 1.442695
    %v4031 = vpow.pop %v4030
    %v4032 = vmul.f32 %v3774, 1.442695
    %v4033 = vpow.pop %v4032
    %v4034 = vmul.f32 %v3775, 1.442695
    %v4035 = vpow.pop %v4034
    %v4036 = vmul.f32 %v3776, 1.442695
    %v4037 = vpow.pop %v4036
    %v4038 = vmul.f32 %v3777, 1.442695
    %v4039 = vpow.pop %v4038
    %v4040 = vmul.f32 %v3778, 1.442695
    %v4041 = vpow.pop %v4040
    %v4042 = vmul.f32 %v3779, 1.442695
    %v4043 = vpow.pop %v4042
    %v4044 = vmul.f32 %v3780, 1.442695
    %v4045 = vpow.pop %v4044
    %v4046 = vmul.f32 %v3781, 1.442695
    %v4047 = vpow.pop %v4046
    %v4048 = vmul.f32 %v3782, 1.442695
    %v4049 = vpow.pop %v4048
    %v4050 = vmul.f32 %v3783, 1.442695
    %v4051 = vpow.pop %v4050
    %v4052 = vmul.f32 %v3784, 1.442695
    %v4053 = vpow.pop %v4052
    %v4054 = vmul.f32 %v3785, 1.442695
    %v4055 = vpow.pop %v4054
    %v4056 = vmul.f32 %v3786, 1.442695
    %v4057 = vpow.pop %v4056
    %v4058 = vmul.f32 %v3787, 1.442695
    %v4059 = vpow.pop %v4058
    %v4060 = vmul.f32 %v3788, 1.442695
    %v4061 = vpow.pop %v4060
    %v4062 = vmul.f32 %v3789, 1.442695
    %v4063 = vpow.pop %v4062
    %v4064 = vmul.f32 %v3790, 1.442695
    %v4065 = vpow.pop %v4064
    %v4066 = vmul.f32 %v3791, 1.442695
    %v4067 = vpow.pop %v4066
    %v4068 = vmul.f32 %v3792, 1.442695
    %v4069 = vpow.pop %v4068
    %v4070 = vmul.f32 %v3793, 1.442695
    %v4071 = vpow.pop %v4070
    %v4072 = vmul.f32 %v3794, 1.442695
    %v4073 = vpow.pop %v4072
    %v4074 = vmul.f32 %v3795, 1.442695
    %v4075 = vpow.pop %v4074
    %v4076 = vmul.f32 %v3796, 1.442695
    %v4077 = vpow.pop %v4076
    %v4078 = vmul.f32 %v3797, 1.442695
    %v4079 = vpow.pop %v4078
    %v4080 = vmul.f32 %v3798, 1.442695
    %v4081 = vpow.pop %v4080
    %v4082 = vmul.f32 %v3799, 1.442695
    %v4083 = vpow.pop %v4082
    %v4084 = vmul.f32 %v3800, 1.442695
    %v4085 = vpow.pop %v4084
    %v4086 = vmul.f32 %v3801, 1.442695
    %v4087 = vpow.pop %v4086
    %v4088 = vmul.f32 %v3802, 1.442695
    %v4089 = vpow.pop %v4088
    %v4090 = vmul.f32 %v3803, 1.442695
    %v4091 = vpow.pop %v4090
    %4236 = vset.pattern.permute.xlu0 0
    %4237 = vperm.xlu0 %4236, %v3805
    %v4238 = vpop.permute.xlu0 %4237
    %4239 = vset.pattern.permute.xlu0 0
    %4240 = vperm.xlu0 %4239, %v3807
    %v4241 = vpop.permute.xlu0 %4240
    %4242 = vset.pattern.permute.xlu0 0
    %4243 = vperm.xlu0 %4242, %v3809
    %v4244 = vpop.permute.xlu0 %4243
    %4245 = vset.pattern.permute.xlu0 0
    %4246 = vperm.xlu0 %4245, %v3811
    %v4247 = vpop.permute.xlu0 %4246
    %4248 = vset.pattern.permute.xlu0 0
    %4249 = vperm.xlu0 %4248, %v3813
    %v4250 = vpop.permute.xlu0 %4249
    %4251 = vset.pattern.permute.xlu0 0
    %4252 = vperm.xlu0 %4251, %v3815
    %v4253 = vpop.permute.xlu0 %4252
    %4254 = vset.pattern.permute.xlu0 0
    %4255 = vperm.xlu0 %4254, %v3817
    %v4256 = vpop.permute.xlu0 %4255
    %4257 = vset.pattern.permute.xlu0 0
    %4258 = vperm.xlu0 %4257, %v3819
    %v4259 = vpop.permute.xlu0 %4258
    %4260 = vset.pattern.permute.xlu0 0
    %4261 = vperm.xlu0 %4260, %v3821
    %v4262 = vpop.permute.xlu0 %4261
    %4263 = vset.pattern.permute.xlu0 0
    %4264 = vperm.xlu0 %4263, %v3823
    %v4265 = vpop.permute.xlu0 %4264
    %4266 = vset.pattern.permute.xlu0 0
    %4267 = vperm.xlu0 %4266, %v3825
    %v4268 = vpop.permute.xlu0 %4267
    %4269 = vset.pattern.permute.xlu0 0
    %4270 = vperm.xlu0 %4269, %v3827
    %v4271 = vpop.permute.xlu0 %4270
    %4272 = vset.pattern.permute.xlu0 0
    %4273 = vperm.xlu0 %4272, %v3829
    %v4274 = vpop.permute.xlu0 %4273
    %4275 = vset.pattern.permute.xlu0 0
    %4276 = vperm.xlu0 %4275, %v3831
    %v4277 = vpop.permute.xlu0 %4276
    %4278 = vset.pattern.permute.xlu0 0
    %4279 = vperm.xlu0 %4278, %v3833
    %v4280 = vpop.permute.xlu0 %4279
    %4281 = vset.pattern.permute.xlu0 0
    %4282 = vperm.xlu0 %4281, %v3835
    %v4283 = vpop.permute.xlu0 %4282
    %4284 = vset.pattern.permute.xlu0 0
    %4285 = vperm.xlu0 %4284, %v3837
    %v4286 = vpop.permute.xlu0 %4285
    %4287 = vset.pattern.permute.xlu0 0
    %4288 = vperm.xlu0 %4287, %v3839
    %v4289 = vpop.permute.xlu0 %4288
    %4290 = vset.pattern.permute.xlu0 0
    %4291 = vperm.xlu0 %4290, %v3841
    %v4292 = vpop.permute.xlu0 %4291
    %4293 = vset.pattern.permute.xlu0 0
    %4294 = vperm.xlu0 %4293, %v3843
    %v4295 = vpop.permute.xlu0 %4294
    %4296 = vset.pattern.permute.xlu0 0
    %4297 = vperm.xlu0 %4296, %v3845
    %v4298 = vpop.permute.xlu0 %4297
    %4299 = vset.pattern.permute.xlu0 0
    %4300 = vperm.xlu0 %4299, %v3847
    %v4301 = vpop.permute.xlu0 %4300
    %4302 = vset.pattern.permute.xlu0 0
    %4303 = vperm.xlu0 %4302, %v3849
    %v4304 = vpop.permute.xlu0 %4303
    %4305 = vset.pattern.permute.xlu0 0
    %4306 = vperm.xlu0 %4305, %v3851
    %v4307 = vpop.permute.xlu0 %4306
    %4308 = vset.pattern.permute.xlu0 0
    %4309 = vperm.xlu0 %4308, %v3853
    %v4310 = vpop.permute.xlu0 %4309
    %4311 = vset.pattern.permute.xlu0 0
    %4312 = vperm.xlu0 %4311, %v3855
    %v4313 = vpop.permute.xlu0 %4312
    %4314 = vset.pattern.permute.xlu0 0
    %4315 = vperm.xlu0 %4314, %v3857
    %v4316 = vpop.permute.xlu0 %4315
    %4317 = vset.pattern.permute.xlu0 0
    %4318 = vperm.xlu0 %4317, %v3859
    %v4319 = vpop.permute.xlu0 %4318
    %4320 = vset.pattern.permute.xlu0 0
    %4321 = vperm.xlu0 %4320, %v3861
    %v4322 = vpop.permute.xlu0 %4321
    %4323 = vset.pattern.permute.xlu0 0
    %4324 = vperm.xlu0 %4323, %v3863
    %v4325 = vpop.permute.xlu0 %4324
    %4326 = vset.pattern.permute.xlu0 0
    %4327 = vperm.xlu0 %4326, %v3865
    %v4328 = vpop.permute.xlu0 %4327
    %4329 = vset.pattern.permute.xlu0 0
    %4330 = vperm.xlu0 %4329, %v3867
    %v4331 = vpop.permute.xlu0 %4330
    %4332 = vset.pattern.permute.xlu0 0
    %4333 = vperm.xlu0 %4332, %v3869
    %v4334 = vpop.permute.xlu0 %4333
    %4335 = vset.pattern.permute.xlu0 0
    %4336 = vperm.xlu0 %4335, %v3871
    %v4337 = vpop.permute.xlu0 %4336
    %4338 = vset.pattern.permute.xlu0 0
    %4339 = vperm.xlu0 %4338, %v3873
    %v4340 = vpop.permute.xlu0 %4339
    %4341 = vset.pattern.permute.xlu0 0
    %4342 = vperm.xlu0 %4341, %v3875
    %v4343 = vpop.permute.xlu0 %4342
    %4344 = vset.pattern.permute.xlu0 0
    %4345 = vperm.xlu0 %4344, %v3877
    %v4346 = vpop.permute.xlu0 %4345
    %4347 = vset.pattern.permute.xlu0 0
    %4348 = vperm.xlu0 %4347, %v3879
    %v4349 = vpop.permute.xlu0 %4348
    %4350 = vset.pattern.permute.xlu0 0
    %4351 = vperm.xlu0 %4350, %v3881
    %v4352 = vpop.permute.xlu0 %4351
    %4353 = vset.pattern.permute.xlu0 0
    %4354 = vperm.xlu0 %4353, %v3883
    %v4355 = vpop.permute.xlu0 %4354
    %4356 = vset.pattern.permute.xlu0 0
    %4357 = vperm.xlu0 %4356, %v3885
    %v4358 = vpop.permute.xlu0 %4357
    %4359 = vset.pattern.permute.xlu0 0
    %4360 = vperm.xlu0 %4359, %v3887
    %v4361 = vpop.permute.xlu0 %4360
    %4362 = vset.pattern.permute.xlu0 0
    %4363 = vperm.xlu0 %4362, %v3889
    %v4364 = vpop.permute.xlu0 %4363
    %4365 = vset.pattern.permute.xlu0 0
    %4366 = vperm.xlu0 %4365, %v3891
    %v4367 = vpop.permute.xlu0 %4366
    %4368 = vset.pattern.permute.xlu0 0
    %4369 = vperm.xlu0 %4368, %v3893
    %v4370 = vpop.permute.xlu0 %4369
    %4371 = vset.pattern.permute.xlu0 0
    %4372 = vperm.xlu0 %4371, %v3895
    %v4373 = vpop.permute.xlu0 %4372
    %4374 = vset.pattern.permute.xlu0 0
    %4375 = vperm.xlu0 %4374, %v3897
    %v4376 = vpop.permute.xlu0 %4375
    %4377 = vset.pattern.permute.xlu0 0
    %4378 = vperm.xlu0 %4377, %v3899
    %v4379 = vpop.permute.xlu0 %4378
    %4380 = vset.pattern.permute.xlu0 0
    %4381 = vperm.xlu0 %4380, %v3901
    %v4382 = vpop.permute.xlu0 %4381
    %4383 = vset.pattern.permute.xlu0 0
    %4384 = vperm.xlu0 %4383, %v3903
    %v4385 = vpop.permute.xlu0 %4384
    %4386 = vset.pattern.permute.xlu0 0
    %4387 = vperm.xlu0 %4386, %v3905
    %v4388 = vpop.permute.xlu0 %4387
    %4389 = vset.pattern.permute.xlu0 0
    %4390 = vperm.xlu0 %4389, %v3907
    %v4391 = vpop.permute.xlu0 %4390
    %4392 = vset.pattern.permute.xlu0 0
    %4393 = vperm.xlu0 %4392, %v3909
    %v4394 = vpop.permute.xlu0 %4393
    %4395 = vset.pattern.permute.xlu0 0
    %4396 = vperm.xlu0 %4395, %v3911
    %v4397 = vpop.permute.xlu0 %4396
    %4398 = vset.pattern.permute.xlu0 0
    %4399 = vperm.xlu0 %4398, %v3913
    %v4400 = vpop.permute.xlu0 %4399
    %4401 = vset.pattern.permute.xlu0 0
    %4402 = vperm.xlu0 %4401, %v3915
    %v4403 = vpop.permute.xlu0 %4402
    %4404 = vset.pattern.permute.xlu0 0
    %4405 = vperm.xlu0 %4404, %v3917
    %v4406 = vpop.permute.xlu0 %4405
    %4407 = vset.pattern.permute.xlu0 0
    %4408 = vperm.xlu0 %4407, %v3919
    %v4409 = vpop.permute.xlu0 %4408
    %4410 = vset.pattern.permute.xlu0 0
    %4411 = vperm.xlu0 %4410, %v3921
    %v4412 = vpop.permute.xlu0 %4411
    %4413 = vset.pattern.permute.xlu0 0
    %4414 = vperm.xlu0 %4413, %v3923
    %v4415 = vpop.permute.xlu0 %4414
    %4416 = vset.pattern.permute.xlu0 0
    %4417 = vperm.xlu0 %4416, %v3925
    %v4418 = vpop.permute.xlu0 %4417
    %4419 = vset.pattern.permute.xlu0 0
    %4420 = vperm.xlu0 %4419, %v3927
    %v4421 = vpop.permute.xlu0 %4420
    %4422 = vset.pattern.permute.xlu0 0
    %4423 = vperm.xlu0 %4422, %v3929
    %v4424 = vpop.permute.xlu0 %4423
    %4425 = vset.pattern.permute.xlu0 0
    %4426 = vperm.xlu0 %4425, %v3931
    %v4427 = vpop.permute.xlu0 %4426
    %4428 = vset.pattern.permute.xlu0 0
    %4429 = vperm.xlu0 %4428, %v3933
    %v4430 = vpop.permute.xlu0 %4429
    %4431 = vset.pattern.permute.xlu0 0
    %4432 = vperm.xlu0 %4431, %v3935
    %v4433 = vpop.permute.xlu0 %4432
    %4434 = vset.pattern.permute.xlu0 0
    %4435 = vperm.xlu0 %4434, %v3937
    %v4436 = vpop.permute.xlu0 %4435
    %4437 = vset.pattern.permute.xlu0 0
    %4438 = vperm.xlu0 %4437, %v3939
    %v4439 = vpop.permute.xlu0 %4438
    %4440 = vset.pattern.permute.xlu0 0
    %4441 = vperm.xlu0 %4440, %v3941
    %v4442 = vpop.permute.xlu0 %4441
    %4443 = vset.pattern.permute.xlu0 0
    %4444 = vperm.xlu0 %4443, %v3943
    %v4445 = vpop.permute.xlu0 %4444
    %4446 = vset.pattern.permute.xlu0 0
    %4447 = vperm.xlu0 %4446, %v3945
    %v4448 = vpop.permute.xlu0 %4447
    %4449 = vset.pattern.permute.xlu0 0
    %4450 = vperm.xlu0 %4449, %v3947
    %v4451 = vpop.permute.xlu0 %4450
    %4452 = vset.pattern.permute.xlu0 0
    %4453 = vperm.xlu0 %4452, %v3949
    %v4454 = vpop.permute.xlu0 %4453
    %4455 = vset.pattern.permute.xlu0 0
    %4456 = vperm.xlu0 %4455, %v3951
    %v4457 = vpop.permute.xlu0 %4456
    %4458 = vset.pattern.permute.xlu0 0
    %4459 = vperm.xlu0 %4458, %v3953
    %v4460 = vpop.permute.xlu0 %4459
    %4461 = vset.pattern.permute.xlu0 0
    %4462 = vperm.xlu0 %4461, %v3955
    %v4463 = vpop.permute.xlu0 %4462
    %4464 = vset.pattern.permute.xlu0 0
    %4465 = vperm.xlu0 %4464, %v3957
    %v4466 = vpop.permute.xlu0 %4465
    %4467 = vset.pattern.permute.xlu0 0
    %4468 = vperm.xlu0 %4467, %v3959
    %v4469 = vpop.permute.xlu0 %4468
    %4470 = vset.pattern.permute.xlu0 0
    %4471 = vperm.xlu0 %4470, %v3961
    %v4472 = vpop.permute.xlu0 %4471
    %4473 = vset.pattern.permute.xlu0 0
    %4474 = vperm.xlu0 %4473, %v3963
    %v4475 = vpop.permute.xlu0 %4474
    %4476 = vset.pattern.permute.xlu0 0
    %4477 = vperm.xlu0 %4476, %v3965
    %v4478 = vpop.permute.xlu0 %4477
    %4479 = vset.pattern.permute.xlu0 0
    %4480 = vperm.xlu0 %4479, %v3967
    %v4481 = vpop.permute.xlu0 %4480
    %4482 = vset.pattern.permute.xlu0 0
    %4483 = vperm.xlu0 %4482, %v3969
    %v4484 = vpop.permute.xlu0 %4483
    %4485 = vset.pattern.permute.xlu0 0
    %4486 = vperm.xlu0 %4485, %v3971
    %v4487 = vpop.permute.xlu0 %4486
    %4488 = vset.pattern.permute.xlu0 0
    %4489 = vperm.xlu0 %4488, %v3973
    %v4490 = vpop.permute.xlu0 %4489
    %4491 = vset.pattern.permute.xlu0 0
    %4492 = vperm.xlu0 %4491, %v3975
    %v4493 = vpop.permute.xlu0 %4492
    %4494 = vset.pattern.permute.xlu0 0
    %4495 = vperm.xlu0 %4494, %v3977
    %v4496 = vpop.permute.xlu0 %4495
    %4497 = vset.pattern.permute.xlu0 0
    %4498 = vperm.xlu0 %4497, %v3979
    %v4499 = vpop.permute.xlu0 %4498
    %4500 = vset.pattern.permute.xlu0 0
    %4501 = vperm.xlu0 %4500, %v3981
    %v4502 = vpop.permute.xlu0 %4501
    %4503 = vset.pattern.permute.xlu0 0
    %4504 = vperm.xlu0 %4503, %v3983
    %v4505 = vpop.permute.xlu0 %4504
    %4506 = vset.pattern.permute.xlu0 0
    %4507 = vperm.xlu0 %4506, %v3985
    %v4508 = vpop.permute.xlu0 %4507
    %4509 = vset.pattern.permute.xlu0 0
    %4510 = vperm.xlu0 %4509, %v3987
    %v4511 = vpop.permute.xlu0 %4510
    %4512 = vset.pattern.permute.xlu0 0
    %4513 = vperm.xlu0 %4512, %v3989
    %v4514 = vpop.permute.xlu0 %4513
    %4515 = vset.pattern.permute.xlu0 0
    %4516 = vperm.xlu0 %4515, %v3991
    %v4517 = vpop.permute.xlu0 %4516
    %4518 = vset.pattern.permute.xlu0 0
    %4519 = vperm.xlu0 %4518, %v3993
    %v4520 = vpop.permute.xlu0 %4519
    %4521 = vset.pattern.permute.xlu0 0
    %4522 = vperm.xlu0 %4521, %v3995
    %v4523 = vpop.permute.xlu0 %4522
    %4524 = vset.pattern.permute.xlu0 0
    %4525 = vperm.xlu0 %4524, %v3997
    %v4526 = vpop.permute.xlu0 %4525
    %4527 = vset.pattern.permute.xlu0 0
    %4528 = vperm.xlu0 %4527, %v3999
    %v4529 = vpop.permute.xlu0 %4528
    %4530 = vset.pattern.permute.xlu0 0
    %4531 = vperm.xlu0 %4530, %v4001
    %v4532 = vpop.permute.xlu0 %4531
    %4533 = vset.pattern.permute.xlu0 0
    %4534 = vperm.xlu0 %4533, %v4003
    %v4535 = vpop.permute.xlu0 %4534
    %4536 = vset.pattern.permute.xlu0 0
    %4537 = vperm.xlu0 %4536, %v4005
    %v4538 = vpop.permute.xlu0 %4537
    %4539 = vset.pattern.permute.xlu0 0
    %4540 = vperm.xlu0 %4539, %v4007
    %v4541 = vpop.permute.xlu0 %4540
    %4542 = vset.pattern.permute.xlu0 0
    %4543 = vperm.xlu0 %4542, %v4009
    %v4544 = vpop.permute.xlu0 %4543
    %4545 = vset.pattern.permute.xlu0 0
    %4546 = vperm.xlu0 %4545, %v4011
    %v4547 = vpop.permute.xlu0 %4546
    %4548 = vset.pattern.permute.xlu0 0
    %4549 = vperm.xlu0 %4548, %v4013
    %v4550 = vpop.permute.xlu0 %4549
    %4551 = vset.pattern.permute.xlu0 0
    %4552 = vperm.xlu0 %4551, %v4015
    %v4553 = vpop.permute.xlu0 %4552
    %4554 = vset.pattern.permute.xlu0 0
    %4555 = vperm.xlu0 %4554, %v4017
    %v4556 = vpop.permute.xlu0 %4555
    %4557 = vset.pattern.permute.xlu0 0
    %4558 = vperm.xlu0 %4557, %v4019
    %v4559 = vpop.permute.xlu0 %4558
    %4560 = vset.pattern.permute.xlu0 0
    %4561 = vperm.xlu0 %4560, %v4021
    %v4562 = vpop.permute.xlu0 %4561
    %4563 = vset.pattern.permute.xlu0 0
    %4564 = vperm.xlu0 %4563, %v4023
    %v4565 = vpop.permute.xlu0 %4564
    %4566 = vset.pattern.permute.xlu0 0
    %4567 = vperm.xlu0 %4566, %v4025
    %v4568 = vpop.permute.xlu0 %4567
    %4569 = vset.pattern.permute.xlu0 0
    %4570 = vperm.xlu0 %4569, %v4027
    %v4571 = vpop.permute.xlu0 %4570
    %4572 = vset.pattern.permute.xlu0 0
    %4573 = vperm.xlu0 %4572, %v4029
    %v4574 = vpop.permute.xlu0 %4573
    %4575 = vset.pattern.permute.xlu0 0
    %4576 = vperm.xlu0 %4575, %v4031
    %v4577 = vpop.permute.xlu0 %4576
    %4578 = vset.pattern.permute.xlu0 0
    %4579 = vperm.xlu0 %4578, %v4033
    %v4580 = vpop.permute.xlu0 %4579
    %4581 = vset.pattern.permute.xlu0 0
    %4582 = vperm.xlu0 %4581, %v4035
    %v4583 = vpop.permute.xlu0 %4582
    %4584 = vset.pattern.permute.xlu0 0
    %4585 = vperm.xlu0 %4584, %v4037
    %v4586 = vpop.permute.xlu0 %4585
    %4587 = vset.pattern.permute.xlu0 0
    %4588 = vperm.xlu0 %4587, %v4039
    %v4589 = vpop.permute.xlu0 %4588
    %4590 = vset.pattern.permute.xlu0 0
    %4591 = vperm.xlu0 %4590, %v4041
    %v4592 = vpop.permute.xlu0 %4591
    %4593 = vset.pattern.permute.xlu0 0
    %4594 = vperm.xlu0 %4593, %v4043
    %v4595 = vpop.permute.xlu0 %4594
    %4596 = vset.pattern.permute.xlu0 0
    %4597 = vperm.xlu0 %4596, %v4045
    %v4598 = vpop.permute.xlu0 %4597
    %4599 = vset.pattern.permute.xlu0 0
    %4600 = vperm.xlu0 %4599, %v4047
    %v4601 = vpop.permute.xlu0 %4600
    %4602 = vset.pattern.permute.xlu0 0
    %4603 = vperm.xlu0 %4602, %v4049
    %v4604 = vpop.permute.xlu0 %4603
    %4605 = vset.pattern.permute.xlu0 0
    %4606 = vperm.xlu0 %4605, %v4051
    %v4607 = vpop.permute.xlu0 %4606
    %4608 = vset.pattern.permute.xlu0 0
    %4609 = vperm.xlu0 %4608, %v4053
    %v4610 = vpop.permute.xlu0 %4609
    %4611 = vset.pattern.permute.xlu0 0
    %4612 = vperm.xlu0 %4611, %v4055
    %v4613 = vpop.permute.xlu0 %4612
    %4614 = vset.pattern.permute.xlu0 0
    %4615 = vperm.xlu0 %4614, %v4057
    %v4616 = vpop.permute.xlu0 %4615
    %4617 = vset.pattern.permute.xlu0 0
    %4618 = vperm.xlu0 %4617, %v4059
    %v4619 = vpop.permute.xlu0 %4618
    %4620 = vset.pattern.permute.xlu0 0
    %4621 = vperm.xlu0 %4620, %v4061
    %v4622 = vpop.permute.xlu0 %4621
    %4623 = vset.pattern.permute.xlu0 0
    %4624 = vperm.xlu0 %4623, %v4063
    %v4625 = vpop.permute.xlu0 %4624
    %4626 = vset.pattern.permute.xlu0 0
    %4627 = vperm.xlu0 %4626, %v4065
    %v4628 = vpop.permute.xlu0 %4627
    %4629 = vset.pattern.permute.xlu0 0
    %4630 = vperm.xlu0 %4629, %v4067
    %v4631 = vpop.permute.xlu0 %4630
    %4632 = vset.pattern.permute.xlu0 0
    %4633 = vperm.xlu0 %4632, %v4069
    %v4634 = vpop.permute.xlu0 %4633
    %4635 = vset.pattern.permute.xlu0 0
    %4636 = vperm.xlu0 %4635, %v4071
    %v4637 = vpop.permute.xlu0 %4636
    %4638 = vset.pattern.permute.xlu0 0
    %4639 = vperm.xlu0 %4638, %v4073
    %v4640 = vpop.permute.xlu0 %4639
    %4641 = vset.pattern.permute.xlu0 0
    %4642 = vperm.xlu0 %4641, %v4075
    %v4643 = vpop.permute.xlu0 %4642
    %4644 = vset.pattern.permute.xlu0 0
    %4645 = vperm.xlu0 %4644, %v4077
    %v4646 = vpop.permute.xlu0 %4645
    %4647 = vset.pattern.permute.xlu0 0
    %4648 = vperm.xlu0 %4647, %v4079
    %v4649 = vpop.permute.xlu0 %4648
    %4650 = vset.pattern.permute.xlu0 0
    %4651 = vperm.xlu0 %4650, %v4081
    %v4652 = vpop.permute.xlu0 %4651
    %4653 = vset.pattern.permute.xlu0 0
    %4654 = vperm.xlu0 %4653, %v4083
    %v4655 = vpop.permute.xlu0 %4654
    %4656 = vset.pattern.permute.xlu0 0
    %4657 = vperm.xlu0 %4656, %v4085
    %v4658 = vpop.permute.xlu0 %4657
    %4659 = vset.pattern.permute.xlu0 0
    %4660 = vperm.xlu0 %4659, %v4087
    %v4661 = vpop.permute.xlu0 %4660
    %4662 = vset.pattern.permute.xlu0 0
    %4663 = vperm.xlu0 %4662, %v4089
    %v4664 = vpop.permute.xlu0 %4663
    %4665 = vset.pattern.permute.xlu0 0
    %4666 = vperm.xlu0 %4665, %v4091
    %v4667 = vpop.permute.xlu0 %4666
    %v4668 = vperm.slane %v4238, %v3239
    %v4669 = vperm.slane %v4241, %v3241
    %v4670 = vsel %vm3243, %v4669, %v4668
    %v4671 = vperm.slane %v4244, %v3245
    %v4672 = vsel %vm3247, %v4671, %v4670
    %v4673 = vperm.slane %v4247, %v3239
    %v4674 = vperm.slane %v4250, %v3241
    %v4675 = vsel %vm3243, %v4674, %v4673
    %v4676 = vperm.slane %v4253, %v3245
    %v4677 = vsel %vm3247, %v4676, %v4675
    %v4678 = vperm.slane %v4256, %v3239
    %v4679 = vperm.slane %v4259, %v3241
    %v4680 = vsel %vm3243, %v4679, %v4678
    %v4681 = vperm.slane %v4262, %v3245
    %v4682 = vsel %vm3247, %v4681, %v4680
    %v4683 = vperm.slane %v4265, %v3239
    %v4684 = vperm.slane %v4268, %v3241
    %v4685 = vsel %vm3243, %v4684, %v4683
    %v4686 = vperm.slane %v4271, %v3245
    %v4687 = vsel %vm3247, %v4686, %v4685
    %v4688 = vperm.slane %v4274, %v3239
    %v4689 = vperm.slane %v4277, %v3241
    %v4690 = vsel %vm3243, %v4689, %v4688
    %v4691 = vperm.slane %v4280, %v3245
    %v4692 = vsel %vm3247, %v4691, %v4690
    %v4693 = vperm.slane %v4283, %v3239
    %v4694 = vperm.slane %v4286, %v3241
    %v4695 = vsel %vm3243, %v4694, %v4693
    %v4696 = vperm.slane %v4289, %v3245
    %v4697 = vsel %vm3247, %v4696, %v4695
    %v4698 = vperm.slane %v4292, %v3239
    %v4699 = vperm.slane %v4295, %v3241
    %v4700 = vsel %vm3243, %v4699, %v4698
    %v4701 = vperm.slane %v4298, %v3245
    %v4702 = vsel %vm3247, %v4701, %v4700
    %v4703 = vperm.slane %v4301, %v3239
    %v4704 = vperm.slane %v4304, %v3241
    %v4705 = vsel %vm3243, %v4704, %v4703
    %v4706 = vperm.slane %v4307, %v3245
    %v4707 = vsel %vm3247, %v4706, %v4705
    %v4708 = vperm.slane %v4310, %v3239
    %v4709 = vperm.slane %v4313, %v3241
    %v4710 = vsel %vm3243, %v4709, %v4708
    %v4711 = vperm.slane %v4316, %v3245
    %v4712 = vsel %vm3247, %v4711, %v4710
    %v4713 = vperm.slane %v4319, %v3239
    %v4714 = vperm.slane %v4322, %v3241
    %v4715 = vsel %vm3243, %v4714, %v4713
    %v4716 = vperm.slane %v4325, %v3245
    %v4717 = vsel %vm3247, %v4716, %v4715
    %v4718 = vperm.slane %v4328, %v3239
    %v4719 = vperm.slane %v4331, %v3241
    %v4720 = vsel %vm3243, %v4719, %v4718
    %v4721 = vperm.slane %v4334, %v3245
    %v4722 = vsel %vm3247, %v4721, %v4720
    %v4723 = vperm.slane %v4337, %v3239
    %v4724 = vperm.slane %v4340, %v3241
    %v4725 = vsel %vm3243, %v4724, %v4723
    %v4726 = vperm.slane %v4343, %v3245
    %v4727 = vsel %vm3247, %v4726, %v4725
    %v4728 = vperm.slane %v4346, %v3239
    %v4729 = vperm.slane %v4349, %v3241
    %v4730 = vsel %vm3243, %v4729, %v4728
    %v4731 = vperm.slane %v4352, %v3245
    %v4732 = vsel %vm3247, %v4731, %v4730
    %v4733 = vperm.slane %v4355, %v3239
    %v4734 = vperm.slane %v4358, %v3241
    %v4735 = vsel %vm3243, %v4734, %v4733
    %v4736 = vperm.slane %v4361, %v3245
    %v4737 = vsel %vm3247, %v4736, %v4735
    %v4738 = vperm.slane %v4364, %v3239
    %v4739 = vperm.slane %v4367, %v3241
    %v4740 = vsel %vm3243, %v4739, %v4738
    %v4741 = vperm.slane %v4370, %v3245
    %v4742 = vsel %vm3247, %v4741, %v4740
    %v4743 = vperm.slane %v4373, %v3239
    %v4744 = vperm.slane %v4376, %v3241
    %v4745 = vsel %vm3243, %v4744, %v4743
    %v4746 = vperm.slane %v4379, %v3245
    %v4747 = vsel %vm3247, %v4746, %v4745
    %v4748 = vperm.slane %v4382, %v3239
    %v4749 = vperm.slane %v4385, %v3241
    %v4750 = vsel %vm3243, %v4749, %v4748
    %v4751 = vperm.slane %v4388, %v3245
    %v4752 = vsel %vm3247, %v4751, %v4750
    %v4753 = vperm.slane %v4391, %v3239
    %v4754 = vperm.slane %v4394, %v3241
    %v4755 = vsel %vm3243, %v4754, %v4753
    %v4756 = vperm.slane %v4397, %v3245
    %v4757 = vsel %vm3247, %v4756, %v4755
    %v4758 = vperm.slane %v4400, %v3239
    %v4759 = vperm.slane %v4403, %v3241
    %v4760 = vsel %vm3243, %v4759, %v4758
    %v4761 = vperm.slane %v4406, %v3245
    %v4762 = vsel %vm3247, %v4761, %v4760
    %v4763 = vperm.slane %v4409, %v3239
    %v4764 = vperm.slane %v4412, %v3241
    %v4765 = vsel %vm3243, %v4764, %v4763
    %v4766 = vperm.slane %v4415, %v3245
    %v4767 = vsel %vm3247, %v4766, %v4765
    %v4768 = vperm.slane %v4418, %v3239
    %v4769 = vperm.slane %v4421, %v3241
    %v4770 = vsel %vm3243, %v4769, %v4768
    %v4771 = vperm.slane %v4424, %v3245
    %v4772 = vsel %vm3247, %v4771, %v4770
    %v4773 = vperm.slane %v4427, %v3239
    %v4774 = vperm.slane %v4430, %v3241
    %v4775 = vsel %vm3243, %v4774, %v4773
    %v4776 = vperm.slane %v4433, %v3245
    %v4777 = vsel %vm3247, %v4776, %v4775
    %v4778 = vperm.slane %v4436, %v3239
    %v4779 = vperm.slane %v4439, %v3241
    %v4780 = vsel %vm3243, %v4779, %v4778
    %v4781 = vperm.slane %v4442, %v3245
    %v4782 = vsel %vm3247, %v4781, %v4780
    %v4783 = vperm.slane %v4445, %v3239
    %v4784 = vperm.slane %v4448, %v3241
    %v4785 = vsel %vm3243, %v4784, %v4783
    %v4786 = vperm.slane %v4451, %v3245
    %v4787 = vsel %vm3247, %v4786, %v4785
    %v4788 = vperm.slane %v4454, %v3239
    %v4789 = vperm.slane %v4457, %v3241
    %v4790 = vsel %vm3243, %v4789, %v4788
    %v4791 = vperm.slane %v4460, %v3245
    %v4792 = vsel %vm3247, %v4791, %v4790
    %v4793 = vperm.slane %v4463, %v3239
    %v4794 = vperm.slane %v4466, %v3241
    %v4795 = vsel %vm3243, %v4794, %v4793
    %v4796 = vperm.slane %v4469, %v3245
    %v4797 = vsel %vm3247, %v4796, %v4795
    %v4798 = vperm.slane %v4472, %v3239
    %v4799 = vperm.slane %v4475, %v3241
    %v4800 = vsel %vm3243, %v4799, %v4798
    %v4801 = vperm.slane %v4478, %v3245
    %v4802 = vsel %vm3247, %v4801, %v4800
    %v4803 = vperm.slane %v4481, %v3239
    %v4804 = vperm.slane %v4484, %v3241
    %v4805 = vsel %vm3243, %v4804, %v4803
    %v4806 = vperm.slane %v4487, %v3245
    %v4807 = vsel %vm3247, %v4806, %v4805
    %v4808 = vperm.slane %v4490, %v3239
    %v4809 = vperm.slane %v4493, %v3241
    %v4810 = vsel %vm3243, %v4809, %v4808
    %v4811 = vperm.slane %v4496, %v3245
    %v4812 = vsel %vm3247, %v4811, %v4810
    %v4813 = vperm.slane %v4499, %v3239
    %v4814 = vperm.slane %v4502, %v3241
    %v4815 = vsel %vm3243, %v4814, %v4813
    %v4816 = vperm.slane %v4505, %v3245
    %v4817 = vsel %vm3247, %v4816, %v4815
    %v4818 = vperm.slane %v4508, %v3239
    %v4819 = vperm.slane %v4511, %v3241
    %v4820 = vsel %vm3243, %v4819, %v4818
    %v4821 = vperm.slane %v4514, %v3245
    %v4822 = vsel %vm3247, %v4821, %v4820
    %v4823 = vperm.slane %v4517, %v3239
    %v4824 = vperm.slane %v4520, %v3241
    %v4825 = vsel %vm3243, %v4824, %v4823
    %v4826 = vperm.slane %v4523, %v3245
    %v4827 = vsel %vm3247, %v4826, %v4825
    %v4828 = vperm.slane %v4526, %v3239
    %v4829 = vperm.slane %v4529, %v3241
    %v4830 = vsel %vm3243, %v4829, %v4828
    %v4831 = vperm.slane %v4532, %v3245
    %v4832 = vsel %vm3247, %v4831, %v4830
    %v4833 = vperm.slane %v4535, %v3239
    %v4834 = vperm.slane %v4538, %v3241
    %v4835 = vsel %vm3243, %v4834, %v4833
    %v4836 = vperm.slane %v4541, %v3245
    %v4837 = vsel %vm3247, %v4836, %v4835
    %v4838 = vperm.slane %v4544, %v3239
    %v4839 = vperm.slane %v4547, %v3241
    %v4840 = vsel %vm3243, %v4839, %v4838
    %v4841 = vperm.slane %v4550, %v3245
    %v4842 = vsel %vm3247, %v4841, %v4840
    %v4843 = vperm.slane %v4553, %v3239
    %v4844 = vperm.slane %v4556, %v3241
    %v4845 = vsel %vm3243, %v4844, %v4843
    %v4846 = vperm.slane %v4559, %v3245
    %v4847 = vsel %vm3247, %v4846, %v4845
    %v4848 = vperm.slane %v4562, %v3239
    %v4849 = vperm.slane %v4565, %v3241
    %v4850 = vsel %vm3243, %v4849, %v4848
    %v4851 = vperm.slane %v4568, %v3245
    %v4852 = vsel %vm3247, %v4851, %v4850
    %v4853 = vperm.slane %v4571, %v3239
    %v4854 = vperm.slane %v4574, %v3241
    %v4855 = vsel %vm3243, %v4854, %v4853
    %v4856 = vperm.slane %v4577, %v3245
    %v4857 = vsel %vm3247, %v4856, %v4855
    %v4858 = vperm.slane %v4580, %v3239
    %v4859 = vperm.slane %v4583, %v3241
    %v4860 = vsel %vm3243, %v4859, %v4858
    %v4861 = vperm.slane %v4586, %v3245
    %v4862 = vsel %vm3247, %v4861, %v4860
    %v4863 = vperm.slane %v4589, %v3239
    %v4864 = vperm.slane %v4592, %v3241
    %v4865 = vsel %vm3243, %v4864, %v4863
    %v4866 = vperm.slane %v4595, %v3245
    %v4867 = vsel %vm3247, %v4866, %v4865
    %v4868 = vperm.slane %v4598, %v3239
    %v4869 = vperm.slane %v4601, %v3241
    %v4870 = vsel %vm3243, %v4869, %v4868
    %v4871 = vperm.slane %v4604, %v3245
    %v4872 = vsel %vm3247, %v4871, %v4870
    %v4873 = vperm.slane %v4607, %v3239
    %v4874 = vperm.slane %v4610, %v3241
    %v4875 = vsel %vm3243, %v4874, %v4873
    %v4876 = vperm.slane %v4613, %v3245
    %v4877 = vsel %vm3247, %v4876, %v4875
    %v4878 = vperm.slane %v4616, %v3239
    %v4879 = vperm.slane %v4619, %v3241
    %v4880 = vsel %vm3243, %v4879, %v4878
    %v4881 = vperm.slane %v4622, %v3245
    %v4882 = vsel %vm3247, %v4881, %v4880
    %v4883 = vperm.slane %v4625, %v3239
    %v4884 = vperm.slane %v4628, %v3241
    %v4885 = vsel %vm3243, %v4884, %v4883
    %v4886 = vperm.slane %v4631, %v3245
    %v4887 = vsel %vm3247, %v4886, %v4885
    %v4888 = vperm.slane %v4634, %v3239
    %v4889 = vperm.slane %v4637, %v3241
    %v4890 = vsel %vm3243, %v4889, %v4888
    %v4891 = vperm.slane %v4640, %v3245
    %v4892 = vsel %vm3247, %v4891, %v4890
    %v4893 = vperm.slane %v4643, %v3239
    %v4894 = vperm.slane %v4646, %v3241
    %v4895 = vsel %vm3243, %v4894, %v4893
    %v4896 = vperm.slane %v4649, %v3245
    %v4897 = vsel %vm3247, %v4896, %v4895
    %v4898 = vperm.slane %v4652, %v3239
    %v4899 = vperm.slane %v4655, %v3241
    %v4900 = vsel %vm3243, %v4899, %v4898
    %v4901 = vperm.slane %v4658, %v3245
    %v4902 = vsel %vm3247, %v4901, %v4900
    %v4903 = vperm.slane %v4661, %v3239
    %v4904 = vperm.slane %v4664, %v3241
    %v4905 = vsel %vm3243, %v4904, %v4903
    %v4906 = vperm.slane %v4667, %v3245
    %v4907 = vsel %vm3247, %v4906, %v4905
    %v4908 = vsel %vm3484, %v4677, %v4672
    %v4909 = vsel %vm3486, %v4682, %v4908
    %v4910 = vsel %vm3488, %v4687, %v4909
    %v4911 = vsel %vm3490, %v4692, %v4910
    %v4912 = vsel %vm3492, %v4697, %v4911
    %v4913 = vsel %vm3494, %v4702, %v4912
    %v4914 = vsel %vm3496, %v4707, %v4913
    %v4915 = vsel %vm3484, %v4717, %v4712
    %v4916 = vsel %vm3486, %v4722, %v4915
    %v4917 = vsel %vm3488, %v4727, %v4916
    %v4918 = vsel %vm3490, %v4732, %v4917
    %v4919 = vsel %vm3492, %v4737, %v4918
    %v4920 = vsel %vm3494, %v4742, %v4919
    %v4921 = vsel %vm3496, %v4747, %v4920
    %v4922 = vsel %vm3484, %v4757, %v4752
    %v4923 = vsel %vm3486, %v4762, %v4922
    %v4924 = vsel %vm3488, %v4767, %v4923
    %v4925 = vsel %vm3490, %v4772, %v4924
    %v4926 = vsel %vm3492, %v4777, %v4925
    %v4927 = vsel %vm3494, %v4782, %v4926
    %v4928 = vsel %vm3496, %v4787, %v4927
    %v4929 = vsel %vm3484, %v4797, %v4792
    %v4930 = vsel %vm3486, %v4802, %v4929
    %v4931 = vsel %vm3488, %v4807, %v4930
    %v4932 = vsel %vm3490, %v4812, %v4931
    %v4933 = vsel %vm3492, %v4817, %v4932
    %v4934 = vsel %vm3494, %v4822, %v4933
    %v4935 = vsel %vm3496, %v4827, %v4934
    %v4936 = vsel %vm3484, %v4837, %v4832
    %v4937 = vsel %vm3486, %v4842, %v4936
    %v4938 = vsel %vm3488, %v4847, %v4937
    %v4939 = vsel %vm3490, %v4852, %v4938
    %v4940 = vsel %vm3492, %v4857, %v4939
    %v4941 = vsel %vm3494, %v4862, %v4940
    %v4942 = vsel %vm3496, %v4867, %v4941
    %v4943 = vsel %vm3484, %v4877, %v4872
    %v4944 = vsel %vm3486, %v4882, %v4943
    %v4945 = vsel %vm3488, %v4887, %v4944
    %v4946 = vsel %vm3490, %v4892, %v4945
    %v4947 = vsel %vm3492, %v4897, %v4946
    %v4948 = vsel %vm3494, %v4902, %v4947
    %v4949 = vsel %vm3496, %v4907, %v4948
    %v4956 = vsel %vm3539, %v4914, 0.0
    %4957 = vadd.xlane.f32.xlu0 %v4956
    %v4958 = vpop.xlane.xlu0 %4957
    %v4959 = vsel %vm3539, %v4921, 0.0
    %4960 = vadd.xlane.f32.xlu0 %v4959
    %v4961 = vpop.xlane.xlu0 %4960
    %v4962 = vsel %vm3539, %v4928, 0.0
    %4963 = vadd.xlane.f32.xlu0 %v4962
    %v4964 = vpop.xlane.xlu0 %4963
    %v4965 = vsel %vm3539, %v4935, 0.0
    %4966 = vadd.xlane.f32.xlu0 %v4965
    %v4967 = vpop.xlane.xlu0 %4966
    %v4968 = vsel %vm3539, %v4942, 0.0
    %4969 = vadd.xlane.f32.xlu0 %v4968
    %v4970 = vpop.xlane.xlu0 %4969
    %v4971 = vsel %vm3539, %v4949, 0.0
    %4972 = vadd.xlane.f32.xlu0 %v4971
    %v4973 = vpop.xlane.xlu0 %4972
    %v4974 = vrcp.pop %v4958
    %v4975 = vrcp.pop %v4961
    %v4976 = vrcp.pop %v4964
    %v4977 = vrcp.pop %v4967
    %v4978 = vrcp.pop %v4970
    %v4979 = vrcp.pop %v4973
    %v4986 = vperm.slane %v4974, 0
    %v4987 = vperm.slane %v4974, 1
    %v4988 = vperm.slane %v4974, 2
    %v4989 = vperm.slane %v4974, 3
    %v4990 = vperm.slane %v4974, 4
    %v4991 = vperm.slane %v4974, 5
    %v4992 = vperm.slane %v4974, 6
    %v4993 = vperm.slane %v4974, 7
    %v4994 = vperm.slane %v4975, 0
    %v4995 = vperm.slane %v4975, 1
    %v4996 = vperm.slane %v4975, 2
    %v4997 = vperm.slane %v4975, 3
    %v4998 = vperm.slane %v4975, 4
    %v4999 = vperm.slane %v4975, 5
    %v5000 = vperm.slane %v4975, 6
    %v5001 = vperm.slane %v4975, 7
    %v5002 = vperm.slane %v4976, 0
    %v5003 = vperm.slane %v4976, 1
    %v5004 = vperm.slane %v4976, 2
    %v5005 = vperm.slane %v4976, 3
    %v5006 = vperm.slane %v4976, 4
    %v5007 = vperm.slane %v4976, 5
    %v5008 = vperm.slane %v4976, 6
    %v5009 = vperm.slane %v4976, 7
    %v5010 = vperm.slane %v4977, 0
    %v5011 = vperm.slane %v4977, 1
    %v5012 = vperm.slane %v4977, 2
    %v5013 = vperm.slane %v4977, 3
    %v5014 = vperm.slane %v4977, 4
    %v5015 = vperm.slane %v4977, 5
    %v5016 = vperm.slane %v4977, 6
    %v5017 = vperm.slane %v4977, 7
    %v5018 = vperm.slane %v4978, 0
    %v5019 = vperm.slane %v4978, 1
    %v5020 = vperm.slane %v4978, 2
    %v5021 = vperm.slane %v4978, 3
    %v5022 = vperm.slane %v4978, 4
    %v5023 = vperm.slane %v4978, 5
    %v5024 = vperm.slane %v4978, 6
    %v5025 = vperm.slane %v4978, 7
    %v5026 = vperm.slane %v4979, 0
    %v5027 = vperm.slane %v4979, 1
    %v5028 = vperm.slane %v4979, 2
    %v5029 = vperm.slane %v4979, 3
    %v5030 = vperm.slane %v4979, 4
    %v5031 = vperm.slane %v4979, 5
    %v5032 = vperm.slane %v4979, 6
    %v5033 = vperm.slane %v4979, 7
    %v5082 = vmul.f32 %v3805, %v4986
    %v5083 = vmul.f32 %v3807, %v4986
    %v5084 = vmul.f32 %v3809, %v4986
    %v5085 = vmul.f32 %v3811, %v4987
    %v5086 = vmul.f32 %v3813, %v4987
    %v5087 = vmul.f32 %v3815, %v4987
    %v5088 = vmul.f32 %v3817, %v4988
    %v5089 = vmul.f32 %v3819, %v4988
    %v5090 = vmul.f32 %v3821, %v4988
    %v5091 = vmul.f32 %v3823, %v4989
    %v5092 = vmul.f32 %v3825, %v4989
    %v5093 = vmul.f32 %v3827, %v4989
    %v5094 = vmul.f32 %v3829, %v4990
    %v5095 = vmul.f32 %v3831, %v4990
    %v5096 = vmul.f32 %v3833, %v4990
    %v5097 = vmul.f32 %v3835, %v4991
    %v5098 = vmul.f32 %v3837, %v4991
    %v5099 = vmul.f32 %v3839, %v4991
    %v5100 = vmul.f32 %v3841, %v4992
    %v5101 = vmul.f32 %v3843, %v4992
    %v5102 = vmul.f32 %v3845, %v4992
    %v5103 = vmul.f32 %v3847, %v4993
    %v5104 = vmul.f32 %v3849, %v4993
    %v5105 = vmul.f32 %v3851, %v4993
    %v5106 = vmul.f32 %v3853, %v4994
    %v5107 = vmul.f32 %v3855, %v4994
    %v5108 = vmul.f32 %v3857, %v4994
    %v5109 = vmul.f32 %v3859, %v4995
    %v5110 = vmul.f32 %v3861, %v4995
    %v5111 = vmul.f32 %v3863, %v4995
    %v5112 = vmul.f32 %v3865, %v4996
    %v5113 = vmul.f32 %v3867, %v4996
    %v5114 = vmul.f32 %v3869, %v4996
    %v5115 = vmul.f32 %v3871, %v4997
    %v5116 = vmul.f32 %v3873, %v4997
    %v5117 = vmul.f32 %v3875, %v4997
    %v5118 = vmul.f32 %v3877, %v4998
    %v5119 = vmul.f32 %v3879, %v4998
    %v5120 = vmul.f32 %v3881, %v4998
    %v5121 = vmul.f32 %v3883, %v4999
    %v5122 = vmul.f32 %v3885, %v4999
    %v5123 = vmul.f32 %v3887, %v4999
    %v5124 = vmul.f32 %v3889, %v5000
    %v5125 = vmul.f32 %v3891, %v5000
    %v5126 = vmul.f32 %v3893, %v5000
    %v5127 = vmul.f32 %v3895, %v5001
    %v5128 = vmul.f32 %v3897, %v5001
    %v5129 = vmul.f32 %v3899, %v5001
    %v5130 = vmul.f32 %v3901, %v5002
    %v5131 = vmul.f32 %v3903, %v5002
    %v5132 = vmul.f32 %v3905, %v5002
    %v5133 = vmul.f32 %v3907, %v5003
    %v5134 = vmul.f32 %v3909, %v5003
    %v5135 = vmul.f32 %v3911, %v5003
    %v5136 = vmul.f32 %v3913, %v5004
    %v5137 = vmul.f32 %v3915, %v5004
    %v5138 = vmul.f32 %v3917, %v5004
    %v5139 = vmul.f32 %v3919, %v5005
    %v5140 = vmul.f32 %v3921, %v5005
    %v5141 = vmul.f32 %v3923, %v5005
    %v5142 = vmul.f32 %v3925, %v5006
    %v5143 = vmul.f32 %v3927, %v5006
    %v5144 = vmul.f32 %v3929, %v5006
    %v5145 = vmul.f32 %v3931, %v5007
    %v5146 = vmul.f32 %v3933, %v5007
    %v5147 = vmul.f32 %v3935, %v5007
    %v5148 = vmul.f32 %v3937, %v5008
    %v5149 = vmul.f32 %v3939, %v5008
    %v5150 = vmul.f32 %v3941, %v5008
    %v5151 = vmul.f32 %v3943, %v5009
    %v5152 = vmul.f32 %v3945, %v5009
    %v5153 = vmul.f32 %v3947, %v5009
    %v5154 = vmul.f32 %v3949, %v5010
    %v5155 = vmul.f32 %v3951, %v5010
    %v5156 = vmul.f32 %v3953, %v5010
    %v5157 = vmul.f32 %v3955, %v5011
    %v5158 = vmul.f32 %v3957, %v5011
    %v5159 = vmul.f32 %v3959, %v5011
    %v5160 = vmul.f32 %v3961, %v5012
    %v5161 = vmul.f32 %v3963, %v5012
    %v5162 = vmul.f32 %v3965, %v5012
    %v5163 = vmul.f32 %v3967, %v5013
    %v5164 = vmul.f32 %v3969, %v5013
    %v5165 = vmul.f32 %v3971, %v5013
    %v5166 = vmul.f32 %v3973, %v5014
    %v5167 = vmul.f32 %v3975, %v5014
    %v5168 = vmul.f32 %v3977, %v5014
    %v5169 = vmul.f32 %v3979, %v5015
    %v5170 = vmul.f32 %v3981, %v5015
    %v5171 = vmul.f32 %v3983, %v5015
    %v5172 = vmul.f32 %v3985, %v5016
    %v5173 = vmul.f32 %v3987, %v5016
    %v5174 = vmul.f32 %v3989, %v5016
    %v5175 = vmul.f32 %v3991, %v5017
    %v5176 = vmul.f32 %v3993, %v5017
    %v5177 = vmul.f32 %v3995, %v5017
    %v5178 = vmul.f32 %v3997, %v5018
    %v5179 = vmul.f32 %v3999, %v5018
    %v5180 = vmul.f32 %v4001, %v5018
    %v5181 = vmul.f32 %v4003, %v5019
    %v5182 = vmul.f32 %v4005, %v5019
    %v5183 = vmul.f32 %v4007, %v5019
    %v5184 = vmul.f32 %v4009, %v5020
    %v5185 = vmul.f32 %v4011, %v5020
    %v5186 = vmul.f32 %v4013, %v5020
    %v5187 = vmul.f32 %v4015, %v5021
    %v5188 = vmul.f32 %v4017, %v5021
    %v5189 = vmul.f32 %v4019, %v5021
    %v5190 = vmul.f32 %v4021, %v5022
    %v5191 = vmul.f32 %v4023, %v5022
    %v5192 = vmul.f32 %v4025, %v5022
    %v5193 = vmul.f32 %v4027, %v5023
    %v5194 = vmul.f32 %v4029, %v5023
    %v5195 = vmul.f32 %v4031, %v5023
    %v5196 = vmul.f32 %v4033, %v5024
    %v5197 = vmul.f32 %v4035, %v5024
    %v5198 = vmul.f32 %v4037, %v5024
    %v5199 = vmul.f32 %v4039, %v5025
    %v5200 = vmul.f32 %v4041, %v5025
    %v5201 = vmul.f32 %v4043, %v5025
    %v5202 = vmul.f32 %v4045, %v5026
    %v5203 = vmul.f32 %v4047, %v5026
    %v5204 = vmul.f32 %v4049, %v5026
    %v5205 = vmul.f32 %v4051, %v5027
    %v5206 = vmul.f32 %v4053, %v5027
    %v5207 = vmul.f32 %v4055, %v5027
    %v5208 = vmul.f32 %v4057, %v5028
    %v5209 = vmul.f32 %v4059, %v5028
    %v5210 = vmul.f32 %v4061, %v5028
    %v5211 = vmul.f32 %v4063, %v5029
    %v5212 = vmul.f32 %v4065, %v5029
    %v5213 = vmul.f32 %v4067, %v5029
    %v5214 = vmul.f32 %v4069, %v5030
    %v5215 = vmul.f32 %v4071, %v5030
    %v5216 = vmul.f32 %v4073, %v5030
    %v5217 = vmul.f32 %v4075, %v5031
    %v5218 = vmul.f32 %v4077, %v5031
    %v5219 = vmul.f32 %v4079, %v5031
    %v5220 = vmul.f32 %v4081, %v5032
    %v5221 = vmul.f32 %v4083, %v5032
    %v5222 = vmul.f32 %v4085, %v5032
    %v5223 = vmul.f32 %v4087, %v5033
    %v5224 = vmul.f32 %v4089, %v5033
    %v5225 = vmul.f32 %v4091, %v5033
    %v5226 = vpack.c.bf16 %v5082, %v5082
    %v5227 = vpack.c.bf16 %v5083, %v5083
    %v5228 = vpack.c.bf16 %v5084, %v5084
    %v5229 = vpack.c.bf16 %v5085, %v5085
    %v5230 = vpack.c.bf16 %v5086, %v5086
    %v5231 = vpack.c.bf16 %v5087, %v5087
    %v5232 = vpack.c.bf16 %v5088, %v5088
    %v5233 = vpack.c.bf16 %v5089, %v5089
    %v5234 = vpack.c.bf16 %v5090, %v5090
    %v5235 = vpack.c.bf16 %v5091, %v5091
    %v5236 = vpack.c.bf16 %v5092, %v5092
    %v5237 = vpack.c.bf16 %v5093, %v5093
    %v5238 = vpack.c.bf16 %v5094, %v5094
    %v5239 = vpack.c.bf16 %v5095, %v5095
    %v5240 = vpack.c.bf16 %v5096, %v5096
    %v5241 = vpack.c.bf16 %v5097, %v5097
    %v5242 = vpack.c.bf16 %v5098, %v5098
    %v5243 = vpack.c.bf16 %v5099, %v5099
    %v5244 = vpack.c.bf16 %v5100, %v5100
    %v5245 = vpack.c.bf16 %v5101, %v5101
    %v5246 = vpack.c.bf16 %v5102, %v5102
    %v5247 = vpack.c.bf16 %v5103, %v5103
    %v5248 = vpack.c.bf16 %v5104, %v5104
    %v5249 = vpack.c.bf16 %v5105, %v5105
    %v5250 = vpack.c.bf16 %v5106, %v5106
    %v5251 = vpack.c.bf16 %v5107, %v5107
    %v5252 = vpack.c.bf16 %v5108, %v5108
    %v5253 = vpack.c.bf16 %v5109, %v5109
    %v5254 = vpack.c.bf16 %v5110, %v5110
    %v5255 = vpack.c.bf16 %v5111, %v5111
    %v5256 = vpack.c.bf16 %v5112, %v5112
    %v5257 = vpack.c.bf16 %v5113, %v5113
    %v5258 = vpack.c.bf16 %v5114, %v5114
    %v5259 = vpack.c.bf16 %v5115, %v5115
    %v5260 = vpack.c.bf16 %v5116, %v5116
    %v5261 = vpack.c.bf16 %v5117, %v5117
    %v5262 = vpack.c.bf16 %v5118, %v5118
    %v5263 = vpack.c.bf16 %v5119, %v5119
    %v5264 = vpack.c.bf16 %v5120, %v5120
    %v5265 = vpack.c.bf16 %v5121, %v5121
    %v5266 = vpack.c.bf16 %v5122, %v5122
    %v5267 = vpack.c.bf16 %v5123, %v5123
    %v5268 = vpack.c.bf16 %v5124, %v5124
    %v5269 = vpack.c.bf16 %v5125, %v5125
    %v5270 = vpack.c.bf16 %v5126, %v5126
    %v5271 = vpack.c.bf16 %v5127, %v5127
    %v5272 = vpack.c.bf16 %v5128, %v5128
    %v5273 = vpack.c.bf16 %v5129, %v5129
    %v5274 = vpack.c.bf16 %v5130, %v5130
    %v5275 = vpack.c.bf16 %v5131, %v5131
    %v5276 = vpack.c.bf16 %v5132, %v5132
    %v5277 = vpack.c.bf16 %v5133, %v5133
    %v5278 = vpack.c.bf16 %v5134, %v5134
    %v5279 = vpack.c.bf16 %v5135, %v5135
    %v5280 = vpack.c.bf16 %v5136, %v5136
    %v5281 = vpack.c.bf16 %v5137, %v5137
    %v5282 = vpack.c.bf16 %v5138, %v5138
    %v5283 = vpack.c.bf16 %v5139, %v5139
    %v5284 = vpack.c.bf16 %v5140, %v5140
    %v5285 = vpack.c.bf16 %v5141, %v5141
    %v5286 = vpack.c.bf16 %v5142, %v5142
    %v5287 = vpack.c.bf16 %v5143, %v5143
    %v5288 = vpack.c.bf16 %v5144, %v5144
    %v5289 = vpack.c.bf16 %v5145, %v5145
    %v5290 = vpack.c.bf16 %v5146, %v5146
    %v5291 = vpack.c.bf16 %v5147, %v5147
    %v5292 = vpack.c.bf16 %v5148, %v5148
    %v5293 = vpack.c.bf16 %v5149, %v5149
    %v5294 = vpack.c.bf16 %v5150, %v5150
    %v5295 = vpack.c.bf16 %v5151, %v5151
    %v5296 = vpack.c.bf16 %v5152, %v5152
    %v5297 = vpack.c.bf16 %v5153, %v5153
    %v5298 = vpack.c.bf16 %v5154, %v5154
    %v5299 = vpack.c.bf16 %v5155, %v5155
    %v5300 = vpack.c.bf16 %v5156, %v5156
    %v5301 = vpack.c.bf16 %v5157, %v5157
    %v5302 = vpack.c.bf16 %v5158, %v5158
    %v5303 = vpack.c.bf16 %v5159, %v5159
    %v5304 = vpack.c.bf16 %v5160, %v5160
    %v5305 = vpack.c.bf16 %v5161, %v5161
    %v5306 = vpack.c.bf16 %v5162, %v5162
    %v5307 = vpack.c.bf16 %v5163, %v5163
    %v5308 = vpack.c.bf16 %v5164, %v5164
    %v5309 = vpack.c.bf16 %v5165, %v5165
    %v5310 = vpack.c.bf16 %v5166, %v5166
    %v5311 = vpack.c.bf16 %v5167, %v5167
    %v5312 = vpack.c.bf16 %v5168, %v5168
    %v5313 = vpack.c.bf16 %v5169, %v5169
    %v5314 = vpack.c.bf16 %v5170, %v5170
    %v5315 = vpack.c.bf16 %v5171, %v5171
    %v5316 = vpack.c.bf16 %v5172, %v5172
    %v5317 = vpack.c.bf16 %v5173, %v5173
    %v5318 = vpack.c.bf16 %v5174, %v5174
    %v5319 = vpack.c.bf16 %v5175, %v5175
    %v5320 = vpack.c.bf16 %v5176, %v5176
    %v5321 = vpack.c.bf16 %v5177, %v5177
    %v5322 = vpack.c.bf16 %v5178, %v5178
    %v5323 = vpack.c.bf16 %v5179, %v5179
    %v5324 = vpack.c.bf16 %v5180, %v5180
    %v5325 = vpack.c.bf16 %v5181, %v5181
    %v5326 = vpack.c.bf16 %v5182, %v5182
    %v5327 = vpack.c.bf16 %v5183, %v5183
    %v5328 = vpack.c.bf16 %v5184, %v5184
    %v5329 = vpack.c.bf16 %v5185, %v5185
    %v5330 = vpack.c.bf16 %v5186, %v5186
    %v5331 = vpack.c.bf16 %v5187, %v5187
    %v5332 = vpack.c.bf16 %v5188, %v5188
    %v5333 = vpack.c.bf16 %v5189, %v5189
    %v5334 = vpack.c.bf16 %v5190, %v5190
    %v5335 = vpack.c.bf16 %v5191, %v5191
    %v5336 = vpack.c.bf16 %v5192, %v5192
    %v5337 = vpack.c.bf16 %v5193, %v5193
    %v5338 = vpack.c.bf16 %v5194, %v5194
    %v5339 = vpack.c.bf16 %v5195, %v5195
    %v5340 = vpack.c.bf16 %v5196, %v5196
    %v5341 = vpack.c.bf16 %v5197, %v5197
    %v5342 = vpack.c.bf16 %v5198, %v5198
    %v5343 = vpack.c.bf16 %v5199, %v5199
    %v5344 = vpack.c.bf16 %v5200, %v5200
    %v5345 = vpack.c.bf16 %v5201, %v5201
    %v5346 = vpack.c.bf16 %v5202, %v5202
    %v5347 = vpack.c.bf16 %v5203, %v5203
    %v5348 = vpack.c.bf16 %v5204, %v5204
    %v5349 = vpack.c.bf16 %v5205, %v5205
    %v5350 = vpack.c.bf16 %v5206, %v5206
    %v5351 = vpack.c.bf16 %v5207, %v5207
    %v5352 = vpack.c.bf16 %v5208, %v5208
    %v5353 = vpack.c.bf16 %v5209, %v5209
    %v5354 = vpack.c.bf16 %v5210, %v5210
    %v5355 = vpack.c.bf16 %v5211, %v5211
    %v5356 = vpack.c.bf16 %v5212, %v5212
    %v5357 = vpack.c.bf16 %v5213, %v5213
    %v5358 = vpack.c.bf16 %v5214, %v5214
    %v5359 = vpack.c.bf16 %v5215, %v5215
    %v5360 = vpack.c.bf16 %v5216, %v5216
    %v5361 = vpack.c.bf16 %v5217, %v5217
    %v5362 = vpack.c.bf16 %v5218, %v5218
    %v5363 = vpack.c.bf16 %v5219, %v5219
    %v5364 = vpack.c.bf16 %v5220, %v5220
    %v5365 = vpack.c.bf16 %v5221, %v5221
    %v5366 = vpack.c.bf16 %v5222, %v5222
    %v5367 = vpack.c.bf16 %v5223, %v5223
    %v5368 = vpack.c.bf16 %v5224, %v5224
    %v5369 = vpack.c.bf16 %v5225, %v5225
    %v5370 = vpack.c.bf16 %v169, %v169
    %v5371 = vpack.c.bf16 %v171, %v171
    %v5372 = vpack.c.bf16 %v174, %v174
    %v5373 = vpack.c.bf16 %v181, %v181
    %v5374 = vpack.c.bf16 %v183, %v183
    %v5375 = vpack.c.bf16 %v185, %v185
    %v5448 = vunpack.c.l.b16 %v5226
    %v5449 = vunpack.c.l.b16 %v5227
    %v5450 = vunpack.c.l.b16 %v5228
    %v5451 = vunpack.c.l.b16 %v5229
    %v5452 = vunpack.c.l.b16 %v5230
    %v5453 = vunpack.c.l.b16 %v5231
    %v5454 = vunpack.c.l.b16 %v5232
    %v5455 = vunpack.c.l.b16 %v5233
    %v5456 = vunpack.c.l.b16 %v5234
    %v5457 = vunpack.c.l.b16 %v5235
    %v5458 = vunpack.c.l.b16 %v5236
    %v5459 = vunpack.c.l.b16 %v5237
    %v5460 = vunpack.c.l.b16 %v5238
    %v5461 = vunpack.c.l.b16 %v5239
    %v5462 = vunpack.c.l.b16 %v5240
    %v5463 = vunpack.c.l.b16 %v5241
    %v5464 = vunpack.c.l.b16 %v5242
    %v5465 = vunpack.c.l.b16 %v5243
    %v5466 = vunpack.c.l.b16 %v5244
    %v5467 = vunpack.c.l.b16 %v5245
    %v5468 = vunpack.c.l.b16 %v5246
    %v5469 = vunpack.c.l.b16 %v5247
    %v5470 = vunpack.c.l.b16 %v5248
    %v5471 = vunpack.c.l.b16 %v5249
    %v5472 = vunpack.c.l.b16 %v5250
    %v5473 = vunpack.c.l.b16 %v5251
    %v5474 = vunpack.c.l.b16 %v5252
    %v5475 = vunpack.c.l.b16 %v5253
    %v5476 = vunpack.c.l.b16 %v5254
    %v5477 = vunpack.c.l.b16 %v5255
    %v5478 = vunpack.c.l.b16 %v5256
    %v5479 = vunpack.c.l.b16 %v5257
    %v5480 = vunpack.c.l.b16 %v5258
    %v5481 = vunpack.c.l.b16 %v5259
    %v5482 = vunpack.c.l.b16 %v5260
    %v5483 = vunpack.c.l.b16 %v5261
    %v5484 = vunpack.c.l.b16 %v5262
    %v5485 = vunpack.c.l.b16 %v5263
    %v5486 = vunpack.c.l.b16 %v5264
    %v5487 = vunpack.c.l.b16 %v5265
    %v5488 = vunpack.c.l.b16 %v5266
    %v5489 = vunpack.c.l.b16 %v5267
    %v5490 = vunpack.c.l.b16 %v5268
    %v5491 = vunpack.c.l.b16 %v5269
    %v5492 = vunpack.c.l.b16 %v5270
    %v5493 = vunpack.c.l.b16 %v5271
    %v5494 = vunpack.c.l.b16 %v5272
    %v5495 = vunpack.c.l.b16 %v5273
    %v5496 = vunpack.c.l.b16 %v5274
    %v5497 = vunpack.c.l.b16 %v5275
    %v5498 = vunpack.c.l.b16 %v5276
    %v5499 = vunpack.c.l.b16 %v5277
    %v5500 = vunpack.c.l.b16 %v5278
    %v5501 = vunpack.c.l.b16 %v5279
    %v5502 = vunpack.c.l.b16 %v5280
    %v5503 = vunpack.c.l.b16 %v5281
    %v5504 = vunpack.c.l.b16 %v5282
    %v5505 = vunpack.c.l.b16 %v5283
    %v5506 = vunpack.c.l.b16 %v5284
    %v5507 = vunpack.c.l.b16 %v5285
    %v5508 = vunpack.c.l.b16 %v5286
    %v5509 = vunpack.c.l.b16 %v5287
    %v5510 = vunpack.c.l.b16 %v5288
    %v5511 = vunpack.c.l.b16 %v5289
    %v5512 = vunpack.c.l.b16 %v5290
    %v5513 = vunpack.c.l.b16 %v5291
    %v5514 = vunpack.c.l.b16 %v5292
    %v5515 = vunpack.c.l.b16 %v5293
    %v5516 = vunpack.c.l.b16 %v5294
    %v5517 = vunpack.c.l.b16 %v5295
    %v5518 = vunpack.c.l.b16 %v5296
    %v5519 = vunpack.c.l.b16 %v5297
    %v5520 = vpack.c.b16 %v5449, %v5448
    %v5521 = vpack.c.b16 %v5450, %v5450
    %v5522 = vpack.c.b16 %v5452, %v5451
    %v5523 = vpack.c.b16 %v5453, %v5453
    %v5524 = vpack.c.b16 %v5455, %v5454
    %v5525 = vpack.c.b16 %v5456, %v5456
    %v5526 = vpack.c.b16 %v5458, %v5457
    %v5527 = vpack.c.b16 %v5459, %v5459
    %v5528 = vpack.c.b16 %v5461, %v5460
    %v5529 = vpack.c.b16 %v5462, %v5462
    %v5530 = vpack.c.b16 %v5464, %v5463
    %v5531 = vpack.c.b16 %v5465, %v5465
    %v5532 = vpack.c.b16 %v5467, %v5466
    %v5533 = vpack.c.b16 %v5468, %v5468
    %v5534 = vpack.c.b16 %v5470, %v5469
    %v5535 = vpack.c.b16 %v5471, %v5471
    %v5536 = vpack.c.b16 %v5473, %v5472
    %v5537 = vpack.c.b16 %v5474, %v5474
    %v5538 = vpack.c.b16 %v5476, %v5475
    %v5539 = vpack.c.b16 %v5477, %v5477
    %v5540 = vpack.c.b16 %v5479, %v5478
    %v5541 = vpack.c.b16 %v5480, %v5480
    %v5542 = vpack.c.b16 %v5482, %v5481
    %v5543 = vpack.c.b16 %v5483, %v5483
    %v5544 = vpack.c.b16 %v5485, %v5484
    %v5545 = vpack.c.b16 %v5486, %v5486
    %v5546 = vpack.c.b16 %v5488, %v5487
    %v5547 = vpack.c.b16 %v5489, %v5489
    %v5548 = vpack.c.b16 %v5491, %v5490
    %v5549 = vpack.c.b16 %v5492, %v5492
    %v5550 = vpack.c.b16 %v5494, %v5493
    %v5551 = vpack.c.b16 %v5495, %v5495
    %v5552 = vpack.c.b16 %v5497, %v5496
    %v5553 = vpack.c.b16 %v5498, %v5498
    %v5554 = vpack.c.b16 %v5500, %v5499
    %v5555 = vpack.c.b16 %v5501, %v5501
    %v5556 = vpack.c.b16 %v5503, %v5502
    %v5557 = vpack.c.b16 %v5504, %v5504
    %v5558 = vpack.c.b16 %v5506, %v5505
    %v5559 = vpack.c.b16 %v5507, %v5507
    %v5560 = vpack.c.b16 %v5509, %v5508
    %v5561 = vpack.c.b16 %v5510, %v5510
    %v5562 = vpack.c.b16 %v5512, %v5511
    %v5563 = vpack.c.b16 %v5513, %v5513
    %v5564 = vpack.c.b16 %v5515, %v5514
    %v5565 = vpack.c.b16 %v5516, %v5516
    %v5566 = vpack.c.b16 %v5518, %v5517
    %v5567 = vpack.c.b16 %v5519, %v5519
    %v5568 = vunpack.c.l.b16 %v5520
    %v5569 = vunpack.c.h.b16 %v5520
    %v5570 = vunpack.c.l.b16 %v5521
    %v5571 = vunpack.c.l.b16 %v5522
    %v5572 = vunpack.c.h.b16 %v5522
    %v5573 = vunpack.c.l.b16 %v5523
    %v5574 = vunpack.c.l.b16 %v5524
    %v5575 = vunpack.c.h.b16 %v5524
    %v5576 = vunpack.c.l.b16 %v5525
    %v5577 = vunpack.c.l.b16 %v5526
    %v5578 = vunpack.c.h.b16 %v5526
    %v5579 = vunpack.c.l.b16 %v5527
    %v5580 = vunpack.c.l.b16 %v5528
    %v5581 = vunpack.c.h.b16 %v5528
    %v5582 = vunpack.c.l.b16 %v5529
    %v5583 = vunpack.c.l.b16 %v5530
    %v5584 = vunpack.c.h.b16 %v5530
    %v5585 = vunpack.c.l.b16 %v5531
    %v5586 = vunpack.c.l.b16 %v5532
    %v5587 = vunpack.c.h.b16 %v5532
    %v5588 = vunpack.c.l.b16 %v5533
    %v5589 = vunpack.c.l.b16 %v5534
    %v5590 = vunpack.c.h.b16 %v5534
    %v5591 = vunpack.c.l.b16 %v5535
    %v5592 = vunpack.c.l.b16 %v5536
    %v5593 = vunpack.c.h.b16 %v5536
    %v5594 = vunpack.c.l.b16 %v5537
    %v5595 = vunpack.c.l.b16 %v5538
    %v5596 = vunpack.c.h.b16 %v5538
    %v5597 = vunpack.c.l.b16 %v5539
    %v5598 = vunpack.c.l.b16 %v5540
    %v5599 = vunpack.c.h.b16 %v5540
    %v5600 = vunpack.c.l.b16 %v5541
    %v5601 = vunpack.c.l.b16 %v5542
    %v5602 = vunpack.c.h.b16 %v5542
    %v5603 = vunpack.c.l.b16 %v5543
    %v5604 = vunpack.c.l.b16 %v5544
    %v5605 = vunpack.c.h.b16 %v5544
    %v5606 = vunpack.c.l.b16 %v5545
    %v5607 = vunpack.c.l.b16 %v5546
    %v5608 = vunpack.c.h.b16 %v5546
    %v5609 = vunpack.c.l.b16 %v5547
    %v5610 = vunpack.c.l.b16 %v5548
    %v5611 = vunpack.c.h.b16 %v5548
    %v5612 = vunpack.c.l.b16 %v5549
    %v5613 = vunpack.c.l.b16 %v5550
    %v5614 = vunpack.c.h.b16 %v5550
    %v5615 = vunpack.c.l.b16 %v5551
    %v5616 = vunpack.c.l.b16 %v5552
    %v5617 = vunpack.c.h.b16 %v5552
    %v5618 = vunpack.c.l.b16 %v5553
    %v5619 = vunpack.c.l.b16 %v5554
    %v5620 = vunpack.c.h.b16 %v5554
    %v5621 = vunpack.c.l.b16 %v5555
    %v5622 = vunpack.c.l.b16 %v5556
    %v5623 = vunpack.c.h.b16 %v5556
    %v5624 = vunpack.c.l.b16 %v5557
    %v5625 = vunpack.c.l.b16 %v5558
    %v5626 = vunpack.c.h.b16 %v5558
    %v5627 = vunpack.c.l.b16 %v5559
    %v5628 = vunpack.c.l.b16 %v5560
    %v5629 = vunpack.c.h.b16 %v5560
    %v5630 = vunpack.c.l.b16 %v5561
    %v5631 = vunpack.c.l.b16 %v5562
    %v5632 = vunpack.c.h.b16 %v5562
    %v5633 = vunpack.c.l.b16 %v5563
    %v5634 = vunpack.c.l.b16 %v5564
    %v5635 = vunpack.c.h.b16 %v5564
    %v5636 = vunpack.c.l.b16 %v5565
    %v5637 = vunpack.c.l.b16 %v5566
    %v5638 = vunpack.c.h.b16 %v5566
    %v5639 = vunpack.c.l.b16 %v5567
    %5640 = vset.pattern.permute.xlu0 0
    %5641 = vperm.xlu0 %5640, %v5568
    %v5642 = vpop.permute.xlu0 %5641
    %5643 = vset.pattern.permute.xlu0 0
    %5644 = vperm.xlu0 %5643, %v5569
    %v5645 = vpop.permute.xlu0 %5644
    %5646 = vset.pattern.permute.xlu0 0
    %5647 = vperm.xlu0 %5646, %v5570
    %v5648 = vpop.permute.xlu0 %5647
    %5649 = vset.pattern.permute.xlu0 0
    %5650 = vperm.xlu0 %5649, %v5571
    %v5651 = vpop.permute.xlu0 %5650
    %5652 = vset.pattern.permute.xlu0 0
    %5653 = vperm.xlu0 %5652, %v5572
    %v5654 = vpop.permute.xlu0 %5653
    %5655 = vset.pattern.permute.xlu0 0
    %5656 = vperm.xlu0 %5655, %v5573
    %v5657 = vpop.permute.xlu0 %5656
    %5658 = vset.pattern.permute.xlu0 0
    %5659 = vperm.xlu0 %5658, %v5574
    %v5660 = vpop.permute.xlu0 %5659
    %5661 = vset.pattern.permute.xlu0 0
    %5662 = vperm.xlu0 %5661, %v5575
    %v5663 = vpop.permute.xlu0 %5662
    %5664 = vset.pattern.permute.xlu0 0
    %5665 = vperm.xlu0 %5664, %v5576
    %v5666 = vpop.permute.xlu0 %5665
    %5667 = vset.pattern.permute.xlu0 0
    %5668 = vperm.xlu0 %5667, %v5577
    %v5669 = vpop.permute.xlu0 %5668
    %5670 = vset.pattern.permute.xlu0 0
    %5671 = vperm.xlu0 %5670, %v5578
    %v5672 = vpop.permute.xlu0 %5671
    %5673 = vset.pattern.permute.xlu0 0
    %5674 = vperm.xlu0 %5673, %v5579
    %v5675 = vpop.permute.xlu0 %5674
    %5676 = vset.pattern.permute.xlu0 0
    %5677 = vperm.xlu0 %5676, %v5580
    %v5678 = vpop.permute.xlu0 %5677
    %5679 = vset.pattern.permute.xlu0 0
    %5680 = vperm.xlu0 %5679, %v5581
    %v5681 = vpop.permute.xlu0 %5680
    %5682 = vset.pattern.permute.xlu0 0
    %5683 = vperm.xlu0 %5682, %v5582
    %v5684 = vpop.permute.xlu0 %5683
    %5685 = vset.pattern.permute.xlu0 0
    %5686 = vperm.xlu0 %5685, %v5583
    %v5687 = vpop.permute.xlu0 %5686
    %5688 = vset.pattern.permute.xlu0 0
    %5689 = vperm.xlu0 %5688, %v5584
    %v5690 = vpop.permute.xlu0 %5689
    %5691 = vset.pattern.permute.xlu0 0
    %5692 = vperm.xlu0 %5691, %v5585
    %v5693 = vpop.permute.xlu0 %5692
    %5694 = vset.pattern.permute.xlu0 0
    %5695 = vperm.xlu0 %5694, %v5586
    %v5696 = vpop.permute.xlu0 %5695
    %5697 = vset.pattern.permute.xlu0 0
    %5698 = vperm.xlu0 %5697, %v5587
    %v5699 = vpop.permute.xlu0 %5698
    %5700 = vset.pattern.permute.xlu0 0
    %5701 = vperm.xlu0 %5700, %v5588
    %v5702 = vpop.permute.xlu0 %5701
    %5703 = vset.pattern.permute.xlu0 0
    %5704 = vperm.xlu0 %5703, %v5589
    %v5705 = vpop.permute.xlu0 %5704
    %5706 = vset.pattern.permute.xlu0 0
    %5707 = vperm.xlu0 %5706, %v5590
    %v5708 = vpop.permute.xlu0 %5707
    %5709 = vset.pattern.permute.xlu0 0
    %5710 = vperm.xlu0 %5709, %v5591
    %v5711 = vpop.permute.xlu0 %5710
    %5712 = vset.pattern.permute.xlu0 0
    %5713 = vperm.xlu0 %5712, %v5592
    %v5714 = vpop.permute.xlu0 %5713
    %5715 = vset.pattern.permute.xlu0 0
    %5716 = vperm.xlu0 %5715, %v5593
    %v5717 = vpop.permute.xlu0 %5716
    %5718 = vset.pattern.permute.xlu0 0
    %5719 = vperm.xlu0 %5718, %v5594
    %v5720 = vpop.permute.xlu0 %5719
    %5721 = vset.pattern.permute.xlu0 0
    %5722 = vperm.xlu0 %5721, %v5595
    %v5723 = vpop.permute.xlu0 %5722
    %5724 = vset.pattern.permute.xlu0 0
    %5725 = vperm.xlu0 %5724, %v5596
    %v5726 = vpop.permute.xlu0 %5725
    %5727 = vset.pattern.permute.xlu0 0
    %5728 = vperm.xlu0 %5727, %v5597
    %v5729 = vpop.permute.xlu0 %5728
    %5730 = vset.pattern.permute.xlu0 0
    %5731 = vperm.xlu0 %5730, %v5598
    %v5732 = vpop.permute.xlu0 %5731
    %5733 = vset.pattern.permute.xlu0 0
    %5734 = vperm.xlu0 %5733, %v5599
    %v5735 = vpop.permute.xlu0 %5734
    %5736 = vset.pattern.permute.xlu0 0
    %5737 = vperm.xlu0 %5736, %v5600
    %v5738 = vpop.permute.xlu0 %5737
    %5739 = vset.pattern.permute.xlu0 0
    %5740 = vperm.xlu0 %5739, %v5601
    %v5741 = vpop.permute.xlu0 %5740
    %5742 = vset.pattern.permute.xlu0 0
    %5743 = vperm.xlu0 %5742, %v5602
    %v5744 = vpop.permute.xlu0 %5743
    %5745 = vset.pattern.permute.xlu0 0
    %5746 = vperm.xlu0 %5745, %v5603
    %v5747 = vpop.permute.xlu0 %5746
    %5748 = vset.pattern.permute.xlu0 0
    %5749 = vperm.xlu0 %5748, %v5604
    %v5750 = vpop.permute.xlu0 %5749
    %5751 = vset.pattern.permute.xlu0 0
    %5752 = vperm.xlu0 %5751, %v5605
    %v5753 = vpop.permute.xlu0 %5752
    %5754 = vset.pattern.permute.xlu0 0
    %5755 = vperm.xlu0 %5754, %v5606
    %v5756 = vpop.permute.xlu0 %5755
    %5757 = vset.pattern.permute.xlu0 0
    %5758 = vperm.xlu0 %5757, %v5607
    %v5759 = vpop.permute.xlu0 %5758
    %5760 = vset.pattern.permute.xlu0 0
    %5761 = vperm.xlu0 %5760, %v5608
    %v5762 = vpop.permute.xlu0 %5761
    %5763 = vset.pattern.permute.xlu0 0
    %5764 = vperm.xlu0 %5763, %v5609
    %v5765 = vpop.permute.xlu0 %5764
    %5766 = vset.pattern.permute.xlu0 0
    %5767 = vperm.xlu0 %5766, %v5610
    %v5768 = vpop.permute.xlu0 %5767
    %5769 = vset.pattern.permute.xlu0 0
    %5770 = vperm.xlu0 %5769, %v5611
    %v5771 = vpop.permute.xlu0 %5770
    %5772 = vset.pattern.permute.xlu0 0
    %5773 = vperm.xlu0 %5772, %v5612
    %v5774 = vpop.permute.xlu0 %5773
    %5775 = vset.pattern.permute.xlu0 0
    %5776 = vperm.xlu0 %5775, %v5613
    %v5777 = vpop.permute.xlu0 %5776
    %5778 = vset.pattern.permute.xlu0 0
    %5779 = vperm.xlu0 %5778, %v5614
    %v5780 = vpop.permute.xlu0 %5779
    %5781 = vset.pattern.permute.xlu0 0
    %5782 = vperm.xlu0 %5781, %v5615
    %v5783 = vpop.permute.xlu0 %5782
    %5784 = vset.pattern.permute.xlu0 0
    %5785 = vperm.xlu0 %5784, %v5616
    %v5786 = vpop.permute.xlu0 %5785
    %5787 = vset.pattern.permute.xlu0 0
    %5788 = vperm.xlu0 %5787, %v5617
    %v5789 = vpop.permute.xlu0 %5788
    %5790 = vset.pattern.permute.xlu0 0
    %5791 = vperm.xlu0 %5790, %v5618
    %v5792 = vpop.permute.xlu0 %5791
    %5793 = vset.pattern.permute.xlu0 0
    %5794 = vperm.xlu0 %5793, %v5619
    %v5795 = vpop.permute.xlu0 %5794
    %5796 = vset.pattern.permute.xlu0 0
    %5797 = vperm.xlu0 %5796, %v5620
    %v5798 = vpop.permute.xlu0 %5797
    %5799 = vset.pattern.permute.xlu0 0
    %5800 = vperm.xlu0 %5799, %v5621
    %v5801 = vpop.permute.xlu0 %5800
    %5802 = vset.pattern.permute.xlu0 0
    %5803 = vperm.xlu0 %5802, %v5622
    %v5804 = vpop.permute.xlu0 %5803
    %5805 = vset.pattern.permute.xlu0 0
    %5806 = vperm.xlu0 %5805, %v5623
    %v5807 = vpop.permute.xlu0 %5806
    %5808 = vset.pattern.permute.xlu0 0
    %5809 = vperm.xlu0 %5808, %v5624
    %v5810 = vpop.permute.xlu0 %5809
    %5811 = vset.pattern.permute.xlu0 0
    %5812 = vperm.xlu0 %5811, %v5625
    %v5813 = vpop.permute.xlu0 %5812
    %5814 = vset.pattern.permute.xlu0 0
    %5815 = vperm.xlu0 %5814, %v5626
    %v5816 = vpop.permute.xlu0 %5815
    %5817 = vset.pattern.permute.xlu0 0
    %5818 = vperm.xlu0 %5817, %v5627
    %v5819 = vpop.permute.xlu0 %5818
    %5820 = vset.pattern.permute.xlu0 0
    %5821 = vperm.xlu0 %5820, %v5628
    %v5822 = vpop.permute.xlu0 %5821
    %5823 = vset.pattern.permute.xlu0 0
    %5824 = vperm.xlu0 %5823, %v5629
    %v5825 = vpop.permute.xlu0 %5824
    %5826 = vset.pattern.permute.xlu0 0
    %5827 = vperm.xlu0 %5826, %v5630
    %v5828 = vpop.permute.xlu0 %5827
    %5829 = vset.pattern.permute.xlu0 0
    %5830 = vperm.xlu0 %5829, %v5631
    %v5831 = vpop.permute.xlu0 %5830
    %5832 = vset.pattern.permute.xlu0 0
    %5833 = vperm.xlu0 %5832, %v5632
    %v5834 = vpop.permute.xlu0 %5833
    %5835 = vset.pattern.permute.xlu0 0
    %5836 = vperm.xlu0 %5835, %v5633
    %v5837 = vpop.permute.xlu0 %5836
    %5838 = vset.pattern.permute.xlu0 0
    %5839 = vperm.xlu0 %5838, %v5634
    %v5840 = vpop.permute.xlu0 %5839
    %5841 = vset.pattern.permute.xlu0 0
    %5842 = vperm.xlu0 %5841, %v5635
    %v5843 = vpop.permute.xlu0 %5842
    %5844 = vset.pattern.permute.xlu0 0
    %5845 = vperm.xlu0 %5844, %v5636
    %v5846 = vpop.permute.xlu0 %5845
    %5847 = vset.pattern.permute.xlu0 0
    %5848 = vperm.xlu0 %5847, %v5637
    %v5849 = vpop.permute.xlu0 %5848
    %5850 = vset.pattern.permute.xlu0 0
    %5851 = vperm.xlu0 %5850, %v5638
    %v5852 = vpop.permute.xlu0 %5851
    %5853 = vset.pattern.permute.xlu0 0
    %5854 = vperm.xlu0 %5853, %v5639
    %v5855 = vpop.permute.xlu0 %5854
    %v5856 = vperm.slane %v5642, %v3239
    %v5857 = vperm.slane %v5645, %v3241
    %v5858 = vsel %vm3243, %v5857, %v5856
    %v5859 = vperm.slane %v5648, %v3245
    %v5860 = vsel %vm3247, %v5859, %v5858
    %v5861 = vperm.slane %v5651, %v3239
    %v5862 = vperm.slane %v5654, %v3241
    %v5863 = vsel %vm3243, %v5862, %v5861
    %v5864 = vperm.slane %v5657, %v3245
    %v5865 = vsel %vm3247, %v5864, %v5863
    %v5866 = vperm.slane %v5660, %v3239
    %v5867 = vperm.slane %v5663, %v3241
    %v5868 = vsel %vm3243, %v5867, %v5866
    %v5869 = vperm.slane %v5666, %v3245
    %v5870 = vsel %vm3247, %v5869, %v5868
    %v5871 = vperm.slane %v5669, %v3239
    %v5872 = vperm.slane %v5672, %v3241
    %v5873 = vsel %vm3243, %v5872, %v5871
    %v5874 = vperm.slane %v5675, %v3245
    %v5875 = vsel %vm3247, %v5874, %v5873
    %v5876 = vperm.slane %v5678, %v3239
    %v5877 = vperm.slane %v5681, %v3241
    %v5878 = vsel %vm3243, %v5877, %v5876
    %v5879 = vperm.slane %v5684, %v3245
    %v5880 = vsel %vm3247, %v5879, %v5878
    %v5881 = vperm.slane %v5687, %v3239
    %v5882 = vperm.slane %v5690, %v3241
    %v5883 = vsel %vm3243, %v5882, %v5881
    %v5884 = vperm.slane %v5693, %v3245
    %v5885 = vsel %vm3247, %v5884, %v5883
    %v5886 = vperm.slane %v5696, %v3239
    %v5887 = vperm.slane %v5699, %v3241
    %v5888 = vsel %vm3243, %v5887, %v5886
    %v5889 = vperm.slane %v5702, %v3245
    %v5890 = vsel %vm3247, %v5889, %v5888
    %v5891 = vperm.slane %v5705, %v3239
    %v5892 = vperm.slane %v5708, %v3241
    %v5893 = vsel %vm3243, %v5892, %v5891
    %v5894 = vperm.slane %v5711, %v3245
    %v5895 = vsel %vm3247, %v5894, %v5893
    %v5896 = vperm.slane %v5714, %v3239
    %v5897 = vperm.slane %v5717, %v3241
    %v5898 = vsel %vm3243, %v5897, %v5896
    %v5899 = vperm.slane %v5720, %v3245
    %v5900 = vsel %vm3247, %v5899, %v5898
    %v5901 = vperm.slane %v5723, %v3239
    %v5902 = vperm.slane %v5726, %v3241
    %v5903 = vsel %vm3243, %v5902, %v5901
    %v5904 = vperm.slane %v5729, %v3245
    %v5905 = vsel %vm3247, %v5904, %v5903
    %v5906 = vperm.slane %v5732, %v3239
    %v5907 = vperm.slane %v5735, %v3241
    %v5908 = vsel %vm3243, %v5907, %v5906
    %v5909 = vperm.slane %v5738, %v3245
    %v5910 = vsel %vm3247, %v5909, %v5908
    %v5911 = vperm.slane %v5741, %v3239
    %v5912 = vperm.slane %v5744, %v3241
    %v5913 = vsel %vm3243, %v5912, %v5911
    %v5914 = vperm.slane %v5747, %v3245
    %v5915 = vsel %vm3247, %v5914, %v5913
    %v5916 = vperm.slane %v5750, %v3239
    %v5917 = vperm.slane %v5753, %v3241
    %v5918 = vsel %vm3243, %v5917, %v5916
    %v5919 = vperm.slane %v5756, %v3245
    %v5920 = vsel %vm3247, %v5919, %v5918
    %v5921 = vperm.slane %v5759, %v3239
    %v5922 = vperm.slane %v5762, %v3241
    %v5923 = vsel %vm3243, %v5922, %v5921
    %v5924 = vperm.slane %v5765, %v3245
    %v5925 = vsel %vm3247, %v5924, %v5923
    %v5926 = vperm.slane %v5768, %v3239
    %v5927 = vperm.slane %v5771, %v3241
    %v5928 = vsel %vm3243, %v5927, %v5926
    %v5929 = vperm.slane %v5774, %v3245
    %v5930 = vsel %vm3247, %v5929, %v5928
    %v5931 = vperm.slane %v5777, %v3239
    %v5932 = vperm.slane %v5780, %v3241
    %v5933 = vsel %vm3243, %v5932, %v5931
    %v5934 = vperm.slane %v5783, %v3245
    %v5935 = vsel %vm3247, %v5934, %v5933
    %v5936 = vperm.slane %v5786, %v3239
    %v5937 = vperm.slane %v5789, %v3241
    %v5938 = vsel %vm3243, %v5937, %v5936
    %v5939 = vperm.slane %v5792, %v3245
    %v5940 = vsel %vm3247, %v5939, %v5938
    %v5941 = vperm.slane %v5795, %v3239
    %v5942 = vperm.slane %v5798, %v3241
    %v5943 = vsel %vm3243, %v5942, %v5941
    %v5944 = vperm.slane %v5801, %v3245
    %v5945 = vsel %vm3247, %v5944, %v5943
    %v5946 = vperm.slane %v5804, %v3239
    %v5947 = vperm.slane %v5807, %v3241
    %v5948 = vsel %vm3243, %v5947, %v5946
    %v5949 = vperm.slane %v5810, %v3245
    %v5950 = vsel %vm3247, %v5949, %v5948
    %v5951 = vperm.slane %v5813, %v3239
    %v5952 = vperm.slane %v5816, %v3241
    %v5953 = vsel %vm3243, %v5952, %v5951
    %v5954 = vperm.slane %v5819, %v3245
    %v5955 = vsel %vm3247, %v5954, %v5953
    %v5956 = vperm.slane %v5822, %v3239
    %v5957 = vperm.slane %v5825, %v3241
    %v5958 = vsel %vm3243, %v5957, %v5956
    %v5959 = vperm.slane %v5828, %v3245
    %v5960 = vsel %vm3247, %v5959, %v5958
    %v5961 = vperm.slane %v5831, %v3239
    %v5962 = vperm.slane %v5834, %v3241
    %v5963 = vsel %vm3243, %v5962, %v5961
    %v5964 = vperm.slane %v5837, %v3245
    %v5965 = vsel %vm3247, %v5964, %v5963
    %v5966 = vperm.slane %v5840, %v3239
    %v5967 = vperm.slane %v5843, %v3241
    %v5968 = vsel %vm3243, %v5967, %v5966
    %v5969 = vperm.slane %v5846, %v3245
    %v5970 = vsel %vm3247, %v5969, %v5968
    %v5971 = vperm.slane %v5849, %v3239
    %v5972 = vperm.slane %v5852, %v3241
    %v5973 = vsel %vm3243, %v5972, %v5971
    %v5974 = vperm.slane %v5855, %v3245
    %v5975 = vsel %vm3247, %v5974, %v5973
    %v5976 = vsel %vm3484, %v5865, %v5860
    %v5977 = vsel %vm3486, %v5870, %v5976
    %v5978 = vsel %vm3488, %v5875, %v5977
    %v5979 = vsel %vm3490, %v5880, %v5978
    %v5980 = vsel %vm3492, %v5885, %v5979
    %v5981 = vsel %vm3494, %v5890, %v5980
    %v5982 = vsel %vm3496, %v5895, %v5981
    %v5983 = vsel %vm3484, %v5905, %v5900
    %v5984 = vsel %vm3486, %v5910, %v5983
    %v5985 = vsel %vm3488, %v5915, %v5984
    %v5986 = vsel %vm3490, %v5920, %v5985
    %v5987 = vsel %vm3492, %v5925, %v5986
    %v5988 = vsel %vm3494, %v5930, %v5987
    %v5989 = vsel %vm3496, %v5935, %v5988
    %v5990 = vsel %vm3484, %v5945, %v5940
    %v5991 = vsel %vm3486, %v5950, %v5990
    %v5992 = vsel %vm3488, %v5955, %v5991
    %v5993 = vsel %vm3490, %v5960, %v5992
    %v5994 = vsel %vm3492, %v5965, %v5993
    %v5995 = vsel %vm3494, %v5970, %v5994
    %v5996 = vsel %vm3496, %v5975, %v5995
    %v5997 = vpack.c.b16 %v5989, %v5982
    %v5998 = vpack.c.b16 %v5996, %v5996
    %v6002 = vunpack.c.l.b16 %v5370
    %v6003 = vunpack.c.l.b16 %v5371
    %v6004 = vunpack.c.l.b16 %v5372
    %v6005 = vpack.c.b16 %v6003, %v6002
    %v6006 = vpack.c.b16 %v6004, %v6004
    %v6009 = vsel %vm3539, %v5997, 0
    %v6012 = vsel %vm3539, %v5998, 0
    %vm6014 = vcmask 1043456
    %v6016 = vsel %vm6014, %v6006, 0
    %6018 = vmatpush.bf16.msra.mxu0 0
    %6019 = vmatpush.bf16.msra.mxu0 0
    %6020 = vmatpush.bf16.msra.mxu0 0
    %6021 = vmatpush.bf16.msra.mxu0 0
    %6022 = vmatpush.bf16.msra.mxu0 0
    %6023 = vmatpush.bf16.msra.mxu0 0
    %6024 = vmatpush.bf16.msra.mxu0 %v6016
    %6025 = vmatpush.bf16.msra.mxu0 %v6005
    %6026 = vmatmul.bf16.gmra.mxu0 %v6009
    %v6027 = vpop.f32.mrf.mxu0
    %v6028 = vadd.f32 0.0, %v6027
    %v6029 = vpop.f32.mrf.mxu0
    %v6030 = vadd.f32 0.0, %v6029
    %6031 = vmatmul.bf16.gmra.mxu0 %v6012
    %v6032 = vpop.f32.mrf.mxu0
    %v6033 = vadd.f32 0.0, %v6032
    %v6034 = vpop.f32.mrf.mxu0
    %6035 = vdwg.mxu0
    %v6108 = vunpack.c.l.b16 %v5298
    %v6109 = vunpack.c.l.b16 %v5299
    %v6110 = vunpack.c.l.b16 %v5300
    %v6111 = vunpack.c.l.b16 %v5301
    %v6112 = vunpack.c.l.b16 %v5302
    %v6113 = vunpack.c.l.b16 %v5303
    %v6114 = vunpack.c.l.b16 %v5304
    %v6115 = vunpack.c.l.b16 %v5305
    %v6116 = vunpack.c.l.b16 %v5306
    %v6117 = vunpack.c.l.b16 %v5307
    %v6118 = vunpack.c.l.b16 %v5308
    %v6119 = vunpack.c.l.b16 %v5309
    %v6120 = vunpack.c.l.b16 %v5310
    %v6121 = vunpack.c.l.b16 %v5311
    %v6122 = vunpack.c.l.b16 %v5312
    %v6123 = vunpack.c.l.b16 %v5313
    %v6124 = vunpack.c.l.b16 %v5314
    %v6125 = vunpack.c.l.b16 %v5315
    %v6126 = vunpack.c.l.b16 %v5316
    %v6127 = vunpack.c.l.b16 %v5317
    %v6128 = vunpack.c.l.b16 %v5318
    %v6129 = vunpack.c.l.b16 %v5319
    %v6130 = vunpack.c.l.b16 %v5320
    %v6131 = vunpack.c.l.b16 %v5321
    %v6132 = vunpack.c.l.b16 %v5322
    %v6133 = vunpack.c.l.b16 %v5323
    %v6134 = vunpack.c.l.b16 %v5324
    %v6135 = vunpack.c.l.b16 %v5325
    %v6136 = vunpack.c.l.b16 %v5326
    %v6137 = vunpack.c.l.b16 %v5327
    %v6138 = vunpack.c.l.b16 %v5328
    %v6139 = vunpack.c.l.b16 %v5329
    %v6140 = vunpack.c.l.b16 %v5330
    %v6141 = vunpack.c.l.b16 %v5331
    %v6142 = vunpack.c.l.b16 %v5332
    %v6143 = vunpack.c.l.b16 %v5333
    %v6144 = vunpack.c.l.b16 %v5334
    %v6145 = vunpack.c.l.b16 %v5335
    %v6146 = vunpack.c.l.b16 %v5336
    %v6147 = vunpack.c.l.b16 %v5337
    %v6148 = vunpack.c.l.b16 %v5338
    %v6149 = vunpack.c.l.b16 %v5339
    %v6150 = vunpack.c.l.b16 %v5340
    %v6151 = vunpack.c.l.b16 %v5341
    %v6152 = vunpack.c.l.b16 %v5342
    %v6153 = vunpack.c.l.b16 %v5343
    %v6154 = vunpack.c.l.b16 %v5344
    %v6155 = vunpack.c.l.b16 %v5345
    %v6156 = vunpack.c.l.b16 %v5346
    %v6157 = vunpack.c.l.b16 %v5347
    %v6158 = vunpack.c.l.b16 %v5348
    %v6159 = vunpack.c.l.b16 %v5349
    %v6160 = vunpack.c.l.b16 %v5350
    %v6161 = vunpack.c.l.b16 %v5351
    %v6162 = vunpack.c.l.b16 %v5352
    %v6163 = vunpack.c.l.b16 %v5353
    %v6164 = vunpack.c.l.b16 %v5354
    %v6165 = vunpack.c.l.b16 %v5355
    %v6166 = vunpack.c.l.b16 %v5356
    %v6167 = vunpack.c.l.b16 %v5357
    %v6168 = vunpack.c.l.b16 %v5358
    %v6169 = vunpack.c.l.b16 %v5359
    %v6170 = vunpack.c.l.b16 %v5360
    %v6171 = vunpack.c.l.b16 %v5361
    %v6172 = vunpack.c.l.b16 %v5362
    %v6173 = vunpack.c.l.b16 %v5363
    %v6174 = vunpack.c.l.b16 %v5364
    %v6175 = vunpack.c.l.b16 %v5365
    %v6176 = vunpack.c.l.b16 %v5366
    %v6177 = vunpack.c.l.b16 %v5367
    %v6178 = vunpack.c.l.b16 %v5368
    %v6179 = vunpack.c.l.b16 %v5369
    %v6180 = vpack.c.b16 %v6109, %v6108
    %v6181 = vpack.c.b16 %v6110, %v6110
    %v6182 = vpack.c.b16 %v6112, %v6111
    %v6183 = vpack.c.b16 %v6113, %v6113
    %v6184 = vpack.c.b16 %v6115, %v6114
    %v6185 = vpack.c.b16 %v6116, %v6116
    %v6186 = vpack.c.b16 %v6118, %v6117
    %v6187 = vpack.c.b16 %v6119, %v6119
    %v6188 = vpack.c.b16 %v6121, %v6120
    %v6189 = vpack.c.b16 %v6122, %v6122
    %v6190 = vpack.c.b16 %v6124, %v6123
    %v6191 = vpack.c.b16 %v6125, %v6125
    %v6192 = vpack.c.b16 %v6127, %v6126
    %v6193 = vpack.c.b16 %v6128, %v6128
    %v6194 = vpack.c.b16 %v6130, %v6129
    %v6195 = vpack.c.b16 %v6131, %v6131
    %v6196 = vpack.c.b16 %v6133, %v6132
    %v6197 = vpack.c.b16 %v6134, %v6134
    %v6198 = vpack.c.b16 %v6136, %v6135
    %v6199 = vpack.c.b16 %v6137, %v6137
    %v6200 = vpack.c.b16 %v6139, %v6138
    %v6201 = vpack.c.b16 %v6140, %v6140
    %v6202 = vpack.c.b16 %v6142, %v6141
    %v6203 = vpack.c.b16 %v6143, %v6143
    %v6204 = vpack.c.b16 %v6145, %v6144
    %v6205 = vpack.c.b16 %v6146, %v6146
    %v6206 = vpack.c.b16 %v6148, %v6147
    %v6207 = vpack.c.b16 %v6149, %v6149
    %v6208 = vpack.c.b16 %v6151, %v6150
    %v6209 = vpack.c.b16 %v6152, %v6152
    %v6210 = vpack.c.b16 %v6154, %v6153
    %v6211 = vpack.c.b16 %v6155, %v6155
    %v6212 = vpack.c.b16 %v6157, %v6156
    %v6213 = vpack.c.b16 %v6158, %v6158
    %v6214 = vpack.c.b16 %v6160, %v6159
    %v6215 = vpack.c.b16 %v6161, %v6161
    %v6216 = vpack.c.b16 %v6163, %v6162
    %v6217 = vpack.c.b16 %v6164, %v6164
    %v6218 = vpack.c.b16 %v6166, %v6165
    %v6219 = vpack.c.b16 %v6167, %v6167
    %v6220 = vpack.c.b16 %v6169, %v6168
    %v6221 = vpack.c.b16 %v6170, %v6170
    %v6222 = vpack.c.b16 %v6172, %v6171
    %v6223 = vpack.c.b16 %v6173, %v6173
    %v6224 = vpack.c.b16 %v6175, %v6174
    %v6225 = vpack.c.b16 %v6176, %v6176
    %v6226 = vpack.c.b16 %v6178, %v6177
    %v6227 = vpack.c.b16 %v6179, %v6179
    %v6228 = vunpack.c.l.b16 %v6180
    %v6229 = vunpack.c.h.b16 %v6180
    %v6230 = vunpack.c.l.b16 %v6181
    %v6231 = vunpack.c.l.b16 %v6182
    %v6232 = vunpack.c.h.b16 %v6182
    %v6233 = vunpack.c.l.b16 %v6183
    %v6234 = vunpack.c.l.b16 %v6184
    %v6235 = vunpack.c.h.b16 %v6184
    %v6236 = vunpack.c.l.b16 %v6185
    %v6237 = vunpack.c.l.b16 %v6186
    %v6238 = vunpack.c.h.b16 %v6186
    %v6239 = vunpack.c.l.b16 %v6187
    %v6240 = vunpack.c.l.b16 %v6188
    %v6241 = vunpack.c.h.b16 %v6188
    %v6242 = vunpack.c.l.b16 %v6189
    %v6243 = vunpack.c.l.b16 %v6190
    %v6244 = vunpack.c.h.b16 %v6190
    %v6245 = vunpack.c.l.b16 %v6191
    %v6246 = vunpack.c.l.b16 %v6192
    %v6247 = vunpack.c.h.b16 %v6192
    %v6248 = vunpack.c.l.b16 %v6193
    %v6249 = vunpack.c.l.b16 %v6194
    %v6250 = vunpack.c.h.b16 %v6194
    %v6251 = vunpack.c.l.b16 %v6195
    %v6252 = vunpack.c.l.b16 %v6196
    %v6253 = vunpack.c.h.b16 %v6196
    %v6254 = vunpack.c.l.b16 %v6197
    %v6255 = vunpack.c.l.b16 %v6198
    %v6256 = vunpack.c.h.b16 %v6198
    %v6257 = vunpack.c.l.b16 %v6199
    %v6258 = vunpack.c.l.b16 %v6200
    %v6259 = vunpack.c.h.b16 %v6200
    %v6260 = vunpack.c.l.b16 %v6201
    %v6261 = vunpack.c.l.b16 %v6202
    %v6262 = vunpack.c.h.b16 %v6202
    %v6263 = vunpack.c.l.b16 %v6203
    %v6264 = vunpack.c.l.b16 %v6204
    %v6265 = vunpack.c.h.b16 %v6204
    %v6266 = vunpack.c.l.b16 %v6205
    %v6267 = vunpack.c.l.b16 %v6206
    %v6268 = vunpack.c.h.b16 %v6206
    %v6269 = vunpack.c.l.b16 %v6207
    %v6270 = vunpack.c.l.b16 %v6208
    %v6271 = vunpack.c.h.b16 %v6208
    %v6272 = vunpack.c.l.b16 %v6209
    %v6273 = vunpack.c.l.b16 %v6210
    %v6274 = vunpack.c.h.b16 %v6210
    %v6275 = vunpack.c.l.b16 %v6211
    %v6276 = vunpack.c.l.b16 %v6212
    %v6277 = vunpack.c.h.b16 %v6212
    %v6278 = vunpack.c.l.b16 %v6213
    %v6279 = vunpack.c.l.b16 %v6214
    %v6280 = vunpack.c.h.b16 %v6214
    %v6281 = vunpack.c.l.b16 %v6215
    %v6282 = vunpack.c.l.b16 %v6216
    %v6283 = vunpack.c.h.b16 %v6216
    %v6284 = vunpack.c.l.b16 %v6217
    %v6285 = vunpack.c.l.b16 %v6218
    %v6286 = vunpack.c.h.b16 %v6218
    %v6287 = vunpack.c.l.b16 %v6219
    %v6288 = vunpack.c.l.b16 %v6220
    %v6289 = vunpack.c.h.b16 %v6220
    %v6290 = vunpack.c.l.b16 %v6221
    %v6291 = vunpack.c.l.b16 %v6222
    %v6292 = vunpack.c.h.b16 %v6222
    %v6293 = vunpack.c.l.b16 %v6223
    %v6294 = vunpack.c.l.b16 %v6224
    %v6295 = vunpack.c.h.b16 %v6224
    %v6296 = vunpack.c.l.b16 %v6225
    %v6297 = vunpack.c.l.b16 %v6226
    %v6298 = vunpack.c.h.b16 %v6226
    %v6299 = vunpack.c.l.b16 %v6227
    %6300 = vset.pattern.permute.xlu0 0
    %6301 = vperm.xlu0 %6300, %v6228
    %v6302 = vpop.permute.xlu0 %6301
    %6303 = vset.pattern.permute.xlu0 0
    %6304 = vperm.xlu0 %6303, %v6229
    %v6305 = vpop.permute.xlu0 %6304
    %6306 = vset.pattern.permute.xlu0 0
    %6307 = vperm.xlu0 %6306, %v6230
    %v6308 = vpop.permute.xlu0 %6307
    %6309 = vset.pattern.permute.xlu0 0
    %6310 = vperm.xlu0 %6309, %v6231
    %v6311 = vpop.permute.xlu0 %6310
    %6312 = vset.pattern.permute.xlu0 0
    %6313 = vperm.xlu0 %6312, %v6232
    %v6314 = vpop.permute.xlu0 %6313
    %6315 = vset.pattern.permute.xlu0 0
    %6316 = vperm.xlu0 %6315, %v6233
    %v6317 = vpop.permute.xlu0 %6316
    %6318 = vset.pattern.permute.xlu0 0
    %6319 = vperm.xlu0 %6318, %v6234
    %v6320 = vpop.permute.xlu0 %6319
    %6321 = vset.pattern.permute.xlu0 0
    %6322 = vperm.xlu0 %6321, %v6235
    %v6323 = vpop.permute.xlu0 %6322
    %6324 = vset.pattern.permute.xlu0 0
    %6325 = vperm.xlu0 %6324, %v6236
    %v6326 = vpop.permute.xlu0 %6325
    %6327 = vset.pattern.permute.xlu0 0
    %6328 = vperm.xlu0 %6327, %v6237
    %v6329 = vpop.permute.xlu0 %6328
    %6330 = vset.pattern.permute.xlu0 0
    %6331 = vperm.xlu0 %6330, %v6238
    %v6332 = vpop.permute.xlu0 %6331
    %6333 = vset.pattern.permute.xlu0 0
    %6334 = vperm.xlu0 %6333, %v6239
    %v6335 = vpop.permute.xlu0 %6334
    %6336 = vset.pattern.permute.xlu0 0
    %6337 = vperm.xlu0 %6336, %v6240
    %v6338 = vpop.permute.xlu0 %6337
    %6339 = vset.pattern.permute.xlu0 0
    %6340 = vperm.xlu0 %6339, %v6241
    %v6341 = vpop.permute.xlu0 %6340
    %6342 = vset.pattern.permute.xlu0 0
    %6343 = vperm.xlu0 %6342, %v6242
    %v6344 = vpop.permute.xlu0 %6343
    %6345 = vset.pattern.permute.xlu0 0
    %6346 = vperm.xlu0 %6345, %v6243
    %v6347 = vpop.permute.xlu0 %6346
    %6348 = vset.pattern.permute.xlu0 0
    %6349 = vperm.xlu0 %6348, %v6244
    %v6350 = vpop.permute.xlu0 %6349
    %6351 = vset.pattern.permute.xlu0 0
    %6352 = vperm.xlu0 %6351, %v6245
    %v6353 = vpop.permute.xlu0 %6352
    %6354 = vset.pattern.permute.xlu0 0
    %6355 = vperm.xlu0 %6354, %v6246
    %v6356 = vpop.permute.xlu0 %6355
    %6357 = vset.pattern.permute.xlu0 0
    %6358 = vperm.xlu0 %6357, %v6247
    %v6359 = vpop.permute.xlu0 %6358
    %6360 = vset.pattern.permute.xlu0 0
    %6361 = vperm.xlu0 %6360, %v6248
    %v6362 = vpop.permute.xlu0 %6361
    %6363 = vset.pattern.permute.xlu0 0
    %6364 = vperm.xlu0 %6363, %v6249
    %v6365 = vpop.permute.xlu0 %6364
    %6366 = vset.pattern.permute.xlu0 0
    %6367 = vperm.xlu0 %6366, %v6250
    %v6368 = vpop.permute.xlu0 %6367
    %6369 = vset.pattern.permute.xlu0 0
    %6370 = vperm.xlu0 %6369, %v6251
    %v6371 = vpop.permute.xlu0 %6370
    %6372 = vset.pattern.permute.xlu0 0
    %6373 = vperm.xlu0 %6372, %v6252
    %v6374 = vpop.permute.xlu0 %6373
    %6375 = vset.pattern.permute.xlu0 0
    %6376 = vperm.xlu0 %6375, %v6253
    %v6377 = vpop.permute.xlu0 %6376
    %6378 = vset.pattern.permute.xlu0 0
    %6379 = vperm.xlu0 %6378, %v6254
    %v6380 = vpop.permute.xlu0 %6379
    %6381 = vset.pattern.permute.xlu0 0
    %6382 = vperm.xlu0 %6381, %v6255
    %v6383 = vpop.permute.xlu0 %6382
    %6384 = vset.pattern.permute.xlu0 0
    %6385 = vperm.xlu0 %6384, %v6256
    %v6386 = vpop.permute.xlu0 %6385
    %6387 = vset.pattern.permute.xlu0 0
    %6388 = vperm.xlu0 %6387, %v6257
    %v6389 = vpop.permute.xlu0 %6388
    %6390 = vset.pattern.permute.xlu0 0
    %6391 = vperm.xlu0 %6390, %v6258
    %v6392 = vpop.permute.xlu0 %6391
    %6393 = vset.pattern.permute.xlu0 0
    %6394 = vperm.xlu0 %6393, %v6259
    %v6395 = vpop.permute.xlu0 %6394
    %6396 = vset.pattern.permute.xlu0 0
    %6397 = vperm.xlu0 %6396, %v6260
    %v6398 = vpop.permute.xlu0 %6397
    %6399 = vset.pattern.permute.xlu0 0
    %6400 = vperm.xlu0 %6399, %v6261
    %v6401 = vpop.permute.xlu0 %6400
    %6402 = vset.pattern.permute.xlu0 0
    %6403 = vperm.xlu0 %6402, %v6262
    %v6404 = vpop.permute.xlu0 %6403
    %6405 = vset.pattern.permute.xlu0 0
    %6406 = vperm.xlu0 %6405, %v6263
    %v6407 = vpop.permute.xlu0 %6406
    %6408 = vset.pattern.permute.xlu0 0
    %6409 = vperm.xlu0 %6408, %v6264
    %v6410 = vpop.permute.xlu0 %6409
    %6411 = vset.pattern.permute.xlu0 0
    %6412 = vperm.xlu0 %6411, %v6265
    %v6413 = vpop.permute.xlu0 %6412
    %6414 = vset.pattern.permute.xlu0 0
    %6415 = vperm.xlu0 %6414, %v6266
    %v6416 = vpop.permute.xlu0 %6415
    %6417 = vset.pattern.permute.xlu0 0
    %6418 = vperm.xlu0 %6417, %v6267
    %v6419 = vpop.permute.xlu0 %6418
    %6420 = vset.pattern.permute.xlu0 0
    %6421 = vperm.xlu0 %6420, %v6268
    %v6422 = vpop.permute.xlu0 %6421
    %6423 = vset.pattern.permute.xlu0 0
    %6424 = vperm.xlu0 %6423, %v6269
    %v6425 = vpop.permute.xlu0 %6424
    %6426 = vset.pattern.permute.xlu0 0
    %6427 = vperm.xlu0 %6426, %v6270
    %v6428 = vpop.permute.xlu0 %6427
    %6429 = vset.pattern.permute.xlu0 0
    %6430 = vperm.xlu0 %6429, %v6271
    %v6431 = vpop.permute.xlu0 %6430
    %6432 = vset.pattern.permute.xlu0 0
    %6433 = vperm.xlu0 %6432, %v6272
    %v6434 = vpop.permute.xlu0 %6433
    %6435 = vset.pattern.permute.xlu0 0
    %6436 = vperm.xlu0 %6435, %v6273
    %v6437 = vpop.permute.xlu0 %6436
    %6438 = vset.pattern.permute.xlu0 0
    %6439 = vperm.xlu0 %6438, %v6274
    %v6440 = vpop.permute.xlu0 %6439
    %6441 = vset.pattern.permute.xlu0 0
    %6442 = vperm.xlu0 %6441, %v6275
    %v6443 = vpop.permute.xlu0 %6442
    %6444 = vset.pattern.permute.xlu0 0
    %6445 = vperm.xlu0 %6444, %v6276
    %v6446 = vpop.permute.xlu0 %6445
    %6447 = vset.pattern.permute.xlu0 0
    %6448 = vperm.xlu0 %6447, %v6277
    %v6449 = vpop.permute.xlu0 %6448
    %6450 = vset.pattern.permute.xlu0 0
    %6451 = vperm.xlu0 %6450, %v6278
    %v6452 = vpop.permute.xlu0 %6451
    %6453 = vset.pattern.permute.xlu0 0
    %6454 = vperm.xlu0 %6453, %v6279
    %v6455 = vpop.permute.xlu0 %6454
    %6456 = vset.pattern.permute.xlu0 0
    %6457 = vperm.xlu0 %6456, %v6280
    %v6458 = vpop.permute.xlu0 %6457
    %6459 = vset.pattern.permute.xlu0 0
    %6460 = vperm.xlu0 %6459, %v6281
    %v6461 = vpop.permute.xlu0 %6460
    %6462 = vset.pattern.permute.xlu0 0
    %6463 = vperm.xlu0 %6462, %v6282
    %v6464 = vpop.permute.xlu0 %6463
    %6465 = vset.pattern.permute.xlu0 0
    %6466 = vperm.xlu0 %6465, %v6283
    %v6467 = vpop.permute.xlu0 %6466
    %6468 = vset.pattern.permute.xlu0 0
    %6469 = vperm.xlu0 %6468, %v6284
    %v6470 = vpop.permute.xlu0 %6469
    %6471 = vset.pattern.permute.xlu0 0
    %6472 = vperm.xlu0 %6471, %v6285
    %v6473 = vpop.permute.xlu0 %6472
    %6474 = vset.pattern.permute.xlu0 0
    %6475 = vperm.xlu0 %6474, %v6286
    %v6476 = vpop.permute.xlu0 %6475
    %6477 = vset.pattern.permute.xlu0 0
    %6478 = vperm.xlu0 %6477, %v6287
    %v6479 = vpop.permute.xlu0 %6478
    %6480 = vset.pattern.permute.xlu0 0
    %6481 = vperm.xlu0 %6480, %v6288
    %v6482 = vpop.permute.xlu0 %6481
    %6483 = vset.pattern.permute.xlu0 0
    %6484 = vperm.xlu0 %6483, %v6289
    %v6485 = vpop.permute.xlu0 %6484
    %6486 = vset.pattern.permute.xlu0 0
    %6487 = vperm.xlu0 %6486, %v6290
    %v6488 = vpop.permute.xlu0 %6487
    %6489 = vset.pattern.permute.xlu0 0
    %6490 = vperm.xlu0 %6489, %v6291
    %v6491 = vpop.permute.xlu0 %6490
    %6492 = vset.pattern.permute.xlu0 0
    %6493 = vperm.xlu0 %6492, %v6292
    %v6494 = vpop.permute.xlu0 %6493
    %6495 = vset.pattern.permute.xlu0 0
    %6496 = vperm.xlu0 %6495, %v6293
    %v6497 = vpop.permute.xlu0 %6496
    %6498 = vset.pattern.permute.xlu0 0
    %6499 = vperm.xlu0 %6498, %v6294
    %v6500 = vpop.permute.xlu0 %6499
    %6501 = vset.pattern.permute.xlu0 0
    %6502 = vperm.xlu0 %6501, %v6295
    %v6503 = vpop.permute.xlu0 %6502
    %6504 = vset.pattern.permute.xlu0 0
    %6505 = vperm.xlu0 %6504, %v6296
    %v6506 = vpop.permute.xlu0 %6505
    %6507 = vset.pattern.permute.xlu0 0
    %6508 = vperm.xlu0 %6507, %v6297
    %v6509 = vpop.permute.xlu0 %6508
    %6510 = vset.pattern.permute.xlu0 0
    %6511 = vperm.xlu0 %6510, %v6298
    %v6512 = vpop.permute.xlu0 %6511
    %6513 = vset.pattern.permute.xlu0 0
    %6514 = vperm.xlu0 %6513, %v6299
    %v6515 = vpop.permute.xlu0 %6514
    %v6516 = vperm.slane %v6302, %v3239
    %v6517 = vperm.slane %v6305, %v3241
    %v6518 = vsel %vm3243, %v6517, %v6516
    %v6519 = vperm.slane %v6308, %v3245
    %v6520 = vsel %vm3247, %v6519, %v6518
    %v6521 = vperm.slane %v6311, %v3239
    %v6522 = vperm.slane %v6314, %v3241
    %v6523 = vsel %vm3243, %v6522, %v6521
    %v6524 = vperm.slane %v6317, %v3245
    %v6525 = vsel %vm3247, %v6524, %v6523
    %v6526 = vperm.slane %v6320, %v3239
    %v6527 = vperm.slane %v6323, %v3241
    %v6528 = vsel %vm3243, %v6527, %v6526
    %v6529 = vperm.slane %v6326, %v3245
    %v6530 = vsel %vm3247, %v6529, %v6528
    %v6531 = vperm.slane %v6329, %v3239
    %v6532 = vperm.slane %v6332, %v3241
    %v6533 = vsel %vm3243, %v6532, %v6531
    %v6534 = vperm.slane %v6335, %v3245
    %v6535 = vsel %vm3247, %v6534, %v6533
    %v6536 = vperm.slane %v6338, %v3239
    %v6537 = vperm.slane %v6341, %v3241
    %v6538 = vsel %vm3243, %v6537, %v6536
    %v6539 = vperm.slane %v6344, %v3245
    %v6540 = vsel %vm3247, %v6539, %v6538
    %v6541 = vperm.slane %v6347, %v3239
    %v6542 = vperm.slane %v6350, %v3241
    %v6543 = vsel %vm3243, %v6542, %v6541
    %v6544 = vperm.slane %v6353, %v3245
    %v6545 = vsel %vm3247, %v6544, %v6543
    %v6546 = vperm.slane %v6356, %v3239
    %v6547 = vperm.slane %v6359, %v3241
    %v6548 = vsel %vm3243, %v6547, %v6546
    %v6549 = vperm.slane %v6362, %v3245
    %v6550 = vsel %vm3247, %v6549, %v6548
    %v6551 = vperm.slane %v6365, %v3239
    %v6552 = vperm.slane %v6368, %v3241
    %v6553 = vsel %vm3243, %v6552, %v6551
    %v6554 = vperm.slane %v6371, %v3245
    %v6555 = vsel %vm3247, %v6554, %v6553
    %v6556 = vperm.slane %v6374, %v3239
    %v6557 = vperm.slane %v6377, %v3241
    %v6558 = vsel %vm3243, %v6557, %v6556
    %v6559 = vperm.slane %v6380, %v3245
    %v6560 = vsel %vm3247, %v6559, %v6558
    %v6561 = vperm.slane %v6383, %v3239
    %v6562 = vperm.slane %v6386, %v3241
    %v6563 = vsel %vm3243, %v6562, %v6561
    %v6564 = vperm.slane %v6389, %v3245
    %v6565 = vsel %vm3247, %v6564, %v6563
    %v6566 = vperm.slane %v6392, %v3239
    %v6567 = vperm.slane %v6395, %v3241
    %v6568 = vsel %vm3243, %v6567, %v6566
    %v6569 = vperm.slane %v6398, %v3245
    %v6570 = vsel %vm3247, %v6569, %v6568
    %v6571 = vperm.slane %v6401, %v3239
    %v6572 = vperm.slane %v6404, %v3241
    %v6573 = vsel %vm3243, %v6572, %v6571
    %v6574 = vperm.slane %v6407, %v3245
    %v6575 = vsel %vm3247, %v6574, %v6573
    %v6576 = vperm.slane %v6410, %v3239
    %v6577 = vperm.slane %v6413, %v3241
    %v6578 = vsel %vm3243, %v6577, %v6576
    %v6579 = vperm.slane %v6416, %v3245
    %v6580 = vsel %vm3247, %v6579, %v6578
    %v6581 = vperm.slane %v6419, %v3239
    %v6582 = vperm.slane %v6422, %v3241
    %v6583 = vsel %vm3243, %v6582, %v6581
    %v6584 = vperm.slane %v6425, %v3245
    %v6585 = vsel %vm3247, %v6584, %v6583
    %v6586 = vperm.slane %v6428, %v3239
    %v6587 = vperm.slane %v6431, %v3241
    %v6588 = vsel %vm3243, %v6587, %v6586
    %v6589 = vperm.slane %v6434, %v3245
    %v6590 = vsel %vm3247, %v6589, %v6588
    %v6591 = vperm.slane %v6437, %v3239
    %v6592 = vperm.slane %v6440, %v3241
    %v6593 = vsel %vm3243, %v6592, %v6591
    %v6594 = vperm.slane %v6443, %v3245
    %v6595 = vsel %vm3247, %v6594, %v6593
    %v6596 = vperm.slane %v6446, %v3239
    %v6597 = vperm.slane %v6449, %v3241
    %v6598 = vsel %vm3243, %v6597, %v6596
    %v6599 = vperm.slane %v6452, %v3245
    %v6600 = vsel %vm3247, %v6599, %v6598
    %v6601 = vperm.slane %v6455, %v3239
    %v6602 = vperm.slane %v6458, %v3241
    %v6603 = vsel %vm3243, %v6602, %v6601
    %v6604 = vperm.slane %v6461, %v3245
    %v6605 = vsel %vm3247, %v6604, %v6603
    %v6606 = vperm.slane %v6464, %v3239
    %v6607 = vperm.slane %v6467, %v3241
    %v6608 = vsel %vm3243, %v6607, %v6606
    %v6609 = vperm.slane %v6470, %v3245
    %v6610 = vsel %vm3247, %v6609, %v6608
    %v6611 = vperm.slane %v6473, %v3239
    %v6612 = vperm.slane %v6476, %v3241
    %v6613 = vsel %vm3243, %v6612, %v6611
    %v6614 = vperm.slane %v6479, %v3245
    %v6615 = vsel %vm3247, %v6614, %v6613
    %v6616 = vperm.slane %v6482, %v3239
    %v6617 = vperm.slane %v6485, %v3241
    %v6618 = vsel %vm3243, %v6617, %v6616
    %v6619 = vperm.slane %v6488, %v3245
    %v6620 = vsel %vm3247, %v6619, %v6618
    %v6621 = vperm.slane %v6491, %v3239
    %v6622 = vperm.slane %v6494, %v3241
    %v6623 = vsel %vm3243, %v6622, %v6621
    %v6624 = vperm.slane %v6497, %v3245
    %v6625 = vsel %vm3247, %v6624, %v6623
    %v6626 = vperm.slane %v6500, %v3239
    %v6627 = vperm.slane %v6503, %v3241
    %v6628 = vsel %vm3243, %v6627, %v6626
    %v6629 = vperm.slane %v6506, %v3245
    %v6630 = vsel %vm3247, %v6629, %v6628
    %v6631 = vperm.slane %v6509, %v3239
    %v6632 = vperm.slane %v6512, %v3241
    %v6633 = vsel %vm3243, %v6632, %v6631
    %v6634 = vperm.slane %v6515, %v3245
    %v6635 = vsel %vm3247, %v6634, %v6633
    %v6636 = vsel %vm3484, %v6525, %v6520
    %v6637 = vsel %vm3486, %v6530, %v6636
    %v6638 = vsel %vm3488, %v6535, %v6637
    %v6639 = vsel %vm3490, %v6540, %v6638
    %v6640 = vsel %vm3492, %v6545, %v6639
    %v6641 = vsel %vm3494, %v6550, %v6640
    %v6642 = vsel %vm3496, %v6555, %v6641
    %v6643 = vsel %vm3484, %v6565, %v6560
    %v6644 = vsel %vm3486, %v6570, %v6643
    %v6645 = vsel %vm3488, %v6575, %v6644
    %v6646 = vsel %vm3490, %v6580, %v6645
    %v6647 = vsel %vm3492, %v6585, %v6646
    %v6648 = vsel %vm3494, %v6590, %v6647
    %v6649 = vsel %vm3496, %v6595, %v6648
    %v6650 = vsel %vm3484, %v6605, %v6600
    %v6651 = vsel %vm3486, %v6610, %v6650
    %v6652 = vsel %vm3488, %v6615, %v6651
    %v6653 = vsel %vm3490, %v6620, %v6652
    %v6654 = vsel %vm3492, %v6625, %v6653
    %v6655 = vsel %vm3494, %v6630, %v6654
    %v6656 = vsel %vm3496, %v6635, %v6655
    %v6657 = vpack.c.b16 %v6649, %v6642
    %v6658 = vpack.c.b16 %v6656, %v6656
    %v6662 = vunpack.c.l.b16 %v5373
    %v6663 = vunpack.c.l.b16 %v5374
    %v6664 = vunpack.c.l.b16 %v5375
    %v6665 = vpack.c.b16 %v6663, %v6662
    %v6666 = vpack.c.b16 %v6664, %v6664
    %v6669 = vsel %vm3539, %v6657, 0
    %v6672 = vsel %vm3539, %v6658, 0
    %v6675 = vsel %vm6014, %v6666, 0
    %6677 = vmatpush.bf16.msra.mxu0 0
    %6678 = vmatpush.bf16.msra.mxu0 0
    %6679 = vmatpush.bf16.msra.mxu0 0
    %6680 = vmatpush.bf16.msra.mxu0 0
    %6681 = vmatpush.bf16.msra.mxu0 0
    %6682 = vmatpush.bf16.msra.mxu0 0
    %6683 = vmatpush.bf16.msra.mxu0 %v6675
    %6684 = vmatpush.bf16.msra.mxu0 %v6665
    %6685 = vmatmul.bf16.gmra.mxu0 %v6669
    %v6686 = vpop.f32.mrf.mxu0
    %v6687 = vadd.f32 0.0, %v6686
    %v6688 = vpop.f32.mrf.mxu0
    %v6689 = vadd.f32 0.0, %v6688
    %6690 = vmatmul.bf16.gmra.mxu0 %v6672
    %v6691 = vpop.f32.mrf.mxu0
    %v6692 = vadd.f32 0.0, %v6691
    %v6693 = vpop.f32.mrf.mxu0
    %6694 = vdwg.mxu0
    %v6695 = vsel %vm152, %v6028, 0.0
    %v6696 = vsel %vm152, %v6687, 0.0
    %v6697 = vadd.f32 %v6695, %v6696
    %v6698 = vsel %vm152, %v6030, 0.0
    %v6699 = vsel %vm152, %v6689, 0.0
    %v6700 = vadd.f32 %v6698, %v6699
    %v6701 = vsel %vm152, %v6033, 0.0
    %v6702 = vsel %vm152, %v6692, 0.0
    %v6703 = vadd.f32 %v6701, %v6702
    %v6704 = vmul.f32 %v6697, 0.5
    %v6705 = vmul.f32 %v6700, 0.5
    %v6706 = vmul.f32 %v6703, 0.5
    %v6707 = vperm.slane %v66, 6
    %v6708 = vadd.f32 %v6704, %v6707
    %v6709 = vadd.f32 %v6705, %v6707
    %v6710 = vadd.f32 %v6706, %v6707
    %v6711 = vmax.f32 %v6708, 0.0
    %v6712 = vmax.f32 %v6709, 0.0
    %v6713 = vmax.f32 %v6710, 0.0
    %v6714 = vpack.c.bf16 %v6712, %v6711
    %v6715 = vpack.c.bf16 %v6713, %v6713
    %v6716 = vperm.slane %v66, 1
    %v6721 = vunpack.c.l.b16 %v58
    %v6722 = vunpack.c.l.b16 %v59
    %v6723 = vunpack.c.l.b16 %v60
    %v6724 = vunpack.c.l.b16 %v61
    %v6725 = vpack.c.b16 %v6722, %v6721
    %v6726 = vpack.c.b16 %v6724, %v6723
    %v6730 = vsel %vm152, %v6714, 0
    %v6733 = vsel %vm152, %v6715, 0
    %6735 = vmatpush.bf16.msra.mxu0 0
    %6736 = vmatpush.bf16.msra.mxu0 0
    %6737 = vmatpush.bf16.msra.mxu0 0
    %6738 = vmatpush.bf16.msra.mxu0 0
    %6739 = vmatpush.bf16.msra.mxu0 0
    %6740 = vmatpush.bf16.msra.mxu0 0
    %6741 = vmatpush.bf16.msra.mxu0 %v6726
    %6742 = vmatpush.bf16.msra.mxu0 %v6725
    %6743 = vmatmul.bf16.gmra.mxu0 %v6730
    %v6744 = vpop.f32.mrf.mxu0
    %v6745 = vadd.f32 %v6716, %v6744
    %v6746 = vpop.f32.mrf.mxu0
    %v6747 = vadd.f32 %v6716, %v6746
    %6748 = vmatmul.bf16.gmra.mxu0 %v6733
    %v6749 = vpop.f32.mrf.mxu0
    %v6750 = vadd.f32 %v6716, %v6749
    %v6751 = vpop.f32.mrf.mxu0
    %6752 = vdwg.mxu0
    %6756 = vrot.lane.b32.xlu0 %v6745, 96
    %v6757 = vpop.permute.xlu0 %6756
    %6758 = vrot.lane.b32.xlu0 %v6747, 96
    %v6759 = vpop.permute.xlu0 %6758
    %6760 = vrot.lane.b32.xlu0 %v6750, 96
    %v6761 = vpop.permute.xlu0 %6760
    %6765 = vst [vmem:[#allocation1] sm:$0xff] %v66
    %s6766 = scalar_lea.vmem [#allocation1], 4
    %v6767 = vld [vmem:[%s6766] ss:$9 sm:$0xff]
    %s6768 = scalar_lea.vmem [#allocation1], 5
    %v6769 = vld [vmem:[%s6768] ss:$9 sm:$0xff]
    %v6772 = vrot.slane %v6745, 1
    %v6773 = vrot.slane %v6745, 2
    %v6774 = vrot.slane %v6745, 3
    %v6775 = vrot.slane %v6745, 4
    %v6776 = vrot.slane %v6745, 5
    %v6777 = vrot.slane %v6745, 6
    %v6778 = vrot.slane %v6745, 7
    %v6779 = vrot.slane %v6747, 1
    %v6780 = vrot.slane %v6747, 2
    %v6781 = vrot.slane %v6747, 3
    %v6782 = vrot.slane %v6747, 4
    %v6783 = vrot.slane %v6747, 5
    %v6784 = vrot.slane %v6747, 6
    %v6785 = vrot.slane %v6747, 7
    %v6786 = vrot.slane %v6750, 1
    %v6787 = vrot.slane %v6750, 2
    %v6788 = vrot.slane %v6750, 3
    %v6789 = vrot.slane %v6750, 4
    %v6790 = vrot.slane %v6750, 5
    %v6791 = vrot.slane %v6750, 6
    %v6792 = vrot.slane %v6750, 7
    %v6793 = vrot.slane %v6757, 1
    %v6794 = vrot.slane %v6757, 2
    %v6795 = vrot.slane %v6757, 3
    %v6796 = vrot.slane %v6757, 4
    %v6797 = vrot.slane %v6757, 5
    %v6798 = vrot.slane %v6757, 6
    %v6799 = vrot.slane %v6757, 7
    %v6800 = vrot.slane %v6759, 1
    %v6801 = vrot.slane %v6759, 2
    %v6802 = vrot.slane %v6759, 3
    %v6803 = vrot.slane %v6759, 4
    %v6804 = vrot.slane %v6759, 5
    %v6805 = vrot.slane %v6759, 6
    %v6806 = vrot.slane %v6759, 7
    %v6807 = vrot.slane %v6761, 1
    %v6808 = vrot.slane %v6761, 2
    %v6809 = vrot.slane %v6761, 3
    %v6810 = vrot.slane %v6761, 4
    %v6811 = vrot.slane %v6761, 5
    %v6812 = vrot.slane %v6761, 6
    %v6813 = vrot.slane %v6761, 7
    %v6814 = vperm.slane %v6745, 0
    %v6815 = vperm.slane %v6772, 0
    %v6816 = vperm.slane %v6773, 0
    %v6817 = vperm.slane %v6774, 0
    %v6818 = vperm.slane %v6775, 0
    %v6819 = vperm.slane %v6776, 0
    %v6820 = vperm.slane %v6777, 0
    %v6821 = vperm.slane %v6778, 0
    %v6822 = vperm.slane %v6747, 0
    %v6823 = vperm.slane %v6779, 0
    %v6824 = vperm.slane %v6780, 0
    %v6825 = vperm.slane %v6781, 0
    %v6826 = vperm.slane %v6782, 0
    %v6827 = vperm.slane %v6783, 0
    %v6828 = vperm.slane %v6784, 0
    %v6829 = vperm.slane %v6785, 0
    %v6830 = vperm.slane %v6750, 0
    %v6831 = vperm.slane %v6786, 0
    %v6832 = vperm.slane %v6787, 0
    %v6833 = vperm.slane %v6788, 0
    %v6834 = vperm.slane %v6789, 0
    %v6835 = vperm.slane %v6790, 0
    %v6836 = vperm.slane %v6791, 0
    %v6837 = vperm.slane %v6792, 0
    %v6838 = vperm.slane %v6757, 0
    %v6839 = vperm.slane %v6793, 0
    %v6840 = vperm.slane %v6794, 0
    %v6841 = vperm.slane %v6795, 0
    %v6842 = vperm.slane %v6796, 0
    %v6843 = vperm.slane %v6797, 0
    %v6844 = vperm.slane %v6798, 0
    %v6845 = vperm.slane %v6799, 0
    %v6846 = vperm.slane %v6759, 0
    %v6847 = vperm.slane %v6800, 0
    %v6848 = vperm.slane %v6801, 0
    %v6849 = vperm.slane %v6802, 0
    %v6850 = vperm.slane %v6803, 0
    %v6851 = vperm.slane %v6804, 0
    %v6852 = vperm.slane %v6805, 0
    %v6853 = vperm.slane %v6806, 0
    %v6854 = vperm.slane %v6761, 0
    %v6855 = vperm.slane %v6807, 0
    %v6856 = vperm.slane %v6808, 0
    %v6857 = vperm.slane %v6809, 0
    %v6858 = vperm.slane %v6810, 0
    %v6859 = vperm.slane %v6811, 0
    %v6860 = vperm.slane %v6812, 0
    %v6861 = vperm.slane %v6813, 0
    %6910 = vrot.lane.b32.xlu0 %v6745, 64
    %v6911 = vpop.permute.xlu0 %6910
    %6912 = vrot.lane.b32.xlu0 %v6747, 64
    %v6913 = vpop.permute.xlu0 %6912
    %6914 = vrot.lane.b32.xlu0 %v6750, 64
    %v6915 = vpop.permute.xlu0 %6914
    %6916 = vrot.lane.b32.xlu0 %v6757, 64
    %v6917 = vpop.permute.xlu0 %6916
    %6918 = vrot.lane.b32.xlu0 %v6759, 64
    %v6919 = vpop.permute.xlu0 %6918
    %6920 = vrot.lane.b32.xlu0 %v6761, 64
    %v6921 = vpop.permute.xlu0 %6920
    %v6928 = vadd.f32 %v6814, %v6911
    %v6929 = vadd.f32 %v6814, %v6913
    %v6930 = vadd.f32 %v6814, %v6915
    %v6931 = vadd.f32 %v6815, %v6911
    %v6932 = vadd.f32 %v6815, %v6913
    %v6933 = vadd.f32 %v6815, %v6915
    %v6934 = vadd.f32 %v6816, %v6911
    %v6935 = vadd.f32 %v6816, %v6913
    %v6936 = vadd.f32 %v6816, %v6915
    %v6937 = vadd.f32 %v6817, %v6911
    %v6938 = vadd.f32 %v6817, %v6913
    %v6939 = vadd.f32 %v6817, %v6915
    %v6940 = vadd.f32 %v6818, %v6911
    %v6941 = vadd.f32 %v6818, %v6913
    %v6942 = vadd.f32 %v6818, %v6915
    %v6943 = vadd.f32 %v6819, %v6911
    %v6944 = vadd.f32 %v6819, %v6913
    %v6945 = vadd.f32 %v6819, %v6915
    %v6946 = vadd.f32 %v6820, %v6911
    %v6947 = vadd.f32 %v6820, %v6913
    %v6948 = vadd.f32 %v6820, %v6915
    %v6949 = vadd.f32 %v6821, %v6911
    %v6950 = vadd.f32 %v6821, %v6913
    %v6951 = vadd.f32 %v6821, %v6915
    %v6952 = vadd.f32 %v6822, %v6911
    %v6953 = vadd.f32 %v6822, %v6913
    %v6954 = vadd.f32 %v6822, %v6915
    %v6955 = vadd.f32 %v6823, %v6911
    %v6956 = vadd.f32 %v6823, %v6913
    %v6957 = vadd.f32 %v6823, %v6915
    %v6958 = vadd.f32 %v6824, %v6911
    %v6959 = vadd.f32 %v6824, %v6913
    %v6960 = vadd.f32 %v6824, %v6915
    %v6961 = vadd.f32 %v6825, %v6911
    %v6962 = vadd.f32 %v6825, %v6913
    %v6963 = vadd.f32 %v6825, %v6915
    %v6964 = vadd.f32 %v6826, %v6911
    %v6965 = vadd.f32 %v6826, %v6913
    %v6966 = vadd.f32 %v6826, %v6915
    %v6967 = vadd.f32 %v6827, %v6911
    %v6968 = vadd.f32 %v6827, %v6913
    %v6969 = vadd.f32 %v6827, %v6915
    %v6970 = vadd.f32 %v6828, %v6911
    %v6971 = vadd.f32 %v6828, %v6913
    %v6972 = vadd.f32 %v6828, %v6915
    %v6973 = vadd.f32 %v6829, %v6911
    %v6974 = vadd.f32 %v6829, %v6913
    %v6975 = vadd.f32 %v6829, %v6915
    %v6976 = vadd.f32 %v6830, %v6911
    %v6977 = vadd.f32 %v6830, %v6913
    %v6978 = vadd.f32 %v6830, %v6915
    %v6979 = vadd.f32 %v6831, %v6911
    %v6980 = vadd.f32 %v6831, %v6913
    %v6981 = vadd.f32 %v6831, %v6915
    %v6982 = vadd.f32 %v6832, %v6911
    %v6983 = vadd.f32 %v6832, %v6913
    %v6984 = vadd.f32 %v6832, %v6915
    %v6985 = vadd.f32 %v6833, %v6911
    %v6986 = vadd.f32 %v6833, %v6913
    %v6987 = vadd.f32 %v6833, %v6915
    %v6988 = vadd.f32 %v6834, %v6911
    %v6989 = vadd.f32 %v6834, %v6913
    %v6990 = vadd.f32 %v6834, %v6915
    %v6991 = vadd.f32 %v6835, %v6911
    %v6992 = vadd.f32 %v6835, %v6913
    %v6993 = vadd.f32 %v6835, %v6915
    %v6994 = vadd.f32 %v6836, %v6911
    %v6995 = vadd.f32 %v6836, %v6913
    %v6996 = vadd.f32 %v6836, %v6915
    %v6997 = vadd.f32 %v6837, %v6911
    %v6998 = vadd.f32 %v6837, %v6913
    %v6999 = vadd.f32 %v6837, %v6915
    %v7000 = vadd.f32 %v6838, %v6917
    %v7001 = vadd.f32 %v6838, %v6919
    %v7002 = vadd.f32 %v6838, %v6921
    %v7003 = vadd.f32 %v6839, %v6917
    %v7004 = vadd.f32 %v6839, %v6919
    %v7005 = vadd.f32 %v6839, %v6921
    %v7006 = vadd.f32 %v6840, %v6917
    %v7007 = vadd.f32 %v6840, %v6919
    %v7008 = vadd.f32 %v6840, %v6921
    %v7009 = vadd.f32 %v6841, %v6917
    %v7010 = vadd.f32 %v6841, %v6919
    %v7011 = vadd.f32 %v6841, %v6921
    %v7012 = vadd.f32 %v6842, %v6917
    %v7013 = vadd.f32 %v6842, %v6919
    %v7014 = vadd.f32 %v6842, %v6921
    %v7015 = vadd.f32 %v6843, %v6917
    %v7016 = vadd.f32 %v6843, %v6919
    %v7017 = vadd.f32 %v6843, %v6921
    %v7018 = vadd.f32 %v6844, %v6917
    %v7019 = vadd.f32 %v6844, %v6919
    %v7020 = vadd.f32 %v6844, %v6921
    %v7021 = vadd.f32 %v6845, %v6917
    %v7022 = vadd.f32 %v6845, %v6919
    %v7023 = vadd.f32 %v6845, %v6921
    %v7024 = vadd.f32 %v6846, %v6917
    %v7025 = vadd.f32 %v6846, %v6919
    %v7026 = vadd.f32 %v6846, %v6921
    %v7027 = vadd.f32 %v6847, %v6917
    %v7028 = vadd.f32 %v6847, %v6919
    %v7029 = vadd.f32 %v6847, %v6921
    %v7030 = vadd.f32 %v6848, %v6917
    %v7031 = vadd.f32 %v6848, %v6919
    %v7032 = vadd.f32 %v6848, %v6921
    %v7033 = vadd.f32 %v6849, %v6917
    %v7034 = vadd.f32 %v6849, %v6919
    %v7035 = vadd.f32 %v6849, %v6921
    %v7036 = vadd.f32 %v6850, %v6917
    %v7037 = vadd.f32 %v6850, %v6919
    %v7038 = vadd.f32 %v6850, %v6921
    %v7039 = vadd.f32 %v6851, %v6917
    %v7040 = vadd.f32 %v6851, %v6919
    %v7041 = vadd.f32 %v6851, %v6921
    %v7042 = vadd.f32 %v6852, %v6917
    %v7043 = vadd.f32 %v6852, %v6919
    %v7044 = vadd.f32 %v6852, %v6921
    %v7045 = vadd.f32 %v6853, %v6917
    %v7046 = vadd.f32 %v6853, %v6919
    %v7047 = vadd.f32 %v6853, %v6921
    %v7048 = vadd.f32 %v6854, %v6917
    %v7049 = vadd.f32 %v6854, %v6919
    %v7050 = vadd.f32 %v6854, %v6921
    %v7051 = vadd.f32 %v6855, %v6917
    %v7052 = vadd.f32 %v6855, %v6919
    %v7053 = vadd.f32 %v6855, %v6921
    %v7054 = vadd.f32 %v6856, %v6917
    %v7055 = vadd.f32 %v6856, %v6919
    %v7056 = vadd.f32 %v6856, %v6921
    %v7057 = vadd.f32 %v6857, %v6917
    %v7058 = vadd.f32 %v6857, %v6919
    %v7059 = vadd.f32 %v6857, %v6921
    %v7060 = vadd.f32 %v6858, %v6917
    %v7061 = vadd.f32 %v6858, %v6919
    %v7062 = vadd.f32 %v6858, %v6921
    %v7063 = vadd.f32 %v6859, %v6917
    %v7064 = vadd.f32 %v6859, %v6919
    %v7065 = vadd.f32 %v6859, %v6921
    %v7066 = vadd.f32 %v6860, %v6917
    %v7067 = vadd.f32 %v6860, %v6919
    %v7068 = vadd.f32 %v6860, %v6921
    %v7069 = vadd.f32 %v6861, %v6917
    %v7070 = vadd.f32 %v6861, %v6919
    %v7071 = vadd.f32 %v6861, %v6921
    %v7072 = vand.u32 2147483647, %v6928
    %v7073 = vand.u32 2147483647, %v6929
    %v7074 = vand.u32 2147483647, %v6930
    %v7075 = vand.u32 2147483647, %v6931
    %v7076 = vand.u32 2147483647, %v6932
    %v7077 = vand.u32 2147483647, %v6933
    %v7078 = vand.u32 2147483647, %v6934
    %v7079 = vand.u32 2147483647, %v6935
    %v7080 = vand.u32 2147483647, %v6936
    %v7081 = vand.u32 2147483647, %v6937
    %v7082 = vand.u32 2147483647, %v6938
    %v7083 = vand.u32 2147483647, %v6939
    %v7084 = vand.u32 2147483647, %v6940
    %v7085 = vand.u32 2147483647, %v6941
    %v7086 = vand.u32 2147483647, %v6942
    %v7087 = vand.u32 2147483647, %v6943
    %v7088 = vand.u32 2147483647, %v6944
    %v7089 = vand.u32 2147483647, %v6945
    %v7090 = vand.u32 2147483647, %v6946
    %v7091 = vand.u32 2147483647, %v6947
    %v7092 = vand.u32 2147483647, %v6948
    %v7093 = vand.u32 2147483647, %v6949
    %v7094 = vand.u32 2147483647, %v6950
    %v7095 = vand.u32 2147483647, %v6951
    %v7096 = vand.u32 2147483647, %v6952
    %v7097 = vand.u32 2147483647, %v6953
    %v7098 = vand.u32 2147483647, %v6954
    %v7099 = vand.u32 2147483647, %v6955
    %v7100 = vand.u32 2147483647, %v6956
    %v7101 = vand.u32 2147483647, %v6957
    %v7102 = vand.u32 2147483647, %v6958
    %v7103 = vand.u32 2147483647, %v6959
    %v7104 = vand.u32 2147483647, %v6960
    %v7105 = vand.u32 2147483647, %v6961
    %v7106 = vand.u32 2147483647, %v6962
    %v7107 = vand.u32 2147483647, %v6963
    %v7108 = vand.u32 2147483647, %v6964
    %v7109 = vand.u32 2147483647, %v6965
    %v7110 = vand.u32 2147483647, %v6966
    %v7111 = vand.u32 2147483647, %v6967
    %v7112 = vand.u32 2147483647, %v6968
    %v7113 = vand.u32 2147483647, %v6969
    %v7114 = vand.u32 2147483647, %v6970
    %v7115 = vand.u32 2147483647, %v6971
    %v7116 = vand.u32 2147483647, %v6972
    %v7117 = vand.u32 2147483647, %v6973
    %v7118 = vand.u32 2147483647, %v6974
    %v7119 = vand.u32 2147483647, %v6975
    %v7120 = vand.u32 2147483647, %v6976
    %v7121 = vand.u32 2147483647, %v6977
    %v7122 = vand.u32 2147483647, %v6978
    %v7123 = vand.u32 2147483647, %v6979
    %v7124 = vand.u32 2147483647, %v6980
    %v7125 = vand.u32 2147483647, %v6981
    %v7126 = vand.u32 2147483647, %v6982
    %v7127 = vand.u32 2147483647, %v6983
    %v7128 = vand.u32 2147483647, %v6984
    %v7129 = vand.u32 2147483647, %v6985
    %v7130 = vand.u32 2147483647, %v6986
    %v7131 = vand.u32 2147483647, %v6987
    %v7132 = vand.u32 2147483647, %v6988
    %v7133 = vand.u32 2147483647, %v6989
    %v7134 = vand.u32 2147483647, %v6990
    %v7135 = vand.u32 2147483647, %v6991
    %v7136 = vand.u32 2147483647, %v6992
    %v7137 = vand.u32 2147483647, %v6993
    %v7138 = vand.u32 2147483647, %v6994
    %v7139 = vand.u32 2147483647, %v6995
    %v7140 = vand.u32 2147483647, %v6996
    %v7141 = vand.u32 2147483647, %v6997
    %v7142 = vand.u32 2147483647, %v6998
    %v7143 = vand.u32 2147483647, %v6999
    %v7144 = vand.u32 2147483647, %v7000
    %v7145 = vand.u32 2147483647, %v7001
    %v7146 = vand.u32 2147483647, %v7002
    %v7147 = vand.u32 2147483647, %v7003
    %v7148 = vand.u32 2147483647, %v7004
    %v7149 = vand.u32 2147483647, %v7005
    %v7150 = vand.u32 2147483647, %v7006
    %v7151 = vand.u32 2147483647, %v7007
    %v7152 = vand.u32 2147483647, %v7008
    %v7153 = vand.u32 2147483647, %v7009
    %v7154 = vand.u32 2147483647, %v7010
    %v7155 = vand.u32 2147483647, %v7011
    %v7156 = vand.u32 2147483647, %v7012
    %v7157 = vand.u32 2147483647, %v7013
    %v7158 = vand.u32 2147483647, %v7014
    %v7159 = vand.u32 2147483647, %v7015
    %v7160 = vand.u32 2147483647, %v7016
    %v7161 = vand.u32 2147483647, %v7017
    %v7162 = vand.u32 2147483647, %v7018
    %v7163 = vand.u32 2147483647, %v7019
    %v7164 = vand.u32 2147483647, %v7020
    %v7165 = vand.u32 2147483647, %v7021
    %v7166 = vand.u32 2147483647, %v7022
    %v7167 = vand.u32 2147483647, %v7023
    %v7168 = vand.u32 2147483647, %v7024
    %v7169 = vand.u32 2147483647, %v7025
    %v7170 = vand.u32 2147483647, %v7026
    %v7171 = vand.u32 2147483647, %v7027
    %v7172 = vand.u32 2147483647, %v7028
    %v7173 = vand.u32 2147483647, %v7029
    %v7174 = vand.u32 2147483647, %v7030
    %v7175 = vand.u32 2147483647, %v7031
    %v7176 = vand.u32 2147483647, %v7032
    %v7177 = vand.u32 2147483647, %v7033
    %v7178 = vand.u32 2147483647, %v7034
    %v7179 = vand.u32 2147483647, %v7035
    %v7180 = vand.u32 2147483647, %v7036
    %v7181 = vand.u32 2147483647, %v7037
    %v7182 = vand.u32 2147483647, %v7038
    %v7183 = vand.u32 2147483647, %v7039
    %v7184 = vand.u32 2147483647, %v7040
    %v7185 = vand.u32 2147483647, %v7041
    %v7186 = vand.u32 2147483647, %v7042
    %v7187 = vand.u32 2147483647, %v7043
    %v7188 = vand.u32 2147483647, %v7044
    %v7189 = vand.u32 2147483647, %v7045
    %v7190 = vand.u32 2147483647, %v7046
    %v7191 = vand.u32 2147483647, %v7047
    %v7192 = vand.u32 2147483647, %v7048
    %v7193 = vand.u32 2147483647, %v7049
    %v7194 = vand.u32 2147483647, %v7050
    %v7195 = vand.u32 2147483647, %v7051
    %v7196 = vand.u32 2147483647, %v7052
    %v7197 = vand.u32 2147483647, %v7053
    %v7198 = vand.u32 2147483647, %v7054
    %v7199 = vand.u32 2147483647, %v7055
    %v7200 = vand.u32 2147483647, %v7056
    %v7201 = vand.u32 2147483647, %v7057
    %v7202 = vand.u32 2147483647, %v7058
    %v7203 = vand.u32 2147483647, %v7059
    %v7204 = vand.u32 2147483647, %v7060
    %v7205 = vand.u32 2147483647, %v7061
    %v7206 = vand.u32 2147483647, %v7062
    %v7207 = vand.u32 2147483647, %v7063
    %v7208 = vand.u32 2147483647, %v7064
    %v7209 = vand.u32 2147483647, %v7065
    %v7210 = vand.u32 2147483647, %v7066
    %v7211 = vand.u32 2147483647, %v7067
    %v7212 = vand.u32 2147483647, %v7068
    %v7213 = vand.u32 2147483647, %v7069
    %v7214 = vand.u32 2147483647, %v7070
    %v7215 = vand.u32 2147483647, %v7071
    %v7216 = vmul.f32 %v6767, 0.4
    %v7217 = vmul.f32 %v6769, 0.4
    %v7220 = vperm.slane %v7216, 0
    %v7221 = vperm.slane %v7217, 0
    %7222 = vrot.lane.b32.xlu0 %v7220, 64
    %v7223 = vpop.permute.xlu0 %7222
    %7224 = vrot.lane.b32.xlu0 %v7221, 64
    %v7225 = vpop.permute.xlu0 %7224
    %v7228 = vmul.f32 %v7072, %v7223
    %v7229 = vmul.f32 %v7073, %v7223
    %v7230 = vmul.f32 %v7074, %v7223
    %v7231 = vmul.f32 %v7075, %v7223
    %v7232 = vmul.f32 %v7076, %v7223
    %v7233 = vmul.f32 %v7077, %v7223
    %v7234 = vmul.f32 %v7078, %v7223
    %v7235 = vmul.f32 %v7079, %v7223
    %v7236 = vmul.f32 %v7080, %v7223
    %v7237 = vmul.f32 %v7081, %v7223
    %v7238 = vmul.f32 %v7082, %v7223
    %v7239 = vmul.f32 %v7083, %v7223
    %v7240 = vmul.f32 %v7084, %v7223
    %v7241 = vmul.f32 %v7085, %v7223
    %v7242 = vmul.f32 %v7086, %v7223
    %v7243 = vmul.f32 %v7087, %v7223
    %v7244 = vmul.f32 %v7088, %v7223
    %v7245 = vmul.f32 %v7089, %v7223
    %v7246 = vmul.f32 %v7090, %v7223
    %v7247 = vmul.f32 %v7091, %v7223
    %v7248 = vmul.f32 %v7092, %v7223
    %v7249 = vmul.f32 %v7093, %v7223
    %v7250 = vmul.f32 %v7094, %v7223
    %v7251 = vmul.f32 %v7095, %v7223
    %v7252 = vmul.f32 %v7096, %v7223
    %v7253 = vmul.f32 %v7097, %v7223
    %v7254 = vmul.f32 %v7098, %v7223
    %v7255 = vmul.f32 %v7099, %v7223
    %v7256 = vmul.f32 %v7100, %v7223
    %v7257 = vmul.f32 %v7101, %v7223
    %v7258 = vmul.f32 %v7102, %v7223
    %v7259 = vmul.f32 %v7103, %v7223
    %v7260 = vmul.f32 %v7104, %v7223
    %v7261 = vmul.f32 %v7105, %v7223
    %v7262 = vmul.f32 %v7106, %v7223
    %v7263 = vmul.f32 %v7107, %v7223
    %v7264 = vmul.f32 %v7108, %v7223
    %v7265 = vmul.f32 %v7109, %v7223
    %v7266 = vmul.f32 %v7110, %v7223
    %v7267 = vmul.f32 %v7111, %v7223
    %v7268 = vmul.f32 %v7112, %v7223
    %v7269 = vmul.f32 %v7113, %v7223
    %v7270 = vmul.f32 %v7114, %v7223
    %v7271 = vmul.f32 %v7115, %v7223
    %v7272 = vmul.f32 %v7116, %v7223
    %v7273 = vmul.f32 %v7117, %v7223
    %v7274 = vmul.f32 %v7118, %v7223
    %v7275 = vmul.f32 %v7119, %v7223
    %v7276 = vmul.f32 %v7120, %v7223
    %v7277 = vmul.f32 %v7121, %v7223
    %v7278 = vmul.f32 %v7122, %v7223
    %v7279 = vmul.f32 %v7123, %v7223
    %v7280 = vmul.f32 %v7124, %v7223
    %v7281 = vmul.f32 %v7125, %v7223
    %v7282 = vmul.f32 %v7126, %v7223
    %v7283 = vmul.f32 %v7127, %v7223
    %v7284 = vmul.f32 %v7128, %v7223
    %v7285 = vmul.f32 %v7129, %v7223
    %v7286 = vmul.f32 %v7130, %v7223
    %v7287 = vmul.f32 %v7131, %v7223
    %v7288 = vmul.f32 %v7132, %v7223
    %v7289 = vmul.f32 %v7133, %v7223
    %v7290 = vmul.f32 %v7134, %v7223
    %v7291 = vmul.f32 %v7135, %v7223
    %v7292 = vmul.f32 %v7136, %v7223
    %v7293 = vmul.f32 %v7137, %v7223
    %v7294 = vmul.f32 %v7138, %v7223
    %v7295 = vmul.f32 %v7139, %v7223
    %v7296 = vmul.f32 %v7140, %v7223
    %v7297 = vmul.f32 %v7141, %v7223
    %v7298 = vmul.f32 %v7142, %v7223
    %v7299 = vmul.f32 %v7143, %v7223
    %v7300 = vmul.f32 %v7144, %v7225
    %v7301 = vmul.f32 %v7145, %v7225
    %v7302 = vmul.f32 %v7146, %v7225
    %v7303 = vmul.f32 %v7147, %v7225
    %v7304 = vmul.f32 %v7148, %v7225
    %v7305 = vmul.f32 %v7149, %v7225
    %v7306 = vmul.f32 %v7150, %v7225
    %v7307 = vmul.f32 %v7151, %v7225
    %v7308 = vmul.f32 %v7152, %v7225
    %v7309 = vmul.f32 %v7153, %v7225
    %v7310 = vmul.f32 %v7154, %v7225
    %v7311 = vmul.f32 %v7155, %v7225
    %v7312 = vmul.f32 %v7156, %v7225
    %v7313 = vmul.f32 %v7157, %v7225
    %v7314 = vmul.f32 %v7158, %v7225
    %v7315 = vmul.f32 %v7159, %v7225
    %v7316 = vmul.f32 %v7160, %v7225
    %v7317 = vmul.f32 %v7161, %v7225
    %v7318 = vmul.f32 %v7162, %v7225
    %v7319 = vmul.f32 %v7163, %v7225
    %v7320 = vmul.f32 %v7164, %v7225
    %v7321 = vmul.f32 %v7165, %v7225
    %v7322 = vmul.f32 %v7166, %v7225
    %v7323 = vmul.f32 %v7167, %v7225
    %v7324 = vmul.f32 %v7168, %v7225
    %v7325 = vmul.f32 %v7169, %v7225
    %v7326 = vmul.f32 %v7170, %v7225
    %v7327 = vmul.f32 %v7171, %v7225
    %v7328 = vmul.f32 %v7172, %v7225
    %v7329 = vmul.f32 %v7173, %v7225
    %v7330 = vmul.f32 %v7174, %v7225
    %v7331 = vmul.f32 %v7175, %v7225
    %v7332 = vmul.f32 %v7176, %v7225
    %v7333 = vmul.f32 %v7177, %v7225
    %v7334 = vmul.f32 %v7178, %v7225
    %v7335 = vmul.f32 %v7179, %v7225
    %v7336 = vmul.f32 %v7180, %v7225
    %v7337 = vmul.f32 %v7181, %v7225
    %v7338 = vmul.f32 %v7182, %v7225
    %v7339 = vmul.f32 %v7183, %v7225
    %v7340 = vmul.f32 %v7184, %v7225
    %v7341 = vmul.f32 %v7185, %v7225
    %v7342 = vmul.f32 %v7186, %v7225
    %v7343 = vmul.f32 %v7187, %v7225
    %v7344 = vmul.f32 %v7188, %v7225
    %v7345 = vmul.f32 %v7189, %v7225
    %v7346 = vmul.f32 %v7190, %v7225
    %v7347 = vmul.f32 %v7191, %v7225
    %v7348 = vmul.f32 %v7192, %v7225
    %v7349 = vmul.f32 %v7193, %v7225
    %v7350 = vmul.f32 %v7194, %v7225
    %v7351 = vmul.f32 %v7195, %v7225
    %v7352 = vmul.f32 %v7196, %v7225
    %v7353 = vmul.f32 %v7197, %v7225
    %v7354 = vmul.f32 %v7198, %v7225
    %v7355 = vmul.f32 %v7199, %v7225
    %v7356 = vmul.f32 %v7200, %v7225
    %v7357 = vmul.f32 %v7201, %v7225
    %v7358 = vmul.f32 %v7202, %v7225
    %v7359 = vmul.f32 %v7203, %v7225
    %v7360 = vmul.f32 %v7204, %v7225
    %v7361 = vmul.f32 %v7205, %v7225
    %v7362 = vmul.f32 %v7206, %v7225
    %v7363 = vmul.f32 %v7207, %v7225
    %v7364 = vmul.f32 %v7208, %v7225
    %v7365 = vmul.f32 %v7209, %v7225
    %v7366 = vmul.f32 %v7210, %v7225
    %v7367 = vmul.f32 %v7211, %v7225
    %v7368 = vmul.f32 %v7212, %v7225
    %v7369 = vmul.f32 %v7213, %v7225
    %v7370 = vmul.f32 %v7214, %v7225
    %v7371 = vmul.f32 %v7215, %v7225
    %v7372 = vmul.f32 %v6767, 0.6
    %v7373 = vmul.f32 %v6769, 0.6
    %v7376 = vperm.slane %v7372, 0
    %v7377 = vperm.slane %v7373, 0
    %v7380 = vmul.f32 %v7376, %v6745
    %v7381 = vmul.f32 %v7376, %v6747
    %v7382 = vmul.f32 %v7376, %v6750
    %v7383 = vmul.f32 %v7377, %v6757
    %v7384 = vmul.f32 %v7377, %v6759
    %v7385 = vmul.f32 %v7377, %v6761
    %7392 = vrot.lane.b32.xlu0 %v7380, 64
    %v7393 = vpop.permute.xlu0 %7392
    %7394 = vrot.lane.b32.xlu0 %v7381, 64
    %v7395 = vpop.permute.xlu0 %7394
    %7396 = vrot.lane.b32.xlu0 %v7382, 64
    %v7397 = vpop.permute.xlu0 %7396
    %7398 = vrot.lane.b32.xlu0 %v7383, 64
    %v7399 = vpop.permute.xlu0 %7398
    %7400 = vrot.lane.b32.xlu0 %v7384, 64
    %v7401 = vpop.permute.xlu0 %7400
    %7402 = vrot.lane.b32.xlu0 %v7385, 64
    %v7403 = vpop.permute.xlu0 %7402
    %v7410 = vadd.f32 %v7228, %v7393
    %v7411 = vadd.f32 %v7229, %v7395
    %v7412 = vadd.f32 %v7230, %v7397
    %v7413 = vadd.f32 %v7231, %v7393
    %v7414 = vadd.f32 %v7232, %v7395
    %v7415 = vadd.f32 %v7233, %v7397
    %v7416 = vadd.f32 %v7234, %v7393
    %v7417 = vadd.f32 %v7235, %v7395
    %v7418 = vadd.f32 %v7236, %v7397
    %v7419 = vadd.f32 %v7237, %v7393
    %v7420 = vadd.f32 %v7238, %v7395
    %v7421 = vadd.f32 %v7239, %v7397
    %v7422 = vadd.f32 %v7240, %v7393
    %v7423 = vadd.f32 %v7241, %v7395
    %v7424 = vadd.f32 %v7242, %v7397
    %v7425 = vadd.f32 %v7243, %v7393
    %v7426 = vadd.f32 %v7244, %v7395
    %v7427 = vadd.f32 %v7245, %v7397
    %v7428 = vadd.f32 %v7246, %v7393
    %v7429 = vadd.f32 %v7247, %v7395
    %v7430 = vadd.f32 %v7248, %v7397
    %v7431 = vadd.f32 %v7249, %v7393
    %v7432 = vadd.f32 %v7250, %v7395
    %v7433 = vadd.f32 %v7251, %v7397
    %v7434 = vadd.f32 %v7252, %v7393
    %v7435 = vadd.f32 %v7253, %v7395
    %v7436 = vadd.f32 %v7254, %v7397
    %v7437 = vadd.f32 %v7255, %v7393
    %v7438 = vadd.f32 %v7256, %v7395
    %v7439 = vadd.f32 %v7257, %v7397
    %v7440 = vadd.f32 %v7258, %v7393
    %v7441 = vadd.f32 %v7259, %v7395
    %v7442 = vadd.f32 %v7260, %v7397
    %v7443 = vadd.f32 %v7261, %v7393
    %v7444 = vadd.f32 %v7262, %v7395
    %v7445 = vadd.f32 %v7263, %v7397
    %v7446 = vadd.f32 %v7264, %v7393
    %v7447 = vadd.f32 %v7265, %v7395
    %v7448 = vadd.f32 %v7266, %v7397
    %v7449 = vadd.f32 %v7267, %v7393
    %v7450 = vadd.f32 %v7268, %v7395
    %v7451 = vadd.f32 %v7269, %v7397
    %v7452 = vadd.f32 %v7270, %v7393
    %v7453 = vadd.f32 %v7271, %v7395
    %v7454 = vadd.f32 %v7272, %v7397
    %v7455 = vadd.f32 %v7273, %v7393
    %v7456 = vadd.f32 %v7274, %v7395
    %v7457 = vadd.f32 %v7275, %v7397
    %v7458 = vadd.f32 %v7276, %v7393
    %v7459 = vadd.f32 %v7277, %v7395
    %v7460 = vadd.f32 %v7278, %v7397
    %v7461 = vadd.f32 %v7279, %v7393
    %v7462 = vadd.f32 %v7280, %v7395
    %v7463 = vadd.f32 %v7281, %v7397
    %v7464 = vadd.f32 %v7282, %v7393
    %v7465 = vadd.f32 %v7283, %v7395
    %v7466 = vadd.f32 %v7284, %v7397
    %v7467 = vadd.f32 %v7285, %v7393
    %v7468 = vadd.f32 %v7286, %v7395
    %v7469 = vadd.f32 %v7287, %v7397
    %v7470 = vadd.f32 %v7288, %v7393
    %v7471 = vadd.f32 %v7289, %v7395
    %v7472 = vadd.f32 %v7290, %v7397
    %v7473 = vadd.f32 %v7291, %v7393
    %v7474 = vadd.f32 %v7292, %v7395
    %v7475 = vadd.f32 %v7293, %v7397
    %v7476 = vadd.f32 %v7294, %v7393
    %v7477 = vadd.f32 %v7295, %v7395
    %v7478 = vadd.f32 %v7296, %v7397
    %v7479 = vadd.f32 %v7297, %v7393
    %v7480 = vadd.f32 %v7298, %v7395
    %v7481 = vadd.f32 %v7299, %v7397
    %v7482 = vadd.f32 %v7300, %v7399
    %v7483 = vadd.f32 %v7301, %v7401
    %v7484 = vadd.f32 %v7302, %v7403
    %v7485 = vadd.f32 %v7303, %v7399
    %v7486 = vadd.f32 %v7304, %v7401
    %v7487 = vadd.f32 %v7305, %v7403
    %v7488 = vadd.f32 %v7306, %v7399
    %v7489 = vadd.f32 %v7307, %v7401
    %v7490 = vadd.f32 %v7308, %v7403
    %v7491 = vadd.f32 %v7309, %v7399
    %v7492 = vadd.f32 %v7310, %v7401
    %v7493 = vadd.f32 %v7311, %v7403
    %v7494 = vadd.f32 %v7312, %v7399
    %v7495 = vadd.f32 %v7313, %v7401
    %v7496 = vadd.f32 %v7314, %v7403
    %v7497 = vadd.f32 %v7315, %v7399
    %v7498 = vadd.f32 %v7316, %v7401
    %v7499 = vadd.f32 %v7317, %v7403
    %v7500 = vadd.f32 %v7318, %v7399
    %v7501 = vadd.f32 %v7319, %v7401
    %v7502 = vadd.f32 %v7320, %v7403
    %v7503 = vadd.f32 %v7321, %v7399
    %v7504 = vadd.f32 %v7322, %v7401
    %v7505 = vadd.f32 %v7323, %v7403
    %v7506 = vadd.f32 %v7324, %v7399
    %v7507 = vadd.f32 %v7325, %v7401
    %v7508 = vadd.f32 %v7326, %v7403
    %v7509 = vadd.f32 %v7327, %v7399
    %v7510 = vadd.f32 %v7328, %v7401
    %v7511 = vadd.f32 %v7329, %v7403
    %v7512 = vadd.f32 %v7330, %v7399
    %v7513 = vadd.f32 %v7331, %v7401
    %v7514 = vadd.f32 %v7332, %v7403
    %v7515 = vadd.f32 %v7333, %v7399
    %v7516 = vadd.f32 %v7334, %v7401
    %v7517 = vadd.f32 %v7335, %v7403
    %v7518 = vadd.f32 %v7336, %v7399
    %v7519 = vadd.f32 %v7337, %v7401
    %v7520 = vadd.f32 %v7338, %v7403
    %v7521 = vadd.f32 %v7339, %v7399
    %v7522 = vadd.f32 %v7340, %v7401
    %v7523 = vadd.f32 %v7341, %v7403
    %v7524 = vadd.f32 %v7342, %v7399
    %v7525 = vadd.f32 %v7343, %v7401
    %v7526 = vadd.f32 %v7344, %v7403
    %v7527 = vadd.f32 %v7345, %v7399
    %v7528 = vadd.f32 %v7346, %v7401
    %v7529 = vadd.f32 %v7347, %v7403
    %v7530 = vadd.f32 %v7348, %v7399
    %v7531 = vadd.f32 %v7349, %v7401
    %v7532 = vadd.f32 %v7350, %v7403
    %v7533 = vadd.f32 %v7351, %v7399
    %v7534 = vadd.f32 %v7352, %v7401
    %v7535 = vadd.f32 %v7353, %v7403
    %v7536 = vadd.f32 %v7354, %v7399
    %v7537 = vadd.f32 %v7355, %v7401
    %v7538 = vadd.f32 %v7356, %v7403
    %v7539 = vadd.f32 %v7357, %v7399
    %v7540 = vadd.f32 %v7358, %v7401
    %v7541 = vadd.f32 %v7359, %v7403
    %v7542 = vadd.f32 %v7360, %v7399
    %v7543 = vadd.f32 %v7361, %v7401
    %v7544 = vadd.f32 %v7362, %v7403
    %v7545 = vadd.f32 %v7363, %v7399
    %v7546 = vadd.f32 %v7364, %v7401
    %v7547 = vadd.f32 %v7365, %v7403
    %v7548 = vadd.f32 %v7366, %v7399
    %v7549 = vadd.f32 %v7367, %v7401
    %v7550 = vadd.f32 %v7368, %v7403
    %v7551 = vadd.f32 %v7369, %v7399
    %v7552 = vadd.f32 %v7370, %v7401
    %v7553 = vadd.f32 %v7371, %v7403
    %7698 = vrot.lane.b32.xlu0 %v7410, 64
    %v7699 = vpop.permute.xlu0 %7698
    %7700 = vrot.lane.b32.xlu0 %v7411, 64
    %v7701 = vpop.permute.xlu0 %7700
    %7702 = vrot.lane.b32.xlu0 %v7412, 64
    %v7703 = vpop.permute.xlu0 %7702
    %7704 = vrot.lane.b32.xlu0 %v7413, 64
    %v7705 = vpop.permute.xlu0 %7704
    %7706 = vrot.lane.b32.xlu0 %v7414, 64
    %v7707 = vpop.permute.xlu0 %7706
    %7708 = vrot.lane.b32.xlu0 %v7415, 64
    %v7709 = vpop.permute.xlu0 %7708
    %7710 = vrot.lane.b32.xlu0 %v7416, 64
    %v7711 = vpop.permute.xlu0 %7710
    %7712 = vrot.lane.b32.xlu0 %v7417, 64
    %v7713 = vpop.permute.xlu0 %7712
    %7714 = vrot.lane.b32.xlu0 %v7418, 64
    %v7715 = vpop.permute.xlu0 %7714
    %7716 = vrot.lane.b32.xlu0 %v7419, 64
    %v7717 = vpop.permute.xlu0 %7716
    %7718 = vrot.lane.b32.xlu0 %v7420, 64
    %v7719 = vpop.permute.xlu0 %7718
    %7720 = vrot.lane.b32.xlu0 %v7421, 64
    %v7721 = vpop.permute.xlu0 %7720
    %7722 = vrot.lane.b32.xlu0 %v7422, 64
    %v7723 = vpop.permute.xlu0 %7722
    %7724 = vrot.lane.b32.xlu0 %v7423, 64
    %v7725 = vpop.permute.xlu0 %7724
    %7726 = vrot.lane.b32.xlu0 %v7424, 64
    %v7727 = vpop.permute.xlu0 %7726
    %7728 = vrot.lane.b32.xlu0 %v7425, 64
    %v7729 = vpop.permute.xlu0 %7728
    %7730 = vrot.lane.b32.xlu0 %v7426, 64
    %v7731 = vpop.permute.xlu0 %7730
    %7732 = vrot.lane.b32.xlu0 %v7427, 64
    %v7733 = vpop.permute.xlu0 %7732
    %7734 = vrot.lane.b32.xlu0 %v7428, 64
    %v7735 = vpop.permute.xlu0 %7734
    %7736 = vrot.lane.b32.xlu0 %v7429, 64
    %v7737 = vpop.permute.xlu0 %7736
    %7738 = vrot.lane.b32.xlu0 %v7430, 64
    %v7739 = vpop.permute.xlu0 %7738
    %7740 = vrot.lane.b32.xlu0 %v7431, 64
    %v7741 = vpop.permute.xlu0 %7740
    %7742 = vrot.lane.b32.xlu0 %v7432, 64
    %v7743 = vpop.permute.xlu0 %7742
    %7744 = vrot.lane.b32.xlu0 %v7433, 64
    %v7745 = vpop.permute.xlu0 %7744
    %7746 = vrot.lane.b32.xlu0 %v7434, 64
    %v7747 = vpop.permute.xlu0 %7746
    %7748 = vrot.lane.b32.xlu0 %v7435, 64
    %v7749 = vpop.permute.xlu0 %7748
    %7750 = vrot.lane.b32.xlu0 %v7436, 64
    %v7751 = vpop.permute.xlu0 %7750
    %7752 = vrot.lane.b32.xlu0 %v7437, 64
    %v7753 = vpop.permute.xlu0 %7752
    %7754 = vrot.lane.b32.xlu0 %v7438, 64
    %v7755 = vpop.permute.xlu0 %7754
    %7756 = vrot.lane.b32.xlu0 %v7439, 64
    %v7757 = vpop.permute.xlu0 %7756
    %7758 = vrot.lane.b32.xlu0 %v7440, 64
    %v7759 = vpop.permute.xlu0 %7758
    %7760 = vrot.lane.b32.xlu0 %v7441, 64
    %v7761 = vpop.permute.xlu0 %7760
    %7762 = vrot.lane.b32.xlu0 %v7442, 64
    %v7763 = vpop.permute.xlu0 %7762
    %7764 = vrot.lane.b32.xlu0 %v7443, 64
    %v7765 = vpop.permute.xlu0 %7764
    %7766 = vrot.lane.b32.xlu0 %v7444, 64
    %v7767 = vpop.permute.xlu0 %7766
    %7768 = vrot.lane.b32.xlu0 %v7445, 64
    %v7769 = vpop.permute.xlu0 %7768
    %7770 = vrot.lane.b32.xlu0 %v7446, 64
    %v7771 = vpop.permute.xlu0 %7770
    %7772 = vrot.lane.b32.xlu0 %v7447, 64
    %v7773 = vpop.permute.xlu0 %7772
    %7774 = vrot.lane.b32.xlu0 %v7448, 64
    %v7775 = vpop.permute.xlu0 %7774
    %7776 = vrot.lane.b32.xlu0 %v7449, 64
    %v7777 = vpop.permute.xlu0 %7776
    %7778 = vrot.lane.b32.xlu0 %v7450, 64
    %v7779 = vpop.permute.xlu0 %7778
    %7780 = vrot.lane.b32.xlu0 %v7451, 64
    %v7781 = vpop.permute.xlu0 %7780
    %7782 = vrot.lane.b32.xlu0 %v7452, 64
    %v7783 = vpop.permute.xlu0 %7782
    %7784 = vrot.lane.b32.xlu0 %v7453, 64
    %v7785 = vpop.permute.xlu0 %7784
    %7786 = vrot.lane.b32.xlu0 %v7454, 64
    %v7787 = vpop.permute.xlu0 %7786
    %7788 = vrot.lane.b32.xlu0 %v7455, 64
    %v7789 = vpop.permute.xlu0 %7788
    %7790 = vrot.lane.b32.xlu0 %v7456, 64
    %v7791 = vpop.permute.xlu0 %7790
    %7792 = vrot.lane.b32.xlu0 %v7457, 64
    %v7793 = vpop.permute.xlu0 %7792
    %7794 = vrot.lane.b32.xlu0 %v7458, 64
    %v7795 = vpop.permute.xlu0 %7794
    %7796 = vrot.lane.b32.xlu0 %v7459, 64
    %v7797 = vpop.permute.xlu0 %7796
    %7798 = vrot.lane.b32.xlu0 %v7460, 64
    %v7799 = vpop.permute.xlu0 %7798
    %7800 = vrot.lane.b32.xlu0 %v7461, 64
    %v7801 = vpop.permute.xlu0 %7800
    %7802 = vrot.lane.b32.xlu0 %v7462, 64
    %v7803 = vpop.permute.xlu0 %7802
    %7804 = vrot.lane.b32.xlu0 %v7463, 64
    %v7805 = vpop.permute.xlu0 %7804
    %7806 = vrot.lane.b32.xlu0 %v7464, 64
    %v7807 = vpop.permute.xlu0 %7806
    %7808 = vrot.lane.b32.xlu0 %v7465, 64
    %v7809 = vpop.permute.xlu0 %7808
    %7810 = vrot.lane.b32.xlu0 %v7466, 64
    %v7811 = vpop.permute.xlu0 %7810
    %7812 = vrot.lane.b32.xlu0 %v7467, 64
    %v7813 = vpop.permute.xlu0 %7812
    %7814 = vrot.lane.b32.xlu0 %v7468, 64
    %v7815 = vpop.permute.xlu0 %7814
    %7816 = vrot.lane.b32.xlu0 %v7469, 64
    %v7817 = vpop.permute.xlu0 %7816
    %7818 = vrot.lane.b32.xlu0 %v7470, 64
    %v7819 = vpop.permute.xlu0 %7818
    %7820 = vrot.lane.b32.xlu0 %v7471, 64
    %v7821 = vpop.permute.xlu0 %7820
    %7822 = vrot.lane.b32.xlu0 %v7472, 64
    %v7823 = vpop.permute.xlu0 %7822
    %7824 = vrot.lane.b32.xlu0 %v7473, 64
    %v7825 = vpop.permute.xlu0 %7824
    %7826 = vrot.lane.b32.xlu0 %v7474, 64
    %v7827 = vpop.permute.xlu0 %7826
    %7828 = vrot.lane.b32.xlu0 %v7475, 64
    %v7829 = vpop.permute.xlu0 %7828
    %7830 = vrot.lane.b32.xlu0 %v7476, 64
    %v7831 = vpop.permute.xlu0 %7830
    %7832 = vrot.lane.b32.xlu0 %v7477, 64
    %v7833 = vpop.permute.xlu0 %7832
    %7834 = vrot.lane.b32.xlu0 %v7478, 64
    %v7835 = vpop.permute.xlu0 %7834
    %7836 = vrot.lane.b32.xlu0 %v7479, 64
    %v7837 = vpop.permute.xlu0 %7836
    %7838 = vrot.lane.b32.xlu0 %v7480, 64
    %v7839 = vpop.permute.xlu0 %7838
    %7840 = vrot.lane.b32.xlu0 %v7481, 64
    %v7841 = vpop.permute.xlu0 %7840
    %7842 = vrot.lane.b32.xlu0 %v7482, 64
    %v7843 = vpop.permute.xlu0 %7842
    %7844 = vrot.lane.b32.xlu0 %v7483, 64
    %v7845 = vpop.permute.xlu0 %7844
    %7846 = vrot.lane.b32.xlu0 %v7484, 64
    %v7847 = vpop.permute.xlu0 %7846
    %7848 = vrot.lane.b32.xlu0 %v7485, 64
    %v7849 = vpop.permute.xlu0 %7848
    %7850 = vrot.lane.b32.xlu0 %v7486, 64
    %v7851 = vpop.permute.xlu0 %7850
    %7852 = vrot.lane.b32.xlu0 %v7487, 64
    %v7853 = vpop.permute.xlu0 %7852
    %7854 = vrot.lane.b32.xlu0 %v7488, 64
    %v7855 = vpop.permute.xlu0 %7854
    %7856 = vrot.lane.b32.xlu0 %v7489, 64
    %v7857 = vpop.permute.xlu0 %7856
    %7858 = vrot.lane.b32.xlu0 %v7490, 64
    %v7859 = vpop.permute.xlu0 %7858
    %7860 = vrot.lane.b32.xlu0 %v7491, 64
    %v7861 = vpop.permute.xlu0 %7860
    %7862 = vrot.lane.b32.xlu0 %v7492, 64
    %v7863 = vpop.permute.xlu0 %7862
    %7864 = vrot.lane.b32.xlu0 %v7493, 64
    %v7865 = vpop.permute.xlu0 %7864
    %7866 = vrot.lane.b32.xlu0 %v7494, 64
    %v7867 = vpop.permute.xlu0 %7866
    %7868 = vrot.lane.b32.xlu0 %v7495, 64
    %v7869 = vpop.permute.xlu0 %7868
    %7870 = vrot.lane.b32.xlu0 %v7496, 64
    %v7871 = vpop.permute.xlu0 %7870
    %7872 = vrot.lane.b32.xlu0 %v7497, 64
    %v7873 = vpop.permute.xlu0 %7872
    %7874 = vrot.lane.b32.xlu0 %v7498, 64
    %v7875 = vpop.permute.xlu0 %7874
    %7876 = vrot.lane.b32.xlu0 %v7499, 64
    %v7877 = vpop.permute.xlu0 %7876
    %7878 = vrot.lane.b32.xlu0 %v7500, 64
    %v7879 = vpop.permute.xlu0 %7878
    %7880 = vrot.lane.b32.xlu0 %v7501, 64
    %v7881 = vpop.permute.xlu0 %7880
    %7882 = vrot.lane.b32.xlu0 %v7502, 64
    %v7883 = vpop.permute.xlu0 %7882
    %7884 = vrot.lane.b32.xlu0 %v7503, 64
    %v7885 = vpop.permute.xlu0 %7884
    %7886 = vrot.lane.b32.xlu0 %v7504, 64
    %v7887 = vpop.permute.xlu0 %7886
    %7888 = vrot.lane.b32.xlu0 %v7505, 64
    %v7889 = vpop.permute.xlu0 %7888
    %7890 = vrot.lane.b32.xlu0 %v7506, 64
    %v7891 = vpop.permute.xlu0 %7890
    %7892 = vrot.lane.b32.xlu0 %v7507, 64
    %v7893 = vpop.permute.xlu0 %7892
    %7894 = vrot.lane.b32.xlu0 %v7508, 64
    %v7895 = vpop.permute.xlu0 %7894
    %7896 = vrot.lane.b32.xlu0 %v7509, 64
    %v7897 = vpop.permute.xlu0 %7896
    %7898 = vrot.lane.b32.xlu0 %v7510, 64
    %v7899 = vpop.permute.xlu0 %7898
    %7900 = vrot.lane.b32.xlu0 %v7511, 64
    %v7901 = vpop.permute.xlu0 %7900
    %7902 = vrot.lane.b32.xlu0 %v7512, 64
    %v7903 = vpop.permute.xlu0 %7902
    %7904 = vrot.lane.b32.xlu0 %v7513, 64
    %v7905 = vpop.permute.xlu0 %7904
    %7906 = vrot.lane.b32.xlu0 %v7514, 64
    %v7907 = vpop.permute.xlu0 %7906
    %7908 = vrot.lane.b32.xlu0 %v7515, 64
    %v7909 = vpop.permute.xlu0 %7908
    %7910 = vrot.lane.b32.xlu0 %v7516, 64
    %v7911 = vpop.permute.xlu0 %7910
    %7912 = vrot.lane.b32.xlu0 %v7517, 64
    %v7913 = vpop.permute.xlu0 %7912
    %7914 = vrot.lane.b32.xlu0 %v7518, 64
    %v7915 = vpop.permute.xlu0 %7914
    %7916 = vrot.lane.b32.xlu0 %v7519, 64
    %v7917 = vpop.permute.xlu0 %7916
    %7918 = vrot.lane.b32.xlu0 %v7520, 64
    %v7919 = vpop.permute.xlu0 %7918
    %7920 = vrot.lane.b32.xlu0 %v7521, 64
    %v7921 = vpop.permute.xlu0 %7920
    %7922 = vrot.lane.b32.xlu0 %v7522, 64
    %v7923 = vpop.permute.xlu0 %7922
    %7924 = vrot.lane.b32.xlu0 %v7523, 64
    %v7925 = vpop.permute.xlu0 %7924
    %7926 = vrot.lane.b32.xlu0 %v7524, 64
    %v7927 = vpop.permute.xlu0 %7926
    %7928 = vrot.lane.b32.xlu0 %v7525, 64
    %v7929 = vpop.permute.xlu0 %7928
    %7930 = vrot.lane.b32.xlu0 %v7526, 64
    %v7931 = vpop.permute.xlu0 %7930
    %7932 = vrot.lane.b32.xlu0 %v7527, 64
    %v7933 = vpop.permute.xlu0 %7932
    %7934 = vrot.lane.b32.xlu0 %v7528, 64
    %v7935 = vpop.permute.xlu0 %7934
    %7936 = vrot.lane.b32.xlu0 %v7529, 64
    %v7937 = vpop.permute.xlu0 %7936
    %7938 = vrot.lane.b32.xlu0 %v7530, 64
    %v7939 = vpop.permute.xlu0 %7938
    %7940 = vrot.lane.b32.xlu0 %v7531, 64
    %v7941 = vpop.permute.xlu0 %7940
    %7942 = vrot.lane.b32.xlu0 %v7532, 64
    %v7943 = vpop.permute.xlu0 %7942
    %7944 = vrot.lane.b32.xlu0 %v7533, 64
    %v7945 = vpop.permute.xlu0 %7944
    %7946 = vrot.lane.b32.xlu0 %v7534, 64
    %v7947 = vpop.permute.xlu0 %7946
    %7948 = vrot.lane.b32.xlu0 %v7535, 64
    %v7949 = vpop.permute.xlu0 %7948
    %7950 = vrot.lane.b32.xlu0 %v7536, 64
    %v7951 = vpop.permute.xlu0 %7950
    %7952 = vrot.lane.b32.xlu0 %v7537, 64
    %v7953 = vpop.permute.xlu0 %7952
    %7954 = vrot.lane.b32.xlu0 %v7538, 64
    %v7955 = vpop.permute.xlu0 %7954
    %7956 = vrot.lane.b32.xlu0 %v7539, 64
    %v7957 = vpop.permute.xlu0 %7956
    %7958 = vrot.lane.b32.xlu0 %v7540, 64
    %v7959 = vpop.permute.xlu0 %7958
    %7960 = vrot.lane.b32.xlu0 %v7541, 64
    %v7961 = vpop.permute.xlu0 %7960
    %7962 = vrot.lane.b32.xlu0 %v7542, 64
    %v7963 = vpop.permute.xlu0 %7962
    %7964 = vrot.lane.b32.xlu0 %v7543, 64
    %v7965 = vpop.permute.xlu0 %7964
    %7966 = vrot.lane.b32.xlu0 %v7544, 64
    %v7967 = vpop.permute.xlu0 %7966
    %7968 = vrot.lane.b32.xlu0 %v7545, 64
    %v7969 = vpop.permute.xlu0 %7968
    %7970 = vrot.lane.b32.xlu0 %v7546, 64
    %v7971 = vpop.permute.xlu0 %7970
    %7972 = vrot.lane.b32.xlu0 %v7547, 64
    %v7973 = vpop.permute.xlu0 %7972
    %7974 = vrot.lane.b32.xlu0 %v7548, 64
    %v7975 = vpop.permute.xlu0 %7974
    %7976 = vrot.lane.b32.xlu0 %v7549, 64
    %v7977 = vpop.permute.xlu0 %7976
    %7978 = vrot.lane.b32.xlu0 %v7550, 64
    %v7979 = vpop.permute.xlu0 %7978
    %7980 = vrot.lane.b32.xlu0 %v7551, 64
    %v7981 = vpop.permute.xlu0 %7980
    %7982 = vrot.lane.b32.xlu0 %v7552, 64
    %v7983 = vpop.permute.xlu0 %7982
    %7984 = vrot.lane.b32.xlu0 %v7553, 64
    %v7985 = vpop.permute.xlu0 %7984
    %v8130 = vsel %vm152, %v7699, 0.0
    %8131 = vadd.xlane.f32.xlu0 %v8130
    %v8132 = vpop.xlane.xlu0 %8131
    %v8133 = vsel %vm152, %v7701, 0.0
    %8134 = vadd.xlane.f32.xlu0 %v8133
    %v8135 = vpop.xlane.xlu0 %8134
    %v8136 = vsel %vm152, %v7703, 0.0
    %8137 = vadd.xlane.f32.xlu0 %v8136
    %v8138 = vpop.xlane.xlu0 %8137
    %v8139 = vsel %vm152, %v7705, 0.0
    %8140 = vadd.xlane.f32.xlu0 %v8139
    %v8141 = vpop.xlane.xlu0 %8140
    %v8142 = vsel %vm152, %v7707, 0.0
    %8143 = vadd.xlane.f32.xlu0 %v8142
    %v8144 = vpop.xlane.xlu0 %8143
    %v8145 = vsel %vm152, %v7709, 0.0
    %8146 = vadd.xlane.f32.xlu0 %v8145
    %v8147 = vpop.xlane.xlu0 %8146
    %v8148 = vsel %vm152, %v7711, 0.0
    %8149 = vadd.xlane.f32.xlu0 %v8148
    %v8150 = vpop.xlane.xlu0 %8149
    %v8151 = vsel %vm152, %v7713, 0.0
    %8152 = vadd.xlane.f32.xlu0 %v8151
    %v8153 = vpop.xlane.xlu0 %8152
    %v8154 = vsel %vm152, %v7715, 0.0
    %8155 = vadd.xlane.f32.xlu0 %v8154
    %v8156 = vpop.xlane.xlu0 %8155
    %v8157 = vsel %vm152, %v7717, 0.0
    %8158 = vadd.xlane.f32.xlu0 %v8157
    %v8159 = vpop.xlane.xlu0 %8158
    %v8160 = vsel %vm152, %v7719, 0.0
    %8161 = vadd.xlane.f32.xlu0 %v8160
    %v8162 = vpop.xlane.xlu0 %8161
    %v8163 = vsel %vm152, %v7721, 0.0
    %8164 = vadd.xlane.f32.xlu0 %v8163
    %v8165 = vpop.xlane.xlu0 %8164
    %v8166 = vsel %vm152, %v7723, 0.0
    %8167 = vadd.xlane.f32.xlu0 %v8166
    %v8168 = vpop.xlane.xlu0 %8167
    %v8169 = vsel %vm152, %v7725, 0.0
    %8170 = vadd.xlane.f32.xlu0 %v8169
    %v8171 = vpop.xlane.xlu0 %8170
    %v8172 = vsel %vm152, %v7727, 0.0
    %8173 = vadd.xlane.f32.xlu0 %v8172
    %v8174 = vpop.xlane.xlu0 %8173
    %v8175 = vsel %vm152, %v7729, 0.0
    %8176 = vadd.xlane.f32.xlu0 %v8175
    %v8177 = vpop.xlane.xlu0 %8176
    %v8178 = vsel %vm152, %v7731, 0.0
    %8179 = vadd.xlane.f32.xlu0 %v8178
    %v8180 = vpop.xlane.xlu0 %8179
    %v8181 = vsel %vm152, %v7733, 0.0
    %8182 = vadd.xlane.f32.xlu0 %v8181
    %v8183 = vpop.xlane.xlu0 %8182
    %v8184 = vsel %vm152, %v7735, 0.0
    %8185 = vadd.xlane.f32.xlu0 %v8184
    %v8186 = vpop.xlane.xlu0 %8185
    %v8187 = vsel %vm152, %v7737, 0.0
    %8188 = vadd.xlane.f32.xlu0 %v8187
    %v8189 = vpop.xlane.xlu0 %8188
    %v8190 = vsel %vm152, %v7739, 0.0
    %8191 = vadd.xlane.f32.xlu0 %v8190
    %v8192 = vpop.xlane.xlu0 %8191
    %v8193 = vsel %vm152, %v7741, 0.0
    %8194 = vadd.xlane.f32.xlu0 %v8193
    %v8195 = vpop.xlane.xlu0 %8194
    %v8196 = vsel %vm152, %v7743, 0.0
    %8197 = vadd.xlane.f32.xlu0 %v8196
    %v8198 = vpop.xlane.xlu0 %8197
    %v8199 = vsel %vm152, %v7745, 0.0
    %8200 = vadd.xlane.f32.xlu0 %v8199
    %v8201 = vpop.xlane.xlu0 %8200
    %v8202 = vsel %vm152, %v7747, 0.0
    %8203 = vadd.xlane.f32.xlu0 %v8202
    %v8204 = vpop.xlane.xlu0 %8203
    %v8205 = vsel %vm152, %v7749, 0.0
    %8206 = vadd.xlane.f32.xlu0 %v8205
    %v8207 = vpop.xlane.xlu0 %8206
    %v8208 = vsel %vm152, %v7751, 0.0
    %8209 = vadd.xlane.f32.xlu0 %v8208
    %v8210 = vpop.xlane.xlu0 %8209
    %v8211 = vsel %vm152, %v7753, 0.0
    %8212 = vadd.xlane.f32.xlu0 %v8211
    %v8213 = vpop.xlane.xlu0 %8212
    %v8214 = vsel %vm152, %v7755, 0.0
    %8215 = vadd.xlane.f32.xlu0 %v8214
    %v8216 = vpop.xlane.xlu0 %8215
    %v8217 = vsel %vm152, %v7757, 0.0
    %8218 = vadd.xlane.f32.xlu0 %v8217
    %v8219 = vpop.xlane.xlu0 %8218
    %v8220 = vsel %vm152, %v7759, 0.0
    %8221 = vadd.xlane.f32.xlu0 %v8220
    %v8222 = vpop.xlane.xlu0 %8221
    %v8223 = vsel %vm152, %v7761, 0.0
    %8224 = vadd.xlane.f32.xlu0 %v8223
    %v8225 = vpop.xlane.xlu0 %8224
    %v8226 = vsel %vm152, %v7763, 0.0
    %8227 = vadd.xlane.f32.xlu0 %v8226
    %v8228 = vpop.xlane.xlu0 %8227
    %v8229 = vsel %vm152, %v7765, 0.0
    %8230 = vadd.xlane.f32.xlu0 %v8229
    %v8231 = vpop.xlane.xlu0 %8230
    %v8232 = vsel %vm152, %v7767, 0.0
    %8233 = vadd.xlane.f32.xlu0 %v8232
    %v8234 = vpop.xlane.xlu0 %8233
    %v8235 = vsel %vm152, %v7769, 0.0
    %8236 = vadd.xlane.f32.xlu0 %v8235
    %v8237 = vpop.xlane.xlu0 %8236
    %v8238 = vsel %vm152, %v7771, 0.0
    %8239 = vadd.xlane.f32.xlu0 %v8238
    %v8240 = vpop.xlane.xlu0 %8239
    %v8241 = vsel %vm152, %v7773, 0.0
    %8242 = vadd.xlane.f32.xlu0 %v8241
    %v8243 = vpop.xlane.xlu0 %8242
    %v8244 = vsel %vm152, %v7775, 0.0
    %8245 = vadd.xlane.f32.xlu0 %v8244
    %v8246 = vpop.xlane.xlu0 %8245
    %v8247 = vsel %vm152, %v7777, 0.0
    %8248 = vadd.xlane.f32.xlu0 %v8247
    %v8249 = vpop.xlane.xlu0 %8248
    %v8250 = vsel %vm152, %v7779, 0.0
    %8251 = vadd.xlane.f32.xlu0 %v8250
    %v8252 = vpop.xlane.xlu0 %8251
    %v8253 = vsel %vm152, %v7781, 0.0
    %8254 = vadd.xlane.f32.xlu0 %v8253
    %v8255 = vpop.xlane.xlu0 %8254
    %v8256 = vsel %vm152, %v7783, 0.0
    %8257 = vadd.xlane.f32.xlu0 %v8256
    %v8258 = vpop.xlane.xlu0 %8257
    %v8259 = vsel %vm152, %v7785, 0.0
    %8260 = vadd.xlane.f32.xlu0 %v8259
    %v8261 = vpop.xlane.xlu0 %8260
    %v8262 = vsel %vm152, %v7787, 0.0
    %8263 = vadd.xlane.f32.xlu0 %v8262
    %v8264 = vpop.xlane.xlu0 %8263
    %v8265 = vsel %vm152, %v7789, 0.0
    %8266 = vadd.xlane.f32.xlu0 %v8265
    %v8267 = vpop.xlane.xlu0 %8266
    %v8268 = vsel %vm152, %v7791, 0.0
    %8269 = vadd.xlane.f32.xlu0 %v8268
    %v8270 = vpop.xlane.xlu0 %8269
    %v8271 = vsel %vm152, %v7793, 0.0
    %8272 = vadd.xlane.f32.xlu0 %v8271
    %v8273 = vpop.xlane.xlu0 %8272
    %v8274 = vsel %vm152, %v7795, 0.0
    %8275 = vadd.xlane.f32.xlu0 %v8274
    %v8276 = vpop.xlane.xlu0 %8275
    %v8277 = vsel %vm152, %v7797, 0.0
    %8278 = vadd.xlane.f32.xlu0 %v8277
    %v8279 = vpop.xlane.xlu0 %8278
    %v8280 = vsel %vm152, %v7799, 0.0
    %8281 = vadd.xlane.f32.xlu0 %v8280
    %v8282 = vpop.xlane.xlu0 %8281
    %v8283 = vsel %vm152, %v7801, 0.0
    %8284 = vadd.xlane.f32.xlu0 %v8283
    %v8285 = vpop.xlane.xlu0 %8284
    %v8286 = vsel %vm152, %v7803, 0.0
    %8287 = vadd.xlane.f32.xlu0 %v8286
    %v8288 = vpop.xlane.xlu0 %8287
    %v8289 = vsel %vm152, %v7805, 0.0
    %8290 = vadd.xlane.f32.xlu0 %v8289
    %v8291 = vpop.xlane.xlu0 %8290
    %v8292 = vsel %vm152, %v7807, 0.0
    %8293 = vadd.xlane.f32.xlu0 %v8292
    %v8294 = vpop.xlane.xlu0 %8293
    %v8295 = vsel %vm152, %v7809, 0.0
    %8296 = vadd.xlane.f32.xlu0 %v8295
    %v8297 = vpop.xlane.xlu0 %8296
    %v8298 = vsel %vm152, %v7811, 0.0
    %8299 = vadd.xlane.f32.xlu0 %v8298
    %v8300 = vpop.xlane.xlu0 %8299
    %v8301 = vsel %vm152, %v7813, 0.0
    %8302 = vadd.xlane.f32.xlu0 %v8301
    %v8303 = vpop.xlane.xlu0 %8302
    %v8304 = vsel %vm152, %v7815, 0.0
    %8305 = vadd.xlane.f32.xlu0 %v8304
    %v8306 = vpop.xlane.xlu0 %8305
    %v8307 = vsel %vm152, %v7817, 0.0
    %8308 = vadd.xlane.f32.xlu0 %v8307
    %v8309 = vpop.xlane.xlu0 %8308
    %v8310 = vsel %vm152, %v7819, 0.0
    %8311 = vadd.xlane.f32.xlu0 %v8310
    %v8312 = vpop.xlane.xlu0 %8311
    %v8313 = vsel %vm152, %v7821, 0.0
    %8314 = vadd.xlane.f32.xlu0 %v8313
    %v8315 = vpop.xlane.xlu0 %8314
    %v8316 = vsel %vm152, %v7823, 0.0
    %8317 = vadd.xlane.f32.xlu0 %v8316
    %v8318 = vpop.xlane.xlu0 %8317
    %v8319 = vsel %vm152, %v7825, 0.0
    %8320 = vadd.xlane.f32.xlu0 %v8319
    %v8321 = vpop.xlane.xlu0 %8320
    %v8322 = vsel %vm152, %v7827, 0.0
    %8323 = vadd.xlane.f32.xlu0 %v8322
    %v8324 = vpop.xlane.xlu0 %8323
    %v8325 = vsel %vm152, %v7829, 0.0
    %8326 = vadd.xlane.f32.xlu0 %v8325
    %v8327 = vpop.xlane.xlu0 %8326
    %v8328 = vsel %vm152, %v7831, 0.0
    %8329 = vadd.xlane.f32.xlu0 %v8328
    %v8330 = vpop.xlane.xlu0 %8329
    %v8331 = vsel %vm152, %v7833, 0.0
    %8332 = vadd.xlane.f32.xlu0 %v8331
    %v8333 = vpop.xlane.xlu0 %8332
    %v8334 = vsel %vm152, %v7835, 0.0
    %8335 = vadd.xlane.f32.xlu0 %v8334
    %v8336 = vpop.xlane.xlu0 %8335
    %v8337 = vsel %vm152, %v7837, 0.0
    %8338 = vadd.xlane.f32.xlu0 %v8337
    %v8339 = vpop.xlane.xlu0 %8338
    %v8340 = vsel %vm152, %v7839, 0.0
    %8341 = vadd.xlane.f32.xlu0 %v8340
    %v8342 = vpop.xlane.xlu0 %8341
    %v8343 = vsel %vm152, %v7841, 0.0
    %8344 = vadd.xlane.f32.xlu0 %v8343
    %v8345 = vpop.xlane.xlu0 %8344
    %v8346 = vsel %vm152, %v7843, 0.0
    %8347 = vadd.xlane.f32.xlu0 %v8346
    %v8348 = vpop.xlane.xlu0 %8347
    %v8349 = vsel %vm152, %v7845, 0.0
    %8350 = vadd.xlane.f32.xlu0 %v8349
    %v8351 = vpop.xlane.xlu0 %8350
    %v8352 = vsel %vm152, %v7847, 0.0
    %8353 = vadd.xlane.f32.xlu0 %v8352
    %v8354 = vpop.xlane.xlu0 %8353
    %v8355 = vsel %vm152, %v7849, 0.0
    %8356 = vadd.xlane.f32.xlu0 %v8355
    %v8357 = vpop.xlane.xlu0 %8356
    %v8358 = vsel %vm152, %v7851, 0.0
    %8359 = vadd.xlane.f32.xlu0 %v8358
    %v8360 = vpop.xlane.xlu0 %8359
    %v8361 = vsel %vm152, %v7853, 0.0
    %8362 = vadd.xlane.f32.xlu0 %v8361
    %v8363 = vpop.xlane.xlu0 %8362
    %v8364 = vsel %vm152, %v7855, 0.0
    %8365 = vadd.xlane.f32.xlu0 %v8364
    %v8366 = vpop.xlane.xlu0 %8365
    %v8367 = vsel %vm152, %v7857, 0.0
    %8368 = vadd.xlane.f32.xlu0 %v8367
    %v8369 = vpop.xlane.xlu0 %8368
    %v8370 = vsel %vm152, %v7859, 0.0
    %8371 = vadd.xlane.f32.xlu0 %v8370
    %v8372 = vpop.xlane.xlu0 %8371
    %v8373 = vsel %vm152, %v7861, 0.0
    %8374 = vadd.xlane.f32.xlu0 %v8373
    %v8375 = vpop.xlane.xlu0 %8374
    %v8376 = vsel %vm152, %v7863, 0.0
    %8377 = vadd.xlane.f32.xlu0 %v8376
    %v8378 = vpop.xlane.xlu0 %8377
    %v8379 = vsel %vm152, %v7865, 0.0
    %8380 = vadd.xlane.f32.xlu0 %v8379
    %v8381 = vpop.xlane.xlu0 %8380
    %v8382 = vsel %vm152, %v7867, 0.0
    %8383 = vadd.xlane.f32.xlu0 %v8382
    %v8384 = vpop.xlane.xlu0 %8383
    %v8385 = vsel %vm152, %v7869, 0.0
    %8386 = vadd.xlane.f32.xlu0 %v8385
    %v8387 = vpop.xlane.xlu0 %8386
    %v8388 = vsel %vm152, %v7871, 0.0
    %8389 = vadd.xlane.f32.xlu0 %v8388
    %v8390 = vpop.xlane.xlu0 %8389
    %v8391 = vsel %vm152, %v7873, 0.0
    %8392 = vadd.xlane.f32.xlu0 %v8391
    %v8393 = vpop.xlane.xlu0 %8392
    %v8394 = vsel %vm152, %v7875, 0.0
    %8395 = vadd.xlane.f32.xlu0 %v8394
    %v8396 = vpop.xlane.xlu0 %8395
    %v8397 = vsel %vm152, %v7877, 0.0
    %8398 = vadd.xlane.f32.xlu0 %v8397
    %v8399 = vpop.xlane.xlu0 %8398
    %v8400 = vsel %vm152, %v7879, 0.0
    %8401 = vadd.xlane.f32.xlu0 %v8400
    %v8402 = vpop.xlane.xlu0 %8401
    %v8403 = vsel %vm152, %v7881, 0.0
    %8404 = vadd.xlane.f32.xlu0 %v8403
    %v8405 = vpop.xlane.xlu0 %8404
    %v8406 = vsel %vm152, %v7883, 0.0
    %8407 = vadd.xlane.f32.xlu0 %v8406
    %v8408 = vpop.xlane.xlu0 %8407
    %v8409 = vsel %vm152, %v7885, 0.0
    %8410 = vadd.xlane.f32.xlu0 %v8409
    %v8411 = vpop.xlane.xlu0 %8410
    %v8412 = vsel %vm152, %v7887, 0.0
    %8413 = vadd.xlane.f32.xlu0 %v8412
    %v8414 = vpop.xlane.xlu0 %8413
    %v8415 = vsel %vm152, %v7889, 0.0
    %8416 = vadd.xlane.f32.xlu0 %v8415
    %v8417 = vpop.xlane.xlu0 %8416
    %v8418 = vsel %vm152, %v7891, 0.0
    %8419 = vadd.xlane.f32.xlu0 %v8418
    %v8420 = vpop.xlane.xlu0 %8419
    %v8421 = vsel %vm152, %v7893, 0.0
    %8422 = vadd.xlane.f32.xlu0 %v8421
    %v8423 = vpop.xlane.xlu0 %8422
    %v8424 = vsel %vm152, %v7895, 0.0
    %8425 = vadd.xlane.f32.xlu0 %v8424
    %v8426 = vpop.xlane.xlu0 %8425
    %v8427 = vsel %vm152, %v7897, 0.0
    %8428 = vadd.xlane.f32.xlu0 %v8427
    %v8429 = vpop.xlane.xlu0 %8428
    %v8430 = vsel %vm152, %v7899, 0.0
    %8431 = vadd.xlane.f32.xlu0 %v8430
    %v8432 = vpop.xlane.xlu0 %8431
    %v8433 = vsel %vm152, %v7901, 0.0
    %8434 = vadd.xlane.f32.xlu0 %v8433
    %v8435 = vpop.xlane.xlu0 %8434
    %v8436 = vsel %vm152, %v7903, 0.0
    %8437 = vadd.xlane.f32.xlu0 %v8436
    %v8438 = vpop.xlane.xlu0 %8437
    %v8439 = vsel %vm152, %v7905, 0.0
    %8440 = vadd.xlane.f32.xlu0 %v8439
    %v8441 = vpop.xlane.xlu0 %8440
    %v8442 = vsel %vm152, %v7907, 0.0
    %8443 = vadd.xlane.f32.xlu0 %v8442
    %v8444 = vpop.xlane.xlu0 %8443
    %v8445 = vsel %vm152, %v7909, 0.0
    %8446 = vadd.xlane.f32.xlu0 %v8445
    %v8447 = vpop.xlane.xlu0 %8446
    %v8448 = vsel %vm152, %v7911, 0.0
    %8449 = vadd.xlane.f32.xlu0 %v8448
    %v8450 = vpop.xlane.xlu0 %8449
    %v8451 = vsel %vm152, %v7913, 0.0
    %8452 = vadd.xlane.f32.xlu0 %v8451
    %v8453 = vpop.xlane.xlu0 %8452
    %v8454 = vsel %vm152, %v7915, 0.0
    %8455 = vadd.xlane.f32.xlu0 %v8454
    %v8456 = vpop.xlane.xlu0 %8455
    %v8457 = vsel %vm152, %v7917, 0.0
    %8458 = vadd.xlane.f32.xlu0 %v8457
    %v8459 = vpop.xlane.xlu0 %8458
    %v8460 = vsel %vm152, %v7919, 0.0
    %8461 = vadd.xlane.f32.xlu0 %v8460
    %v8462 = vpop.xlane.xlu0 %8461
    %v8463 = vsel %vm152, %v7921, 0.0
    %8464 = vadd.xlane.f32.xlu0 %v8463
    %v8465 = vpop.xlane.xlu0 %8464
    %v8466 = vsel %vm152, %v7923, 0.0
    %8467 = vadd.xlane.f32.xlu0 %v8466
    %v8468 = vpop.xlane.xlu0 %8467
    %v8469 = vsel %vm152, %v7925, 0.0
    %8470 = vadd.xlane.f32.xlu0 %v8469
    %v8471 = vpop.xlane.xlu0 %8470
    %v8472 = vsel %vm152, %v7927, 0.0
    %8473 = vadd.xlane.f32.xlu0 %v8472
    %v8474 = vpop.xlane.xlu0 %8473
    %v8475 = vsel %vm152, %v7929, 0.0
    %8476 = vadd.xlane.f32.xlu0 %v8475
    %v8477 = vpop.xlane.xlu0 %8476
    %v8478 = vsel %vm152, %v7931, 0.0
    %8479 = vadd.xlane.f32.xlu0 %v8478
    %v8480 = vpop.xlane.xlu0 %8479
    %v8481 = vsel %vm152, %v7933, 0.0
    %8482 = vadd.xlane.f32.xlu0 %v8481
    %v8483 = vpop.xlane.xlu0 %8482
    %v8484 = vsel %vm152, %v7935, 0.0
    %8485 = vadd.xlane.f32.xlu0 %v8484
    %v8486 = vpop.xlane.xlu0 %8485
    %v8487 = vsel %vm152, %v7937, 0.0
    %8488 = vadd.xlane.f32.xlu0 %v8487
    %v8489 = vpop.xlane.xlu0 %8488
    %v8490 = vsel %vm152, %v7939, 0.0
    %8491 = vadd.xlane.f32.xlu0 %v8490
    %v8492 = vpop.xlane.xlu0 %8491
    %v8493 = vsel %vm152, %v7941, 0.0
    %8494 = vadd.xlane.f32.xlu0 %v8493
    %v8495 = vpop.xlane.xlu0 %8494
    %v8496 = vsel %vm152, %v7943, 0.0
    %8497 = vadd.xlane.f32.xlu0 %v8496
    %v8498 = vpop.xlane.xlu0 %8497
    %v8499 = vsel %vm152, %v7945, 0.0
    %8500 = vadd.xlane.f32.xlu0 %v8499
    %v8501 = vpop.xlane.xlu0 %8500
    %v8502 = vsel %vm152, %v7947, 0.0
    %8503 = vadd.xlane.f32.xlu0 %v8502
    %v8504 = vpop.xlane.xlu0 %8503
    %v8505 = vsel %vm152, %v7949, 0.0
    %8506 = vadd.xlane.f32.xlu0 %v8505
    %v8507 = vpop.xlane.xlu0 %8506
    %v8508 = vsel %vm152, %v7951, 0.0
    %8509 = vadd.xlane.f32.xlu0 %v8508
    %v8510 = vpop.xlane.xlu0 %8509
    %v8511 = vsel %vm152, %v7953, 0.0
    %8512 = vadd.xlane.f32.xlu0 %v8511
    %v8513 = vpop.xlane.xlu0 %8512
    %v8514 = vsel %vm152, %v7955, 0.0
    %8515 = vadd.xlane.f32.xlu0 %v8514
    %v8516 = vpop.xlane.xlu0 %8515
    %v8517 = vsel %vm152, %v7957, 0.0
    %8518 = vadd.xlane.f32.xlu0 %v8517
    %v8519 = vpop.xlane.xlu0 %8518
    %v8520 = vsel %vm152, %v7959, 0.0
    %8521 = vadd.xlane.f32.xlu0 %v8520
    %v8522 = vpop.xlane.xlu0 %8521
    %v8523 = vsel %vm152, %v7961, 0.0
    %8524 = vadd.xlane.f32.xlu0 %v8523
    %v8525 = vpop.xlane.xlu0 %8524
    %v8526 = vsel %vm152, %v7963, 0.0
    %8527 = vadd.xlane.f32.xlu0 %v8526
    %v8528 = vpop.xlane.xlu0 %8527
    %v8529 = vsel %vm152, %v7965, 0.0
    %8530 = vadd.xlane.f32.xlu0 %v8529
    %v8531 = vpop.xlane.xlu0 %8530
    %v8532 = vsel %vm152, %v7967, 0.0
    %8533 = vadd.xlane.f32.xlu0 %v8532
    %v8534 = vpop.xlane.xlu0 %8533
    %v8535 = vsel %vm152, %v7969, 0.0
    %8536 = vadd.xlane.f32.xlu0 %v8535
    %v8537 = vpop.xlane.xlu0 %8536
    %v8538 = vsel %vm152, %v7971, 0.0
    %8539 = vadd.xlane.f32.xlu0 %v8538
    %v8540 = vpop.xlane.xlu0 %8539
    %v8541 = vsel %vm152, %v7973, 0.0
    %8542 = vadd.xlane.f32.xlu0 %v8541
    %v8543 = vpop.xlane.xlu0 %8542
    %v8544 = vsel %vm152, %v7975, 0.0
    %8545 = vadd.xlane.f32.xlu0 %v8544
    %v8546 = vpop.xlane.xlu0 %8545
    %v8547 = vsel %vm152, %v7977, 0.0
    %8548 = vadd.xlane.f32.xlu0 %v8547
    %v8549 = vpop.xlane.xlu0 %8548
    %v8550 = vsel %vm152, %v7979, 0.0
    %8551 = vadd.xlane.f32.xlu0 %v8550
    %v8552 = vpop.xlane.xlu0 %8551
    %v8553 = vsel %vm152, %v7981, 0.0
    %8554 = vadd.xlane.f32.xlu0 %v8553
    %v8555 = vpop.xlane.xlu0 %8554
    %v8556 = vsel %vm152, %v7983, 0.0
    %8557 = vadd.xlane.f32.xlu0 %v8556
    %v8558 = vpop.xlane.xlu0 %8557
    %v8559 = vsel %vm152, %v7985, 0.0
    %8560 = vadd.xlane.f32.xlu0 %v8559
    %v8561 = vpop.xlane.xlu0 %8560
    %v8562 = vadd.f32 %v8132, %v1996
    %v8563 = vadd.f32 %v8135, %v2002
    %v8564 = vadd.f32 %v8138, %v2008
    %v8565 = vadd.f32 %v8141, %v2015
    %v8566 = vadd.f32 %v8144, %v2021
    %v8567 = vadd.f32 %v8147, %v2027
    %v8568 = vadd.f32 %v8150, %v2034
    %v8569 = vadd.f32 %v8153, %v2040
    %v8570 = vadd.f32 %v8156, %v2046
    %v8571 = vadd.f32 %v8159, %v2053
    %v8572 = vadd.f32 %v8162, %v2059
    %v8573 = vadd.f32 %v8165, %v2065
    %v8574 = vadd.f32 %v8168, %v2072
    %v8575 = vadd.f32 %v8171, %v2078
    %v8576 = vadd.f32 %v8174, %v2084
    %v8577 = vadd.f32 %v8177, %v2091
    %v8578 = vadd.f32 %v8180, %v2097
    %v8579 = vadd.f32 %v8183, %v2103
    %v8580 = vadd.f32 %v8186, %v2110
    %v8581 = vadd.f32 %v8189, %v2116
    %v8582 = vadd.f32 %v8192, %v2122
    %v8583 = vadd.f32 %v8195, %v2129
    %v8584 = vadd.f32 %v8198, %v2135
    %v8585 = vadd.f32 %v8201, %v2141
    %v8586 = vadd.f32 %v8204, %v2148
    %v8587 = vadd.f32 %v8207, %v2154
    %v8588 = vadd.f32 %v8210, %v2160
    %v8589 = vadd.f32 %v8213, %v2167
    %v8590 = vadd.f32 %v8216, %v2173
    %v8591 = vadd.f32 %v8219, %v2179
    %v8592 = vadd.f32 %v8222, %v2186
    %v8593 = vadd.f32 %v8225, %v2192
    %v8594 = vadd.f32 %v8228, %v2198
    %v8595 = vadd.f32 %v8231, %v2205
    %v8596 = vadd.f32 %v8234, %v2211
    %v8597 = vadd.f32 %v8237, %v2217
    %v8598 = vadd.f32 %v8240, %v2224
    %v8599 = vadd.f32 %v8243, %v2230
    %v8600 = vadd.f32 %v8246, %v2236
    %v8601 = vadd.f32 %v8249, %v2243
    %v8602 = vadd.f32 %v8252, %v2249
    %v8603 = vadd.f32 %v8255, %v2255
    %v8604 = vadd.f32 %v8258, %v2262
    %v8605 = vadd.f32 %v8261, %v2268
    %v8606 = vadd.f32 %v8264, %v2274
    %v8607 = vadd.f32 %v8267, %v2281
    %v8608 = vadd.f32 %v8270, %v2287
    %v8609 = vadd.f32 %v8273, %v2293
    %v8610 = vadd.f32 %v8276, %v2300
    %v8611 = vadd.f32 %v8279, %v2306
    %v8612 = vadd.f32 %v8282, %v2312
    %v8613 = vadd.f32 %v8285, %v2319
    %v8614 = vadd.f32 %v8288, %v2325
    %v8615 = vadd.f32 %v8291, %v2331
    %v8616 = vadd.f32 %v8294, %v2338
    %v8617 = vadd.f32 %v8297, %v2344
    %v8618 = vadd.f32 %v8300, %v2350
    %v8619 = vadd.f32 %v8303, %v2357
    %v8620 = vadd.f32 %v8306, %v2363
    %v8621 = vadd.f32 %v8309, %v2369
    %v8622 = vadd.f32 %v8312, %v2376
    %v8623 = vadd.f32 %v8315, %v2382
    %v8624 = vadd.f32 %v8318, %v2388
    %v8625 = vadd.f32 %v8321, %v2395
    %v8626 = vadd.f32 %v8324, %v2401
    %v8627 = vadd.f32 %v8327, %v2407
    %v8628 = vadd.f32 %v8330, %v2414
    %v8629 = vadd.f32 %v8333, %v2420
    %v8630 = vadd.f32 %v8336, %v2426
    %v8631 = vadd.f32 %v8339, %v2433
    %v8632 = vadd.f32 %v8342, %v2439
    %v8633 = vadd.f32 %v8345, %v2445
    %v8634 = vadd.f32 %v8348, %v1996
    %v8635 = vadd.f32 %v8351, %v2002
    %v8636 = vadd.f32 %v8354, %v2008
    %v8637 = vadd.f32 %v8357, %v2015
    %v8638 = vadd.f32 %v8360, %v2021
    %v8639 = vadd.f32 %v8363, %v2027
    %v8640 = vadd.f32 %v8366, %v2034
    %v8641 = vadd.f32 %v8369, %v2040
    %v8642 = vadd.f32 %v8372, %v2046
    %v8643 = vadd.f32 %v8375, %v2053
    %v8644 = vadd.f32 %v8378, %v2059
    %v8645 = vadd.f32 %v8381, %v2065
    %v8646 = vadd.f32 %v8384, %v2072
    %v8647 = vadd.f32 %v8387, %v2078
    %v8648 = vadd.f32 %v8390, %v2084
    %v8649 = vadd.f32 %v8393, %v2091
    %v8650 = vadd.f32 %v8396, %v2097
    %v8651 = vadd.f32 %v8399, %v2103
    %v8652 = vadd.f32 %v8402, %v2110
    %v8653 = vadd.f32 %v8405, %v2116
    %v8654 = vadd.f32 %v8408, %v2122
    %v8655 = vadd.f32 %v8411, %v2129
    %v8656 = vadd.f32 %v8414, %v2135
    %v8657 = vadd.f32 %v8417, %v2141
    %v8658 = vadd.f32 %v8420, %v2148
    %v8659 = vadd.f32 %v8423, %v2154
    %v8660 = vadd.f32 %v8426, %v2160
    %v8661 = vadd.f32 %v8429, %v2167
    %v8662 = vadd.f32 %v8432, %v2173
    %v8663 = vadd.f32 %v8435, %v2179
    %v8664 = vadd.f32 %v8438, %v2186
    %v8665 = vadd.f32 %v8441, %v2192
    %v8666 = vadd.f32 %v8444, %v2198
    %v8667 = vadd.f32 %v8447, %v2205
    %v8668 = vadd.f32 %v8450, %v2211
    %v8669 = vadd.f32 %v8453, %v2217
    %v8670 = vadd.f32 %v8456, %v2224
    %v8671 = vadd.f32 %v8459, %v2230
    %v8672 = vadd.f32 %v8462, %v2236
    %v8673 = vadd.f32 %v8465, %v2243
    %v8674 = vadd.f32 %v8468, %v2249
    %v8675 = vadd.f32 %v8471, %v2255
    %v8676 = vadd.f32 %v8474, %v2262
    %v8677 = vadd.f32 %v8477, %v2268
    %v8678 = vadd.f32 %v8480, %v2274
    %v8679 = vadd.f32 %v8483, %v2281
    %v8680 = vadd.f32 %v8486, %v2287
    %v8681 = vadd.f32 %v8489, %v2293
    %v8682 = vadd.f32 %v8492, %v2300
    %v8683 = vadd.f32 %v8495, %v2306
    %v8684 = vadd.f32 %v8498, %v2312
    %v8685 = vadd.f32 %v8501, %v2319
    %v8686 = vadd.f32 %v8504, %v2325
    %v8687 = vadd.f32 %v8507, %v2331
    %v8688 = vadd.f32 %v8510, %v2338
    %v8689 = vadd.f32 %v8513, %v2344
    %v8690 = vadd.f32 %v8516, %v2350
    %v8691 = vadd.f32 %v8519, %v2357
    %v8692 = vadd.f32 %v8522, %v2363
    %v8693 = vadd.f32 %v8525, %v2369
    %v8694 = vadd.f32 %v8528, %v2376
    %v8695 = vadd.f32 %v8531, %v2382
    %v8696 = vadd.f32 %v8534, %v2388
    %v8697 = vadd.f32 %v8537, %v2395
    %v8698 = vadd.f32 %v8540, %v2401
    %v8699 = vadd.f32 %v8543, %v2407
    %v8700 = vadd.f32 %v8546, %v2414
    %v8701 = vadd.f32 %v8549, %v2420
    %v8702 = vadd.f32 %v8552, %v2426
    %v8703 = vadd.f32 %v8555, %v2433
    %v8704 = vadd.f32 %v8558, %v2439
    %v8705 = vadd.f32 %v8561, %v2445
    %8850 = vset.pattern.permute.xlu0 0
    %8851 = vperm.xlu0 %8850, %v8562
    %v8852 = vpop.permute.xlu0 %8851
    %8853 = vset.pattern.permute.xlu0 0
    %8854 = vperm.xlu0 %8853, %v8563
    %v8855 = vpop.permute.xlu0 %8854
    %8856 = vset.pattern.permute.xlu0 0
    %8857 = vperm.xlu0 %8856, %v8564
    %v8858 = vpop.permute.xlu0 %8857
    %8859 = vset.pattern.permute.xlu0 0
    %8860 = vperm.xlu0 %8859, %v8565
    %v8861 = vpop.permute.xlu0 %8860
    %8862 = vset.pattern.permute.xlu0 0
    %8863 = vperm.xlu0 %8862, %v8566
    %v8864 = vpop.permute.xlu0 %8863
    %8865 = vset.pattern.permute.xlu0 0
    %8866 = vperm.xlu0 %8865, %v8567
    %v8867 = vpop.permute.xlu0 %8866
    %8868 = vset.pattern.permute.xlu0 0
    %8869 = vperm.xlu0 %8868, %v8568
    %v8870 = vpop.permute.xlu0 %8869
    %8871 = vset.pattern.permute.xlu0 0
    %8872 = vperm.xlu0 %8871, %v8569
    %v8873 = vpop.permute.xlu0 %8872
    %8874 = vset.pattern.permute.xlu0 0
    %8875 = vperm.xlu0 %8874, %v8570
    %v8876 = vpop.permute.xlu0 %8875
    %8877 = vset.pattern.permute.xlu0 0
    %8878 = vperm.xlu0 %8877, %v8571
    %v8879 = vpop.permute.xlu0 %8878
    %8880 = vset.pattern.permute.xlu0 0
    %8881 = vperm.xlu0 %8880, %v8572
    %v8882 = vpop.permute.xlu0 %8881
    %8883 = vset.pattern.permute.xlu0 0
    %8884 = vperm.xlu0 %8883, %v8573
    %v8885 = vpop.permute.xlu0 %8884
    %8886 = vset.pattern.permute.xlu0 0
    %8887 = vperm.xlu0 %8886, %v8574
    %v8888 = vpop.permute.xlu0 %8887
    %8889 = vset.pattern.permute.xlu0 0
    %8890 = vperm.xlu0 %8889, %v8575
    %v8891 = vpop.permute.xlu0 %8890
    %8892 = vset.pattern.permute.xlu0 0
    %8893 = vperm.xlu0 %8892, %v8576
    %v8894 = vpop.permute.xlu0 %8893
    %8895 = vset.pattern.permute.xlu0 0
    %8896 = vperm.xlu0 %8895, %v8577
    %v8897 = vpop.permute.xlu0 %8896
    %8898 = vset.pattern.permute.xlu0 0
    %8899 = vperm.xlu0 %8898, %v8578
    %v8900 = vpop.permute.xlu0 %8899
    %8901 = vset.pattern.permute.xlu0 0
    %8902 = vperm.xlu0 %8901, %v8579
    %v8903 = vpop.permute.xlu0 %8902
    %8904 = vset.pattern.permute.xlu0 0
    %8905 = vperm.xlu0 %8904, %v8580
    %v8906 = vpop.permute.xlu0 %8905
    %8907 = vset.pattern.permute.xlu0 0
    %8908 = vperm.xlu0 %8907, %v8581
    %v8909 = vpop.permute.xlu0 %8908
    %8910 = vset.pattern.permute.xlu0 0
    %8911 = vperm.xlu0 %8910, %v8582
    %v8912 = vpop.permute.xlu0 %8911
    %8913 = vset.pattern.permute.xlu0 0
    %8914 = vperm.xlu0 %8913, %v8583
    %v8915 = vpop.permute.xlu0 %8914
    %8916 = vset.pattern.permute.xlu0 0
    %8917 = vperm.xlu0 %8916, %v8584
    %v8918 = vpop.permute.xlu0 %8917
    %8919 = vset.pattern.permute.xlu0 0
    %8920 = vperm.xlu0 %8919, %v8585
    %v8921 = vpop.permute.xlu0 %8920
    %8922 = vset.pattern.permute.xlu0 0
    %8923 = vperm.xlu0 %8922, %v8586
    %v8924 = vpop.permute.xlu0 %8923
    %8925 = vset.pattern.permute.xlu0 0
    %8926 = vperm.xlu0 %8925, %v8587
    %v8927 = vpop.permute.xlu0 %8926
    %8928 = vset.pattern.permute.xlu0 0
    %8929 = vperm.xlu0 %8928, %v8588
    %v8930 = vpop.permute.xlu0 %8929
    %8931 = vset.pattern.permute.xlu0 0
    %8932 = vperm.xlu0 %8931, %v8589
    %v8933 = vpop.permute.xlu0 %8932
    %8934 = vset.pattern.permute.xlu0 0
    %8935 = vperm.xlu0 %8934, %v8590
    %v8936 = vpop.permute.xlu0 %8935
    %8937 = vset.pattern.permute.xlu0 0
    %8938 = vperm.xlu0 %8937, %v8591
    %v8939 = vpop.permute.xlu0 %8938
    %8940 = vset.pattern.permute.xlu0 0
    %8941 = vperm.xlu0 %8940, %v8592
    %v8942 = vpop.permute.xlu0 %8941
    %8943 = vset.pattern.permute.xlu0 0
    %8944 = vperm.xlu0 %8943, %v8593
    %v8945 = vpop.permute.xlu0 %8944
    %8946 = vset.pattern.permute.xlu0 0
    %8947 = vperm.xlu0 %8946, %v8594
    %v8948 = vpop.permute.xlu0 %8947
    %8949 = vset.pattern.permute.xlu0 0
    %8950 = vperm.xlu0 %8949, %v8595
    %v8951 = vpop.permute.xlu0 %8950
    %8952 = vset.pattern.permute.xlu0 0
    %8953 = vperm.xlu0 %8952, %v8596
    %v8954 = vpop.permute.xlu0 %8953
    %8955 = vset.pattern.permute.xlu0 0
    %8956 = vperm.xlu0 %8955, %v8597
    %v8957 = vpop.permute.xlu0 %8956
    %8958 = vset.pattern.permute.xlu0 0
    %8959 = vperm.xlu0 %8958, %v8598
    %v8960 = vpop.permute.xlu0 %8959
    %8961 = vset.pattern.permute.xlu0 0
    %8962 = vperm.xlu0 %8961, %v8599
    %v8963 = vpop.permute.xlu0 %8962
    %8964 = vset.pattern.permute.xlu0 0
    %8965 = vperm.xlu0 %8964, %v8600
    %v8966 = vpop.permute.xlu0 %8965
    %8967 = vset.pattern.permute.xlu0 0
    %8968 = vperm.xlu0 %8967, %v8601
    %v8969 = vpop.permute.xlu0 %8968
    %8970 = vset.pattern.permute.xlu0 0
    %8971 = vperm.xlu0 %8970, %v8602
    %v8972 = vpop.permute.xlu0 %8971
    %8973 = vset.pattern.permute.xlu0 0
    %8974 = vperm.xlu0 %8973, %v8603
    %v8975 = vpop.permute.xlu0 %8974
    %8976 = vset.pattern.permute.xlu0 0
    %8977 = vperm.xlu0 %8976, %v8604
    %v8978 = vpop.permute.xlu0 %8977
    %8979 = vset.pattern.permute.xlu0 0
    %8980 = vperm.xlu0 %8979, %v8605
    %v8981 = vpop.permute.xlu0 %8980
    %8982 = vset.pattern.permute.xlu0 0
    %8983 = vperm.xlu0 %8982, %v8606
    %v8984 = vpop.permute.xlu0 %8983
    %8985 = vset.pattern.permute.xlu0 0
    %8986 = vperm.xlu0 %8985, %v8607
    %v8987 = vpop.permute.xlu0 %8986
    %8988 = vset.pattern.permute.xlu0 0
    %8989 = vperm.xlu0 %8988, %v8608
    %v8990 = vpop.permute.xlu0 %8989
    %8991 = vset.pattern.permute.xlu0 0
    %8992 = vperm.xlu0 %8991, %v8609
    %v8993 = vpop.permute.xlu0 %8992
    %8994 = vset.pattern.permute.xlu0 0
    %8995 = vperm.xlu0 %8994, %v8610
    %v8996 = vpop.permute.xlu0 %8995
    %8997 = vset.pattern.permute.xlu0 0
    %8998 = vperm.xlu0 %8997, %v8611
    %v8999 = vpop.permute.xlu0 %8998
    %9000 = vset.pattern.permute.xlu0 0
    %9001 = vperm.xlu0 %9000, %v8612
    %v9002 = vpop.permute.xlu0 %9001
    %9003 = vset.pattern.permute.xlu0 0
    %9004 = vperm.xlu0 %9003, %v8613
    %v9005 = vpop.permute.xlu0 %9004
    %9006 = vset.pattern.permute.xlu0 0
    %9007 = vperm.xlu0 %9006, %v8614
    %v9008 = vpop.permute.xlu0 %9007
    %9009 = vset.pattern.permute.xlu0 0
    %9010 = vperm.xlu0 %9009, %v8615
    %v9011 = vpop.permute.xlu0 %9010
    %9012 = vset.pattern.permute.xlu0 0
    %9013 = vperm.xlu0 %9012, %v8616
    %v9014 = vpop.permute.xlu0 %9013
    %9015 = vset.pattern.permute.xlu0 0
    %9016 = vperm.xlu0 %9015, %v8617
    %v9017 = vpop.permute.xlu0 %9016
    %9018 = vset.pattern.permute.xlu0 0
    %9019 = vperm.xlu0 %9018, %v8618
    %v9020 = vpop.permute.xlu0 %9019
    %9021 = vset.pattern.permute.xlu0 0
    %9022 = vperm.xlu0 %9021, %v8619
    %v9023 = vpop.permute.xlu0 %9022
    %9024 = vset.pattern.permute.xlu0 0
    %9025 = vperm.xlu0 %9024, %v8620
    %v9026 = vpop.permute.xlu0 %9025
    %9027 = vset.pattern.permute.xlu0 0
    %9028 = vperm.xlu0 %9027, %v8621
    %v9029 = vpop.permute.xlu0 %9028
    %9030 = vset.pattern.permute.xlu0 0
    %9031 = vperm.xlu0 %9030, %v8622
    %v9032 = vpop.permute.xlu0 %9031
    %9033 = vset.pattern.permute.xlu0 0
    %9034 = vperm.xlu0 %9033, %v8623
    %v9035 = vpop.permute.xlu0 %9034
    %9036 = vset.pattern.permute.xlu0 0
    %9037 = vperm.xlu0 %9036, %v8624
    %v9038 = vpop.permute.xlu0 %9037
    %9039 = vset.pattern.permute.xlu0 0
    %9040 = vperm.xlu0 %9039, %v8625
    %v9041 = vpop.permute.xlu0 %9040
    %9042 = vset.pattern.permute.xlu0 0
    %9043 = vperm.xlu0 %9042, %v8626
    %v9044 = vpop.permute.xlu0 %9043
    %9045 = vset.pattern.permute.xlu0 0
    %9046 = vperm.xlu0 %9045, %v8627
    %v9047 = vpop.permute.xlu0 %9046
    %9048 = vset.pattern.permute.xlu0 0
    %9049 = vperm.xlu0 %9048, %v8628
    %v9050 = vpop.permute.xlu0 %9049
    %9051 = vset.pattern.permute.xlu0 0
    %9052 = vperm.xlu0 %9051, %v8629
    %v9053 = vpop.permute.xlu0 %9052
    %9054 = vset.pattern.permute.xlu0 0
    %9055 = vperm.xlu0 %9054, %v8630
    %v9056 = vpop.permute.xlu0 %9055
    %9057 = vset.pattern.permute.xlu0 0
    %9058 = vperm.xlu0 %9057, %v8631
    %v9059 = vpop.permute.xlu0 %9058
    %9060 = vset.pattern.permute.xlu0 0
    %9061 = vperm.xlu0 %9060, %v8632
    %v9062 = vpop.permute.xlu0 %9061
    %9063 = vset.pattern.permute.xlu0 0
    %9064 = vperm.xlu0 %9063, %v8633
    %v9065 = vpop.permute.xlu0 %9064
    %9066 = vset.pattern.permute.xlu0 0
    %9067 = vperm.xlu0 %9066, %v8634
    %v9068 = vpop.permute.xlu0 %9067
    %9069 = vset.pattern.permute.xlu0 0
    %9070 = vperm.xlu0 %9069, %v8635
    %v9071 = vpop.permute.xlu0 %9070
    %9072 = vset.pattern.permute.xlu0 0
    %9073 = vperm.xlu0 %9072, %v8636
    %v9074 = vpop.permute.xlu0 %9073
    %9075 = vset.pattern.permute.xlu0 0
    %9076 = vperm.xlu0 %9075, %v8637
    %v9077 = vpop.permute.xlu0 %9076
    %9078 = vset.pattern.permute.xlu0 0
    %9079 = vperm.xlu0 %9078, %v8638
    %v9080 = vpop.permute.xlu0 %9079
    %9081 = vset.pattern.permute.xlu0 0
    %9082 = vperm.xlu0 %9081, %v8639
    %v9083 = vpop.permute.xlu0 %9082
    %9084 = vset.pattern.permute.xlu0 0
    %9085 = vperm.xlu0 %9084, %v8640
    %v9086 = vpop.permute.xlu0 %9085
    %9087 = vset.pattern.permute.xlu0 0
    %9088 = vperm.xlu0 %9087, %v8641
    %v9089 = vpop.permute.xlu0 %9088
    %9090 = vset.pattern.permute.xlu0 0
    %9091 = vperm.xlu0 %9090, %v8642
    %v9092 = vpop.permute.xlu0 %9091
    %9093 = vset.pattern.permute.xlu0 0
    %9094 = vperm.xlu0 %9093, %v8643
    %v9095 = vpop.permute.xlu0 %9094
    %9096 = vset.pattern.permute.xlu0 0
    %9097 = vperm.xlu0 %9096, %v8644
    %v9098 = vpop.permute.xlu0 %9097
    %9099 = vset.pattern.permute.xlu0 0
    %9100 = vperm.xlu0 %9099, %v8645
    %v9101 = vpop.permute.xlu0 %9100
    %9102 = vset.pattern.permute.xlu0 0
    %9103 = vperm.xlu0 %9102, %v8646
    %v9104 = vpop.permute.xlu0 %9103
    %9105 = vset.pattern.permute.xlu0 0
    %9106 = vperm.xlu0 %9105, %v8647
    %v9107 = vpop.permute.xlu0 %9106
    %9108 = vset.pattern.permute.xlu0 0
    %9109 = vperm.xlu0 %9108, %v8648
    %v9110 = vpop.permute.xlu0 %9109
    %9111 = vset.pattern.permute.xlu0 0
    %9112 = vperm.xlu0 %9111, %v8649
    %v9113 = vpop.permute.xlu0 %9112
    %9114 = vset.pattern.permute.xlu0 0
    %9115 = vperm.xlu0 %9114, %v8650
    %v9116 = vpop.permute.xlu0 %9115
    %9117 = vset.pattern.permute.xlu0 0
    %9118 = vperm.xlu0 %9117, %v8651
    %v9119 = vpop.permute.xlu0 %9118
    %9120 = vset.pattern.permute.xlu0 0
    %9121 = vperm.xlu0 %9120, %v8652
    %v9122 = vpop.permute.xlu0 %9121
    %9123 = vset.pattern.permute.xlu0 0
    %9124 = vperm.xlu0 %9123, %v8653
    %v9125 = vpop.permute.xlu0 %9124
    %9126 = vset.pattern.permute.xlu0 0
    %9127 = vperm.xlu0 %9126, %v8654
    %v9128 = vpop.permute.xlu0 %9127
    %9129 = vset.pattern.permute.xlu0 0
    %9130 = vperm.xlu0 %9129, %v8655
    %v9131 = vpop.permute.xlu0 %9130
    %9132 = vset.pattern.permute.xlu0 0
    %9133 = vperm.xlu0 %9132, %v8656
    %v9134 = vpop.permute.xlu0 %9133
    %9135 = vset.pattern.permute.xlu0 0
    %9136 = vperm.xlu0 %9135, %v8657
    %v9137 = vpop.permute.xlu0 %9136
    %9138 = vset.pattern.permute.xlu0 0
    %9139 = vperm.xlu0 %9138, %v8658
    %v9140 = vpop.permute.xlu0 %9139
    %9141 = vset.pattern.permute.xlu0 0
    %9142 = vperm.xlu0 %9141, %v8659
    %v9143 = vpop.permute.xlu0 %9142
    %9144 = vset.pattern.permute.xlu0 0
    %9145 = vperm.xlu0 %9144, %v8660
    %v9146 = vpop.permute.xlu0 %9145
    %9147 = vset.pattern.permute.xlu0 0
    %9148 = vperm.xlu0 %9147, %v8661
    %v9149 = vpop.permute.xlu0 %9148
    %9150 = vset.pattern.permute.xlu0 0
    %9151 = vperm.xlu0 %9150, %v8662
    %v9152 = vpop.permute.xlu0 %9151
    %9153 = vset.pattern.permute.xlu0 0
    %9154 = vperm.xlu0 %9153, %v8663
    %v9155 = vpop.permute.xlu0 %9154
    %9156 = vset.pattern.permute.xlu0 0
    %9157 = vperm.xlu0 %9156, %v8664
    %v9158 = vpop.permute.xlu0 %9157
    %9159 = vset.pattern.permute.xlu0 0
    %9160 = vperm.xlu0 %9159, %v8665
    %v9161 = vpop.permute.xlu0 %9160
    %9162 = vset.pattern.permute.xlu0 0
    %9163 = vperm.xlu0 %9162, %v8666
    %v9164 = vpop.permute.xlu0 %9163
    %9165 = vset.pattern.permute.xlu0 0
    %9166 = vperm.xlu0 %9165, %v8667
    %v9167 = vpop.permute.xlu0 %9166
    %9168 = vset.pattern.permute.xlu0 0
    %9169 = vperm.xlu0 %9168, %v8668
    %v9170 = vpop.permute.xlu0 %9169
    %9171 = vset.pattern.permute.xlu0 0
    %9172 = vperm.xlu0 %9171, %v8669
    %v9173 = vpop.permute.xlu0 %9172
    %9174 = vset.pattern.permute.xlu0 0
    %9175 = vperm.xlu0 %9174, %v8670
    %v9176 = vpop.permute.xlu0 %9175
    %9177 = vset.pattern.permute.xlu0 0
    %9178 = vperm.xlu0 %9177, %v8671
    %v9179 = vpop.permute.xlu0 %9178
    %9180 = vset.pattern.permute.xlu0 0
    %9181 = vperm.xlu0 %9180, %v8672
    %v9182 = vpop.permute.xlu0 %9181
    %9183 = vset.pattern.permute.xlu0 0
    %9184 = vperm.xlu0 %9183, %v8673
    %v9185 = vpop.permute.xlu0 %9184
    %9186 = vset.pattern.permute.xlu0 0
    %9187 = vperm.xlu0 %9186, %v8674
    %v9188 = vpop.permute.xlu0 %9187
    %9189 = vset.pattern.permute.xlu0 0
    %9190 = vperm.xlu0 %9189, %v8675
    %v9191 = vpop.permute.xlu0 %9190
    %9192 = vset.pattern.permute.xlu0 0
    %9193 = vperm.xlu0 %9192, %v8676
    %v9194 = vpop.permute.xlu0 %9193
    %9195 = vset.pattern.permute.xlu0 0
    %9196 = vperm.xlu0 %9195, %v8677
    %v9197 = vpop.permute.xlu0 %9196
    %9198 = vset.pattern.permute.xlu0 0
    %9199 = vperm.xlu0 %9198, %v8678
    %v9200 = vpop.permute.xlu0 %9199
    %9201 = vset.pattern.permute.xlu0 0
    %9202 = vperm.xlu0 %9201, %v8679
    %v9203 = vpop.permute.xlu0 %9202
    %9204 = vset.pattern.permute.xlu0 0
    %9205 = vperm.xlu0 %9204, %v8680
    %v9206 = vpop.permute.xlu0 %9205
    %9207 = vset.pattern.permute.xlu0 0
    %9208 = vperm.xlu0 %9207, %v8681
    %v9209 = vpop.permute.xlu0 %9208
    %9210 = vset.pattern.permute.xlu0 0
    %9211 = vperm.xlu0 %9210, %v8682
    %v9212 = vpop.permute.xlu0 %9211
    %9213 = vset.pattern.permute.xlu0 0
    %9214 = vperm.xlu0 %9213, %v8683
    %v9215 = vpop.permute.xlu0 %9214
    %9216 = vset.pattern.permute.xlu0 0
    %9217 = vperm.xlu0 %9216, %v8684
    %v9218 = vpop.permute.xlu0 %9217
    %9219 = vset.pattern.permute.xlu0 0
    %9220 = vperm.xlu0 %9219, %v8685
    %v9221 = vpop.permute.xlu0 %9220
    %9222 = vset.pattern.permute.xlu0 0
    %9223 = vperm.xlu0 %9222, %v8686
    %v9224 = vpop.permute.xlu0 %9223
    %9225 = vset.pattern.permute.xlu0 0
    %9226 = vperm.xlu0 %9225, %v8687
    %v9227 = vpop.permute.xlu0 %9226
    %9228 = vset.pattern.permute.xlu0 0
    %9229 = vperm.xlu0 %9228, %v8688
    %v9230 = vpop.permute.xlu0 %9229
    %9231 = vset.pattern.permute.xlu0 0
    %9232 = vperm.xlu0 %9231, %v8689
    %v9233 = vpop.permute.xlu0 %9232
    %9234 = vset.pattern.permute.xlu0 0
    %9235 = vperm.xlu0 %9234, %v8690
    %v9236 = vpop.permute.xlu0 %9235
    %9237 = vset.pattern.permute.xlu0 0
    %9238 = vperm.xlu0 %9237, %v8691
    %v9239 = vpop.permute.xlu0 %9238
    %9240 = vset.pattern.permute.xlu0 0
    %9241 = vperm.xlu0 %9240, %v8692
    %v9242 = vpop.permute.xlu0 %9241
    %9243 = vset.pattern.permute.xlu0 0
    %9244 = vperm.xlu0 %9243, %v8693
    %v9245 = vpop.permute.xlu0 %9244
    %9246 = vset.pattern.permute.xlu0 0
    %9247 = vperm.xlu0 %9246, %v8694
    %v9248 = vpop.permute.xlu0 %9247
    %9249 = vset.pattern.permute.xlu0 0
    %9250 = vperm.xlu0 %9249, %v8695
    %v9251 = vpop.permute.xlu0 %9250
    %9252 = vset.pattern.permute.xlu0 0
    %9253 = vperm.xlu0 %9252, %v8696
    %v9254 = vpop.permute.xlu0 %9253
    %9255 = vset.pattern.permute.xlu0 0
    %9256 = vperm.xlu0 %9255, %v8697
    %v9257 = vpop.permute.xlu0 %9256
    %9258 = vset.pattern.permute.xlu0 0
    %9259 = vperm.xlu0 %9258, %v8698
    %v9260 = vpop.permute.xlu0 %9259
    %9261 = vset.pattern.permute.xlu0 0
    %9262 = vperm.xlu0 %9261, %v8699
    %v9263 = vpop.permute.xlu0 %9262
    %9264 = vset.pattern.permute.xlu0 0
    %9265 = vperm.xlu0 %9264, %v8700
    %v9266 = vpop.permute.xlu0 %9265
    %9267 = vset.pattern.permute.xlu0 0
    %9268 = vperm.xlu0 %9267, %v8701
    %v9269 = vpop.permute.xlu0 %9268
    %9270 = vset.pattern.permute.xlu0 0
    %9271 = vperm.xlu0 %9270, %v8702
    %v9272 = vpop.permute.xlu0 %9271
    %9273 = vset.pattern.permute.xlu0 0
    %9274 = vperm.xlu0 %9273, %v8703
    %v9275 = vpop.permute.xlu0 %9274
    %9276 = vset.pattern.permute.xlu0 0
    %9277 = vperm.xlu0 %9276, %v8704
    %v9278 = vpop.permute.xlu0 %9277
    %9279 = vset.pattern.permute.xlu0 0
    %9280 = vperm.xlu0 %9279, %v8705
    %v9281 = vpop.permute.xlu0 %9280
    %v9282 = vperm.slane %v8852, %v3239
    %v9283 = vperm.slane %v8855, %v3241
    %v9284 = vsel %vm3243, %v9283, %v9282
    %v9285 = vperm.slane %v8858, %v3245
    %v9286 = vsel %vm3247, %v9285, %v9284
    %v9287 = vperm.slane %v8861, %v3239
    %v9288 = vperm.slane %v8864, %v3241
    %v9289 = vsel %vm3243, %v9288, %v9287
    %v9290 = vperm.slane %v8867, %v3245
    %v9291 = vsel %vm3247, %v9290, %v9289
    %v9292 = vperm.slane %v8870, %v3239
    %v9293 = vperm.slane %v8873, %v3241
    %v9294 = vsel %vm3243, %v9293, %v9292
    %v9295 = vperm.slane %v8876, %v3245
    %v9296 = vsel %vm3247, %v9295, %v9294
    %v9297 = vperm.slane %v8879, %v3239
    %v9298 = vperm.slane %v8882, %v3241
    %v9299 = vsel %vm3243, %v9298, %v9297
    %v9300 = vperm.slane %v8885, %v3245
    %v9301 = vsel %vm3247, %v9300, %v9299
    %v9302 = vperm.slane %v8888, %v3239
    %v9303 = vperm.slane %v8891, %v3241
    %v9304 = vsel %vm3243, %v9303, %v9302
    %v9305 = vperm.slane %v8894, %v3245
    %v9306 = vsel %vm3247, %v9305, %v9304
    %v9307 = vperm.slane %v8897, %v3239
    %v9308 = vperm.slane %v8900, %v3241
    %v9309 = vsel %vm3243, %v9308, %v9307
    %v9310 = vperm.slane %v8903, %v3245
    %v9311 = vsel %vm3247, %v9310, %v9309
    %v9312 = vperm.slane %v8906, %v3239
    %v9313 = vperm.slane %v8909, %v3241
    %v9314 = vsel %vm3243, %v9313, %v9312
    %v9315 = vperm.slane %v8912, %v3245
    %v9316 = vsel %vm3247, %v9315, %v9314
    %v9317 = vperm.slane %v8915, %v3239
    %v9318 = vperm.slane %v8918, %v3241
    %v9319 = vsel %vm3243, %v9318, %v9317
    %v9320 = vperm.slane %v8921, %v3245
    %v9321 = vsel %vm3247, %v9320, %v9319
    %v9322 = vperm.slane %v8924, %v3239
    %v9323 = vperm.slane %v8927, %v3241
    %v9324 = vsel %vm3243, %v9323, %v9322
    %v9325 = vperm.slane %v8930, %v3245
    %v9326 = vsel %vm3247, %v9325, %v9324
    %v9327 = vperm.slane %v8933, %v3239
    %v9328 = vperm.slane %v8936, %v3241
    %v9329 = vsel %vm3243, %v9328, %v9327
    %v9330 = vperm.slane %v8939, %v3245
    %v9331 = vsel %vm3247, %v9330, %v9329
    %v9332 = vperm.slane %v8942, %v3239
    %v9333 = vperm.slane %v8945, %v3241
    %v9334 = vsel %vm3243, %v9333, %v9332
    %v9335 = vperm.slane %v8948, %v3245
    %v9336 = vsel %vm3247, %v9335, %v9334
    %v9337 = vperm.slane %v8951, %v3239
    %v9338 = vperm.slane %v8954, %v3241
    %v9339 = vsel %vm3243, %v9338, %v9337
    %v9340 = vperm.slane %v8957, %v3245
    %v9341 = vsel %vm3247, %v9340, %v9339
    %v9342 = vperm.slane %v8960, %v3239
    %v9343 = vperm.slane %v8963, %v3241
    %v9344 = vsel %vm3243, %v9343, %v9342
    %v9345 = vperm.slane %v8966, %v3245
    %v9346 = vsel %vm3247, %v9345, %v9344
    %v9347 = vperm.slane %v8969, %v3239
    %v9348 = vperm.slane %v8972, %v3241
    %v9349 = vsel %vm3243, %v9348, %v9347
    %v9350 = vperm.slane %v8975, %v3245
    %v9351 = vsel %vm3247, %v9350, %v9349
    %v9352 = vperm.slane %v8978, %v3239
    %v9353 = vperm.slane %v8981, %v3241
    %v9354 = vsel %vm3243, %v9353, %v9352
    %v9355 = vperm.slane %v8984, %v3245
    %v9356 = vsel %vm3247, %v9355, %v9354
    %v9357 = vperm.slane %v8987, %v3239
    %v9358 = vperm.slane %v8990, %v3241
    %v9359 = vsel %vm3243, %v9358, %v9357
    %v9360 = vperm.slane %v8993, %v3245
    %v9361 = vsel %vm3247, %v9360, %v9359
    %v9362 = vperm.slane %v8996, %v3239
    %v9363 = vperm.slane %v8999, %v3241
    %v9364 = vsel %vm3243, %v9363, %v9362
    %v9365 = vperm.slane %v9002, %v3245
    %v9366 = vsel %vm3247, %v9365, %v9364
    %v9367 = vperm.slane %v9005, %v3239
    %v9368 = vperm.slane %v9008, %v3241
    %v9369 = vsel %vm3243, %v9368, %v9367
    %v9370 = vperm.slane %v9011, %v3245
    %v9371 = vsel %vm3247, %v9370, %v9369
    %v9372 = vperm.slane %v9014, %v3239
    %v9373 = vperm.slane %v9017, %v3241
    %v9374 = vsel %vm3243, %v9373, %v9372
    %v9375 = vperm.slane %v9020, %v3245
    %v9376 = vsel %vm3247, %v9375, %v9374
    %v9377 = vperm.slane %v9023, %v3239
    %v9378 = vperm.slane %v9026, %v3241
    %v9379 = vsel %vm3243, %v9378, %v9377
    %v9380 = vperm.slane %v9029, %v3245
    %v9381 = vsel %vm3247, %v9380, %v9379
    %v9382 = vperm.slane %v9032, %v3239
    %v9383 = vperm.slane %v9035, %v3241
    %v9384 = vsel %vm3243, %v9383, %v9382
    %v9385 = vperm.slane %v9038, %v3245
    %v9386 = vsel %vm3247, %v9385, %v9384
    %v9387 = vperm.slane %v9041, %v3239
    %v9388 = vperm.slane %v9044, %v3241
    %v9389 = vsel %vm3243, %v9388, %v9387
    %v9390 = vperm.slane %v9047, %v3245
    %v9391 = vsel %vm3247, %v9390, %v9389
    %v9392 = vperm.slane %v9050, %v3239
    %v9393 = vperm.slane %v9053, %v3241
    %v9394 = vsel %vm3243, %v9393, %v9392
    %v9395 = vperm.slane %v9056, %v3245
    %v9396 = vsel %vm3247, %v9395, %v9394
    %v9397 = vperm.slane %v9059, %v3239
    %v9398 = vperm.slane %v9062, %v3241
    %v9399 = vsel %vm3243, %v9398, %v9397
    %v9400 = vperm.slane %v9065, %v3245
    %v9401 = vsel %vm3247, %v9400, %v9399
    %v9402 = vperm.slane %v9068, %v3239
    %v9403 = vperm.slane %v9071, %v3241
    %v9404 = vsel %vm3243, %v9403, %v9402
    %v9405 = vperm.slane %v9074, %v3245
    %v9406 = vsel %vm3247, %v9405, %v9404
    %v9407 = vperm.slane %v9077, %v3239
    %v9408 = vperm.slane %v9080, %v3241
    %v9409 = vsel %vm3243, %v9408, %v9407
    %v9410 = vperm.slane %v9083, %v3245
    %v9411 = vsel %vm3247, %v9410, %v9409
    %v9412 = vperm.slane %v9086, %v3239
    %v9413 = vperm.slane %v9089, %v3241
    %v9414 = vsel %vm3243, %v9413, %v9412
    %v9415 = vperm.slane %v9092, %v3245
    %v9416 = vsel %vm3247, %v9415, %v9414
    %v9417 = vperm.slane %v9095, %v3239
    %v9418 = vperm.slane %v9098, %v3241
    %v9419 = vsel %vm3243, %v9418, %v9417
    %v9420 = vperm.slane %v9101, %v3245
    %v9421 = vsel %vm3247, %v9420, %v9419
    %v9422 = vperm.slane %v9104, %v3239
    %v9423 = vperm.slane %v9107, %v3241
    %v9424 = vsel %vm3243, %v9423, %v9422
    %v9425 = vperm.slane %v9110, %v3245
    %v9426 = vsel %vm3247, %v9425, %v9424
    %v9427 = vperm.slane %v9113, %v3239
    %v9428 = vperm.slane %v9116, %v3241
    %v9429 = vsel %vm3243, %v9428, %v9427
    %v9430 = vperm.slane %v9119, %v3245
    %v9431 = vsel %vm3247, %v9430, %v9429
    %v9432 = vperm.slane %v9122, %v3239
    %v9433 = vperm.slane %v9125, %v3241
    %v9434 = vsel %vm3243, %v9433, %v9432
    %v9435 = vperm.slane %v9128, %v3245
    %v9436 = vsel %vm3247, %v9435, %v9434
    %v9437 = vperm.slane %v9131, %v3239
    %v9438 = vperm.slane %v9134, %v3241
    %v9439 = vsel %vm3243, %v9438, %v9437
    %v9440 = vperm.slane %v9137, %v3245
    %v9441 = vsel %vm3247, %v9440, %v9439
    %v9442 = vperm.slane %v9140, %v3239
    %v9443 = vperm.slane %v9143, %v3241
    %v9444 = vsel %vm3243, %v9443, %v9442
    %v9445 = vperm.slane %v9146, %v3245
    %v9446 = vsel %vm3247, %v9445, %v9444
    %v9447 = vperm.slane %v9149, %v3239
    %v9448 = vperm.slane %v9152, %v3241
    %v9449 = vsel %vm3243, %v9448, %v9447
    %v9450 = vperm.slane %v9155, %v3245
    %v9451 = vsel %vm3247, %v9450, %v9449
    %v9452 = vperm.slane %v9158, %v3239
    %v9453 = vperm.slane %v9161, %v3241
    %v9454 = vsel %vm3243, %v9453, %v9452
    %v9455 = vperm.slane %v9164, %v3245
    %v9456 = vsel %vm3247, %v9455, %v9454
    %v9457 = vperm.slane %v9167, %v3239
    %v9458 = vperm.slane %v9170, %v3241
    %v9459 = vsel %vm3243, %v9458, %v9457
    %v9460 = vperm.slane %v9173, %v3245
    %v9461 = vsel %vm3247, %v9460, %v9459
    %v9462 = vperm.slane %v9176, %v3239
    %v9463 = vperm.slane %v9179, %v3241
    %v9464 = vsel %vm3243, %v9463, %v9462
    %v9465 = vperm.slane %v9182, %v3245
    %v9466 = vsel %vm3247, %v9465, %v9464
    %v9467 = vperm.slane %v9185, %v3239
    %v9468 = vperm.slane %v9188, %v3241
    %v9469 = vsel %vm3243, %v9468, %v9467
    %v9470 = vperm.slane %v9191, %v3245
    %v9471 = vsel %vm3247, %v9470, %v9469
    %v9472 = vperm.slane %v9194, %v3239
    %v9473 = vperm.slane %v9197, %v3241
    %v9474 = vsel %vm3243, %v9473, %v9472
    %v9475 = vperm.slane %v9200, %v3245
    %v9476 = vsel %vm3247, %v9475, %v9474
    %v9477 = vperm.slane %v9203, %v3239
    %v9478 = vperm.slane %v9206, %v3241
    %v9479 = vsel %vm3243, %v9478, %v9477
    %v9480 = vperm.slane %v9209, %v3245
    %v9481 = vsel %vm3247, %v9480, %v9479
    %v9482 = vperm.slane %v9212, %v3239
    %v9483 = vperm.slane %v9215, %v3241
    %v9484 = vsel %vm3243, %v9483, %v9482
    %v9485 = vperm.slane %v9218, %v3245
    %v9486 = vsel %vm3247, %v9485, %v9484
    %v9487 = vperm.slane %v9221, %v3239
    %v9488 = vperm.slane %v9224, %v3241
    %v9489 = vsel %vm3243, %v9488, %v9487
    %v9490 = vperm.slane %v9227, %v3245
    %v9491 = vsel %vm3247, %v9490, %v9489
    %v9492 = vperm.slane %v9230, %v3239
    %v9493 = vperm.slane %v9233, %v3241
    %v9494 = vsel %vm3243, %v9493, %v9492
    %v9495 = vperm.slane %v9236, %v3245
    %v9496 = vsel %vm3247, %v9495, %v9494
    %v9497 = vperm.slane %v9239, %v3239
    %v9498 = vperm.slane %v9242, %v3241
    %v9499 = vsel %vm3243, %v9498, %v9497
    %v9500 = vperm.slane %v9245, %v3245
    %v9501 = vsel %vm3247, %v9500, %v9499
    %v9502 = vperm.slane %v9248, %v3239
    %v9503 = vperm.slane %v9251, %v3241
    %v9504 = vsel %vm3243, %v9503, %v9502
    %v9505 = vperm.slane %v9254, %v3245
    %v9506 = vsel %vm3247, %v9505, %v9504
    %v9507 = vperm.slane %v9257, %v3239
    %v9508 = vperm.slane %v9260, %v3241
    %v9509 = vsel %vm3243, %v9508, %v9507
    %v9510 = vperm.slane %v9263, %v3245
    %v9511 = vsel %vm3247, %v9510, %v9509
    %v9512 = vperm.slane %v9266, %v3239
    %v9513 = vperm.slane %v9269, %v3241
    %v9514 = vsel %vm3243, %v9513, %v9512
    %v9515 = vperm.slane %v9272, %v3245
    %v9516 = vsel %vm3247, %v9515, %v9514
    %v9517 = vperm.slane %v9275, %v3239
    %v9518 = vperm.slane %v9278, %v3241
    %v9519 = vsel %vm3243, %v9518, %v9517
    %v9520 = vperm.slane %v9281, %v3245
    %v9521 = vsel %vm3247, %v9520, %v9519
    %v9522 = vsel %vm3484, %v9291, %v9286
    %v9523 = vsel %vm3486, %v9296, %v9522
    %v9524 = vsel %vm3488, %v9301, %v9523
    %v9525 = vsel %vm3490, %v9306, %v9524
    %v9526 = vsel %vm3492, %v9311, %v9525
    %v9527 = vsel %vm3494, %v9316, %v9526
    %v9528 = vsel %vm3496, %v9321, %v9527
    %v9529 = vsel %vm3484, %v9331, %v9326
    %v9530 = vsel %vm3486, %v9336, %v9529
    %v9531 = vsel %vm3488, %v9341, %v9530
    %v9532 = vsel %vm3490, %v9346, %v9531
    %v9533 = vsel %vm3492, %v9351, %v9532
    %v9534 = vsel %vm3494, %v9356, %v9533
    %v9535 = vsel %vm3496, %v9361, %v9534
    %v9536 = vsel %vm3484, %v9371, %v9366
    %v9537 = vsel %vm3486, %v9376, %v9536
    %v9538 = vsel %vm3488, %v9381, %v9537
    %v9539 = vsel %vm3490, %v9386, %v9538
    %v9540 = vsel %vm3492, %v9391, %v9539
    %v9541 = vsel %vm3494, %v9396, %v9540
    %v9542 = vsel %vm3496, %v9401, %v9541
    %v9543 = vsel %vm3484, %v9411, %v9406
    %v9544 = vsel %vm3486, %v9416, %v9543
    %v9545 = vsel %vm3488, %v9421, %v9544
    %v9546 = vsel %vm3490, %v9426, %v9545
    %v9547 = vsel %vm3492, %v9431, %v9546
    %v9548 = vsel %vm3494, %v9436, %v9547
    %v9549 = vsel %vm3496, %v9441, %v9548
    %v9550 = vsel %vm3484, %v9451, %v9446
    %v9551 = vsel %vm3486, %v9456, %v9550
    %v9552 = vsel %vm3488, %v9461, %v9551
    %v9553 = vsel %vm3490, %v9466, %v9552
    %v9554 = vsel %vm3492, %v9471, %v9553
    %v9555 = vsel %vm3494, %v9476, %v9554
    %v9556 = vsel %vm3496, %v9481, %v9555
    %v9557 = vsel %vm3484, %v9491, %v9486
    %v9558 = vsel %vm3486, %v9496, %v9557
    %v9559 = vsel %vm3488, %v9501, %v9558
    %v9560 = vsel %vm3490, %v9506, %v9559
    %v9561 = vsel %vm3492, %v9511, %v9560
    %v9562 = vsel %vm3494, %v9516, %v9561
    %v9563 = vsel %vm3496, %v9521, %v9562
    %v9570 = vsel %vm3539, %v9528, -inf
    %9571 = vmax.xlane.f32.xlu0 %v9570
    %v9572 = vpop.xlane.xlu0 %9571
    %v9573 = vsel %vm3539, %v9535, -inf
    %9574 = vmax.xlane.f32.xlu0 %v9573
    %v9575 = vpop.xlane.xlu0 %9574
    %v9576 = vsel %vm3539, %v9542, -inf
    %9577 = vmax.xlane.f32.xlu0 %v9576
    %v9578 = vpop.xlane.xlu0 %9577
    %v9579 = vsel %vm3539, %v9549, -inf
    %9580 = vmax.xlane.f32.xlu0 %v9579
    %v9581 = vpop.xlane.xlu0 %9580
    %v9582 = vsel %vm3539, %v9556, -inf
    %9583 = vmax.xlane.f32.xlu0 %v9582
    %v9584 = vpop.xlane.xlu0 %9583
    %v9585 = vsel %vm3539, %v9563, -inf
    %9586 = vmax.xlane.f32.xlu0 %v9585
    %v9587 = vpop.xlane.xlu0 %9586
    %v9594 = vperm.slane %v9572, 0
    %v9595 = vperm.slane %v9572, 1
    %v9596 = vperm.slane %v9572, 2
    %v9597 = vperm.slane %v9572, 3
    %v9598 = vperm.slane %v9572, 4
    %v9599 = vperm.slane %v9572, 5
    %v9600 = vperm.slane %v9572, 6
    %v9601 = vperm.slane %v9572, 7
    %v9602 = vperm.slane %v9575, 0
    %v9603 = vperm.slane %v9575, 1
    %v9604 = vperm.slane %v9575, 2
    %v9605 = vperm.slane %v9575, 3
    %v9606 = vperm.slane %v9575, 4
    %v9607 = vperm.slane %v9575, 5
    %v9608 = vperm.slane %v9575, 6
    %v9609 = vperm.slane %v9575, 7
    %v9610 = vperm.slane %v9578, 0
    %v9611 = vperm.slane %v9578, 1
    %v9612 = vperm.slane %v9578, 2
    %v9613 = vperm.slane %v9578, 3
    %v9614 = vperm.slane %v9578, 4
    %v9615 = vperm.slane %v9578, 5
    %v9616 = vperm.slane %v9578, 6
    %v9617 = vperm.slane %v9578, 7
    %v9618 = vperm.slane %v9581, 0
    %v9619 = vperm.slane %v9581, 1
    %v9620 = vperm.slane %v9581, 2
    %v9621 = vperm.slane %v9581, 3
    %v9622 = vperm.slane %v9581, 4
    %v9623 = vperm.slane %v9581, 5
    %v9624 = vperm.slane %v9581, 6
    %v9625 = vperm.slane %v9581, 7
    %v9626 = vperm.slane %v9584, 0
    %v9627 = vperm.slane %v9584, 1
    %v9628 = vperm.slane %v9584, 2
    %v9629 = vperm.slane %v9584, 3
    %v9630 = vperm.slane %v9584, 4
    %v9631 = vperm.slane %v9584, 5
    %v9632 = vperm.slane %v9584, 6
    %v9633 = vperm.slane %v9584, 7
    %v9634 = vperm.slane %v9587, 0
    %v9635 = vperm.slane %v9587, 1
    %v9636 = vperm.slane %v9587, 2
    %v9637 = vperm.slane %v9587, 3
    %v9638 = vperm.slane %v9587, 4
    %v9639 = vperm.slane %v9587, 5
    %v9640 = vperm.slane %v9587, 6
    %v9641 = vperm.slane %v9587, 7
    %v9690 = vsub.f32 %v8562, %v9594
    %v9691 = vsub.f32 %v8563, %v9594
    %v9692 = vsub.f32 %v8564, %v9594
    %v9693 = vsub.f32 %v8565, %v9595
    %v9694 = vsub.f32 %v8566, %v9595
    %v9695 = vsub.f32 %v8567, %v9595
    %v9696 = vsub.f32 %v8568, %v9596
    %v9697 = vsub.f32 %v8569, %v9596
    %v9698 = vsub.f32 %v8570, %v9596
    %v9699 = vsub.f32 %v8571, %v9597
    %v9700 = vsub.f32 %v8572, %v9597
    %v9701 = vsub.f32 %v8573, %v9597
    %v9702 = vsub.f32 %v8574, %v9598
    %v9703 = vsub.f32 %v8575, %v9598
    %v9704 = vsub.f32 %v8576, %v9598
    %v9705 = vsub.f32 %v8577, %v9599
    %v9706 = vsub.f32 %v8578, %v9599
    %v9707 = vsub.f32 %v8579, %v9599
    %v9708 = vsub.f32 %v8580, %v9600
    %v9709 = vsub.f32 %v8581, %v9600
    %v9710 = vsub.f32 %v8582, %v9600
    %v9711 = vsub.f32 %v8583, %v9601
    %v9712 = vsub.f32 %v8584, %v9601
    %v9713 = vsub.f32 %v8585, %v9601
    %v9714 = vsub.f32 %v8586, %v9602
    %v9715 = vsub.f32 %v8587, %v9602
    %v9716 = vsub.f32 %v8588, %v9602
    %v9717 = vsub.f32 %v8589, %v9603
    %v9718 = vsub.f32 %v8590, %v9603
    %v9719 = vsub.f32 %v8591, %v9603
    %v9720 = vsub.f32 %v8592, %v9604
    %v9721 = vsub.f32 %v8593, %v9604
    %v9722 = vsub.f32 %v8594, %v9604
    %v9723 = vsub.f32 %v8595, %v9605
    %v9724 = vsub.f32 %v8596, %v9605
    %v9725 = vsub.f32 %v8597, %v9605
    %v9726 = vsub.f32 %v8598, %v9606
    %v9727 = vsub.f32 %v8599, %v9606
    %v9728 = vsub.f32 %v8600, %v9606
    %v9729 = vsub.f32 %v8601, %v9607
    %v9730 = vsub.f32 %v8602, %v9607
    %v9731 = vsub.f32 %v8603, %v9607
    %v9732 = vsub.f32 %v8604, %v9608
    %v9733 = vsub.f32 %v8605, %v9608
    %v9734 = vsub.f32 %v8606, %v9608
    %v9735 = vsub.f32 %v8607, %v9609
    %v9736 = vsub.f32 %v8608, %v9609
    %v9737 = vsub.f32 %v8609, %v9609
    %v9738 = vsub.f32 %v8610, %v9610
    %v9739 = vsub.f32 %v8611, %v9610
    %v9740 = vsub.f32 %v8612, %v9610
    %v9741 = vsub.f32 %v8613, %v9611
    %v9742 = vsub.f32 %v8614, %v9611
    %v9743 = vsub.f32 %v8615, %v9611
    %v9744 = vsub.f32 %v8616, %v9612
    %v9745 = vsub.f32 %v8617, %v9612
    %v9746 = vsub.f32 %v8618, %v9612
    %v9747 = vsub.f32 %v8619, %v9613
    %v9748 = vsub.f32 %v8620, %v9613
    %v9749 = vsub.f32 %v8621, %v9613
    %v9750 = vsub.f32 %v8622, %v9614
    %v9751 = vsub.f32 %v8623, %v9614
    %v9752 = vsub.f32 %v8624, %v9614
    %v9753 = vsub.f32 %v8625, %v9615
    %v9754 = vsub.f32 %v8626, %v9615
    %v9755 = vsub.f32 %v8627, %v9615
    %v9756 = vsub.f32 %v8628, %v9616
    %v9757 = vsub.f32 %v8629, %v9616
    %v9758 = vsub.f32 %v8630, %v9616
    %v9759 = vsub.f32 %v8631, %v9617
    %v9760 = vsub.f32 %v8632, %v9617
    %v9761 = vsub.f32 %v8633, %v9617
    %v9762 = vsub.f32 %v8634, %v9618
    %v9763 = vsub.f32 %v8635, %v9618
    %v9764 = vsub.f32 %v8636, %v9618
    %v9765 = vsub.f32 %v8637, %v9619
    %v9766 = vsub.f32 %v8638, %v9619
    %v9767 = vsub.f32 %v8639, %v9619
    %v9768 = vsub.f32 %v8640, %v9620
    %v9769 = vsub.f32 %v8641, %v9620
    %v9770 = vsub.f32 %v8642, %v9620
    %v9771 = vsub.f32 %v8643, %v9621
    %v9772 = vsub.f32 %v8644, %v9621
    %v9773 = vsub.f32 %v8645, %v9621
    %v9774 = vsub.f32 %v8646, %v9622
    %v9775 = vsub.f32 %v8647, %v9622
    %v9776 = vsub.f32 %v8648, %v9622
    %v9777 = vsub.f32 %v8649, %v9623
    %v9778 = vsub.f32 %v8650, %v9623
    %v9779 = vsub.f32 %v8651, %v9623
    %v9780 = vsub.f32 %v8652, %v9624
    %v9781 = vsub.f32 %v8653, %v9624
    %v9782 = vsub.f32 %v8654, %v9624
    %v9783 = vsub.f32 %v8655, %v9625
    %v9784 = vsub.f32 %v8656, %v9625
    %v9785 = vsub.f32 %v8657, %v9625
    %v9786 = vsub.f32 %v8658, %v9626
    %v9787 = vsub.f32 %v8659, %v9626
    %v9788 = vsub.f32 %v8660, %v9626
    %v9789 = vsub.f32 %v8661, %v9627
    %v9790 = vsub.f32 %v8662, %v9627
    %v9791 = vsub.f32 %v8663, %v9627
    %v9792 = vsub.f32 %v8664, %v9628
    %v9793 = vsub.f32 %v8665, %v9628
    %v9794 = vsub.f32 %v8666, %v9628
    %v9795 = vsub.f32 %v8667, %v9629
    %v9796 = vsub.f32 %v8668, %v9629
    %v9797 = vsub.f32 %v8669, %v9629
    %v9798 = vsub.f32 %v8670, %v9630
    %v9799 = vsub.f32 %v8671, %v9630
    %v9800 = vsub.f32 %v8672, %v9630
    %v9801 = vsub.f32 %v8673, %v9631
    %v9802 = vsub.f32 %v8674, %v9631
    %v9803 = vsub.f32 %v8675, %v9631
    %v9804 = vsub.f32 %v8676, %v9632
    %v9805 = vsub.f32 %v8677, %v9632
    %v9806 = vsub.f32 %v8678, %v9632
    %v9807 = vsub.f32 %v8679, %v9633
    %v9808 = vsub.f32 %v8680, %v9633
    %v9809 = vsub.f32 %v8681, %v9633
    %v9810 = vsub.f32 %v8682, %v9634
    %v9811 = vsub.f32 %v8683, %v9634
    %v9812 = vsub.f32 %v8684, %v9634
    %v9813 = vsub.f32 %v8685, %v9635
    %v9814 = vsub.f32 %v8686, %v9635
    %v9815 = vsub.f32 %v8687, %v9635
    %v9816 = vsub.f32 %v8688, %v9636
    %v9817 = vsub.f32 %v8689, %v9636
    %v9818 = vsub.f32 %v8690, %v9636
    %v9819 = vsub.f32 %v8691, %v9637
    %v9820 = vsub.f32 %v8692, %v9637
    %v9821 = vsub.f32 %v8693, %v9637
    %v9822 = vsub.f32 %v8694, %v9638
    %v9823 = vsub.f32 %v8695, %v9638
    %v9824 = vsub.f32 %v8696, %v9638
    %v9825 = vsub.f32 %v8697, %v9639
    %v9826 = vsub.f32 %v8698, %v9639
    %v9827 = vsub.f32 %v8699, %v9639
    %v9828 = vsub.f32 %v8700, %v9640
    %v9829 = vsub.f32 %v8701, %v9640
    %v9830 = vsub.f32 %v8702, %v9640
    %v9831 = vsub.f32 %v8703, %v9641
    %v9832 = vsub.f32 %v8704, %v9641
    %v9833 = vsub.f32 %v8705, %v9641
    %v9834 = vmul.f32 %v9690, 1.442695
    %v9835 = vpow.pop %v9834
    %v9836 = vmul.f32 %v9691, 1.442695
    %v9837 = vpow.pop %v9836
    %v9838 = vmul.f32 %v9692, 1.442695
    %v9839 = vpow.pop %v9838
    %v9840 = vmul.f32 %v9693, 1.442695
    %v9841 = vpow.pop %v9840
    %v9842 = vmul.f32 %v9694, 1.442695
    %v9843 = vpow.pop %v9842
    %v9844 = vmul.f32 %v9695, 1.442695
    %v9845 = vpow.pop %v9844
    %v9846 = vmul.f32 %v9696, 1.442695
    %v9847 = vpow.pop %v9846
    %v9848 = vmul.f32 %v9697, 1.442695
    %v9849 = vpow.pop %v9848
    %v9850 = vmul.f32 %v9698, 1.442695
    %v9851 = vpow.pop %v9850
    %v9852 = vmul.f32 %v9699, 1.442695
    %v9853 = vpow.pop %v9852
    %v9854 = vmul.f32 %v9700, 1.442695
    %v9855 = vpow.pop %v9854
    %v9856 = vmul.f32 %v9701, 1.442695
    %v9857 = vpow.pop %v9856
    %v9858 = vmul.f32 %v9702, 1.442695
    %v9859 = vpow.pop %v9858
    %v9860 = vmul.f32 %v9703, 1.442695
    %v9861 = vpow.pop %v9860
    %v9862 = vmul.f32 %v9704, 1.442695
    %v9863 = vpow.pop %v9862
    %v9864 = vmul.f32 %v9705, 1.442695
    %v9865 = vpow.pop %v9864
    %v9866 = vmul.f32 %v9706, 1.442695
    %v9867 = vpow.pop %v9866
    %v9868 = vmul.f32 %v9707, 1.442695
    %v9869 = vpow.pop %v9868
    %v9870 = vmul.f32 %v9708, 1.442695
    %v9871 = vpow.pop %v9870
    %v9872 = vmul.f32 %v9709, 1.442695
    %v9873 = vpow.pop %v9872
    %v9874 = vmul.f32 %v9710, 1.442695
    %v9875 = vpow.pop %v9874
    %v9876 = vmul.f32 %v9711, 1.442695
    %v9877 = vpow.pop %v9876
    %v9878 = vmul.f32 %v9712, 1.442695
    %v9879 = vpow.pop %v9878
    %v9880 = vmul.f32 %v9713, 1.442695
    %v9881 = vpow.pop %v9880
    %v9882 = vmul.f32 %v9714, 1.442695
    %v9883 = vpow.pop %v9882
    %v9884 = vmul.f32 %v9715, 1.442695
    %v9885 = vpow.pop %v9884
    %v9886 = vmul.f32 %v9716, 1.442695
    %v9887 = vpow.pop %v9886
    %v9888 = vmul.f32 %v9717, 1.442695
    %v9889 = vpow.pop %v9888
    %v9890 = vmul.f32 %v9718, 1.442695
    %v9891 = vpow.pop %v9890
    %v9892 = vmul.f32 %v9719, 1.442695
    %v9893 = vpow.pop %v9892
    %v9894 = vmul.f32 %v9720, 1.442695
    %v9895 = vpow.pop %v9894
    %v9896 = vmul.f32 %v9721, 1.442695
    %v9897 = vpow.pop %v9896
    %v9898 = vmul.f32 %v9722, 1.442695
    %v9899 = vpow.pop %v9898
    %v9900 = vmul.f32 %v9723, 1.442695
    %v9901 = vpow.pop %v9900
    %v9902 = vmul.f32 %v9724, 1.442695
    %v9903 = vpow.pop %v9902
    %v9904 = vmul.f32 %v9725, 1.442695
    %v9905 = vpow.pop %v9904
    %v9906 = vmul.f32 %v9726, 1.442695
    %v9907 = vpow.pop %v9906
    %v9908 = vmul.f32 %v9727, 1.442695
    %v9909 = vpow.pop %v9908
    %v9910 = vmul.f32 %v9728, 1.442695
    %v9911 = vpow.pop %v9910
    %v9912 = vmul.f32 %v9729, 1.442695
    %v9913 = vpow.pop %v9912
    %v9914 = vmul.f32 %v9730, 1.442695
    %v9915 = vpow.pop %v9914
    %v9916 = vmul.f32 %v9731, 1.442695
    %v9917 = vpow.pop %v9916
    %v9918 = vmul.f32 %v9732, 1.442695
    %v9919 = vpow.pop %v9918
    %v9920 = vmul.f32 %v9733, 1.442695
    %v9921 = vpow.pop %v9920
    %v9922 = vmul.f32 %v9734, 1.442695
    %v9923 = vpow.pop %v9922
    %v9924 = vmul.f32 %v9735, 1.442695
    %v9925 = vpow.pop %v9924
    %v9926 = vmul.f32 %v9736, 1.442695
    %v9927 = vpow.pop %v9926
    %v9928 = vmul.f32 %v9737, 1.442695
    %v9929 = vpow.pop %v9928
    %v9930 = vmul.f32 %v9738, 1.442695
    %v9931 = vpow.pop %v9930
    %v9932 = vmul.f32 %v9739, 1.442695
    %v9933 = vpow.pop %v9932
    %v9934 = vmul.f32 %v9740, 1.442695
    %v9935 = vpow.pop %v9934
    %v9936 = vmul.f32 %v9741, 1.442695
    %v9937 = vpow.pop %v9936
    %v9938 = vmul.f32 %v9742, 1.442695
    %v9939 = vpow.pop %v9938
    %v9940 = vmul.f32 %v9743, 1.442695
    %v9941 = vpow.pop %v9940
    %v9942 = vmul.f32 %v9744, 1.442695
    %v9943 = vpow.pop %v9942
    %v9944 = vmul.f32 %v9745, 1.442695
    %v9945 = vpow.pop %v9944
    %v9946 = vmul.f32 %v9746, 1.442695
    %v9947 = vpow.pop %v9946
    %v9948 = vmul.f32 %v9747, 1.442695
    %v9949 = vpow.pop %v9948
    %v9950 = vmul.f32 %v9748, 1.442695
    %v9951 = vpow.pop %v9950
    %v9952 = vmul.f32 %v9749, 1.442695
    %v9953 = vpow.pop %v9952
    %v9954 = vmul.f32 %v9750, 1.442695
    %v9955 = vpow.pop %v9954
    %v9956 = vmul.f32 %v9751, 1.442695
    %v9957 = vpow.pop %v9956
    %v9958 = vmul.f32 %v9752, 1.442695
    %v9959 = vpow.pop %v9958
    %v9960 = vmul.f32 %v9753, 1.442695
    %v9961 = vpow.pop %v9960
    %v9962 = vmul.f32 %v9754, 1.442695
    %v9963 = vpow.pop %v9962
    %v9964 = vmul.f32 %v9755, 1.442695
    %v9965 = vpow.pop %v9964
    %v9966 = vmul.f32 %v9756, 1.442695
    %v9967 = vpow.pop %v9966
    %v9968 = vmul.f32 %v9757, 1.442695
    %v9969 = vpow.pop %v9968
    %v9970 = vmul.f32 %v9758, 1.442695
    %v9971 = vpow.pop %v9970
    %v9972 = vmul.f32 %v9759, 1.442695
    %v9973 = vpow.pop %v9972
    %v9974 = vmul.f32 %v9760, 1.442695
    %v9975 = vpow.pop %v9974
    %v9976 = vmul.f32 %v9761, 1.442695
    %v9977 = vpow.pop %v9976
    %v9978 = vmul.f32 %v9762, 1.442695
    %v9979 = vpow.pop %v9978
    %v9980 = vmul.f32 %v9763, 1.442695
    %v9981 = vpow.pop %v9980
    %v9982 = vmul.f32 %v9764, 1.442695
    %v9983 = vpow.pop %v9982
    %v9984 = vmul.f32 %v9765, 1.442695
    %v9985 = vpow.pop %v9984
    %v9986 = vmul.f32 %v9766, 1.442695
    %v9987 = vpow.pop %v9986
    %v9988 = vmul.f32 %v9767, 1.442695
    %v9989 = vpow.pop %v9988
    %v9990 = vmul.f32 %v9768, 1.442695
    %v9991 = vpow.pop %v9990
    %v9992 = vmul.f32 %v9769, 1.442695
    %v9993 = vpow.pop %v9992
    %v9994 = vmul.f32 %v9770, 1.442695
    %v9995 = vpow.pop %v9994
    %v9996 = vmul.f32 %v9771, 1.442695
    %v9997 = vpow.pop %v9996
    %v9998 = vmul.f32 %v9772, 1.442695
    %v9999 = vpow.pop %v9998
    %v10000 = vmul.f32 %v9773, 1.442695
    %v10001 = vpow.pop %v10000
    %v10002 = vmul.f32 %v9774, 1.442695
    %v10003 = vpow.pop %v10002
    %v10004 = vmul.f32 %v9775, 1.442695
    %v10005 = vpow.pop %v10004
    %v10006 = vmul.f32 %v9776, 1.442695
    %v10007 = vpow.pop %v10006
    %v10008 = vmul.f32 %v9777, 1.442695
    %v10009 = vpow.pop %v10008
    %v10010 = vmul.f32 %v9778, 1.442695
    %v10011 = vpow.pop %v10010
    %v10012 = vmul.f32 %v9779, 1.442695
    %v10013 = vpow.pop %v10012
    %v10014 = vmul.f32 %v9780, 1.442695
    %v10015 = vpow.pop %v10014
    %v10016 = vmul.f32 %v9781, 1.442695
    %v10017 = vpow.pop %v10016
    %v10018 = vmul.f32 %v9782, 1.442695
    %v10019 = vpow.pop %v10018
    %v10020 = vmul.f32 %v9783, 1.442695
    %v10021 = vpow.pop %v10020
    %v10022 = vmul.f32 %v9784, 1.442695
    %v10023 = vpow.pop %v10022
    %v10024 = vmul.f32 %v9785, 1.442695
    %v10025 = vpow.pop %v10024
    %v10026 = vmul.f32 %v9786, 1.442695
    %v10027 = vpow.pop %v10026
    %v10028 = vmul.f32 %v9787, 1.442695
    %v10029 = vpow.pop %v10028
    %v10030 = vmul.f32 %v9788, 1.442695
    %v10031 = vpow.pop %v10030
    %v10032 = vmul.f32 %v9789, 1.442695
    %v10033 = vpow.pop %v10032
    %v10034 = vmul.f32 %v9790, 1.442695
    %v10035 = vpow.pop %v10034
    %v10036 = vmul.f32 %v9791, 1.442695
    %v10037 = vpow.pop %v10036
    %v10038 = vmul.f32 %v9792, 1.442695
    %v10039 = vpow.pop %v10038
    %v10040 = vmul.f32 %v9793, 1.442695
    %v10041 = vpow.pop %v10040
    %v10042 = vmul.f32 %v9794, 1.442695
    %v10043 = vpow.pop %v10042
    %v10044 = vmul.f32 %v9795, 1.442695
    %v10045 = vpow.pop %v10044
    %v10046 = vmul.f32 %v9796, 1.442695
    %v10047 = vpow.pop %v10046
    %v10048 = vmul.f32 %v9797, 1.442695
    %v10049 = vpow.pop %v10048
    %v10050 = vmul.f32 %v9798, 1.442695
    %v10051 = vpow.pop %v10050
    %v10052 = vmul.f32 %v9799, 1.442695
    %v10053 = vpow.pop %v10052
    %v10054 = vmul.f32 %v9800, 1.442695
    %v10055 = vpow.pop %v10054
    %v10056 = vmul.f32 %v9801, 1.442695
    %v10057 = vpow.pop %v10056
    %v10058 = vmul.f32 %v9802, 1.442695
    %v10059 = vpow.pop %v10058
    %v10060 = vmul.f32 %v9803, 1.442695
    %v10061 = vpow.pop %v10060
    %v10062 = vmul.f32 %v9804, 1.442695
    %v10063 = vpow.pop %v10062
    %v10064 = vmul.f32 %v9805, 1.442695
    %v10065 = vpow.pop %v10064
    %v10066 = vmul.f32 %v9806, 1.442695
    %v10067 = vpow.pop %v10066
    %v10068 = vmul.f32 %v9807, 1.442695
    %v10069 = vpow.pop %v10068
    %v10070 = vmul.f32 %v9808, 1.442695
    %v10071 = vpow.pop %v10070
    %v10072 = vmul.f32 %v9809, 1.442695
    %v10073 = vpow.pop %v10072
    %v10074 = vmul.f32 %v9810, 1.442695
    %v10075 = vpow.pop %v10074
    %v10076 = vmul.f32 %v9811, 1.442695
    %v10077 = vpow.pop %v10076
    %v10078 = vmul.f32 %v9812, 1.442695
    %v10079 = vpow.pop %v10078
    %v10080 = vmul.f32 %v9813, 1.442695
    %v10081 = vpow.pop %v10080
    %v10082 = vmul.f32 %v9814, 1.442695
    %v10083 = vpow.pop %v10082
    %v10084 = vmul.f32 %v9815, 1.442695
    %v10085 = vpow.pop %v10084
    %v10086 = vmul.f32 %v9816, 1.442695
    %v10087 = vpow.pop %v10086
    %v10088 = vmul.f32 %v9817, 1.442695
    %v10089 = vpow.pop %v10088
    %v10090 = vmul.f32 %v9818, 1.442695
    %v10091 = vpow.pop %v10090
    %v10092 = vmul.f32 %v9819, 1.442695
    %v10093 = vpow.pop %v10092
    %v10094 = vmul.f32 %v9820, 1.442695
    %v10095 = vpow.pop %v10094
    %v10096 = vmul.f32 %v9821, 1.442695
    %v10097 = vpow.pop %v10096
    %v10098 = vmul.f32 %v9822, 1.442695
    %v10099 = vpow.pop %v10098
    %v10100 = vmul.f32 %v9823, 1.442695
    %v10101 = vpow.pop %v10100
    %v10102 = vmul.f32 %v9824, 1.442695
    %v10103 = vpow.pop %v10102
    %v10104 = vmul.f32 %v9825, 1.442695
    %v10105 = vpow.pop %v10104
    %v10106 = vmul.f32 %v9826, 1.442695
    %v10107 = vpow.pop %v10106
    %v10108 = vmul.f32 %v9827, 1.442695
    %v10109 = vpow.pop %v10108
    %v10110 = vmul.f32 %v9828, 1.442695
    %v10111 = vpow.pop %v10110
    %v10112 = vmul.f32 %v9829, 1.442695
    %v10113 = vpow.pop %v10112
    %v10114 = vmul.f32 %v9830, 1.442695
    %v10115 = vpow.pop %v10114
    %v10116 = vmul.f32 %v9831, 1.442695
    %v10117 = vpow.pop %v10116
    %v10118 = vmul.f32 %v9832, 1.442695
    %v10119 = vpow.pop %v10118
    %v10120 = vmul.f32 %v9833, 1.442695
    %v10121 = vpow.pop %v10120
    %10266 = vset.pattern.permute.xlu0 0
    %10267 = vperm.xlu0 %10266, %v9835
    %v10268 = vpop.permute.xlu0 %10267
    %10269 = vset.pattern.permute.xlu0 0
    %10270 = vperm.xlu0 %10269, %v9837
    %v10271 = vpop.permute.xlu0 %10270
    %10272 = vset.pattern.permute.xlu0 0
    %10273 = vperm.xlu0 %10272, %v9839
    %v10274 = vpop.permute.xlu0 %10273
    %10275 = vset.pattern.permute.xlu0 0
    %10276 = vperm.xlu0 %10275, %v9841
    %v10277 = vpop.permute.xlu0 %10276
    %10278 = vset.pattern.permute.xlu0 0
    %10279 = vperm.xlu0 %10278, %v9843
    %v10280 = vpop.permute.xlu0 %10279
    %10281 = vset.pattern.permute.xlu0 0
    %10282 = vperm.xlu0 %10281, %v9845
    %v10283 = vpop.permute.xlu0 %10282
    %10284 = vset.pattern.permute.xlu0 0
    %10285 = vperm.xlu0 %10284, %v9847
    %v10286 = vpop.permute.xlu0 %10285
    %10287 = vset.pattern.permute.xlu0 0
    %10288 = vperm.xlu0 %10287, %v9849
    %v10289 = vpop.permute.xlu0 %10288
    %10290 = vset.pattern.permute.xlu0 0
    %10291 = vperm.xlu0 %10290, %v9851
    %v10292 = vpop.permute.xlu0 %10291
    %10293 = vset.pattern.permute.xlu0 0
    %10294 = vperm.xlu0 %10293, %v9853
    %v10295 = vpop.permute.xlu0 %10294
    %10296 = vset.pattern.permute.xlu0 0
    %10297 = vperm.xlu0 %10296, %v9855
    %v10298 = vpop.permute.xlu0 %10297
    %10299 = vset.pattern.permute.xlu0 0
    %10300 = vperm.xlu0 %10299, %v9857
    %v10301 = vpop.permute.xlu0 %10300
    %10302 = vset.pattern.permute.xlu0 0
    %10303 = vperm.xlu0 %10302, %v9859
    %v10304 = vpop.permute.xlu0 %10303
    %10305 = vset.pattern.permute.xlu0 0
    %10306 = vperm.xlu0 %10305, %v9861
    %v10307 = vpop.permute.xlu0 %10306
    %10308 = vset.pattern.permute.xlu0 0
    %10309 = vperm.xlu0 %10308, %v9863
    %v10310 = vpop.permute.xlu0 %10309
    %10311 = vset.pattern.permute.xlu0 0
    %10312 = vperm.xlu0 %10311, %v9865
    %v10313 = vpop.permute.xlu0 %10312
    %10314 = vset.pattern.permute.xlu0 0
    %10315 = vperm.xlu0 %10314, %v9867
    %v10316 = vpop.permute.xlu0 %10315
    %10317 = vset.pattern.permute.xlu0 0
    %10318 = vperm.xlu0 %10317, %v9869
    %v10319 = vpop.permute.xlu0 %10318
    %10320 = vset.pattern.permute.xlu0 0
    %10321 = vperm.xlu0 %10320, %v9871
    %v10322 = vpop.permute.xlu0 %10321
    %10323 = vset.pattern.permute.xlu0 0
    %10324 = vperm.xlu0 %10323, %v9873
    %v10325 = vpop.permute.xlu0 %10324
    %10326 = vset.pattern.permute.xlu0 0
    %10327 = vperm.xlu0 %10326, %v9875
    %v10328 = vpop.permute.xlu0 %10327
    %10329 = vset.pattern.permute.xlu0 0
    %10330 = vperm.xlu0 %10329, %v9877
    %v10331 = vpop.permute.xlu0 %10330
    %10332 = vset.pattern.permute.xlu0 0
    %10333 = vperm.xlu0 %10332, %v9879
    %v10334 = vpop.permute.xlu0 %10333
    %10335 = vset.pattern.permute.xlu0 0
    %10336 = vperm.xlu0 %10335, %v9881
    %v10337 = vpop.permute.xlu0 %10336
    %10338 = vset.pattern.permute.xlu0 0
    %10339 = vperm.xlu0 %10338, %v9883
    %v10340 = vpop.permute.xlu0 %10339
    %10341 = vset.pattern.permute.xlu0 0
    %10342 = vperm.xlu0 %10341, %v9885
    %v10343 = vpop.permute.xlu0 %10342
    %10344 = vset.pattern.permute.xlu0 0
    %10345 = vperm.xlu0 %10344, %v9887
    %v10346 = vpop.permute.xlu0 %10345
    %10347 = vset.pattern.permute.xlu0 0
    %10348 = vperm.xlu0 %10347, %v9889
    %v10349 = vpop.permute.xlu0 %10348
    %10350 = vset.pattern.permute.xlu0 0
    %10351 = vperm.xlu0 %10350, %v9891
    %v10352 = vpop.permute.xlu0 %10351
    %10353 = vset.pattern.permute.xlu0 0
    %10354 = vperm.xlu0 %10353, %v9893
    %v10355 = vpop.permute.xlu0 %10354
    %10356 = vset.pattern.permute.xlu0 0
    %10357 = vperm.xlu0 %10356, %v9895
    %v10358 = vpop.permute.xlu0 %10357
    %10359 = vset.pattern.permute.xlu0 0
    %10360 = vperm.xlu0 %10359, %v9897
    %v10361 = vpop.permute.xlu0 %10360
    %10362 = vset.pattern.permute.xlu0 0
    %10363 = vperm.xlu0 %10362, %v9899
    %v10364 = vpop.permute.xlu0 %10363
    %10365 = vset.pattern.permute.xlu0 0
    %10366 = vperm.xlu0 %10365, %v9901
    %v10367 = vpop.permute.xlu0 %10366
    %10368 = vset.pattern.permute.xlu0 0
    %10369 = vperm.xlu0 %10368, %v9903
    %v10370 = vpop.permute.xlu0 %10369
    %10371 = vset.pattern.permute.xlu0 0
    %10372 = vperm.xlu0 %10371, %v9905
    %v10373 = vpop.permute.xlu0 %10372
    %10374 = vset.pattern.permute.xlu0 0
    %10375 = vperm.xlu0 %10374, %v9907
    %v10376 = vpop.permute.xlu0 %10375
    %10377 = vset.pattern.permute.xlu0 0
    %10378 = vperm.xlu0 %10377, %v9909
    %v10379 = vpop.permute.xlu0 %10378
    %10380 = vset.pattern.permute.xlu0 0
    %10381 = vperm.xlu0 %10380, %v9911
    %v10382 = vpop.permute.xlu0 %10381
    %10383 = vset.pattern.permute.xlu0 0
    %10384 = vperm.xlu0 %10383, %v9913
    %v10385 = vpop.permute.xlu0 %10384
    %10386 = vset.pattern.permute.xlu0 0
    %10387 = vperm.xlu0 %10386, %v9915
    %v10388 = vpop.permute.xlu0 %10387
    %10389 = vset.pattern.permute.xlu0 0
    %10390 = vperm.xlu0 %10389, %v9917
    %v10391 = vpop.permute.xlu0 %10390
    %10392 = vset.pattern.permute.xlu0 0
    %10393 = vperm.xlu0 %10392, %v9919
    %v10394 = vpop.permute.xlu0 %10393
    %10395 = vset.pattern.permute.xlu0 0
    %10396 = vperm.xlu0 %10395, %v9921
    %v10397 = vpop.permute.xlu0 %10396
    %10398 = vset.pattern.permute.xlu0 0
    %10399 = vperm.xlu0 %10398, %v9923
    %v10400 = vpop.permute.xlu0 %10399
    %10401 = vset.pattern.permute.xlu0 0
    %10402 = vperm.xlu0 %10401, %v9925
    %v10403 = vpop.permute.xlu0 %10402
    %10404 = vset.pattern.permute.xlu0 0
    %10405 = vperm.xlu0 %10404, %v9927
    %v10406 = vpop.permute.xlu0 %10405
    %10407 = vset.pattern.permute.xlu0 0
    %10408 = vperm.xlu0 %10407, %v9929
    %v10409 = vpop.permute.xlu0 %10408
    %10410 = vset.pattern.permute.xlu0 0
    %10411 = vperm.xlu0 %10410, %v9931
    %v10412 = vpop.permute.xlu0 %10411
    %10413 = vset.pattern.permute.xlu0 0
    %10414 = vperm.xlu0 %10413, %v9933
    %v10415 = vpop.permute.xlu0 %10414
    %10416 = vset.pattern.permute.xlu0 0
    %10417 = vperm.xlu0 %10416, %v9935
    %v10418 = vpop.permute.xlu0 %10417
    %10419 = vset.pattern.permute.xlu0 0
    %10420 = vperm.xlu0 %10419, %v9937
    %v10421 = vpop.permute.xlu0 %10420
    %10422 = vset.pattern.permute.xlu0 0
    %10423 = vperm.xlu0 %10422, %v9939
    %v10424 = vpop.permute.xlu0 %10423
    %10425 = vset.pattern.permute.xlu0 0
    %10426 = vperm.xlu0 %10425, %v9941
    %v10427 = vpop.permute.xlu0 %10426
    %10428 = vset.pattern.permute.xlu0 0
    %10429 = vperm.xlu0 %10428, %v9943
    %v10430 = vpop.permute.xlu0 %10429
    %10431 = vset.pattern.permute.xlu0 0
    %10432 = vperm.xlu0 %10431, %v9945
    %v10433 = vpop.permute.xlu0 %10432
    %10434 = vset.pattern.permute.xlu0 0
    %10435 = vperm.xlu0 %10434, %v9947
    %v10436 = vpop.permute.xlu0 %10435
    %10437 = vset.pattern.permute.xlu0 0
    %10438 = vperm.xlu0 %10437, %v9949
    %v10439 = vpop.permute.xlu0 %10438
    %10440 = vset.pattern.permute.xlu0 0
    %10441 = vperm.xlu0 %10440, %v9951
    %v10442 = vpop.permute.xlu0 %10441
    %10443 = vset.pattern.permute.xlu0 0
    %10444 = vperm.xlu0 %10443, %v9953
    %v10445 = vpop.permute.xlu0 %10444
    %10446 = vset.pattern.permute.xlu0 0
    %10447 = vperm.xlu0 %10446, %v9955
    %v10448 = vpop.permute.xlu0 %10447
    %10449 = vset.pattern.permute.xlu0 0
    %10450 = vperm.xlu0 %10449, %v9957
    %v10451 = vpop.permute.xlu0 %10450
    %10452 = vset.pattern.permute.xlu0 0
    %10453 = vperm.xlu0 %10452, %v9959
    %v10454 = vpop.permute.xlu0 %10453
    %10455 = vset.pattern.permute.xlu0 0
    %10456 = vperm.xlu0 %10455, %v9961
    %v10457 = vpop.permute.xlu0 %10456
    %10458 = vset.pattern.permute.xlu0 0
    %10459 = vperm.xlu0 %10458, %v9963
    %v10460 = vpop.permute.xlu0 %10459
    %10461 = vset.pattern.permute.xlu0 0
    %10462 = vperm.xlu0 %10461, %v9965
    %v10463 = vpop.permute.xlu0 %10462
    %10464 = vset.pattern.permute.xlu0 0
    %10465 = vperm.xlu0 %10464, %v9967
    %v10466 = vpop.permute.xlu0 %10465
    %10467 = vset.pattern.permute.xlu0 0
    %10468 = vperm.xlu0 %10467, %v9969
    %v10469 = vpop.permute.xlu0 %10468
    %10470 = vset.pattern.permute.xlu0 0
    %10471 = vperm.xlu0 %10470, %v9971
    %v10472 = vpop.permute.xlu0 %10471
    %10473 = vset.pattern.permute.xlu0 0
    %10474 = vperm.xlu0 %10473, %v9973
    %v10475 = vpop.permute.xlu0 %10474
    %10476 = vset.pattern.permute.xlu0 0
    %10477 = vperm.xlu0 %10476, %v9975
    %v10478 = vpop.permute.xlu0 %10477
    %10479 = vset.pattern.permute.xlu0 0
    %10480 = vperm.xlu0 %10479, %v9977
    %v10481 = vpop.permute.xlu0 %10480
    %10482 = vset.pattern.permute.xlu0 0
    %10483 = vperm.xlu0 %10482, %v9979
    %v10484 = vpop.permute.xlu0 %10483
    %10485 = vset.pattern.permute.xlu0 0
    %10486 = vperm.xlu0 %10485, %v9981
    %v10487 = vpop.permute.xlu0 %10486
    %10488 = vset.pattern.permute.xlu0 0
    %10489 = vperm.xlu0 %10488, %v9983
    %v10490 = vpop.permute.xlu0 %10489
    %10491 = vset.pattern.permute.xlu0 0
    %10492 = vperm.xlu0 %10491, %v9985
    %v10493 = vpop.permute.xlu0 %10492
    %10494 = vset.pattern.permute.xlu0 0
    %10495 = vperm.xlu0 %10494, %v9987
    %v10496 = vpop.permute.xlu0 %10495
    %10497 = vset.pattern.permute.xlu0 0
    %10498 = vperm.xlu0 %10497, %v9989
    %v10499 = vpop.permute.xlu0 %10498
    %10500 = vset.pattern.permute.xlu0 0
    %10501 = vperm.xlu0 %10500, %v9991
    %v10502 = vpop.permute.xlu0 %10501
    %10503 = vset.pattern.permute.xlu0 0
    %10504 = vperm.xlu0 %10503, %v9993
    %v10505 = vpop.permute.xlu0 %10504
    %10506 = vset.pattern.permute.xlu0 0
    %10507 = vperm.xlu0 %10506, %v9995
    %v10508 = vpop.permute.xlu0 %10507
    %10509 = vset.pattern.permute.xlu0 0
    %10510 = vperm.xlu0 %10509, %v9997
    %v10511 = vpop.permute.xlu0 %10510
    %10512 = vset.pattern.permute.xlu0 0
    %10513 = vperm.xlu0 %10512, %v9999
    %v10514 = vpop.permute.xlu0 %10513
    %10515 = vset.pattern.permute.xlu0 0
    %10516 = vperm.xlu0 %10515, %v10001
    %v10517 = vpop.permute.xlu0 %10516
    %10518 = vset.pattern.permute.xlu0 0
    %10519 = vperm.xlu0 %10518, %v10003
    %v10520 = vpop.permute.xlu0 %10519
    %10521 = vset.pattern.permute.xlu0 0
    %10522 = vperm.xlu0 %10521, %v10005
    %v10523 = vpop.permute.xlu0 %10522
    %10524 = vset.pattern.permute.xlu0 0
    %10525 = vperm.xlu0 %10524, %v10007
    %v10526 = vpop.permute.xlu0 %10525
    %10527 = vset.pattern.permute.xlu0 0
    %10528 = vperm.xlu0 %10527, %v10009
    %v10529 = vpop.permute.xlu0 %10528
    %10530 = vset.pattern.permute.xlu0 0
    %10531 = vperm.xlu0 %10530, %v10011
    %v10532 = vpop.permute.xlu0 %10531
    %10533 = vset.pattern.permute.xlu0 0
    %10534 = vperm.xlu0 %10533, %v10013
    %v10535 = vpop.permute.xlu0 %10534
    %10536 = vset.pattern.permute.xlu0 0
    %10537 = vperm.xlu0 %10536, %v10015
    %v10538 = vpop.permute.xlu0 %10537
    %10539 = vset.pattern.permute.xlu0 0
    %10540 = vperm.xlu0 %10539, %v10017
    %v10541 = vpop.permute.xlu0 %10540
    %10542 = vset.pattern.permute.xlu0 0
    %10543 = vperm.xlu0 %10542, %v10019
    %v10544 = vpop.permute.xlu0 %10543
    %10545 = vset.pattern.permute.xlu0 0
    %10546 = vperm.xlu0 %10545, %v10021
    %v10547 = vpop.permute.xlu0 %10546
    %10548 = vset.pattern.permute.xlu0 0
    %10549 = vperm.xlu0 %10548, %v10023
    %v10550 = vpop.permute.xlu0 %10549
    %10551 = vset.pattern.permute.xlu0 0
    %10552 = vperm.xlu0 %10551, %v10025
    %v10553 = vpop.permute.xlu0 %10552
    %10554 = vset.pattern.permute.xlu0 0
    %10555 = vperm.xlu0 %10554, %v10027
    %v10556 = vpop.permute.xlu0 %10555
    %10557 = vset.pattern.permute.xlu0 0
    %10558 = vperm.xlu0 %10557, %v10029
    %v10559 = vpop.permute.xlu0 %10558
    %10560 = vset.pattern.permute.xlu0 0
    %10561 = vperm.xlu0 %10560, %v10031
    %v10562 = vpop.permute.xlu0 %10561
    %10563 = vset.pattern.permute.xlu0 0
    %10564 = vperm.xlu0 %10563, %v10033
    %v10565 = vpop.permute.xlu0 %10564
    %10566 = vset.pattern.permute.xlu0 0
    %10567 = vperm.xlu0 %10566, %v10035
    %v10568 = vpop.permute.xlu0 %10567
    %10569 = vset.pattern.permute.xlu0 0
    %10570 = vperm.xlu0 %10569, %v10037
    %v10571 = vpop.permute.xlu0 %10570
    %10572 = vset.pattern.permute.xlu0 0
    %10573 = vperm.xlu0 %10572, %v10039
    %v10574 = vpop.permute.xlu0 %10573
    %10575 = vset.pattern.permute.xlu0 0
    %10576 = vperm.xlu0 %10575, %v10041
    %v10577 = vpop.permute.xlu0 %10576
    %10578 = vset.pattern.permute.xlu0 0
    %10579 = vperm.xlu0 %10578, %v10043
    %v10580 = vpop.permute.xlu0 %10579
    %10581 = vset.pattern.permute.xlu0 0
    %10582 = vperm.xlu0 %10581, %v10045
    %v10583 = vpop.permute.xlu0 %10582
    %10584 = vset.pattern.permute.xlu0 0
    %10585 = vperm.xlu0 %10584, %v10047
    %v10586 = vpop.permute.xlu0 %10585
    %10587 = vset.pattern.permute.xlu0 0
    %10588 = vperm.xlu0 %10587, %v10049
    %v10589 = vpop.permute.xlu0 %10588
    %10590 = vset.pattern.permute.xlu0 0
    %10591 = vperm.xlu0 %10590, %v10051
    %v10592 = vpop.permute.xlu0 %10591
    %10593 = vset.pattern.permute.xlu0 0
    %10594 = vperm.xlu0 %10593, %v10053
    %v10595 = vpop.permute.xlu0 %10594
    %10596 = vset.pattern.permute.xlu0 0
    %10597 = vperm.xlu0 %10596, %v10055
    %v10598 = vpop.permute.xlu0 %10597
    %10599 = vset.pattern.permute.xlu0 0
    %10600 = vperm.xlu0 %10599, %v10057
    %v10601 = vpop.permute.xlu0 %10600
    %10602 = vset.pattern.permute.xlu0 0
    %10603 = vperm.xlu0 %10602, %v10059
    %v10604 = vpop.permute.xlu0 %10603
    %10605 = vset.pattern.permute.xlu0 0
    %10606 = vperm.xlu0 %10605, %v10061
    %v10607 = vpop.permute.xlu0 %10606
    %10608 = vset.pattern.permute.xlu0 0
    %10609 = vperm.xlu0 %10608, %v10063
    %v10610 = vpop.permute.xlu0 %10609
    %10611 = vset.pattern.permute.xlu0 0
    %10612 = vperm.xlu0 %10611, %v10065
    %v10613 = vpop.permute.xlu0 %10612
    %10614 = vset.pattern.permute.xlu0 0
    %10615 = vperm.xlu0 %10614, %v10067
    %v10616 = vpop.permute.xlu0 %10615
    %10617 = vset.pattern.permute.xlu0 0
    %10618 = vperm.xlu0 %10617, %v10069
    %v10619 = vpop.permute.xlu0 %10618
    %10620 = vset.pattern.permute.xlu0 0
    %10621 = vperm.xlu0 %10620, %v10071
    %v10622 = vpop.permute.xlu0 %10621
    %10623 = vset.pattern.permute.xlu0 0
    %10624 = vperm.xlu0 %10623, %v10073
    %v10625 = vpop.permute.xlu0 %10624
    %10626 = vset.pattern.permute.xlu0 0
    %10627 = vperm.xlu0 %10626, %v10075
    %v10628 = vpop.permute.xlu0 %10627
    %10629 = vset.pattern.permute.xlu0 0
    %10630 = vperm.xlu0 %10629, %v10077
    %v10631 = vpop.permute.xlu0 %10630
    %10632 = vset.pattern.permute.xlu0 0
    %10633 = vperm.xlu0 %10632, %v10079
    %v10634 = vpop.permute.xlu0 %10633
    %10635 = vset.pattern.permute.xlu0 0
    %10636 = vperm.xlu0 %10635, %v10081
    %v10637 = vpop.permute.xlu0 %10636
    %10638 = vset.pattern.permute.xlu0 0
    %10639 = vperm.xlu0 %10638, %v10083
    %v10640 = vpop.permute.xlu0 %10639
    %10641 = vset.pattern.permute.xlu0 0
    %10642 = vperm.xlu0 %10641, %v10085
    %v10643 = vpop.permute.xlu0 %10642
    %10644 = vset.pattern.permute.xlu0 0
    %10645 = vperm.xlu0 %10644, %v10087
    %v10646 = vpop.permute.xlu0 %10645
    %10647 = vset.pattern.permute.xlu0 0
    %10648 = vperm.xlu0 %10647, %v10089
    %v10649 = vpop.permute.xlu0 %10648
    %10650 = vset.pattern.permute.xlu0 0
    %10651 = vperm.xlu0 %10650, %v10091
    %v10652 = vpop.permute.xlu0 %10651
    %10653 = vset.pattern.permute.xlu0 0
    %10654 = vperm.xlu0 %10653, %v10093
    %v10655 = vpop.permute.xlu0 %10654
    %10656 = vset.pattern.permute.xlu0 0
    %10657 = vperm.xlu0 %10656, %v10095
    %v10658 = vpop.permute.xlu0 %10657
    %10659 = vset.pattern.permute.xlu0 0
    %10660 = vperm.xlu0 %10659, %v10097
    %v10661 = vpop.permute.xlu0 %10660
    %10662 = vset.pattern.permute.xlu0 0
    %10663 = vperm.xlu0 %10662, %v10099
    %v10664 = vpop.permute.xlu0 %10663
    %10665 = vset.pattern.permute.xlu0 0
    %10666 = vperm.xlu0 %10665, %v10101
    %v10667 = vpop.permute.xlu0 %10666
    %10668 = vset.pattern.permute.xlu0 0
    %10669 = vperm.xlu0 %10668, %v10103
    %v10670 = vpop.permute.xlu0 %10669
    %10671 = vset.pattern.permute.xlu0 0
    %10672 = vperm.xlu0 %10671, %v10105
    %v10673 = vpop.permute.xlu0 %10672
    %10674 = vset.pattern.permute.xlu0 0
    %10675 = vperm.xlu0 %10674, %v10107
    %v10676 = vpop.permute.xlu0 %10675
    %10677 = vset.pattern.permute.xlu0 0
    %10678 = vperm.xlu0 %10677, %v10109
    %v10679 = vpop.permute.xlu0 %10678
    %10680 = vset.pattern.permute.xlu0 0
    %10681 = vperm.xlu0 %10680, %v10111
    %v10682 = vpop.permute.xlu0 %10681
    %10683 = vset.pattern.permute.xlu0 0
    %10684 = vperm.xlu0 %10683, %v10113
    %v10685 = vpop.permute.xlu0 %10684
    %10686 = vset.pattern.permute.xlu0 0
    %10687 = vperm.xlu0 %10686, %v10115
    %v10688 = vpop.permute.xlu0 %10687
    %10689 = vset.pattern.permute.xlu0 0
    %10690 = vperm.xlu0 %10689, %v10117
    %v10691 = vpop.permute.xlu0 %10690
    %10692 = vset.pattern.permute.xlu0 0
    %10693 = vperm.xlu0 %10692, %v10119
    %v10694 = vpop.permute.xlu0 %10693
    %10695 = vset.pattern.permute.xlu0 0
    %10696 = vperm.xlu0 %10695, %v10121
    %v10697 = vpop.permute.xlu0 %10696
    %v10698 = vperm.slane %v10268, %v3239
    %v10699 = vperm.slane %v10271, %v3241
    %v10700 = vsel %vm3243, %v10699, %v10698
    %v10701 = vperm.slane %v10274, %v3245
    %v10702 = vsel %vm3247, %v10701, %v10700
    %v10703 = vperm.slane %v10277, %v3239
    %v10704 = vperm.slane %v10280, %v3241
    %v10705 = vsel %vm3243, %v10704, %v10703
    %v10706 = vperm.slane %v10283, %v3245
    %v10707 = vsel %vm3247, %v10706, %v10705
    %v10708 = vperm.slane %v10286, %v3239
    %v10709 = vperm.slane %v10289, %v3241
    %v10710 = vsel %vm3243, %v10709, %v10708
    %v10711 = vperm.slane %v10292, %v3245
    %v10712 = vsel %vm3247, %v10711, %v10710
    %v10713 = vperm.slane %v10295, %v3239
    %v10714 = vperm.slane %v10298, %v3241
    %v10715 = vsel %vm3243, %v10714, %v10713
    %v10716 = vperm.slane %v10301, %v3245
    %v10717 = vsel %vm3247, %v10716, %v10715
    %v10718 = vperm.slane %v10304, %v3239
    %v10719 = vperm.slane %v10307, %v3241
    %v10720 = vsel %vm3243, %v10719, %v10718
    %v10721 = vperm.slane %v10310, %v3245
    %v10722 = vsel %vm3247, %v10721, %v10720
    %v10723 = vperm.slane %v10313, %v3239
    %v10724 = vperm.slane %v10316, %v3241
    %v10725 = vsel %vm3243, %v10724, %v10723
    %v10726 = vperm.slane %v10319, %v3245
    %v10727 = vsel %vm3247, %v10726, %v10725
    %v10728 = vperm.slane %v10322, %v3239
    %v10729 = vperm.slane %v10325, %v3241
    %v10730 = vsel %vm3243, %v10729, %v10728
    %v10731 = vperm.slane %v10328, %v3245
    %v10732 = vsel %vm3247, %v10731, %v10730
    %v10733 = vperm.slane %v10331, %v3239
    %v10734 = vperm.slane %v10334, %v3241
    %v10735 = vsel %vm3243, %v10734, %v10733
    %v10736 = vperm.slane %v10337, %v3245
    %v10737 = vsel %vm3247, %v10736, %v10735
    %v10738 = vperm.slane %v10340, %v3239
    %v10739 = vperm.slane %v10343, %v3241
    %v10740 = vsel %vm3243, %v10739, %v10738
    %v10741 = vperm.slane %v10346, %v3245
    %v10742 = vsel %vm3247, %v10741, %v10740
    %v10743 = vperm.slane %v10349, %v3239
    %v10744 = vperm.slane %v10352, %v3241
    %v10745 = vsel %vm3243, %v10744, %v10743
    %v10746 = vperm.slane %v10355, %v3245
    %v10747 = vsel %vm3247, %v10746, %v10745
    %v10748 = vperm.slane %v10358, %v3239
    %v10749 = vperm.slane %v10361, %v3241
    %v10750 = vsel %vm3243, %v10749, %v10748
    %v10751 = vperm.slane %v10364, %v3245
    %v10752 = vsel %vm3247, %v10751, %v10750
    %v10753 = vperm.slane %v10367, %v3239
    %v10754 = vperm.slane %v10370, %v3241
    %v10755 = vsel %vm3243, %v10754, %v10753
    %v10756 = vperm.slane %v10373, %v3245
    %v10757 = vsel %vm3247, %v10756, %v10755
    %v10758 = vperm.slane %v10376, %v3239
    %v10759 = vperm.slane %v10379, %v3241
    %v10760 = vsel %vm3243, %v10759, %v10758
    %v10761 = vperm.slane %v10382, %v3245
    %v10762 = vsel %vm3247, %v10761, %v10760
    %v10763 = vperm.slane %v10385, %v3239
    %v10764 = vperm.slane %v10388, %v3241
    %v10765 = vsel %vm3243, %v10764, %v10763
    %v10766 = vperm.slane %v10391, %v3245
    %v10767 = vsel %vm3247, %v10766, %v10765
    %v10768 = vperm.slane %v10394, %v3239
    %v10769 = vperm.slane %v10397, %v3241
    %v10770 = vsel %vm3243, %v10769, %v10768
    %v10771 = vperm.slane %v10400, %v3245
    %v10772 = vsel %vm3247, %v10771, %v10770
    %v10773 = vperm.slane %v10403, %v3239
    %v10774 = vperm.slane %v10406, %v3241
    %v10775 = vsel %vm3243, %v10774, %v10773
    %v10776 = vperm.slane %v10409, %v3245
    %v10777 = vsel %vm3247, %v10776, %v10775
    %v10778 = vperm.slane %v10412, %v3239
    %v10779 = vperm.slane %v10415, %v3241
    %v10780 = vsel %vm3243, %v10779, %v10778
    %v10781 = vperm.slane %v10418, %v3245
    %v10782 = vsel %vm3247, %v10781, %v10780
    %v10783 = vperm.slane %v10421, %v3239
    %v10784 = vperm.slane %v10424, %v3241
    %v10785 = vsel %vm3243, %v10784, %v10783
    %v10786 = vperm.slane %v10427, %v3245
    %v10787 = vsel %vm3247, %v10786, %v10785
    %v10788 = vperm.slane %v10430, %v3239
    %v10789 = vperm.slane %v10433, %v3241
    %v10790 = vsel %vm3243, %v10789, %v10788
    %v10791 = vperm.slane %v10436, %v3245
    %v10792 = vsel %vm3247, %v10791, %v10790
    %v10793 = vperm.slane %v10439, %v3239
    %v10794 = vperm.slane %v10442, %v3241
    %v10795 = vsel %vm3243, %v10794, %v10793
    %v10796 = vperm.slane %v10445, %v3245
    %v10797 = vsel %vm3247, %v10796, %v10795
    %v10798 = vperm.slane %v10448, %v3239
    %v10799 = vperm.slane %v10451, %v3241
    %v10800 = vsel %vm3243, %v10799, %v10798
    %v10801 = vperm.slane %v10454, %v3245
    %v10802 = vsel %vm3247, %v10801, %v10800
    %v10803 = vperm.slane %v10457, %v3239
    %v10804 = vperm.slane %v10460, %v3241
    %v10805 = vsel %vm3243, %v10804, %v10803
    %v10806 = vperm.slane %v10463, %v3245
    %v10807 = vsel %vm3247, %v10806, %v10805
    %v10808 = vperm.slane %v10466, %v3239
    %v10809 = vperm.slane %v10469, %v3241
    %v10810 = vsel %vm3243, %v10809, %v10808
    %v10811 = vperm.slane %v10472, %v3245
    %v10812 = vsel %vm3247, %v10811, %v10810
    %v10813 = vperm.slane %v10475, %v3239
    %v10814 = vperm.slane %v10478, %v3241
    %v10815 = vsel %vm3243, %v10814, %v10813
    %v10816 = vperm.slane %v10481, %v3245
    %v10817 = vsel %vm3247, %v10816, %v10815
    %v10818 = vperm.slane %v10484, %v3239
    %v10819 = vperm.slane %v10487, %v3241
    %v10820 = vsel %vm3243, %v10819, %v10818
    %v10821 = vperm.slane %v10490, %v3245
    %v10822 = vsel %vm3247, %v10821, %v10820
    %v10823 = vperm.slane %v10493, %v3239
    %v10824 = vperm.slane %v10496, %v3241
    %v10825 = vsel %vm3243, %v10824, %v10823
    %v10826 = vperm.slane %v10499, %v3245
    %v10827 = vsel %vm3247, %v10826, %v10825
    %v10828 = vperm.slane %v10502, %v3239
    %v10829 = vperm.slane %v10505, %v3241
    %v10830 = vsel %vm3243, %v10829, %v10828
    %v10831 = vperm.slane %v10508, %v3245
    %v10832 = vsel %vm3247, %v10831, %v10830
    %v10833 = vperm.slane %v10511, %v3239
    %v10834 = vperm.slane %v10514, %v3241
    %v10835 = vsel %vm3243, %v10834, %v10833
    %v10836 = vperm.slane %v10517, %v3245
    %v10837 = vsel %vm3247, %v10836, %v10835
    %v10838 = vperm.slane %v10520, %v3239
    %v10839 = vperm.slane %v10523, %v3241
    %v10840 = vsel %vm3243, %v10839, %v10838
    %v10841 = vperm.slane %v10526, %v3245
    %v10842 = vsel %vm3247, %v10841, %v10840
    %v10843 = vperm.slane %v10529, %v3239
    %v10844 = vperm.slane %v10532, %v3241
    %v10845 = vsel %vm3243, %v10844, %v10843
    %v10846 = vperm.slane %v10535, %v3245
    %v10847 = vsel %vm3247, %v10846, %v10845
    %v10848 = vperm.slane %v10538, %v3239
    %v10849 = vperm.slane %v10541, %v3241
    %v10850 = vsel %vm3243, %v10849, %v10848
    %v10851 = vperm.slane %v10544, %v3245
    %v10852 = vsel %vm3247, %v10851, %v10850
    %v10853 = vperm.slane %v10547, %v3239
    %v10854 = vperm.slane %v10550, %v3241
    %v10855 = vsel %vm3243, %v10854, %v10853
    %v10856 = vperm.slane %v10553, %v3245
    %v10857 = vsel %vm3247, %v10856, %v10855
    %v10858 = vperm.slane %v10556, %v3239
    %v10859 = vperm.slane %v10559, %v3241
    %v10860 = vsel %vm3243, %v10859, %v10858
    %v10861 = vperm.slane %v10562, %v3245
    %v10862 = vsel %vm3247, %v10861, %v10860
    %v10863 = vperm.slane %v10565, %v3239
    %v10864 = vperm.slane %v10568, %v3241
    %v10865 = vsel %vm3243, %v10864, %v10863
    %v10866 = vperm.slane %v10571, %v3245
    %v10867 = vsel %vm3247, %v10866, %v10865
    %v10868 = vperm.slane %v10574, %v3239
    %v10869 = vperm.slane %v10577, %v3241
    %v10870 = vsel %vm3243, %v10869, %v10868
    %v10871 = vperm.slane %v10580, %v3245
    %v10872 = vsel %vm3247, %v10871, %v10870
    %v10873 = vperm.slane %v10583, %v3239
    %v10874 = vperm.slane %v10586, %v3241
    %v10875 = vsel %vm3243, %v10874, %v10873
    %v10876 = vperm.slane %v10589, %v3245
    %v10877 = vsel %vm3247, %v10876, %v10875
    %v10878 = vperm.slane %v10592, %v3239
    %v10879 = vperm.slane %v10595, %v3241
    %v10880 = vsel %vm3243, %v10879, %v10878
    %v10881 = vperm.slane %v10598, %v3245
    %v10882 = vsel %vm3247, %v10881, %v10880
    %v10883 = vperm.slane %v10601, %v3239
    %v10884 = vperm.slane %v10604, %v3241
    %v10885 = vsel %vm3243, %v10884, %v10883
    %v10886 = vperm.slane %v10607, %v3245
    %v10887 = vsel %vm3247, %v10886, %v10885
    %v10888 = vperm.slane %v10610, %v3239
    %v10889 = vperm.slane %v10613, %v3241
    %v10890 = vsel %vm3243, %v10889, %v10888
    %v10891 = vperm.slane %v10616, %v3245
    %v10892 = vsel %vm3247, %v10891, %v10890
    %v10893 = vperm.slane %v10619, %v3239
    %v10894 = vperm.slane %v10622, %v3241
    %v10895 = vsel %vm3243, %v10894, %v10893
    %v10896 = vperm.slane %v10625, %v3245
    %v10897 = vsel %vm3247, %v10896, %v10895
    %v10898 = vperm.slane %v10628, %v3239
    %v10899 = vperm.slane %v10631, %v3241
    %v10900 = vsel %vm3243, %v10899, %v10898
    %v10901 = vperm.slane %v10634, %v3245
    %v10902 = vsel %vm3247, %v10901, %v10900
    %v10903 = vperm.slane %v10637, %v3239
    %v10904 = vperm.slane %v10640, %v3241
    %v10905 = vsel %vm3243, %v10904, %v10903
    %v10906 = vperm.slane %v10643, %v3245
    %v10907 = vsel %vm3247, %v10906, %v10905
    %v10908 = vperm.slane %v10646, %v3239
    %v10909 = vperm.slane %v10649, %v3241
    %v10910 = vsel %vm3243, %v10909, %v10908
    %v10911 = vperm.slane %v10652, %v3245
    %v10912 = vsel %vm3247, %v10911, %v10910
    %v10913 = vperm.slane %v10655, %v3239
    %v10914 = vperm.slane %v10658, %v3241
    %v10915 = vsel %vm3243, %v10914, %v10913
    %v10916 = vperm.slane %v10661, %v3245
    %v10917 = vsel %vm3247, %v10916, %v10915
    %v10918 = vperm.slane %v10664, %v3239
    %v10919 = vperm.slane %v10667, %v3241
    %v10920 = vsel %vm3243, %v10919, %v10918
    %v10921 = vperm.slane %v10670, %v3245
    %v10922 = vsel %vm3247, %v10921, %v10920
    %v10923 = vperm.slane %v10673, %v3239
    %v10924 = vperm.slane %v10676, %v3241
    %v10925 = vsel %vm3243, %v10924, %v10923
    %v10926 = vperm.slane %v10679, %v3245
    %v10927 = vsel %vm3247, %v10926, %v10925
    %v10928 = vperm.slane %v10682, %v3239
    %v10929 = vperm.slane %v10685, %v3241
    %v10930 = vsel %vm3243, %v10929, %v10928
    %v10931 = vperm.slane %v10688, %v3245
    %v10932 = vsel %vm3247, %v10931, %v10930
    %v10933 = vperm.slane %v10691, %v3239
    %v10934 = vperm.slane %v10694, %v3241
    %v10935 = vsel %vm3243, %v10934, %v10933
    %v10936 = vperm.slane %v10697, %v3245
    %v10937 = vsel %vm3247, %v10936, %v10935
    %v10938 = vsel %vm3484, %v10707, %v10702
    %v10939 = vsel %vm3486, %v10712, %v10938
    %v10940 = vsel %vm3488, %v10717, %v10939
    %v10941 = vsel %vm3490, %v10722, %v10940
    %v10942 = vsel %vm3492, %v10727, %v10941
    %v10943 = vsel %vm3494, %v10732, %v10942
    %v10944 = vsel %vm3496, %v10737, %v10943
    %v10945 = vsel %vm3484, %v10747, %v10742
    %v10946 = vsel %vm3486, %v10752, %v10945
    %v10947 = vsel %vm3488, %v10757, %v10946
    %v10948 = vsel %vm3490, %v10762, %v10947
    %v10949 = vsel %vm3492, %v10767, %v10948
    %v10950 = vsel %vm3494, %v10772, %v10949
    %v10951 = vsel %vm3496, %v10777, %v10950
    %v10952 = vsel %vm3484, %v10787, %v10782
    %v10953 = vsel %vm3486, %v10792, %v10952
    %v10954 = vsel %vm3488, %v10797, %v10953
    %v10955 = vsel %vm3490, %v10802, %v10954
    %v10956 = vsel %vm3492, %v10807, %v10955
    %v10957 = vsel %vm3494, %v10812, %v10956
    %v10958 = vsel %vm3496, %v10817, %v10957
    %v10959 = vsel %vm3484, %v10827, %v10822
    %v10960 = vsel %vm3486, %v10832, %v10959
    %v10961 = vsel %vm3488, %v10837, %v10960
    %v10962 = vsel %vm3490, %v10842, %v10961
    %v10963 = vsel %vm3492, %v10847, %v10962
    %v10964 = vsel %vm3494, %v10852, %v10963
    %v10965 = vsel %vm3496, %v10857, %v10964
    %v10966 = vsel %vm3484, %v10867, %v10862
    %v10967 = vsel %vm3486, %v10872, %v10966
    %v10968 = vsel %vm3488, %v10877, %v10967
    %v10969 = vsel %vm3490, %v10882, %v10968
    %v10970 = vsel %vm3492, %v10887, %v10969
    %v10971 = vsel %vm3494, %v10892, %v10970
    %v10972 = vsel %vm3496, %v10897, %v10971
    %v10973 = vsel %vm3484, %v10907, %v10902
    %v10974 = vsel %vm3486, %v10912, %v10973
    %v10975 = vsel %vm3488, %v10917, %v10974
    %v10976 = vsel %vm3490, %v10922, %v10975
    %v10977 = vsel %vm3492, %v10927, %v10976
    %v10978 = vsel %vm3494, %v10932, %v10977
    %v10979 = vsel %vm3496, %v10937, %v10978
    %v10986 = vsel %vm3539, %v10944, 0.0
    %10987 = vadd.xlane.f32.xlu0 %v10986
    %v10988 = vpop.xlane.xlu0 %10987
    %v10989 = vsel %vm3539, %v10951, 0.0
    %10990 = vadd.xlane.f32.xlu0 %v10989
    %v10991 = vpop.xlane.xlu0 %10990
    %v10992 = vsel %vm3539, %v10958, 0.0
    %10993 = vadd.xlane.f32.xlu0 %v10992
    %v10994 = vpop.xlane.xlu0 %10993
    %v10995 = vsel %vm3539, %v10965, 0.0
    %10996 = vadd.xlane.f32.xlu0 %v10995
    %v10997 = vpop.xlane.xlu0 %10996
    %v10998 = vsel %vm3539, %v10972, 0.0
    %10999 = vadd.xlane.f32.xlu0 %v10998
    %v11000 = vpop.xlane.xlu0 %10999
    %v11001 = vsel %vm3539, %v10979, 0.0
    %11002 = vadd.xlane.f32.xlu0 %v11001
    %v11003 = vpop.xlane.xlu0 %11002
    %v11004 = vrcp.pop %v10988
    %v11005 = vrcp.pop %v10991
    %v11006 = vrcp.pop %v10994
    %v11007 = vrcp.pop %v10997
    %v11008 = vrcp.pop %v11000
    %v11009 = vrcp.pop %v11003
    %v11016 = vperm.slane %v11004, 0
    %v11017 = vperm.slane %v11004, 1
    %v11018 = vperm.slane %v11004, 2
    %v11019 = vperm.slane %v11004, 3
    %v11020 = vperm.slane %v11004, 4
    %v11021 = vperm.slane %v11004, 5
    %v11022 = vperm.slane %v11004, 6
    %v11023 = vperm.slane %v11004, 7
    %v11024 = vperm.slane %v11005, 0
    %v11025 = vperm.slane %v11005, 1
    %v11026 = vperm.slane %v11005, 2
    %v11027 = vperm.slane %v11005, 3
    %v11028 = vperm.slane %v11005, 4
    %v11029 = vperm.slane %v11005, 5
    %v11030 = vperm.slane %v11005, 6
    %v11031 = vperm.slane %v11005, 7
    %v11032 = vperm.slane %v11006, 0
    %v11033 = vperm.slane %v11006, 1
    %v11034 = vperm.slane %v11006, 2
    %v11035 = vperm.slane %v11006, 3
    %v11036 = vperm.slane %v11006, 4
    %v11037 = vperm.slane %v11006, 5
    %v11038 = vperm.slane %v11006, 6
    %v11039 = vperm.slane %v11006, 7
    %v11040 = vperm.slane %v11007, 0
    %v11041 = vperm.slane %v11007, 1
    %v11042 = vperm.slane %v11007, 2
    %v11043 = vperm.slane %v11007, 3
    %v11044 = vperm.slane %v11007, 4
    %v11045 = vperm.slane %v11007, 5
    %v11046 = vperm.slane %v11007, 6
    %v11047 = vperm.slane %v11007, 7
    %v11048 = vperm.slane %v11008, 0
    %v11049 = vperm.slane %v11008, 1
    %v11050 = vperm.slane %v11008, 2
    %v11051 = vperm.slane %v11008, 3
    %v11052 = vperm.slane %v11008, 4
    %v11053 = vperm.slane %v11008, 5
    %v11054 = vperm.slane %v11008, 6
    %v11055 = vperm.slane %v11008, 7
    %v11056 = vperm.slane %v11009, 0
    %v11057 = vperm.slane %v11009, 1
    %v11058 = vperm.slane %v11009, 2
    %v11059 = vperm.slane %v11009, 3
    %v11060 = vperm.slane %v11009, 4
    %v11061 = vperm.slane %v11009, 5
    %v11062 = vperm.slane %v11009, 6
    %v11063 = vperm.slane %v11009, 7
    %v11112 = vmul.f32 %v9835, %v11016
    %v11113 = vmul.f32 %v9837, %v11016
    %v11114 = vmul.f32 %v9839, %v11016
    %v11115 = vmul.f32 %v9841, %v11017
    %v11116 = vmul.f32 %v9843, %v11017
    %v11117 = vmul.f32 %v9845, %v11017
    %v11118 = vmul.f32 %v9847, %v11018
    %v11119 = vmul.f32 %v9849, %v11018
    %v11120 = vmul.f32 %v9851, %v11018
    %v11121 = vmul.f32 %v9853, %v11019
    %v11122 = vmul.f32 %v9855, %v11019
    %v11123 = vmul.f32 %v9857, %v11019
    %v11124 = vmul.f32 %v9859, %v11020
    %v11125 = vmul.f32 %v9861, %v11020
    %v11126 = vmul.f32 %v9863, %v11020
    %v11127 = vmul.f32 %v9865, %v11021
    %v11128 = vmul.f32 %v9867, %v11021
    %v11129 = vmul.f32 %v9869, %v11021
    %v11130 = vmul.f32 %v9871, %v11022
    %v11131 = vmul.f32 %v9873, %v11022
    %v11132 = vmul.f32 %v9875, %v11022
    %v11133 = vmul.f32 %v9877, %v11023
    %v11134 = vmul.f32 %v9879, %v11023
    %v11135 = vmul.f32 %v9881, %v11023
    %v11136 = vmul.f32 %v9883, %v11024
    %v11137 = vmul.f32 %v9885, %v11024
    %v11138 = vmul.f32 %v9887, %v11024
    %v11139 = vmul.f32 %v9889, %v11025
    %v11140 = vmul.f32 %v9891, %v11025
    %v11141 = vmul.f32 %v9893, %v11025
    %v11142 = vmul.f32 %v9895, %v11026
    %v11143 = vmul.f32 %v9897, %v11026
    %v11144 = vmul.f32 %v9899, %v11026
    %v11145 = vmul.f32 %v9901, %v11027
    %v11146 = vmul.f32 %v9903, %v11027
    %v11147 = vmul.f32 %v9905, %v11027
    %v11148 = vmul.f32 %v9907, %v11028
    %v11149 = vmul.f32 %v9909, %v11028
    %v11150 = vmul.f32 %v9911, %v11028
    %v11151 = vmul.f32 %v9913, %v11029
    %v11152 = vmul.f32 %v9915, %v11029
    %v11153 = vmul.f32 %v9917, %v11029
    %v11154 = vmul.f32 %v9919, %v11030
    %v11155 = vmul.f32 %v9921, %v11030
    %v11156 = vmul.f32 %v9923, %v11030
    %v11157 = vmul.f32 %v9925, %v11031
    %v11158 = vmul.f32 %v9927, %v11031
    %v11159 = vmul.f32 %v9929, %v11031
    %v11160 = vmul.f32 %v9931, %v11032
    %v11161 = vmul.f32 %v9933, %v11032
    %v11162 = vmul.f32 %v9935, %v11032
    %v11163 = vmul.f32 %v9937, %v11033
    %v11164 = vmul.f32 %v9939, %v11033
    %v11165 = vmul.f32 %v9941, %v11033
    %v11166 = vmul.f32 %v9943, %v11034
    %v11167 = vmul.f32 %v9945, %v11034
    %v11168 = vmul.f32 %v9947, %v11034
    %v11169 = vmul.f32 %v9949, %v11035
    %v11170 = vmul.f32 %v9951, %v11035
    %v11171 = vmul.f32 %v9953, %v11035
    %v11172 = vmul.f32 %v9955, %v11036
    %v11173 = vmul.f32 %v9957, %v11036
    %v11174 = vmul.f32 %v9959, %v11036
    %v11175 = vmul.f32 %v9961, %v11037
    %v11176 = vmul.f32 %v9963, %v11037
    %v11177 = vmul.f32 %v9965, %v11037
    %v11178 = vmul.f32 %v9967, %v11038
    %v11179 = vmul.f32 %v9969, %v11038
    %v11180 = vmul.f32 %v9971, %v11038
    %v11181 = vmul.f32 %v9973, %v11039
    %v11182 = vmul.f32 %v9975, %v11039
    %v11183 = vmul.f32 %v9977, %v11039
    %v11184 = vmul.f32 %v9979, %v11040
    %v11185 = vmul.f32 %v9981, %v11040
    %v11186 = vmul.f32 %v9983, %v11040
    %v11187 = vmul.f32 %v9985, %v11041
    %v11188 = vmul.f32 %v9987, %v11041
    %v11189 = vmul.f32 %v9989, %v11041
    %v11190 = vmul.f32 %v9991, %v11042
    %v11191 = vmul.f32 %v9993, %v11042
    %v11192 = vmul.f32 %v9995, %v11042
    %v11193 = vmul.f32 %v9997, %v11043
    %v11194 = vmul.f32 %v9999, %v11043
    %v11195 = vmul.f32 %v10001, %v11043
    %v11196 = vmul.f32 %v10003, %v11044
    %v11197 = vmul.f32 %v10005, %v11044
    %v11198 = vmul.f32 %v10007, %v11044
    %v11199 = vmul.f32 %v10009, %v11045
    %v11200 = vmul.f32 %v10011, %v11045
    %v11201 = vmul.f32 %v10013, %v11045
    %v11202 = vmul.f32 %v10015, %v11046
    %v11203 = vmul.f32 %v10017, %v11046
    %v11204 = vmul.f32 %v10019, %v11046
    %v11205 = vmul.f32 %v10021, %v11047
    %v11206 = vmul.f32 %v10023, %v11047
    %v11207 = vmul.f32 %v10025, %v11047
    %v11208 = vmul.f32 %v10027, %v11048
    %v11209 = vmul.f32 %v10029, %v11048
    %v11210 = vmul.f32 %v10031, %v11048
    %v11211 = vmul.f32 %v10033, %v11049
    %v11212 = vmul.f32 %v10035, %v11049
    %v11213 = vmul.f32 %v10037, %v11049
    %v11214 = vmul.f32 %v10039, %v11050
    %v11215 = vmul.f32 %v10041, %v11050
    %v11216 = vmul.f32 %v10043, %v11050
    %v11217 = vmul.f32 %v10045, %v11051
    %v11218 = vmul.f32 %v10047, %v11051
    %v11219 = vmul.f32 %v10049, %v11051
    %v11220 = vmul.f32 %v10051, %v11052
    %v11221 = vmul.f32 %v10053, %v11052
    %v11222 = vmul.f32 %v10055, %v11052
    %v11223 = vmul.f32 %v10057, %v11053
    %v11224 = vmul.f32 %v10059, %v11053
    %v11225 = vmul.f32 %v10061, %v11053
    %v11226 = vmul.f32 %v10063, %v11054
    %v11227 = vmul.f32 %v10065, %v11054
    %v11228 = vmul.f32 %v10067, %v11054
    %v11229 = vmul.f32 %v10069, %v11055
    %v11230 = vmul.f32 %v10071, %v11055
    %v11231 = vmul.f32 %v10073, %v11055
    %v11232 = vmul.f32 %v10075, %v11056
    %v11233 = vmul.f32 %v10077, %v11056
    %v11234 = vmul.f32 %v10079, %v11056
    %v11235 = vmul.f32 %v10081, %v11057
    %v11236 = vmul.f32 %v10083, %v11057
    %v11237 = vmul.f32 %v10085, %v11057
    %v11238 = vmul.f32 %v10087, %v11058
    %v11239 = vmul.f32 %v10089, %v11058
    %v11240 = vmul.f32 %v10091, %v11058
    %v11241 = vmul.f32 %v10093, %v11059
    %v11242 = vmul.f32 %v10095, %v11059
    %v11243 = vmul.f32 %v10097, %v11059
    %v11244 = vmul.f32 %v10099, %v11060
    %v11245 = vmul.f32 %v10101, %v11060
    %v11246 = vmul.f32 %v10103, %v11060
    %v11247 = vmul.f32 %v10105, %v11061
    %v11248 = vmul.f32 %v10107, %v11061
    %v11249 = vmul.f32 %v10109, %v11061
    %v11250 = vmul.f32 %v10111, %v11062
    %v11251 = vmul.f32 %v10113, %v11062
    %v11252 = vmul.f32 %v10115, %v11062
    %v11253 = vmul.f32 %v10117, %v11063
    %v11254 = vmul.f32 %v10119, %v11063
    %v11255 = vmul.f32 %v10121, %v11063
    %v11256 = vpack.c.bf16 %v11112, %v11112
    %v11257 = vpack.c.bf16 %v11113, %v11113
    %v11258 = vpack.c.bf16 %v11114, %v11114
    %v11259 = vpack.c.bf16 %v11115, %v11115
    %v11260 = vpack.c.bf16 %v11116, %v11116
    %v11261 = vpack.c.bf16 %v11117, %v11117
    %v11262 = vpack.c.bf16 %v11118, %v11118
    %v11263 = vpack.c.bf16 %v11119, %v11119
    %v11264 = vpack.c.bf16 %v11120, %v11120
    %v11265 = vpack.c.bf16 %v11121, %v11121
    %v11266 = vpack.c.bf16 %v11122, %v11122
    %v11267 = vpack.c.bf16 %v11123, %v11123
    %v11268 = vpack.c.bf16 %v11124, %v11124
    %v11269 = vpack.c.bf16 %v11125, %v11125
    %v11270 = vpack.c.bf16 %v11126, %v11126
    %v11271 = vpack.c.bf16 %v11127, %v11127
    %v11272 = vpack.c.bf16 %v11128, %v11128
    %v11273 = vpack.c.bf16 %v11129, %v11129
    %v11274 = vpack.c.bf16 %v11130, %v11130
    %v11275 = vpack.c.bf16 %v11131, %v11131
    %v11276 = vpack.c.bf16 %v11132, %v11132
    %v11277 = vpack.c.bf16 %v11133, %v11133
    %v11278 = vpack.c.bf16 %v11134, %v11134
    %v11279 = vpack.c.bf16 %v11135, %v11135
    %v11280 = vpack.c.bf16 %v11136, %v11136
    %v11281 = vpack.c.bf16 %v11137, %v11137
    %v11282 = vpack.c.bf16 %v11138, %v11138
    %v11283 = vpack.c.bf16 %v11139, %v11139
    %v11284 = vpack.c.bf16 %v11140, %v11140
    %v11285 = vpack.c.bf16 %v11141, %v11141
    %v11286 = vpack.c.bf16 %v11142, %v11142
    %v11287 = vpack.c.bf16 %v11143, %v11143
    %v11288 = vpack.c.bf16 %v11144, %v11144
    %v11289 = vpack.c.bf16 %v11145, %v11145
    %v11290 = vpack.c.bf16 %v11146, %v11146
    %v11291 = vpack.c.bf16 %v11147, %v11147
    %v11292 = vpack.c.bf16 %v11148, %v11148
    %v11293 = vpack.c.bf16 %v11149, %v11149
    %v11294 = vpack.c.bf16 %v11150, %v11150
    %v11295 = vpack.c.bf16 %v11151, %v11151
    %v11296 = vpack.c.bf16 %v11152, %v11152
    %v11297 = vpack.c.bf16 %v11153, %v11153
    %v11298 = vpack.c.bf16 %v11154, %v11154
    %v11299 = vpack.c.bf16 %v11155, %v11155
    %v11300 = vpack.c.bf16 %v11156, %v11156
    %v11301 = vpack.c.bf16 %v11157, %v11157
    %v11302 = vpack.c.bf16 %v11158, %v11158
    %v11303 = vpack.c.bf16 %v11159, %v11159
    %v11304 = vpack.c.bf16 %v11160, %v11160
    %v11305 = vpack.c.bf16 %v11161, %v11161
    %v11306 = vpack.c.bf16 %v11162, %v11162
    %v11307 = vpack.c.bf16 %v11163, %v11163
    %v11308 = vpack.c.bf16 %v11164, %v11164
    %v11309 = vpack.c.bf16 %v11165, %v11165
    %v11310 = vpack.c.bf16 %v11166, %v11166
    %v11311 = vpack.c.bf16 %v11167, %v11167
    %v11312 = vpack.c.bf16 %v11168, %v11168
    %v11313 = vpack.c.bf16 %v11169, %v11169
    %v11314 = vpack.c.bf16 %v11170, %v11170
    %v11315 = vpack.c.bf16 %v11171, %v11171
    %v11316 = vpack.c.bf16 %v11172, %v11172
    %v11317 = vpack.c.bf16 %v11173, %v11173
    %v11318 = vpack.c.bf16 %v11174, %v11174
    %v11319 = vpack.c.bf16 %v11175, %v11175
    %v11320 = vpack.c.bf16 %v11176, %v11176
    %v11321 = vpack.c.bf16 %v11177, %v11177
    %v11322 = vpack.c.bf16 %v11178, %v11178
    %v11323 = vpack.c.bf16 %v11179, %v11179
    %v11324 = vpack.c.bf16 %v11180, %v11180
    %v11325 = vpack.c.bf16 %v11181, %v11181
    %v11326 = vpack.c.bf16 %v11182, %v11182
    %v11327 = vpack.c.bf16 %v11183, %v11183
    %v11328 = vpack.c.bf16 %v11184, %v11184
    %v11329 = vpack.c.bf16 %v11185, %v11185
    %v11330 = vpack.c.bf16 %v11186, %v11186
    %v11331 = vpack.c.bf16 %v11187, %v11187
    %v11332 = vpack.c.bf16 %v11188, %v11188
    %v11333 = vpack.c.bf16 %v11189, %v11189
    %v11334 = vpack.c.bf16 %v11190, %v11190
    %v11335 = vpack.c.bf16 %v11191, %v11191
    %v11336 = vpack.c.bf16 %v11192, %v11192
    %v11337 = vpack.c.bf16 %v11193, %v11193
    %v11338 = vpack.c.bf16 %v11194, %v11194
    %v11339 = vpack.c.bf16 %v11195, %v11195
    %v11340 = vpack.c.bf16 %v11196, %v11196
    %v11341 = vpack.c.bf16 %v11197, %v11197
    %v11342 = vpack.c.bf16 %v11198, %v11198
    %v11343 = vpack.c.bf16 %v11199, %v11199
    %v11344 = vpack.c.bf16 %v11200, %v11200
    %v11345 = vpack.c.bf16 %v11201, %v11201
    %v11346 = vpack.c.bf16 %v11202, %v11202
    %v11347 = vpack.c.bf16 %v11203, %v11203
    %v11348 = vpack.c.bf16 %v11204, %v11204
    %v11349 = vpack.c.bf16 %v11205, %v11205
    %v11350 = vpack.c.bf16 %v11206, %v11206
    %v11351 = vpack.c.bf16 %v11207, %v11207
    %v11352 = vpack.c.bf16 %v11208, %v11208
    %v11353 = vpack.c.bf16 %v11209, %v11209
    %v11354 = vpack.c.bf16 %v11210, %v11210
    %v11355 = vpack.c.bf16 %v11211, %v11211
    %v11356 = vpack.c.bf16 %v11212, %v11212
    %v11357 = vpack.c.bf16 %v11213, %v11213
    %v11358 = vpack.c.bf16 %v11214, %v11214
    %v11359 = vpack.c.bf16 %v11215, %v11215
    %v11360 = vpack.c.bf16 %v11216, %v11216
    %v11361 = vpack.c.bf16 %v11217, %v11217
    %v11362 = vpack.c.bf16 %v11218, %v11218
    %v11363 = vpack.c.bf16 %v11219, %v11219
    %v11364 = vpack.c.bf16 %v11220, %v11220
    %v11365 = vpack.c.bf16 %v11221, %v11221
    %v11366 = vpack.c.bf16 %v11222, %v11222
    %v11367 = vpack.c.bf16 %v11223, %v11223
    %v11368 = vpack.c.bf16 %v11224, %v11224
    %v11369 = vpack.c.bf16 %v11225, %v11225
    %v11370 = vpack.c.bf16 %v11226, %v11226
    %v11371 = vpack.c.bf16 %v11227, %v11227
    %v11372 = vpack.c.bf16 %v11228, %v11228
    %v11373 = vpack.c.bf16 %v11229, %v11229
    %v11374 = vpack.c.bf16 %v11230, %v11230
    %v11375 = vpack.c.bf16 %v11231, %v11231
    %v11376 = vpack.c.bf16 %v11232, %v11232
    %v11377 = vpack.c.bf16 %v11233, %v11233
    %v11378 = vpack.c.bf16 %v11234, %v11234
    %v11379 = vpack.c.bf16 %v11235, %v11235
    %v11380 = vpack.c.bf16 %v11236, %v11236
    %v11381 = vpack.c.bf16 %v11237, %v11237
    %v11382 = vpack.c.bf16 %v11238, %v11238
    %v11383 = vpack.c.bf16 %v11239, %v11239
    %v11384 = vpack.c.bf16 %v11240, %v11240
    %v11385 = vpack.c.bf16 %v11241, %v11241
    %v11386 = vpack.c.bf16 %v11242, %v11242
    %v11387 = vpack.c.bf16 %v11243, %v11243
    %v11388 = vpack.c.bf16 %v11244, %v11244
    %v11389 = vpack.c.bf16 %v11245, %v11245
    %v11390 = vpack.c.bf16 %v11246, %v11246
    %v11391 = vpack.c.bf16 %v11247, %v11247
    %v11392 = vpack.c.bf16 %v11248, %v11248
    %v11393 = vpack.c.bf16 %v11249, %v11249
    %v11394 = vpack.c.bf16 %v11250, %v11250
    %v11395 = vpack.c.bf16 %v11251, %v11251
    %v11396 = vpack.c.bf16 %v11252, %v11252
    %v11397 = vpack.c.bf16 %v11253, %v11253
    %v11398 = vpack.c.bf16 %v11254, %v11254
    %v11399 = vpack.c.bf16 %v11255, %v11255
    %v11400 = vpack.c.bf16 %v6745, %v6745
    %v11401 = vpack.c.bf16 %v6747, %v6747
    %v11402 = vpack.c.bf16 %v6750, %v6750
    %v11403 = vpack.c.bf16 %v6757, %v6757
    %v11404 = vpack.c.bf16 %v6759, %v6759
    %v11405 = vpack.c.bf16 %v6761, %v6761
    %v11478 = vunpack.c.l.b16 %v11256
    %v11479 = vunpack.c.l.b16 %v11257
    %v11480 = vunpack.c.l.b16 %v11258
    %v11481 = vunpack.c.l.b16 %v11259
    %v11482 = vunpack.c.l.b16 %v11260
    %v11483 = vunpack.c.l.b16 %v11261
    %v11484 = vunpack.c.l.b16 %v11262
    %v11485 = vunpack.c.l.b16 %v11263
    %v11486 = vunpack.c.l.b16 %v11264
    %v11487 = vunpack.c.l.b16 %v11265
    %v11488 = vunpack.c.l.b16 %v11266
    %v11489 = vunpack.c.l.b16 %v11267
    %v11490 = vunpack.c.l.b16 %v11268
    %v11491 = vunpack.c.l.b16 %v11269
    %v11492 = vunpack.c.l.b16 %v11270
    %v11493 = vunpack.c.l.b16 %v11271
    %v11494 = vunpack.c.l.b16 %v11272
    %v11495 = vunpack.c.l.b16 %v11273
    %v11496 = vunpack.c.l.b16 %v11274
    %v11497 = vunpack.c.l.b16 %v11275
    %v11498 = vunpack.c.l.b16 %v11276
    %v11499 = vunpack.c.l.b16 %v11277
    %v11500 = vunpack.c.l.b16 %v11278
    %v11501 = vunpack.c.l.b16 %v11279
    %v11502 = vunpack.c.l.b16 %v11280
    %v11503 = vunpack.c.l.b16 %v11281
    %v11504 = vunpack.c.l.b16 %v11282
    %v11505 = vunpack.c.l.b16 %v11283
    %v11506 = vunpack.c.l.b16 %v11284
    %v11507 = vunpack.c.l.b16 %v11285
    %v11508 = vunpack.c.l.b16 %v11286
    %v11509 = vunpack.c.l.b16 %v11287
    %v11510 = vunpack.c.l.b16 %v11288
    %v11511 = vunpack.c.l.b16 %v11289
    %v11512 = vunpack.c.l.b16 %v11290
    %v11513 = vunpack.c.l.b16 %v11291
    %v11514 = vunpack.c.l.b16 %v11292
    %v11515 = vunpack.c.l.b16 %v11293
    %v11516 = vunpack.c.l.b16 %v11294
    %v11517 = vunpack.c.l.b16 %v11295
    %v11518 = vunpack.c.l.b16 %v11296
    %v11519 = vunpack.c.l.b16 %v11297
    %v11520 = vunpack.c.l.b16 %v11298
    %v11521 = vunpack.c.l.b16 %v11299
    %v11522 = vunpack.c.l.b16 %v11300
    %v11523 = vunpack.c.l.b16 %v11301
    %v11524 = vunpack.c.l.b16 %v11302
    %v11525 = vunpack.c.l.b16 %v11303
    %v11526 = vunpack.c.l.b16 %v11304
    %v11527 = vunpack.c.l.b16 %v11305
    %v11528 = vunpack.c.l.b16 %v11306
    %v11529 = vunpack.c.l.b16 %v11307
    %v11530 = vunpack.c.l.b16 %v11308
    %v11531 = vunpack.c.l.b16 %v11309
    %v11532 = vunpack.c.l.b16 %v11310
    %v11533 = vunpack.c.l.b16 %v11311
    %v11534 = vunpack.c.l.b16 %v11312
    %v11535 = vunpack.c.l.b16 %v11313
    %v11536 = vunpack.c.l.b16 %v11314
    %v11537 = vunpack.c.l.b16 %v11315
    %v11538 = vunpack.c.l.b16 %v11316
    %v11539 = vunpack.c.l.b16 %v11317
    %v11540 = vunpack.c.l.b16 %v11318
    %v11541 = vunpack.c.l.b16 %v11319
    %v11542 = vunpack.c.l.b16 %v11320
    %v11543 = vunpack.c.l.b16 %v11321
    %v11544 = vunpack.c.l.b16 %v11322
    %v11545 = vunpack.c.l.b16 %v11323
    %v11546 = vunpack.c.l.b16 %v11324
    %v11547 = vunpack.c.l.b16 %v11325
    %v11548 = vunpack.c.l.b16 %v11326
    %v11549 = vunpack.c.l.b16 %v11327
    %v11550 = vpack.c.b16 %v11479, %v11478
    %v11551 = vpack.c.b16 %v11480, %v11480
    %v11552 = vpack.c.b16 %v11482, %v11481
    %v11553 = vpack.c.b16 %v11483, %v11483
    %v11554 = vpack.c.b16 %v11485, %v11484
    %v11555 = vpack.c.b16 %v11486, %v11486
    %v11556 = vpack.c.b16 %v11488, %v11487
    %v11557 = vpack.c.b16 %v11489, %v11489
    %v11558 = vpack.c.b16 %v11491, %v11490
    %v11559 = vpack.c.b16 %v11492, %v11492
    %v11560 = vpack.c.b16 %v11494, %v11493
    %v11561 = vpack.c.b16 %v11495, %v11495
    %v11562 = vpack.c.b16 %v11497, %v11496
    %v11563 = vpack.c.b16 %v11498, %v11498
    %v11564 = vpack.c.b16 %v11500, %v11499
    %v11565 = vpack.c.b16 %v11501, %v11501
    %v11566 = vpack.c.b16 %v11503, %v11502
    %v11567 = vpack.c.b16 %v11504, %v11504
    %v11568 = vpack.c.b16 %v11506, %v11505
    %v11569 = vpack.c.b16 %v11507, %v11507
    %v11570 = vpack.c.b16 %v11509, %v11508
    %v11571 = vpack.c.b16 %v11510, %v11510
    %v11572 = vpack.c.b16 %v11512, %v11511
    %v11573 = vpack.c.b16 %v11513, %v11513
    %v11574 = vpack.c.b16 %v11515, %v11514
    %v11575 = vpack.c.b16 %v11516, %v11516
    %v11576 = vpack.c.b16 %v11518, %v11517
    %v11577 = vpack.c.b16 %v11519, %v11519
    %v11578 = vpack.c.b16 %v11521, %v11520
    %v11579 = vpack.c.b16 %v11522, %v11522
    %v11580 = vpack.c.b16 %v11524, %v11523
    %v11581 = vpack.c.b16 %v11525, %v11525
    %v11582 = vpack.c.b16 %v11527, %v11526
    %v11583 = vpack.c.b16 %v11528, %v11528
    %v11584 = vpack.c.b16 %v11530, %v11529
    %v11585 = vpack.c.b16 %v11531, %v11531
    %v11586 = vpack.c.b16 %v11533, %v11532
    %v11587 = vpack.c.b16 %v11534, %v11534
    %v11588 = vpack.c.b16 %v11536, %v11535
    %v11589 = vpack.c.b16 %v11537, %v11537
    %v11590 = vpack.c.b16 %v11539, %v11538
    %v11591 = vpack.c.b16 %v11540, %v11540
    %v11592 = vpack.c.b16 %v11542, %v11541
    %v11593 = vpack.c.b16 %v11543, %v11543
    %v11594 = vpack.c.b16 %v11545, %v11544
    %v11595 = vpack.c.b16 %v11546, %v11546
    %v11596 = vpack.c.b16 %v11548, %v11547
    %v11597 = vpack.c.b16 %v11549, %v11549
    %v11598 = vunpack.c.l.b16 %v11550
    %v11599 = vunpack.c.h.b16 %v11550
    %v11600 = vunpack.c.l.b16 %v11551
    %v11601 = vunpack.c.l.b16 %v11552
    %v11602 = vunpack.c.h.b16 %v11552
    %v11603 = vunpack.c.l.b16 %v11553
    %v11604 = vunpack.c.l.b16 %v11554
    %v11605 = vunpack.c.h.b16 %v11554
    %v11606 = vunpack.c.l.b16 %v11555
    %v11607 = vunpack.c.l.b16 %v11556
    %v11608 = vunpack.c.h.b16 %v11556
    %v11609 = vunpack.c.l.b16 %v11557
    %v11610 = vunpack.c.l.b16 %v11558
    %v11611 = vunpack.c.h.b16 %v11558
    %v11612 = vunpack.c.l.b16 %v11559
    %v11613 = vunpack.c.l.b16 %v11560
    %v11614 = vunpack.c.h.b16 %v11560
    %v11615 = vunpack.c.l.b16 %v11561
    %v11616 = vunpack.c.l.b16 %v11562
    %v11617 = vunpack.c.h.b16 %v11562
    %v11618 = vunpack.c.l.b16 %v11563
    %v11619 = vunpack.c.l.b16 %v11564
    %v11620 = vunpack.c.h.b16 %v11564
    %v11621 = vunpack.c.l.b16 %v11565
    %v11622 = vunpack.c.l.b16 %v11566
    %v11623 = vunpack.c.h.b16 %v11566
    %v11624 = vunpack.c.l.b16 %v11567
    %v11625 = vunpack.c.l.b16 %v11568
    %v11626 = vunpack.c.h.b16 %v11568
    %v11627 = vunpack.c.l.b16 %v11569
    %v11628 = vunpack.c.l.b16 %v11570
    %v11629 = vunpack.c.h.b16 %v11570
    %v11630 = vunpack.c.l.b16 %v11571
    %v11631 = vunpack.c.l.b16 %v11572
    %v11632 = vunpack.c.h.b16 %v11572
    %v11633 = vunpack.c.l.b16 %v11573
    %v11634 = vunpack.c.l.b16 %v11574
    %v11635 = vunpack.c.h.b16 %v11574
    %v11636 = vunpack.c.l.b16 %v11575
    %v11637 = vunpack.c.l.b16 %v11576
    %v11638 = vunpack.c.h.b16 %v11576
    %v11639 = vunpack.c.l.b16 %v11577
    %v11640 = vunpack.c.l.b16 %v11578
    %v11641 = vunpack.c.h.b16 %v11578
    %v11642 = vunpack.c.l.b16 %v11579
    %v11643 = vunpack.c.l.b16 %v11580
    %v11644 = vunpack.c.h.b16 %v11580
    %v11645 = vunpack.c.l.b16 %v11581
    %v11646 = vunpack.c.l.b16 %v11582
    %v11647 = vunpack.c.h.b16 %v11582
    %v11648 = vunpack.c.l.b16 %v11583
    %v11649 = vunpack.c.l.b16 %v11584
    %v11650 = vunpack.c.h.b16 %v11584
    %v11651 = vunpack.c.l.b16 %v11585
    %v11652 = vunpack.c.l.b16 %v11586
    %v11653 = vunpack.c.h.b16 %v11586
    %v11654 = vunpack.c.l.b16 %v11587
    %v11655 = vunpack.c.l.b16 %v11588
    %v11656 = vunpack.c.h.b16 %v11588
    %v11657 = vunpack.c.l.b16 %v11589
    %v11658 = vunpack.c.l.b16 %v11590
    %v11659 = vunpack.c.h.b16 %v11590
    %v11660 = vunpack.c.l.b16 %v11591
    %v11661 = vunpack.c.l.b16 %v11592
    %v11662 = vunpack.c.h.b16 %v11592
    %v11663 = vunpack.c.l.b16 %v11593
    %v11664 = vunpack.c.l.b16 %v11594
    %v11665 = vunpack.c.h.b16 %v11594
    %v11666 = vunpack.c.l.b16 %v11595
    %v11667 = vunpack.c.l.b16 %v11596
    %v11668 = vunpack.c.h.b16 %v11596
    %v11669 = vunpack.c.l.b16 %v11597
    %11670 = vset.pattern.permute.xlu0 0
    %11671 = vperm.xlu0 %11670, %v11598
    %v11672 = vpop.permute.xlu0 %11671
    %11673 = vset.pattern.permute.xlu0 0
    %11674 = vperm.xlu0 %11673, %v11599
    %v11675 = vpop.permute.xlu0 %11674
    %11676 = vset.pattern.permute.xlu0 0
    %11677 = vperm.xlu0 %11676, %v11600
    %v11678 = vpop.permute.xlu0 %11677
    %11679 = vset.pattern.permute.xlu0 0
    %11680 = vperm.xlu0 %11679, %v11601
    %v11681 = vpop.permute.xlu0 %11680
    %11682 = vset.pattern.permute.xlu0 0
    %11683 = vperm.xlu0 %11682, %v11602
    %v11684 = vpop.permute.xlu0 %11683
    %11685 = vset.pattern.permute.xlu0 0
    %11686 = vperm.xlu0 %11685, %v11603
    %v11687 = vpop.permute.xlu0 %11686
    %11688 = vset.pattern.permute.xlu0 0
    %11689 = vperm.xlu0 %11688, %v11604
    %v11690 = vpop.permute.xlu0 %11689
    %11691 = vset.pattern.permute.xlu0 0
    %11692 = vperm.xlu0 %11691, %v11605
    %v11693 = vpop.permute.xlu0 %11692
    %11694 = vset.pattern.permute.xlu0 0
    %11695 = vperm.xlu0 %11694, %v11606
    %v11696 = vpop.permute.xlu0 %11695
    %11697 = vset.pattern.permute.xlu0 0
    %11698 = vperm.xlu0 %11697, %v11607
    %v11699 = vpop.permute.xlu0 %11698
    %11700 = vset.pattern.permute.xlu0 0
    %11701 = vperm.xlu0 %11700, %v11608
    %v11702 = vpop.permute.xlu0 %11701
    %11703 = vset.pattern.permute.xlu0 0
    %11704 = vperm.xlu0 %11703, %v11609
    %v11705 = vpop.permute.xlu0 %11704
    %11706 = vset.pattern.permute.xlu0 0
    %11707 = vperm.xlu0 %11706, %v11610
    %v11708 = vpop.permute.xlu0 %11707
    %11709 = vset.pattern.permute.xlu0 0
    %11710 = vperm.xlu0 %11709, %v11611
    %v11711 = vpop.permute.xlu0 %11710
    %11712 = vset.pattern.permute.xlu0 0
    %11713 = vperm.xlu0 %11712, %v11612
    %v11714 = vpop.permute.xlu0 %11713
    %11715 = vset.pattern.permute.xlu0 0
    %11716 = vperm.xlu0 %11715, %v11613
    %v11717 = vpop.permute.xlu0 %11716
    %11718 = vset.pattern.permute.xlu0 0
    %11719 = vperm.xlu0 %11718, %v11614
    %v11720 = vpop.permute.xlu0 %11719
    %11721 = vset.pattern.permute.xlu0 0
    %11722 = vperm.xlu0 %11721, %v11615
    %v11723 = vpop.permute.xlu0 %11722
    %11724 = vset.pattern.permute.xlu0 0
    %11725 = vperm.xlu0 %11724, %v11616
    %v11726 = vpop.permute.xlu0 %11725
    %11727 = vset.pattern.permute.xlu0 0
    %11728 = vperm.xlu0 %11727, %v11617
    %v11729 = vpop.permute.xlu0 %11728
    %11730 = vset.pattern.permute.xlu0 0
    %11731 = vperm.xlu0 %11730, %v11618
    %v11732 = vpop.permute.xlu0 %11731
    %11733 = vset.pattern.permute.xlu0 0
    %11734 = vperm.xlu0 %11733, %v11619
    %v11735 = vpop.permute.xlu0 %11734
    %11736 = vset.pattern.permute.xlu0 0
    %11737 = vperm.xlu0 %11736, %v11620
    %v11738 = vpop.permute.xlu0 %11737
    %11739 = vset.pattern.permute.xlu0 0
    %11740 = vperm.xlu0 %11739, %v11621
    %v11741 = vpop.permute.xlu0 %11740
    %11742 = vset.pattern.permute.xlu0 0
    %11743 = vperm.xlu0 %11742, %v11622
    %v11744 = vpop.permute.xlu0 %11743
    %11745 = vset.pattern.permute.xlu0 0
    %11746 = vperm.xlu0 %11745, %v11623
    %v11747 = vpop.permute.xlu0 %11746
    %11748 = vset.pattern.permute.xlu0 0
    %11749 = vperm.xlu0 %11748, %v11624
    %v11750 = vpop.permute.xlu0 %11749
    %11751 = vset.pattern.permute.xlu0 0
    %11752 = vperm.xlu0 %11751, %v11625
    %v11753 = vpop.permute.xlu0 %11752
    %11754 = vset.pattern.permute.xlu0 0
    %11755 = vperm.xlu0 %11754, %v11626
    %v11756 = vpop.permute.xlu0 %11755
    %11757 = vset.pattern.permute.xlu0 0
    %11758 = vperm.xlu0 %11757, %v11627
    %v11759 = vpop.permute.xlu0 %11758
    %11760 = vset.pattern.permute.xlu0 0
    %11761 = vperm.xlu0 %11760, %v11628
    %v11762 = vpop.permute.xlu0 %11761
    %11763 = vset.pattern.permute.xlu0 0
    %11764 = vperm.xlu0 %11763, %v11629
    %v11765 = vpop.permute.xlu0 %11764
    %11766 = vset.pattern.permute.xlu0 0
    %11767 = vperm.xlu0 %11766, %v11630
    %v11768 = vpop.permute.xlu0 %11767
    %11769 = vset.pattern.permute.xlu0 0
    %11770 = vperm.xlu0 %11769, %v11631
    %v11771 = vpop.permute.xlu0 %11770
    %11772 = vset.pattern.permute.xlu0 0
    %11773 = vperm.xlu0 %11772, %v11632
    %v11774 = vpop.permute.xlu0 %11773
    %11775 = vset.pattern.permute.xlu0 0
    %11776 = vperm.xlu0 %11775, %v11633
    %v11777 = vpop.permute.xlu0 %11776
    %11778 = vset.pattern.permute.xlu0 0
    %11779 = vperm.xlu0 %11778, %v11634
    %v11780 = vpop.permute.xlu0 %11779
    %11781 = vset.pattern.permute.xlu0 0
    %11782 = vperm.xlu0 %11781, %v11635
    %v11783 = vpop.permute.xlu0 %11782
    %11784 = vset.pattern.permute.xlu0 0
    %11785 = vperm.xlu0 %11784, %v11636
    %v11786 = vpop.permute.xlu0 %11785
    %11787 = vset.pattern.permute.xlu0 0
    %11788 = vperm.xlu0 %11787, %v11637
    %v11789 = vpop.permute.xlu0 %11788
    %11790 = vset.pattern.permute.xlu0 0
    %11791 = vperm.xlu0 %11790, %v11638
    %v11792 = vpop.permute.xlu0 %11791
    %11793 = vset.pattern.permute.xlu0 0
    %11794 = vperm.xlu0 %11793, %v11639
    %v11795 = vpop.permute.xlu0 %11794
    %11796 = vset.pattern.permute.xlu0 0
    %11797 = vperm.xlu0 %11796, %v11640
    %v11798 = vpop.permute.xlu0 %11797
    %11799 = vset.pattern.permute.xlu0 0
    %11800 = vperm.xlu0 %11799, %v11641
    %v11801 = vpop.permute.xlu0 %11800
    %11802 = vset.pattern.permute.xlu0 0
    %11803 = vperm.xlu0 %11802, %v11642
    %v11804 = vpop.permute.xlu0 %11803
    %11805 = vset.pattern.permute.xlu0 0
    %11806 = vperm.xlu0 %11805, %v11643
    %v11807 = vpop.permute.xlu0 %11806
    %11808 = vset.pattern.permute.xlu0 0
    %11809 = vperm.xlu0 %11808, %v11644
    %v11810 = vpop.permute.xlu0 %11809
    %11811 = vset.pattern.permute.xlu0 0
    %11812 = vperm.xlu0 %11811, %v11645
    %v11813 = vpop.permute.xlu0 %11812
    %11814 = vset.pattern.permute.xlu0 0
    %11815 = vperm.xlu0 %11814, %v11646
    %v11816 = vpop.permute.xlu0 %11815
    %11817 = vset.pattern.permute.xlu0 0
    %11818 = vperm.xlu0 %11817, %v11647
    %v11819 = vpop.permute.xlu0 %11818
    %11820 = vset.pattern.permute.xlu0 0
    %11821 = vperm.xlu0 %11820, %v11648
    %v11822 = vpop.permute.xlu0 %11821
    %11823 = vset.pattern.permute.xlu0 0
    %11824 = vperm.xlu0 %11823, %v11649
    %v11825 = vpop.permute.xlu0 %11824
    %11826 = vset.pattern.permute.xlu0 0
    %11827 = vperm.xlu0 %11826, %v11650
    %v11828 = vpop.permute.xlu0 %11827
    %11829 = vset.pattern.permute.xlu0 0
    %11830 = vperm.xlu0 %11829, %v11651
    %v11831 = vpop.permute.xlu0 %11830
    %11832 = vset.pattern.permute.xlu0 0
    %11833 = vperm.xlu0 %11832, %v11652
    %v11834 = vpop.permute.xlu0 %11833
    %11835 = vset.pattern.permute.xlu0 0
    %11836 = vperm.xlu0 %11835, %v11653
    %v11837 = vpop.permute.xlu0 %11836
    %11838 = vset.pattern.permute.xlu0 0
    %11839 = vperm.xlu0 %11838, %v11654
    %v11840 = vpop.permute.xlu0 %11839
    %11841 = vset.pattern.permute.xlu0 0
    %11842 = vperm.xlu0 %11841, %v11655
    %v11843 = vpop.permute.xlu0 %11842
    %11844 = vset.pattern.permute.xlu0 0
    %11845 = vperm.xlu0 %11844, %v11656
    %v11846 = vpop.permute.xlu0 %11845
    %11847 = vset.pattern.permute.xlu0 0
    %11848 = vperm.xlu0 %11847, %v11657
    %v11849 = vpop.permute.xlu0 %11848
    %11850 = vset.pattern.permute.xlu0 0
    %11851 = vperm.xlu0 %11850, %v11658
    %v11852 = vpop.permute.xlu0 %11851
    %11853 = vset.pattern.permute.xlu0 0
    %11854 = vperm.xlu0 %11853, %v11659
    %v11855 = vpop.permute.xlu0 %11854
    %11856 = vset.pattern.permute.xlu0 0
    %11857 = vperm.xlu0 %11856, %v11660
    %v11858 = vpop.permute.xlu0 %11857
    %11859 = vset.pattern.permute.xlu0 0
    %11860 = vperm.xlu0 %11859, %v11661
    %v11861 = vpop.permute.xlu0 %11860
    %11862 = vset.pattern.permute.xlu0 0
    %11863 = vperm.xlu0 %11862, %v11662
    %v11864 = vpop.permute.xlu0 %11863
    %11865 = vset.pattern.permute.xlu0 0
    %11866 = vperm.xlu0 %11865, %v11663
    %v11867 = vpop.permute.xlu0 %11866
    %11868 = vset.pattern.permute.xlu0 0
    %11869 = vperm.xlu0 %11868, %v11664
    %v11870 = vpop.permute.xlu0 %11869
    %11871 = vset.pattern.permute.xlu0 0
    %11872 = vperm.xlu0 %11871, %v11665
    %v11873 = vpop.permute.xlu0 %11872
    %11874 = vset.pattern.permute.xlu0 0
    %11875 = vperm.xlu0 %11874, %v11666
    %v11876 = vpop.permute.xlu0 %11875
    %11877 = vset.pattern.permute.xlu0 0
    %11878 = vperm.xlu0 %11877, %v11667
    %v11879 = vpop.permute.xlu0 %11878
    %11880 = vset.pattern.permute.xlu0 0
    %11881 = vperm.xlu0 %11880, %v11668
    %v11882 = vpop.permute.xlu0 %11881
    %11883 = vset.pattern.permute.xlu0 0
    %11884 = vperm.xlu0 %11883, %v11669
    %v11885 = vpop.permute.xlu0 %11884
    %v11886 = vperm.slane %v11672, %v3239
    %v11887 = vperm.slane %v11675, %v3241
    %v11888 = vsel %vm3243, %v11887, %v11886
    %v11889 = vperm.slane %v11678, %v3245
    %v11890 = vsel %vm3247, %v11889, %v11888
    %v11891 = vperm.slane %v11681, %v3239
    %v11892 = vperm.slane %v11684, %v3241
    %v11893 = vsel %vm3243, %v11892, %v11891
    %v11894 = vperm.slane %v11687, %v3245
    %v11895 = vsel %vm3247, %v11894, %v11893
    %v11896 = vperm.slane %v11690, %v3239
    %v11897 = vperm.slane %v11693, %v3241
    %v11898 = vsel %vm3243, %v11897, %v11896
    %v11899 = vperm.slane %v11696, %v3245
    %v11900 = vsel %vm3247, %v11899, %v11898
    %v11901 = vperm.slane %v11699, %v3239
    %v11902 = vperm.slane %v11702, %v3241
    %v11903 = vsel %vm3243, %v11902, %v11901
    %v11904 = vperm.slane %v11705, %v3245
    %v11905 = vsel %vm3247, %v11904, %v11903
    %v11906 = vperm.slane %v11708, %v3239
    %v11907 = vperm.slane %v11711, %v3241
    %v11908 = vsel %vm3243, %v11907, %v11906
    %v11909 = vperm.slane %v11714, %v3245
    %v11910 = vsel %vm3247, %v11909, %v11908
    %v11911 = vperm.slane %v11717, %v3239
    %v11912 = vperm.slane %v11720, %v3241
    %v11913 = vsel %vm3243, %v11912, %v11911
    %v11914 = vperm.slane %v11723, %v3245
    %v11915 = vsel %vm3247, %v11914, %v11913
    %v11916 = vperm.slane %v11726, %v3239
    %v11917 = vperm.slane %v11729, %v3241
    %v11918 = vsel %vm3243, %v11917, %v11916
    %v11919 = vperm.slane %v11732, %v3245
    %v11920 = vsel %vm3247, %v11919, %v11918
    %v11921 = vperm.slane %v11735, %v3239
    %v11922 = vperm.slane %v11738, %v3241
    %v11923 = vsel %vm3243, %v11922, %v11921
    %v11924 = vperm.slane %v11741, %v3245
    %v11925 = vsel %vm3247, %v11924, %v11923
    %v11926 = vperm.slane %v11744, %v3239
    %v11927 = vperm.slane %v11747, %v3241
    %v11928 = vsel %vm3243, %v11927, %v11926
    %v11929 = vperm.slane %v11750, %v3245
    %v11930 = vsel %vm3247, %v11929, %v11928
    %v11931 = vperm.slane %v11753, %v3239
    %v11932 = vperm.slane %v11756, %v3241
    %v11933 = vsel %vm3243, %v11932, %v11931
    %v11934 = vperm.slane %v11759, %v3245
    %v11935 = vsel %vm3247, %v11934, %v11933
    %v11936 = vperm.slane %v11762, %v3239
    %v11937 = vperm.slane %v11765, %v3241
    %v11938 = vsel %vm3243, %v11937, %v11936
    %v11939 = vperm.slane %v11768, %v3245
    %v11940 = vsel %vm3247, %v11939, %v11938
    %v11941 = vperm.slane %v11771, %v3239
    %v11942 = vperm.slane %v11774, %v3241
    %v11943 = vsel %vm3243, %v11942, %v11941
    %v11944 = vperm.slane %v11777, %v3245
    %v11945 = vsel %vm3247, %v11944, %v11943
    %v11946 = vperm.slane %v11780, %v3239
    %v11947 = vperm.slane %v11783, %v3241
    %v11948 = vsel %vm3243, %v11947, %v11946
    %v11949 = vperm.slane %v11786, %v3245
    %v11950 = vsel %vm3247, %v11949, %v11948
    %v11951 = vperm.slane %v11789, %v3239
    %v11952 = vperm.slane %v11792, %v3241
    %v11953 = vsel %vm3243, %v11952, %v11951
    %v11954 = vperm.slane %v11795, %v3245
    %v11955 = vsel %vm3247, %v11954, %v11953
    %v11956 = vperm.slane %v11798, %v3239
    %v11957 = vperm.slane %v11801, %v3241
    %v11958 = vsel %vm3243, %v11957, %v11956
    %v11959 = vperm.slane %v11804, %v3245
    %v11960 = vsel %vm3247, %v11959, %v11958
    %v11961 = vperm.slane %v11807, %v3239
    %v11962 = vperm.slane %v11810, %v3241
    %v11963 = vsel %vm3243, %v11962, %v11961
    %v11964 = vperm.slane %v11813, %v3245
    %v11965 = vsel %vm3247, %v11964, %v11963
    %v11966 = vperm.slane %v11816, %v3239
    %v11967 = vperm.slane %v11819, %v3241
    %v11968 = vsel %vm3243, %v11967, %v11966
    %v11969 = vperm.slane %v11822, %v3245
    %v11970 = vsel %vm3247, %v11969, %v11968
    %v11971 = vperm.slane %v11825, %v3239
    %v11972 = vperm.slane %v11828, %v3241
    %v11973 = vsel %vm3243, %v11972, %v11971
    %v11974 = vperm.slane %v11831, %v3245
    %v11975 = vsel %vm3247, %v11974, %v11973
    %v11976 = vperm.slane %v11834, %v3239
    %v11977 = vperm.slane %v11837, %v3241
    %v11978 = vsel %vm3243, %v11977, %v11976
    %v11979 = vperm.slane %v11840, %v3245
    %v11980 = vsel %vm3247, %v11979, %v11978
    %v11981 = vperm.slane %v11843, %v3239
    %v11982 = vperm.slane %v11846, %v3241
    %v11983 = vsel %vm3243, %v11982, %v11981
    %v11984 = vperm.slane %v11849, %v3245
    %v11985 = vsel %vm3247, %v11984, %v11983
    %v11986 = vperm.slane %v11852, %v3239
    %v11987 = vperm.slane %v11855, %v3241
    %v11988 = vsel %vm3243, %v11987, %v11986
    %v11989 = vperm.slane %v11858, %v3245
    %v11990 = vsel %vm3247, %v11989, %v11988
    %v11991 = vperm.slane %v11861, %v3239
    %v11992 = vperm.slane %v11864, %v3241
    %v11993 = vsel %vm3243, %v11992, %v11991
    %v11994 = vperm.slane %v11867, %v3245
    %v11995 = vsel %vm3247, %v11994, %v11993
    %v11996 = vperm.slane %v11870, %v3239
    %v11997 = vperm.slane %v11873, %v3241
    %v11998 = vsel %vm3243, %v11997, %v11996
    %v11999 = vperm.slane %v11876, %v3245
    %v12000 = vsel %vm3247, %v11999, %v11998
    %v12001 = vperm.slane %v11879, %v3239
    %v12002 = vperm.slane %v11882, %v3241
    %v12003 = vsel %vm3243, %v12002, %v12001
    %v12004 = vperm.slane %v11885, %v3245
    %v12005 = vsel %vm3247, %v12004, %v12003
    %v12006 = vsel %vm3484, %v11895, %v11890
    %v12007 = vsel %vm3486, %v11900, %v12006
    %v12008 = vsel %vm3488, %v11905, %v12007
    %v12009 = vsel %vm3490, %v11910, %v12008
    %v12010 = vsel %vm3492, %v11915, %v12009
    %v12011 = vsel %vm3494, %v11920, %v12010
    %v12012 = vsel %vm3496, %v11925, %v12011
    %v12013 = vsel %vm3484, %v11935, %v11930
    %v12014 = vsel %vm3486, %v11940, %v12013
    %v12015 = vsel %vm3488, %v11945, %v12014
    %v12016 = vsel %vm3490, %v11950, %v12015
    %v12017 = vsel %vm3492, %v11955, %v12016
    %v12018 = vsel %vm3494, %v11960, %v12017
    %v12019 = vsel %vm3496, %v11965, %v12018
    %v12020 = vsel %vm3484, %v11975, %v11970
    %v12021 = vsel %vm3486, %v11980, %v12020
    %v12022 = vsel %vm3488, %v11985, %v12021
    %v12023 = vsel %vm3490, %v11990, %v12022
    %v12024 = vsel %vm3492, %v11995, %v12023
    %v12025 = vsel %vm3494, %v12000, %v12024
    %v12026 = vsel %vm3496, %v12005, %v12025
    %v12027 = vpack.c.b16 %v12019, %v12012
    %v12028 = vpack.c.b16 %v12026, %v12026
    %v12032 = vunpack.c.l.b16 %v11400
    %v12033 = vunpack.c.l.b16 %v11401
    %v12034 = vunpack.c.l.b16 %v11402
    %v12035 = vpack.c.b16 %v12033, %v12032
    %v12036 = vpack.c.b16 %v12034, %v12034
    %v12039 = vsel %vm3539, %v12027, 0
    %v12042 = vsel %vm3539, %v12028, 0
    %v12045 = vsel %vm6014, %v12036, 0
    %12047 = vmatpush.bf16.msra.mxu0 0
    %12048 = vmatpush.bf16.msra.mxu0 0
    %12049 = vmatpush.bf16.msra.mxu0 0
    %12050 = vmatpush.bf16.msra.mxu0 0
    %12051 = vmatpush.bf16.msra.mxu0 0
    %12052 = vmatpush.bf16.msra.mxu0 0
    %12053 = vmatpush.bf16.msra.mxu0 %v12045
    %12054 = vmatpush.bf16.msra.mxu0 %v12035
    %12055 = vmatmul.bf16.gmra.mxu0 %v12039
    %v12056 = vpop.f32.mrf.mxu0
    %v12057 = vadd.f32 0.0, %v12056
    %v12058 = vpop.f32.mrf.mxu0
    %v12059 = vadd.f32 0.0, %v12058
    %12060 = vmatmul.bf16.gmra.mxu0 %v12042
    %v12061 = vpop.f32.mrf.mxu0
    %v12062 = vadd.f32 0.0, %v12061
    %v12063 = vpop.f32.mrf.mxu0
    %12064 = vdwg.mxu0
    %v12137 = vunpack.c.l.b16 %v11328
    %v12138 = vunpack.c.l.b16 %v11329
    %v12139 = vunpack.c.l.b16 %v11330
    %v12140 = vunpack.c.l.b16 %v11331
    %v12141 = vunpack.c.l.b16 %v11332
    %v12142 = vunpack.c.l.b16 %v11333
    %v12143 = vunpack.c.l.b16 %v11334
    %v12144 = vunpack.c.l.b16 %v11335
    %v12145 = vunpack.c.l.b16 %v11336
    %v12146 = vunpack.c.l.b16 %v11337
    %v12147 = vunpack.c.l.b16 %v11338
    %v12148 = vunpack.c.l.b16 %v11339
    %v12149 = vunpack.c.l.b16 %v11340
    %v12150 = vunpack.c.l.b16 %v11341
    %v12151 = vunpack.c.l.b16 %v11342
    %v12152 = vunpack.c.l.b16 %v11343
    %v12153 = vunpack.c.l.b16 %v11344
    %v12154 = vunpack.c.l.b16 %v11345
    %v12155 = vunpack.c.l.b16 %v11346
    %v12156 = vunpack.c.l.b16 %v11347
    %v12157 = vunpack.c.l.b16 %v11348
    %v12158 = vunpack.c.l.b16 %v11349
    %v12159 = vunpack.c.l.b16 %v11350
    %v12160 = vunpack.c.l.b16 %v11351
    %v12161 = vunpack.c.l.b16 %v11352
    %v12162 = vunpack.c.l.b16 %v11353
    %v12163 = vunpack.c.l.b16 %v11354
    %v12164 = vunpack.c.l.b16 %v11355
    %v12165 = vunpack.c.l.b16 %v11356
    %v12166 = vunpack.c.l.b16 %v11357
    %v12167 = vunpack.c.l.b16 %v11358
    %v12168 = vunpack.c.l.b16 %v11359
    %v12169 = vunpack.c.l.b16 %v11360
    %v12170 = vunpack.c.l.b16 %v11361
    %v12171 = vunpack.c.l.b16 %v11362
    %v12172 = vunpack.c.l.b16 %v11363
    %v12173 = vunpack.c.l.b16 %v11364
    %v12174 = vunpack.c.l.b16 %v11365
    %v12175 = vunpack.c.l.b16 %v11366
    %v12176 = vunpack.c.l.b16 %v11367
    %v12177 = vunpack.c.l.b16 %v11368
    %v12178 = vunpack.c.l.b16 %v11369
    %v12179 = vunpack.c.l.b16 %v11370
    %v12180 = vunpack.c.l.b16 %v11371
    %v12181 = vunpack.c.l.b16 %v11372
    %v12182 = vunpack.c.l.b16 %v11373
    %v12183 = vunpack.c.l.b16 %v11374
    %v12184 = vunpack.c.l.b16 %v11375
    %v12185 = vunpack.c.l.b16 %v11376
    %v12186 = vunpack.c.l.b16 %v11377
    %v12187 = vunpack.c.l.b16 %v11378
    %v12188 = vunpack.c.l.b16 %v11379
    %v12189 = vunpack.c.l.b16 %v11380
    %v12190 = vunpack.c.l.b16 %v11381
    %v12191 = vunpack.c.l.b16 %v11382
    %v12192 = vunpack.c.l.b16 %v11383
    %v12193 = vunpack.c.l.b16 %v11384
    %v12194 = vunpack.c.l.b16 %v11385
    %v12195 = vunpack.c.l.b16 %v11386
    %v12196 = vunpack.c.l.b16 %v11387
    %v12197 = vunpack.c.l.b16 %v11388
    %v12198 = vunpack.c.l.b16 %v11389
    %v12199 = vunpack.c.l.b16 %v11390
    %v12200 = vunpack.c.l.b16 %v11391
    %v12201 = vunpack.c.l.b16 %v11392
    %v12202 = vunpack.c.l.b16 %v11393
    %v12203 = vunpack.c.l.b16 %v11394
    %v12204 = vunpack.c.l.b16 %v11395
    %v12205 = vunpack.c.l.b16 %v11396
    %v12206 = vunpack.c.l.b16 %v11397
    %v12207 = vunpack.c.l.b16 %v11398
    %v12208 = vunpack.c.l.b16 %v11399
    %v12209 = vpack.c.b16 %v12138, %v12137
    %v12210 = vpack.c.b16 %v12139, %v12139
    %v12211 = vpack.c.b16 %v12141, %v12140
    %v12212 = vpack.c.b16 %v12142, %v12142
    %v12213 = vpack.c.b16 %v12144, %v12143
    %v12214 = vpack.c.b16 %v12145, %v12145
    %v12215 = vpack.c.b16 %v12147, %v12146
    %v12216 = vpack.c.b16 %v12148, %v12148
    %v12217 = vpack.c.b16 %v12150, %v12149
    %v12218 = vpack.c.b16 %v12151, %v12151
    %v12219 = vpack.c.b16 %v12153, %v12152
    %v12220 = vpack.c.b16 %v12154, %v12154
    %v12221 = vpack.c.b16 %v12156, %v12155
    %v12222 = vpack.c.b16 %v12157, %v12157
    %v12223 = vpack.c.b16 %v12159, %v12158
    %v12224 = vpack.c.b16 %v12160, %v12160
    %v12225 = vpack.c.b16 %v12162, %v12161
    %v12226 = vpack.c.b16 %v12163, %v12163
    %v12227 = vpack.c.b16 %v12165, %v12164
    %v12228 = vpack.c.b16 %v12166, %v12166
    %v12229 = vpack.c.b16 %v12168, %v12167
    %v12230 = vpack.c.b16 %v12169, %v12169
    %v12231 = vpack.c.b16 %v12171, %v12170
    %v12232 = vpack.c.b16 %v12172, %v12172
    %v12233 = vpack.c.b16 %v12174, %v12173
    %v12234 = vpack.c.b16 %v12175, %v12175
    %v12235 = vpack.c.b16 %v12177, %v12176
    %v12236 = vpack.c.b16 %v12178, %v12178
    %v12237 = vpack.c.b16 %v12180, %v12179
    %v12238 = vpack.c.b16 %v12181, %v12181
    %v12239 = vpack.c.b16 %v12183, %v12182
    %v12240 = vpack.c.b16 %v12184, %v12184
    %v12241 = vpack.c.b16 %v12186, %v12185
    %v12242 = vpack.c.b16 %v12187, %v12187
    %v12243 = vpack.c.b16 %v12189, %v12188
    %v12244 = vpack.c.b16 %v12190, %v12190
    %v12245 = vpack.c.b16 %v12192, %v12191
    %v12246 = vpack.c.b16 %v12193, %v12193
    %v12247 = vpack.c.b16 %v12195, %v12194
    %v12248 = vpack.c.b16 %v12196, %v12196
    %v12249 = vpack.c.b16 %v12198, %v12197
    %v12250 = vpack.c.b16 %v12199, %v12199
    %v12251 = vpack.c.b16 %v12201, %v12200
    %v12252 = vpack.c.b16 %v12202, %v12202
    %v12253 = vpack.c.b16 %v12204, %v12203
    %v12254 = vpack.c.b16 %v12205, %v12205
    %v12255 = vpack.c.b16 %v12207, %v12206
    %v12256 = vpack.c.b16 %v12208, %v12208
    %v12257 = vunpack.c.l.b16 %v12209
    %v12258 = vunpack.c.h.b16 %v12209
    %v12259 = vunpack.c.l.b16 %v12210
    %v12260 = vunpack.c.l.b16 %v12211
    %v12261 = vunpack.c.h.b16 %v12211
    %v12262 = vunpack.c.l.b16 %v12212
    %v12263 = vunpack.c.l.b16 %v12213
    %v12264 = vunpack.c.h.b16 %v12213
    %v12265 = vunpack.c.l.b16 %v12214
    %v12266 = vunpack.c.l.b16 %v12215
    %v12267 = vunpack.c.h.b16 %v12215
    %v12268 = vunpack.c.l.b16 %v12216
    %v12269 = vunpack.c.l.b16 %v12217
    %v12270 = vunpack.c.h.b16 %v12217
    %v12271 = vunpack.c.l.b16 %v12218
    %v12272 = vunpack.c.l.b16 %v12219
    %v12273 = vunpack.c.h.b16 %v12219
    %v12274 = vunpack.c.l.b16 %v12220
    %v12275 = vunpack.c.l.b16 %v12221
    %v12276 = vunpack.c.h.b16 %v12221
    %v12277 = vunpack.c.l.b16 %v12222
    %v12278 = vunpack.c.l.b16 %v12223
    %v12279 = vunpack.c.h.b16 %v12223
    %v12280 = vunpack.c.l.b16 %v12224
    %v12281 = vunpack.c.l.b16 %v12225
    %v12282 = vunpack.c.h.b16 %v12225
    %v12283 = vunpack.c.l.b16 %v12226
    %v12284 = vunpack.c.l.b16 %v12227
    %v12285 = vunpack.c.h.b16 %v12227
    %v12286 = vunpack.c.l.b16 %v12228
    %v12287 = vunpack.c.l.b16 %v12229
    %v12288 = vunpack.c.h.b16 %v12229
    %v12289 = vunpack.c.l.b16 %v12230
    %v12290 = vunpack.c.l.b16 %v12231
    %v12291 = vunpack.c.h.b16 %v12231
    %v12292 = vunpack.c.l.b16 %v12232
    %v12293 = vunpack.c.l.b16 %v12233
    %v12294 = vunpack.c.h.b16 %v12233
    %v12295 = vunpack.c.l.b16 %v12234
    %v12296 = vunpack.c.l.b16 %v12235
    %v12297 = vunpack.c.h.b16 %v12235
    %v12298 = vunpack.c.l.b16 %v12236
    %v12299 = vunpack.c.l.b16 %v12237
    %v12300 = vunpack.c.h.b16 %v12237
    %v12301 = vunpack.c.l.b16 %v12238
    %v12302 = vunpack.c.l.b16 %v12239
    %v12303 = vunpack.c.h.b16 %v12239
    %v12304 = vunpack.c.l.b16 %v12240
    %v12305 = vunpack.c.l.b16 %v12241
    %v12306 = vunpack.c.h.b16 %v12241
    %v12307 = vunpack.c.l.b16 %v12242
    %v12308 = vunpack.c.l.b16 %v12243
    %v12309 = vunpack.c.h.b16 %v12243
    %v12310 = vunpack.c.l.b16 %v12244
    %v12311 = vunpack.c.l.b16 %v12245
    %v12312 = vunpack.c.h.b16 %v12245
    %v12313 = vunpack.c.l.b16 %v12246
    %v12314 = vunpack.c.l.b16 %v12247
    %v12315 = vunpack.c.h.b16 %v12247
    %v12316 = vunpack.c.l.b16 %v12248
    %v12317 = vunpack.c.l.b16 %v12249
    %v12318 = vunpack.c.h.b16 %v12249
    %v12319 = vunpack.c.l.b16 %v12250
    %v12320 = vunpack.c.l.b16 %v12251
    %v12321 = vunpack.c.h.b16 %v12251
    %v12322 = vunpack.c.l.b16 %v12252
    %v12323 = vunpack.c.l.b16 %v12253
    %v12324 = vunpack.c.h.b16 %v12253
    %v12325 = vunpack.c.l.b16 %v12254
    %v12326 = vunpack.c.l.b16 %v12255
    %v12327 = vunpack.c.h.b16 %v12255
    %v12328 = vunpack.c.l.b16 %v12256
    %12329 = vset.pattern.permute.xlu0 0
    %12330 = vperm.xlu0 %12329, %v12257
    %v12331 = vpop.permute.xlu0 %12330
    %12332 = vset.pattern.permute.xlu0 0
    %12333 = vperm.xlu0 %12332, %v12258
    %v12334 = vpop.permute.xlu0 %12333
    %12335 = vset.pattern.permute.xlu0 0
    %12336 = vperm.xlu0 %12335, %v12259
    %v12337 = vpop.permute.xlu0 %12336
    %12338 = vset.pattern.permute.xlu0 0
    %12339 = vperm.xlu0 %12338, %v12260
    %v12340 = vpop.permute.xlu0 %12339
    %12341 = vset.pattern.permute.xlu0 0
    %12342 = vperm.xlu0 %12341, %v12261
    %v12343 = vpop.permute.xlu0 %12342
    %12344 = vset.pattern.permute.xlu0 0
    %12345 = vperm.xlu0 %12344, %v12262
    %v12346 = vpop.permute.xlu0 %12345
    %12347 = vset.pattern.permute.xlu0 0
    %12348 = vperm.xlu0 %12347, %v12263
    %v12349 = vpop.permute.xlu0 %12348
    %12350 = vset.pattern.permute.xlu0 0
    %12351 = vperm.xlu0 %12350, %v12264
    %v12352 = vpop.permute.xlu0 %12351
    %12353 = vset.pattern.permute.xlu0 0
    %12354 = vperm.xlu0 %12353, %v12265
    %v12355 = vpop.permute.xlu0 %12354
    %12356 = vset.pattern.permute.xlu0 0
    %12357 = vperm.xlu0 %12356, %v12266
    %v12358 = vpop.permute.xlu0 %12357
    %12359 = vset.pattern.permute.xlu0 0
    %12360 = vperm.xlu0 %12359, %v12267
    %v12361 = vpop.permute.xlu0 %12360
    %12362 = vset.pattern.permute.xlu0 0
    %12363 = vperm.xlu0 %12362, %v12268
    %v12364 = vpop.permute.xlu0 %12363
    %12365 = vset.pattern.permute.xlu0 0
    %12366 = vperm.xlu0 %12365, %v12269
    %v12367 = vpop.permute.xlu0 %12366
    %12368 = vset.pattern.permute.xlu0 0
    %12369 = vperm.xlu0 %12368, %v12270
    %v12370 = vpop.permute.xlu0 %12369
    %12371 = vset.pattern.permute.xlu0 0
    %12372 = vperm.xlu0 %12371, %v12271
    %v12373 = vpop.permute.xlu0 %12372
    %12374 = vset.pattern.permute.xlu0 0
    %12375 = vperm.xlu0 %12374, %v12272
    %v12376 = vpop.permute.xlu0 %12375
    %12377 = vset.pattern.permute.xlu0 0
    %12378 = vperm.xlu0 %12377, %v12273
    %v12379 = vpop.permute.xlu0 %12378
    %12380 = vset.pattern.permute.xlu0 0
    %12381 = vperm.xlu0 %12380, %v12274
    %v12382 = vpop.permute.xlu0 %12381
    %12383 = vset.pattern.permute.xlu0 0
    %12384 = vperm.xlu0 %12383, %v12275
    %v12385 = vpop.permute.xlu0 %12384
    %12386 = vset.pattern.permute.xlu0 0
    %12387 = vperm.xlu0 %12386, %v12276
    %v12388 = vpop.permute.xlu0 %12387
    %12389 = vset.pattern.permute.xlu0 0
    %12390 = vperm.xlu0 %12389, %v12277
    %v12391 = vpop.permute.xlu0 %12390
    %12392 = vset.pattern.permute.xlu0 0
    %12393 = vperm.xlu0 %12392, %v12278
    %v12394 = vpop.permute.xlu0 %12393
    %12395 = vset.pattern.permute.xlu0 0
    %12396 = vperm.xlu0 %12395, %v12279
    %v12397 = vpop.permute.xlu0 %12396
    %12398 = vset.pattern.permute.xlu0 0
    %12399 = vperm.xlu0 %12398, %v12280
    %v12400 = vpop.permute.xlu0 %12399
    %12401 = vset.pattern.permute.xlu0 0
    %12402 = vperm.xlu0 %12401, %v12281
    %v12403 = vpop.permute.xlu0 %12402
    %12404 = vset.pattern.permute.xlu0 0
    %12405 = vperm.xlu0 %12404, %v12282
    %v12406 = vpop.permute.xlu0 %12405
    %12407 = vset.pattern.permute.xlu0 0
    %12408 = vperm.xlu0 %12407, %v12283
    %v12409 = vpop.permute.xlu0 %12408
    %12410 = vset.pattern.permute.xlu0 0
    %12411 = vperm.xlu0 %12410, %v12284
    %v12412 = vpop.permute.xlu0 %12411
    %12413 = vset.pattern.permute.xlu0 0
    %12414 = vperm.xlu0 %12413, %v12285
    %v12415 = vpop.permute.xlu0 %12414
    %12416 = vset.pattern.permute.xlu0 0
    %12417 = vperm.xlu0 %12416, %v12286
    %v12418 = vpop.permute.xlu0 %12417
    %12419 = vset.pattern.permute.xlu0 0
    %12420 = vperm.xlu0 %12419, %v12287
    %v12421 = vpop.permute.xlu0 %12420
    %12422 = vset.pattern.permute.xlu0 0
    %12423 = vperm.xlu0 %12422, %v12288
    %v12424 = vpop.permute.xlu0 %12423
    %12425 = vset.pattern.permute.xlu0 0
    %12426 = vperm.xlu0 %12425, %v12289
    %v12427 = vpop.permute.xlu0 %12426
    %12428 = vset.pattern.permute.xlu0 0
    %12429 = vperm.xlu0 %12428, %v12290
    %v12430 = vpop.permute.xlu0 %12429
    %12431 = vset.pattern.permute.xlu0 0
    %12432 = vperm.xlu0 %12431, %v12291
    %v12433 = vpop.permute.xlu0 %12432
    %12434 = vset.pattern.permute.xlu0 0
    %12435 = vperm.xlu0 %12434, %v12292
    %v12436 = vpop.permute.xlu0 %12435
    %12437 = vset.pattern.permute.xlu0 0
    %12438 = vperm.xlu0 %12437, %v12293
    %v12439 = vpop.permute.xlu0 %12438
    %12440 = vset.pattern.permute.xlu0 0
    %12441 = vperm.xlu0 %12440, %v12294
    %v12442 = vpop.permute.xlu0 %12441
    %12443 = vset.pattern.permute.xlu0 0
    %12444 = vperm.xlu0 %12443, %v12295
    %v12445 = vpop.permute.xlu0 %12444
    %12446 = vset.pattern.permute.xlu0 0
    %12447 = vperm.xlu0 %12446, %v12296
    %v12448 = vpop.permute.xlu0 %12447
    %12449 = vset.pattern.permute.xlu0 0
    %12450 = vperm.xlu0 %12449, %v12297
    %v12451 = vpop.permute.xlu0 %12450
    %12452 = vset.pattern.permute.xlu0 0
    %12453 = vperm.xlu0 %12452, %v12298
    %v12454 = vpop.permute.xlu0 %12453
    %12455 = vset.pattern.permute.xlu0 0
    %12456 = vperm.xlu0 %12455, %v12299
    %v12457 = vpop.permute.xlu0 %12456
    %12458 = vset.pattern.permute.xlu0 0
    %12459 = vperm.xlu0 %12458, %v12300
    %v12460 = vpop.permute.xlu0 %12459
    %12461 = vset.pattern.permute.xlu0 0
    %12462 = vperm.xlu0 %12461, %v12301
    %v12463 = vpop.permute.xlu0 %12462
    %12464 = vset.pattern.permute.xlu0 0
    %12465 = vperm.xlu0 %12464, %v12302
    %v12466 = vpop.permute.xlu0 %12465
    %12467 = vset.pattern.permute.xlu0 0
    %12468 = vperm.xlu0 %12467, %v12303
    %v12469 = vpop.permute.xlu0 %12468
    %12470 = vset.pattern.permute.xlu0 0
    %12471 = vperm.xlu0 %12470, %v12304
    %v12472 = vpop.permute.xlu0 %12471
    %12473 = vset.pattern.permute.xlu0 0
    %12474 = vperm.xlu0 %12473, %v12305
    %v12475 = vpop.permute.xlu0 %12474
    %12476 = vset.pattern.permute.xlu0 0
    %12477 = vperm.xlu0 %12476, %v12306
    %v12478 = vpop.permute.xlu0 %12477
    %12479 = vset.pattern.permute.xlu0 0
    %12480 = vperm.xlu0 %12479, %v12307
    %v12481 = vpop.permute.xlu0 %12480
    %12482 = vset.pattern.permute.xlu0 0
    %12483 = vperm.xlu0 %12482, %v12308
    %v12484 = vpop.permute.xlu0 %12483
    %12485 = vset.pattern.permute.xlu0 0
    %12486 = vperm.xlu0 %12485, %v12309
    %v12487 = vpop.permute.xlu0 %12486
    %12488 = vset.pattern.permute.xlu0 0
    %12489 = vperm.xlu0 %12488, %v12310
    %v12490 = vpop.permute.xlu0 %12489
    %12491 = vset.pattern.permute.xlu0 0
    %12492 = vperm.xlu0 %12491, %v12311
    %v12493 = vpop.permute.xlu0 %12492
    %12494 = vset.pattern.permute.xlu0 0
    %12495 = vperm.xlu0 %12494, %v12312
    %v12496 = vpop.permute.xlu0 %12495
    %12497 = vset.pattern.permute.xlu0 0
    %12498 = vperm.xlu0 %12497, %v12313
    %v12499 = vpop.permute.xlu0 %12498
    %12500 = vset.pattern.permute.xlu0 0
    %12501 = vperm.xlu0 %12500, %v12314
    %v12502 = vpop.permute.xlu0 %12501
    %12503 = vset.pattern.permute.xlu0 0
    %12504 = vperm.xlu0 %12503, %v12315
    %v12505 = vpop.permute.xlu0 %12504
    %12506 = vset.pattern.permute.xlu0 0
    %12507 = vperm.xlu0 %12506, %v12316
    %v12508 = vpop.permute.xlu0 %12507
    %12509 = vset.pattern.permute.xlu0 0
    %12510 = vperm.xlu0 %12509, %v12317
    %v12511 = vpop.permute.xlu0 %12510
    %12512 = vset.pattern.permute.xlu0 0
    %12513 = vperm.xlu0 %12512, %v12318
    %v12514 = vpop.permute.xlu0 %12513
    %12515 = vset.pattern.permute.xlu0 0
    %12516 = vperm.xlu0 %12515, %v12319
    %v12517 = vpop.permute.xlu0 %12516
    %12518 = vset.pattern.permute.xlu0 0
    %12519 = vperm.xlu0 %12518, %v12320
    %v12520 = vpop.permute.xlu0 %12519
    %12521 = vset.pattern.permute.xlu0 0
    %12522 = vperm.xlu0 %12521, %v12321
    %v12523 = vpop.permute.xlu0 %12522
    %12524 = vset.pattern.permute.xlu0 0
    %12525 = vperm.xlu0 %12524, %v12322
    %v12526 = vpop.permute.xlu0 %12525
    %12527 = vset.pattern.permute.xlu0 0
    %12528 = vperm.xlu0 %12527, %v12323
    %v12529 = vpop.permute.xlu0 %12528
    %12530 = vset.pattern.permute.xlu0 0
    %12531 = vperm.xlu0 %12530, %v12324
    %v12532 = vpop.permute.xlu0 %12531
    %12533 = vset.pattern.permute.xlu0 0
    %12534 = vperm.xlu0 %12533, %v12325
    %v12535 = vpop.permute.xlu0 %12534
    %12536 = vset.pattern.permute.xlu0 0
    %12537 = vperm.xlu0 %12536, %v12326
    %v12538 = vpop.permute.xlu0 %12537
    %12539 = vset.pattern.permute.xlu0 0
    %12540 = vperm.xlu0 %12539, %v12327
    %v12541 = vpop.permute.xlu0 %12540
    %12542 = vset.pattern.permute.xlu0 0
    %12543 = vperm.xlu0 %12542, %v12328
    %v12544 = vpop.permute.xlu0 %12543
    %v12545 = vperm.slane %v12331, %v3239
    %v12546 = vperm.slane %v12334, %v3241
    %v12547 = vsel %vm3243, %v12546, %v12545
    %v12548 = vperm.slane %v12337, %v3245
    %v12549 = vsel %vm3247, %v12548, %v12547
    %v12550 = vperm.slane %v12340, %v3239
    %v12551 = vperm.slane %v12343, %v3241
    %v12552 = vsel %vm3243, %v12551, %v12550
    %v12553 = vperm.slane %v12346, %v3245
    %v12554 = vsel %vm3247, %v12553, %v12552
    %v12555 = vperm.slane %v12349, %v3239
    %v12556 = vperm.slane %v12352, %v3241
    %v12557 = vsel %vm3243, %v12556, %v12555
    %v12558 = vperm.slane %v12355, %v3245
    %v12559 = vsel %vm3247, %v12558, %v12557
    %v12560 = vperm.slane %v12358, %v3239
    %v12561 = vperm.slane %v12361, %v3241
    %v12562 = vsel %vm3243, %v12561, %v12560
    %v12563 = vperm.slane %v12364, %v3245
    %v12564 = vsel %vm3247, %v12563, %v12562
    %v12565 = vperm.slane %v12367, %v3239
    %v12566 = vperm.slane %v12370, %v3241
    %v12567 = vsel %vm3243, %v12566, %v12565
    %v12568 = vperm.slane %v12373, %v3245
    %v12569 = vsel %vm3247, %v12568, %v12567
    %v12570 = vperm.slane %v12376, %v3239
    %v12571 = vperm.slane %v12379, %v3241
    %v12572 = vsel %vm3243, %v12571, %v12570
    %v12573 = vperm.slane %v12382, %v3245
    %v12574 = vsel %vm3247, %v12573, %v12572
    %v12575 = vperm.slane %v12385, %v3239
    %v12576 = vperm.slane %v12388, %v3241
    %v12577 = vsel %vm3243, %v12576, %v12575
    %v12578 = vperm.slane %v12391, %v3245
    %v12579 = vsel %vm3247, %v12578, %v12577
    %v12580 = vperm.slane %v12394, %v3239
    %v12581 = vperm.slane %v12397, %v3241
    %v12582 = vsel %vm3243, %v12581, %v12580
    %v12583 = vperm.slane %v12400, %v3245
    %v12584 = vsel %vm3247, %v12583, %v12582
    %v12585 = vperm.slane %v12403, %v3239
    %v12586 = vperm.slane %v12406, %v3241
    %v12587 = vsel %vm3243, %v12586, %v12585
    %v12588 = vperm.slane %v12409, %v3245
    %v12589 = vsel %vm3247, %v12588, %v12587
    %v12590 = vperm.slane %v12412, %v3239
    %v12591 = vperm.slane %v12415, %v3241
    %v12592 = vsel %vm3243, %v12591, %v12590
    %v12593 = vperm.slane %v12418, %v3245
    %v12594 = vsel %vm3247, %v12593, %v12592
    %v12595 = vperm.slane %v12421, %v3239
    %v12596 = vperm.slane %v12424, %v3241
    %v12597 = vsel %vm3243, %v12596, %v12595
    %v12598 = vperm.slane %v12427, %v3245
    %v12599 = vsel %vm3247, %v12598, %v12597
    %v12600 = vperm.slane %v12430, %v3239
    %v12601 = vperm.slane %v12433, %v3241
    %v12602 = vsel %vm3243, %v12601, %v12600
    %v12603 = vperm.slane %v12436, %v3245
    %v12604 = vsel %vm3247, %v12603, %v12602
    %v12605 = vperm.slane %v12439, %v3239
    %v12606 = vperm.slane %v12442, %v3241
    %v12607 = vsel %vm3243, %v12606, %v12605
    %v12608 = vperm.slane %v12445, %v3245
    %v12609 = vsel %vm3247, %v12608, %v12607
    %v12610 = vperm.slane %v12448, %v3239
    %v12611 = vperm.slane %v12451, %v3241
    %v12612 = vsel %vm3243, %v12611, %v12610
    %v12613 = vperm.slane %v12454, %v3245
    %v12614 = vsel %vm3247, %v12613, %v12612
    %v12615 = vperm.slane %v12457, %v3239
    %v12616 = vperm.slane %v12460, %v3241
    %v12617 = vsel %vm3243, %v12616, %v12615
    %v12618 = vperm.slane %v12463, %v3245
    %v12619 = vsel %vm3247, %v12618, %v12617
    %v12620 = vperm.slane %v12466, %v3239
    %v12621 = vperm.slane %v12469, %v3241
    %v12622 = vsel %vm3243, %v12621, %v12620
    %v12623 = vperm.slane %v12472, %v3245
    %v12624 = vsel %vm3247, %v12623, %v12622
    %v12625 = vperm.slane %v12475, %v3239
    %v12626 = vperm.slane %v12478, %v3241
    %v12627 = vsel %vm3243, %v12626, %v12625
    %v12628 = vperm.slane %v12481, %v3245
    %v12629 = vsel %vm3247, %v12628, %v12627
    %v12630 = vperm.slane %v12484, %v3239
    %v12631 = vperm.slane %v12487, %v3241
    %v12632 = vsel %vm3243, %v12631, %v12630
    %v12633 = vperm.slane %v12490, %v3245
    %v12634 = vsel %vm3247, %v12633, %v12632
    %v12635 = vperm.slane %v12493, %v3239
    %v12636 = vperm.slane %v12496, %v3241
    %v12637 = vsel %vm3243, %v12636, %v12635
    %v12638 = vperm.slane %v12499, %v3245
    %v12639 = vsel %vm3247, %v12638, %v12637
    %v12640 = vperm.slane %v12502, %v3239
    %v12641 = vperm.slane %v12505, %v3241
    %v12642 = vsel %vm3243, %v12641, %v12640
    %v12643 = vperm.slane %v12508, %v3245
    %v12644 = vsel %vm3247, %v12643, %v12642
    %v12645 = vperm.slane %v12511, %v3239
    %v12646 = vperm.slane %v12514, %v3241
    %v12647 = vsel %vm3243, %v12646, %v12645
    %v12648 = vperm.slane %v12517, %v3245
    %v12649 = vsel %vm3247, %v12648, %v12647
    %v12650 = vperm.slane %v12520, %v3239
    %v12651 = vperm.slane %v12523, %v3241
    %v12652 = vsel %vm3243, %v12651, %v12650
    %v12653 = vperm.slane %v12526, %v3245
    %v12654 = vsel %vm3247, %v12653, %v12652
    %v12655 = vperm.slane %v12529, %v3239
    %v12656 = vperm.slane %v12532, %v3241
    %v12657 = vsel %vm3243, %v12656, %v12655
    %v12658 = vperm.slane %v12535, %v3245
    %v12659 = vsel %vm3247, %v12658, %v12657
    %v12660 = vperm.slane %v12538, %v3239
    %v12661 = vperm.slane %v12541, %v3241
    %v12662 = vsel %vm3243, %v12661, %v12660
    %v12663 = vperm.slane %v12544, %v3245
    %v12664 = vsel %vm3247, %v12663, %v12662
    %v12665 = vsel %vm3484, %v12554, %v12549
    %v12666 = vsel %vm3486, %v12559, %v12665
    %v12667 = vsel %vm3488, %v12564, %v12666
    %v12668 = vsel %vm3490, %v12569, %v12667
    %v12669 = vsel %vm3492, %v12574, %v12668
    %v12670 = vsel %vm3494, %v12579, %v12669
    %v12671 = vsel %vm3496, %v12584, %v12670
    %v12672 = vsel %vm3484, %v12594, %v12589
    %v12673 = vsel %vm3486, %v12599, %v12672
    %v12674 = vsel %vm3488, %v12604, %v12673
    %v12675 = vsel %vm3490, %v12609, %v12674
    %v12676 = vsel %vm3492, %v12614, %v12675
    %v12677 = vsel %vm3494, %v12619, %v12676
    %v12678 = vsel %vm3496, %v12624, %v12677
    %v12679 = vsel %vm3484, %v12634, %v12629
    %v12680 = vsel %vm3486, %v12639, %v12679
    %v12681 = vsel %vm3488, %v12644, %v12680
    %v12682 = vsel %vm3490, %v12649, %v12681
    %v12683 = vsel %vm3492, %v12654, %v12682
    %v12684 = vsel %vm3494, %v12659, %v12683
    %v12685 = vsel %vm3496, %v12664, %v12684
    %v12686 = vpack.c.b16 %v12678, %v12671
    %v12687 = vpack.c.b16 %v12685, %v12685
    %v12691 = vunpack.c.l.b16 %v11403
    %v12692 = vunpack.c.l.b16 %v11404
    %v12693 = vunpack.c.l.b16 %v11405
    %v12694 = vpack.c.b16 %v12692, %v12691
    %v12695 = vpack.c.b16 %v12693, %v12693
    %v12698 = vsel %vm3539, %v12686, 0
    %v12701 = vsel %vm3539, %v12687, 0
    %v12704 = vsel %vm6014, %v12695, 0
    %12706 = vmatpush.bf16.msra.mxu0 0
    %12707 = vmatpush.bf16.msra.mxu0 0
    %12708 = vmatpush.bf16.msra.mxu0 0
    %12709 = vmatpush.bf16.msra.mxu0 0
    %12710 = vmatpush.bf16.msra.mxu0 0
    %12711 = vmatpush.bf16.msra.mxu0 0
    %12712 = vmatpush.bf16.msra.mxu0 %v12704
    %12713 = vmatpush.bf16.msra.mxu0 %v12694
    %12714 = vmatmul.bf16.gmra.mxu0 %v12698
    %v12715 = vpop.f32.mrf.mxu0
    %v12716 = vadd.f32 0.0, %v12715
    %v12717 = vpop.f32.mrf.mxu0
    %v12718 = vadd.f32 0.0, %v12717
    %12719 = vmatmul.bf16.gmra.mxu0 %v12701
    %v12720 = vpop.f32.mrf.mxu0
    %v12721 = vadd.f32 0.0, %v12720
    %v12722 = vpop.f32.mrf.mxu0
    %12723 = vdwg.mxu0
    %v12724 = vsel %vm152, %v12057, 0.0
    %v12725 = vsel %vm152, %v12716, 0.0
    %v12726 = vadd.f32 %v12724, %v12725
    %v12727 = vsel %vm152, %v12059, 0.0
    %v12728 = vsel %vm152, %v12718, 0.0
    %v12729 = vadd.f32 %v12727, %v12728
    %v12730 = vsel %vm152, %v12062, 0.0
    %v12731 = vsel %vm152, %v12721, 0.0
    %v12732 = vadd.f32 %v12730, %v12731
    %v12733 = vmul.f32 %v12726, 0.5
    %v12734 = vmul.f32 %v12729, 0.5
    %v12735 = vmul.f32 %v12732, 0.5
    %v12736 = vperm.slane %v66, 7
    %v12737 = vadd.f32 %v12733, %v12736
    %v12738 = vadd.f32 %v12734, %v12736
    %v12739 = vadd.f32 %v12735, %v12736
    %12740 = vst.msk [vmem:[#allocation2] sm:$0xff] %vm152, %v12737
    %12741 = vst.msk [vmem:[#allocation2 + $0x8] sm:$0xff] %vm152, %v12738
    %12742 = vst.msk [vmem:[#allocation2 + $0x10] sm:$0xff] %vm152, %v12739
    %s12743 = sld [smem:[#allocation3]]
    %s12744 = scalar_lea.vmem [#allocation2], %s12743
    %v12745 = vld [vmem:[%s12744] sm:$0x1]
    %s12746 = sld [smem:[#allocation3 + $0x1]]
    %s12747 = scalar_lea.vmem [#allocation2], %s12746
    %v12748 = vld [vmem:[%s12747] sm:$0x1]
    %s12749 = sld [smem:[#allocation3 + $0x2]]
    %s12750 = scalar_lea.vmem [#allocation2], %s12749
    %v12751 = vld [vmem:[%s12750] sm:$0x1]
    %s12752 = sld [smem:[#allocation3 + $0x3]]
    %s12753 = scalar_lea.vmem [#allocation2], %s12752
    %v12754 = vld [vmem:[%s12753] sm:$0x1]
    %s12755 = sld [smem:[#allocation3 + $0x4]]
    %s12756 = scalar_lea.vmem [#allocation2], %s12755
    %v12757 = vld [vmem:[%s12756] sm:$0x1]
    %s12758 = sld [smem:[#allocation3 + $0x5]]
    %s12759 = scalar_lea.vmem [#allocation2], %s12758
    %v12760 = vld [vmem:[%s12759] sm:$0x1]
    %s12761 = sld [smem:[#allocation3 + $0x6]]
    %s12762 = scalar_lea.vmem [#allocation2], %s12761
    %v12763 = vld [vmem:[%s12762] sm:$0x1]
    %s12764 = sld [smem:[#allocation3 + $0x7]]
    %s12765 = scalar_lea.vmem [#allocation2], %s12764
    %v12766 = vld [vmem:[%s12765] sm:$0x1]
    %s12767 = sld [smem:[#allocation3 + $0x8]]
    %s12768 = scalar_lea.vmem [#allocation2], %s12767
    %v12769 = vld [vmem:[%s12768] sm:$0x1]
    %s12770 = sld [smem:[#allocation3 + $0x9]]
    %s12771 = scalar_lea.vmem [#allocation2], %s12770
    %v12772 = vld [vmem:[%s12771] sm:$0x1]
    %s12773 = sld [smem:[#allocation3 + $0xa]]
    %s12774 = scalar_lea.vmem [#allocation2], %s12773
    %v12775 = vld [vmem:[%s12774] sm:$0x1]
    %s12776 = sld [smem:[#allocation3 + $0xb]]
    %s12777 = scalar_lea.vmem [#allocation2], %s12776
    %v12778 = vld [vmem:[%s12777] sm:$0x1]
    %v12780 = vrot.slane %v12748, 7
    %v12783 = vrot.slane %v12751, 6
    %v12786 = vrot.slane %v12754, 5
    %v12789 = vrot.slane %v12757, 4
    %v12792 = vrot.slane %v12760, 3
    %v12795 = vrot.slane %v12763, 2
    %v12798 = vrot.slane %v12766, 1
    %v12801 = vrot.slane %v12772, 7
    %v12804 = vrot.slane %v12775, 6
    %v12807 = vrot.slane %v12778, 5
    %vm12809 = vcmask 1040384
    %v12810 = vsel %vm12809, %v12745, %v12780
    %vm12811 = vcmask 1041408
    %v12812 = vsel %vm12811, %v12810, %v12783
    %vm12813 = vcmask 1042432
    %v12814 = vsel %vm12813, %v12812, %v12786
    %v12815 = vsel %vm6014, %v12814, %v12789
    %v12816 = vsel %vm115, %v12815, %v12792
    %vm12817 = vcmask 1045504
    %v12818 = vsel %vm12817, %v12816, %v12795
    %vm12819 = vcmask 1046528
    %v12820 = vsel %vm12819, %v12818, %v12798
    %v12821 = vsel %vm12809, %v12769, %v12801
    %v12822 = vsel %vm12811, %v12821, %v12804
    %v12823 = vsel %vm12813, %v12822, %v12807
    %s12824 = sld [smem:[#allocation3 + $0x80]]
    %s12825 = scalar_lea.vmem [#allocation2], %s12824
    %v12826 = vld [vmem:[%s12825] sm:$0x1]
    %s12827 = sld [smem:[#allocation3 + $0x81]]
    %s12828 = scalar_lea.vmem [#allocation2], %s12827
    %v12829 = vld [vmem:[%s12828] sm:$0x1]
    %s12830 = sld [smem:[#allocation3 + $0x82]]
    %s12831 = scalar_lea.vmem [#allocation2], %s12830
    %v12832 = vld [vmem:[%s12831] sm:$0x1]
    %s12833 = sld [smem:[#allocation3 + $0x83]]
    %s12834 = scalar_lea.vmem [#allocation2], %s12833
    %v12835 = vld [vmem:[%s12834] sm:$0x1]
    %s12836 = sld [smem:[#allocation3 + $0x84]]
    %s12837 = scalar_lea.vmem [#allocation2], %s12836
    %v12838 = vld [vmem:[%s12837] sm:$0x1]
    %s12839 = sld [smem:[#allocation3 + $0x85]]
    %s12840 = scalar_lea.vmem [#allocation2], %s12839
    %v12841 = vld [vmem:[%s12840] sm:$0x1]
    %s12842 = sld [smem:[#allocation3 + $0x86]]
    %s12843 = scalar_lea.vmem [#allocation2], %s12842
    %v12844 = vld [vmem:[%s12843] sm:$0x1]
    %s12845 = sld [smem:[#allocation3 + $0x87]]
    %s12846 = scalar_lea.vmem [#allocation2], %s12845
    %v12847 = vld [vmem:[%s12846] sm:$0x1]
    %s12848 = sld [smem:[#allocation3 + $0x88]]
    %s12849 = scalar_lea.vmem [#allocation2], %s12848
    %v12850 = vld [vmem:[%s12849] sm:$0x1]
    %s12851 = sld [smem:[#allocation3 + $0x89]]
    %s12852 = scalar_lea.vmem [#allocation2], %s12851
    %v12853 = vld [vmem:[%s12852] sm:$0x1]
    %s12854 = sld [smem:[#allocation3 + $0x8a]]
    %s12855 = scalar_lea.vmem [#allocation2], %s12854
    %v12856 = vld [vmem:[%s12855] sm:$0x1]
    %s12857 = sld [smem:[#allocation3 + $0x8b]]
    %s12858 = scalar_lea.vmem [#allocation2], %s12857
    %v12859 = vld [vmem:[%s12858] sm:$0x1]
    %v12861 = vrot.slane %v12829, 7
    %v12864 = vrot.slane %v12832, 6
    %v12867 = vrot.slane %v12835, 5
    %v12870 = vrot.slane %v12838, 4
    %v12873 = vrot.slane %v12841, 3
    %v12876 = vrot.slane %v12844, 2
    %v12879 = vrot.slane %v12847, 1
    %v12882 = vrot.slane %v12853, 7
    %v12885 = vrot.slane %v12856, 6
    %v12888 = vrot.slane %v12859, 5
    %v12890 = vsel %vm12809, %v12826, %v12861
    %v12891 = vsel %vm12811, %v12890, %v12864
    %v12892 = vsel %vm12813, %v12891, %v12867
    %v12893 = vsel %vm6014, %v12892, %v12870
    %v12894 = vsel %vm115, %v12893, %v12873
    %v12895 = vsel %vm12817, %v12894, %v12876
    %v12896 = vsel %vm12819, %v12895, %v12879
    %v12897 = vsel %vm12809, %v12850, %v12882
    %v12898 = vsel %vm12811, %v12897, %v12885
    %v12899 = vsel %vm12813, %v12898, %v12888
    %v12900 = vmul.f32 %v12820, %v12820
    %v12901 = vmul.f32 %v12823, %v12823
    %v12902 = vsel %vm152, %v12900, 0.0
    %12903 = vadd.xlane.f32.xlu0 %v12902
    %v12904 = vpop.xlane.xlu0 %12903
    %vm12905 = vcmask 257024
    %v12906 = vsel %vm12905, %v12901, 0.0
    %12907 = vadd.xlane.f32.xlu0 %v12906
    %v12908 = vpop.xlane.xlu0 %12907
    %v12909 = vmax.f32 %v12904, 1e-24
    %v12910 = vmax.f32 %v12908, 1e-24
    %v12911 = vrsqrt.pop %v12909
    %v12912 = vmul.f32 %v12911, %v12909
    %v12913 = vmul.f32 %v12912, %v12911
    %v12914 = vmul.f32 0.5, %v12913
    %v12915 = vsub.f32 1.5, %v12914
    %v12916 = vmul.f32 %v12911, %v12915
    %vm12917 = vweird.f32 %v12909
    %vm12918 = vweird.f32 %v12911
    %vm12919 = vmor %vm12917, %vm12918
    %v12920 = vsel %vm12919, %v12911, %v12916
    %v12921 = vrsqrt.pop %v12910
    %v12922 = vmul.f32 %v12921, %v12910
    %v12923 = vmul.f32 %v12922, %v12921
    %v12924 = vmul.f32 0.5, %v12923
    %v12925 = vsub.f32 1.5, %v12924
    %v12926 = vmul.f32 %v12921, %v12925
    %vm12927 = vweird.f32 %v12910
    %vm12928 = vweird.f32 %v12921
    %vm12929 = vmor %vm12927, %vm12928
    %v12930 = vsel %vm12929, %v12921, %v12926
    %v12931 = vmul.f32 %v12820, %v12920
    %v12932 = vmul.f32 %v12823, %v12930
    %v12933 = vmul.f32 %v12896, %v12896
    %v12934 = vmul.f32 %v12899, %v12899
    %v12935 = vsel %vm152, %v12933, 0.0
    %12936 = vadd.xlane.f32.xlu0 %v12935
    %v12937 = vpop.xlane.xlu0 %12936
    %v12938 = vsel %vm12905, %v12934, 0.0
    %12939 = vadd.xlane.f32.xlu0 %v12938
    %v12940 = vpop.xlane.xlu0 %12939
    %v12941 = vmax.f32 %v12937, 1e-24
    %v12942 = vmax.f32 %v12940, 1e-24
    %v12943 = vrsqrt.pop %v12941
    %v12944 = vmul.f32 %v12943, %v12941
    %v12945 = vmul.f32 %v12944, %v12943
    %v12946 = vmul.f32 0.5, %v12945
    %v12947 = vsub.f32 1.5, %v12946
    %v12948 = vmul.f32 %v12943, %v12947
    %vm12949 = vweird.f32 %v12941
    %vm12950 = vweird.f32 %v12943
    %vm12951 = vmor %vm12949, %vm12950
    %v12952 = vsel %vm12951, %v12943, %v12948
    %v12953 = vrsqrt.pop %v12942
    %v12954 = vmul.f32 %v12953, %v12942
    %v12955 = vmul.f32 %v12954, %v12953
    %v12956 = vmul.f32 0.5, %v12955
    %v12957 = vsub.f32 1.5, %v12956
    %v12958 = vmul.f32 %v12953, %v12957
    %vm12959 = vweird.f32 %v12942
    %vm12960 = vweird.f32 %v12953
    %vm12961 = vmor %vm12959, %vm12960
    %v12962 = vsel %vm12961, %v12953, %v12958
    %v12963 = vmul.f32 %v12896, %v12952
    %v12964 = vmul.f32 %v12899, %v12962
    %v12965 = vmul.f32 %v12931, %v12963
    %v12966 = vmul.f32 %v12932, %v12964
    %v12967 = vpack.c.bf16 %v12966, %v12965
    %v12968 = vperm.slane %v67, 0
    %v12973 = vunpack.c.l.b16 %v62
    %v12974 = vunpack.c.l.b16 %v63
    %v12975 = vunpack.c.l.b16 %v64
    %v12976 = vunpack.c.l.b16 %v65
    %v12977 = vpack.c.b16 %v12974, %v12973
    %v12978 = vpack.c.b16 %v12976, %v12975
    %v12982 = vsel %vm152, %v12967, 0
    %12984 = vmatpush.bf16.msra.mxu0 0
    %12985 = vmatpush.bf16.msra.mxu0 0
    %12986 = vmatpush.bf16.msra.mxu0 0
    %12987 = vmatpush.bf16.msra.mxu0 0
    %12988 = vmatpush.bf16.msra.mxu0 0
    %12989 = vmatpush.bf16.msra.mxu0 0
    %12990 = vmatpush.bf16.msra.mxu0 %v12978
    %12991 = vmatpush.bf16.msra.mxu0 %v12977
    %12992 = vmatmul.bf16.gmra.mxu0 %v12982
    %v12993 = vpop.f32.mrf.mxu0
    %v12994 = vadd.f32 %v12968, %v12993
    %v12995 = vpop.f32.mrf.mxu0
    %v12996 = vadd.f32 %v12968, %v12995
    %12997 = vdwg.mxu0
    %v12998 = vmax.f32 %v12994, 0.0
    %v12999 = vmax.f32 %v12996, 0.0
    %v13000 = vperm.slane %v67, 1
    %v13001 = vmul.f32 %v12998, %v13000
    %v13002 = vmul.f32 %v12999, %v13000
    %13003 = vadd.xlane.f32.xlu0 %v13001
    %v13004 = vpop.xlane.xlu0 %13003
    %v13005 = vsel %vm6014, %v13002, 0.0
    %13006 = vadd.xlane.f32.xlu0 %v13005
    %v13007 = vpop.xlane.xlu0 %13006
    %v13010 = vperm.slane %v13004, %v3239
    %v13011 = vperm.slane %v13007, %v3241
    %v13012 = vsel %vm3243, %v13011, %v13010
    %vm13014 = vcmask 90112
    %13015 = vst.msk [vmem:[#allocation8] sm:$0x1] %vm13014, %v13012
    // Predicated region
    $region34: #{tpu_custom_call.1} parent=1 // pred_check
      _
    $region35: #{tpu_custom_call.1} parent=1 // pred_check_branch
      %13017 = sbr.rel (0) target = $region37
    $region36: #{tpu_custom_call.1} parent=1 // pred_region
      %13019 = vsyncadd [#allocation5], 0
      %s13021 = sshll.u32 [#allocation8], 4
      %s13022 = int_to_ptr.vmem [resolvable:$true] %s13021
      %s13023 = sshll.u32 %s6, 4
      %s13024 = int_to_ptr.hbm [resolvable:$true] %s13023
      %13026 = dma.vmem_to_hbm [thread:$0]  %s13022, 16, %s13024, [#allocation5]
    $region37: #{tpu_custom_call.1} parent=1 // pred_fallthru
      _
    // Predicated region
    $region38: #{tpu_custom_call.1} parent=1 // pred_check
      _
    $region39: #{tpu_custom_call.1} parent=1 // pred_check_branch
      %13028 = sbr.rel (0) target = $region41
    $region40: #{tpu_custom_call.1} parent=1 // pred_region
      %13030 = dma.done [#allocation5], 16
    $region41: #{tpu_custom_call.1} parent=1 // pred_fallthru
      _
    %13031 = vsyncpa [#allocation4], 1
    %13032 = vsyncpa [#allocation5], 1
    %13033 = vsyncpa [#allocation6], 1

</llo_original>
